<compile_context>
chip_gen: v7x
topology: tpu7x:2x2x1
jax: 0.10.0
libtpu: 0.0.40
codegen_flags: <defaults>
</compile_context>

<pallas_src>
import functools

import jax
import jax.numpy as jnp
from jax.experimental import pallas as pl
from jax.experimental.pallas import tpu as pltpu


def encoder_layer_kernel(xf_ref, xq_ref, mask_ref,
                         wq_ref, bq_ref, wkv_ref, bkv_ref, wo_ref, bo_ref,
                         g1_ref, beta1_ref,
                         w1_ref, bf1_ref, w2_ref, bf2_ref,
                         g2_ref, beta2_ref,
                         out_ref,
                         k_cache, v_cache, *, num_heads):
    f32 = jnp.float32
    x_q = xq_ref[0]                       # (TQ, D)  compute dtype
    not_attend = mask_ref[0, 0] == 0      # (TQ, S)  bool (integer mask)
    dt = x_q.dtype                        # native operand dtype for the MXU
    TQ, D = x_q.shape
    H = num_heads
    dk = D // H
    S = k_cache.shape[1]

    def linear(a, w_ref, b_ref):
        # native-dtype operands (bf16 at full MXU rate), f32 accumulation.
        return (jnp.dot(a, w_ref[...], preferred_element_type=f32)
                + b_ref[...].astype(f32))

    # ---- K/V: computed once per sequence (first query tile) and cached in
    #      persistent VMEM scratch, already head-major -----------------------
    @pl.when(pl.program_id(1) == 0)
    def _():
        x_full = xf_ref[0]                              # (S, D)
        kv = linear(x_full, wkv_ref, bkv_ref)           # (S, 2D)  f32
        k = kv[:, :D].astype(dt).reshape(S, H, dk)
        v = kv[:, D:].astype(dt).reshape(S, H, dk)
        k_cache[...] = pltpu.einshape("khd->hkd", k)    # (H, S, dk)
        v_cache[...] = pltpu.einshape("khd->hkd", v)

    # ---- Q projection for this query tile only -----------------------------
    q = linear(x_q, wq_ref, bq_ref)                     # (TQ, D)  f32
    qh = pltpu.einshape("qhd->hqd", q.astype(dt).reshape(TQ, H, dk))
    kh = k_cache[...]                                   # (H, S, dk)
    vh = v_cache[...]                                   # (H, S, dk)

    # ---- attention, batched over heads (no per-head loop / concat) ---------
    # NOTE: no 1/sqrt(d_k) scaling, matching the reference module.
    scores = jnp.einsum("hqd,hkd->hqk", qh, kh, preferred_element_type=f32)
    scores = jnp.where(not_attend[None, :, :], f32(-1e9), scores)
    scores = scores - jnp.max(scores, axis=-1, keepdims=True)
    p = jnp.exp(scores)
    attn = p * pl.reciprocal(jnp.sum(p, axis=-1, keepdims=True), approx=True)

    ctx = jnp.einsum("hqk,hkd->hqd", attn.astype(dt), vh,
                     preferred_element_type=f32)            # (H, TQ, dk)
    ctx = pltpu.einshape("hqd->qhd", ctx).reshape(TQ, D)     # (TQ, D)
    attn_out = linear(ctx.astype(dt), wo_ref, bo_ref)        # (TQ, D)  f32

    def layernorm(a, g_ref, b_ref):
        # single pass: one pair of cross-lane reductions instead of two.
        mu = jnp.mean(a, axis=-1, keepdims=True)
        var = jnp.mean(a * a, axis=-1, keepdims=True) - mu * mu
        return ((a - mu) * jax.lax.rsqrt(var + 1e-5)
                * g_ref[...].astype(f32) + b_ref[...].astype(f32))

    # Dropout is identity in inference mode.
    # TODO(synk): train-mode dropout would need pltpu.prng_seed/prng_random_bits.
    x2 = layernorm(x_q.astype(f32) + attn_out, g1_ref, beta1_ref)   # (TQ, D)

    # ---- feed-forward -------------------------------------------------------
    h1 = jnp.maximum(linear(x2.astype(dt), w1_ref, bf1_ref), 0.0)   # (TQ, dff)
    ff = linear(h1.astype(dt), w2_ref, bf2_ref)                     # (TQ, D)

    out_ref[0] = layernorm(x2 + ff, g2_ref, beta2_ref).astype(out_ref.dtype)


def encoder_layer(x, mask, params, num_heads, *, tq=None,
                  single_buffer_weights=True):
    """One encoder layer.  `params` uses the same (unfused) keys as `reference`."""
    B, S, D = x.shape
    if tq is None:
        tq = S if S <= 256 else 256
    assert S % tq == 0, "S must be divisible by the query tile size"
    nq = S // tq
    dk = D // num_heads

    # Integer 0/1 mask (nonzero == attend): no float `== 0` in-kernel, and only
    # the (tq, S) mask tile needed by each grid step is DMA'd.
    mask_i = (mask != 0).astype(jnp.int32)

    fused = dict(
        wq=params["wq"], bq=params["bq"],
        wkv=jnp.concatenate([params["wk"], params["wv"]], axis=1),
        bkv=jnp.concatenate([params["bk"], params["bv"]], axis=1),
        wo=params["wo"], bo=params["bo"],
        g1=params["g1"], beta1=params["beta1"],
        w1=params["w1"], bf1=params["bf1"],
        w2=params["w2"], bf2=params["bf2"],
        g2=params["g2"], beta2=params["beta2"],
    )
    order = ["wq", "bq", "wkv", "bkv", "wo", "bo", "g1", "beta1",
             "w1", "bf1", "w2", "bf2", "g2", "beta2"]
    plist = [fused[k] for k in order]

    kernel = functools.partial(encoder_layer_kernel, num_heads=num_heads)

    # K / V caches (head-major, native compute dtype) persist across the
    # query-tile axis of the grid.
    scratch_shapes = [pltpu.VMEM((num_heads, S, dk), x.dtype),
                      pltpu.VMEM((num_heads, S, dk), x.dtype)]

    def build(single_buffer):
        # Weights/biases have a grid-invariant block index; single-buffering
        # them halves their VMEM footprint (matters most on v7x's 64 MiB).
        wkw = {"pipeline_mode": pl.Buffered(1)} if single_buffer else {}

        def weight_spec(arr):
            return pl.BlockSpec(arr.shape, lambda b, qi: (0, 0), **wkw)

        in_specs = [
            pl.BlockSpec((1, S, D), lambda b, qi: (b, 0, 0)),          # x, full
            pl.BlockSpec((1, tq, D), lambda b, qi: (b, qi, 0)),        # x, tile
            pl.BlockSpec((1, 1, tq, S), lambda b, qi: (b, 0, qi, 0)),  # mask tile
        ] + [weight_spec(a) for a in plist]

        return pl.pallas_call(
            kernel,
            out_shape=jax.ShapeDtypeStruct((B, S, D), x.dtype),
            grid_spec=pltpu.PrefetchScalarGridSpec(
                num_scalar_prefetch=0,
                grid=(B, nq),
                in_specs=in_specs,
                out_specs=pl.BlockSpec((1, tq, D), lambda b, qi: (b, qi, 0)),
                scratch_shapes=scratch_shapes,
            ),
            compiler_params=pltpu.CompilerParams(
                # qi axis must be sequential because K/V are cached at qi == 0.
                dimension_semantics=("parallel", "arbitrary")),
        )

    args = (x, x, mask_i, *plist)
    if single_buffer_weights:
        try:
            return build(True)(*args)
        except Exception:
            # pipeline_mode=pl.Buffered(1) unsupported on this JAX build;
            # fall back to default double-buffering (correctness unaffected).
            pass
    return build(False)(*args)


def reference(x, mask, p, num_heads):
    """Pure-JAX f32 reference matching the PyTorch forward semantics."""
    B, S, D = x.shape
    dk = D // num_heads

    def lin(a, w, b):
        return a @ w + b

    def layernorm(a, g, b):
        mu = jnp.mean(a, axis=-1, keepdims=True)
        var = jnp.mean((a - mu) ** 2, axis=-1, keepdims=True)
        return (a - mu) / jnp.sqrt(var + 1e-5) * g + b

    Q = lin(x, p["wq"], p["bq"]).reshape(B, S, num_heads, dk).transpose(0, 2, 1, 3)
    K = lin(x, p["wk"], p["bk"]).reshape(B, S, num_heads, dk).transpose(0, 2, 1, 3)
    V = lin(x, p["wv"], p["bv"]).reshape(B, S, num_heads, dk).transpose(0, 2, 1, 3)
    scores = Q @ jnp.swapaxes(K, -2, -1)                 # (B, H, S, S), no scaling
    scores = jnp.where(mask == 0, -1e9, scores)
    attn = jax.nn.softmax(scores, axis=-1)
    ctx = (attn @ V).transpose(0, 2, 1, 3).reshape(B, S, D)
    attn_out = lin(ctx, p["wo"], p["bo"])
    x2 = layernorm(x + attn_out, p["g1"], p["beta1"])
    ff = lin(jax.nn.relu(lin(x2, p["w1"], p["bf1"])), p["w2"], p["bf2"])
    return layernorm(x2 + ff, p["g2"], p["beta2"])


if __name__ == "__main__":
    B, S, d_model, num_heads, d_ff = 2, 32, 32, 4, 64
    tq = 16                                   # 2 query tiles/sequence -> grid (2, 2)

    key = jax.random.PRNGKey(0)
    keys = jax.random.split(key, 16)

    def init_w(k, shape, scale=0.1):
        return (scale * jax.random.normal(k, shape)).astype(jnp.float32)

    params = {
        "wq": init_w(keys[0], (d_model, d_model)),
        "bq": init_w(keys[1], (1, d_model)),
        "wk": init_w(keys[2], (d_model, d_model)),
        "bk": init_w(keys[3], (1, d_model)),
        "wv": init_w(keys[4], (d_model, d_model)),
        "bv": init_w(keys[5], (1, d_model)),
        "wo": init_w(keys[6], (d_model, d_model)),
        "bo": init_w(keys[7], (1, d_model)),
        "g1": jnp.ones((1, d_model), jnp.float32),
        "beta1": jnp.zeros((1, d_model), jnp.float32),
        "w1": init_w(keys[8], (d_model, d_ff)),
        "bf1": init_w(keys[9], (1, d_ff)),
        "w2": init_w(keys[10], (d_ff, d_model)),
        "bf2": init_w(keys[11], (1, d_model)),
        "g2": jnp.ones((1, d_model), jnp.float32),
        "beta2": jnp.zeros((1, d_model), jnp.float32),
    }

    x = jax.random.normal(keys[12], (B, S, d_model), dtype=jnp.float32)
    # causal mask, shape (B, 1, S, S), broadcasts over heads like the torch code
    causal = (jnp.arange(S)[:, None] >= jnp.arange(S)[None, :]).astype(jnp.float32)
    mask = jnp.broadcast_to(causal, (B, 1, S, S))

    ref = reference(x, mask, params, num_heads)

    # f32 run (exercises the query-tiled grid + K/V cache, nq = 2)
    out = encoder_layer(x, mask, params, num_heads, tq=tq)
    out = jax.block_until_ready(out)
    assert out.shape == (B, S, d_model)
    err = jnp.max(jnp.abs(out - ref))
    assert jnp.allclose(out, ref, atol=5e-3, rtol=5e-3), f"f32 max abs err {err}"

    # bf16 run: native bf16 operands feed the MXU, f32 accumulation in-kernel.
    x_bf = x.astype(jnp.bfloat16)
    params_bf = jax.tree_util.tree_map(lambda a: a.astype(jnp.bfloat16), params)
    out_bf = encoder_layer(x_bf, mask, params_bf, num_heads, tq=tq)
    out_bf = jax.block_until_ready(out_bf).astype(jnp.float32)
    err_bf = jnp.max(jnp.abs(out_bf - ref))
    assert jnp.allclose(out_bf, ref, atol=0.15, rtol=0.15), \
        f"bf16 max abs err {err_bf}"

    print("KERNEL_OK")
</pallas_src>

<mosaic_0001>
module attributes {stable_mosaic.version = 11 : i64} {
  func.func @encoder_layer_kernel(%arg0: i32, %arg1: i32, %arg2: memref<1x32x32xf32, #tpu.memory_space<vmem>>, %arg3: memref<1x16x32xf32, #tpu.memory_space<vmem>>, %arg4: memref<1x1x16x32xi32, #tpu.memory_space<vmem>>, %arg5: memref<32x32xf32, #tpu.memory_space<vmem>>, %arg6: memref<1x32xf32, #tpu.memory_space<vmem>>, %arg7: memref<32x64xf32, #tpu.memory_space<vmem>>, %arg8: memref<1x64xf32, #tpu.memory_space<vmem>>, %arg9: memref<32x32xf32, #tpu.memory_space<vmem>>, %arg10: memref<1x32xf32, #tpu.memory_space<vmem>>, %arg11: memref<1x32xf32, #tpu.memory_space<vmem>>, %arg12: memref<1x32xf32, #tpu.memory_space<vmem>>, %arg13: memref<32x64xf32, #tpu.memory_space<vmem>>, %arg14: memref<1x64xf32, #tpu.memory_space<vmem>>, %arg15: memref<64x32xf32, #tpu.memory_space<vmem>>, %arg16: memref<1x32xf32, #tpu.memory_space<vmem>>, %arg17: memref<1x32xf32, #tpu.memory_space<vmem>>, %arg18: memref<1x32xf32, #tpu.memory_space<vmem>>, %arg19: memref<1x16x32xf32, #tpu.memory_space<vmem>>, %arg20: memref<4x32x8xf32, #tpu.memory_space<vmem>>, %arg21: memref<4x32x8xf32, #tpu.memory_space<vmem>>) attributes {dimension_semantics = [#tpu.dimension_semantics<parallel>, #tpu.dimension_semantics<arbitrary>], iteration_bounds = array<i64: 2, 2>, scalar_prefetch = 0 : i64, scratch_operands = 2 : i64, tpu.core_type = #tpu.core_type<tc>, window_params = [{transform_indices = @transform_0, window_bounds = array<i64: 1, 32, 32>}, {transform_indices = @transform_1, window_bounds = array<i64: 1, 16, 32>}, {transform_indices = @transform_2, window_bounds = array<i64: 1, 1, 16, 32>}, {pipeline_mode = #tpu.pipeline_mode<synchronous>, transform_indices = @transform_3, window_bounds = array<i64: 32, 32>}, {pipeline_mode = #tpu.pipeline_mode<synchronous>, transform_indices = @transform_4, window_bounds = array<i64: 1, 32>}, {pipeline_mode = #tpu.pipeline_mode<synchronous>, transform_indices = @transform_5, window_bounds = array<i64: 32, 64>}, {pipeline_mode = #tpu.pipeline_mode<synchronous>, transform_indices = @transform_6, window_bounds = array<i64: 1, 64>}, {pipeline_mode = #tpu.pipeline_mode<synchronous>, transform_indices = @transform_7, window_bounds = array<i64: 32, 32>}, {pipeline_mode = #tpu.pipeline_mode<synchronous>, transform_indices = @transform_8, window_bounds = array<i64: 1, 32>}, {pipeline_mode = #tpu.pipeline_mode<synchronous>, transform_indices = @transform_9, window_bounds = array<i64: 1, 32>}, {pipeline_mode = #tpu.pipeline_mode<synchronous>, transform_indices = @transform_10, window_bounds = array<i64: 1, 32>}, {pipeline_mode = #tpu.pipeline_mode<synchronous>, transform_indices = @transform_11, window_bounds = array<i64: 32, 64>}, {pipeline_mode = #tpu.pipeline_mode<synchronous>, transform_indices = @transform_12, window_bounds = array<i64: 1, 64>}, {pipeline_mode = #tpu.pipeline_mode<synchronous>, transform_indices = @transform_13, window_bounds = array<i64: 64, 32>}, {pipeline_mode = #tpu.pipeline_mode<synchronous>, transform_indices = @transform_14, window_bounds = array<i64: 1, 32>}, {pipeline_mode = #tpu.pipeline_mode<synchronous>, transform_indices = @transform_15, window_bounds = array<i64: 1, 32>}, {pipeline_mode = #tpu.pipeline_mode<synchronous>, transform_indices = @transform_16, window_bounds = array<i64: 1, 32>}, {transform_indices = @transform_17, window_bounds = array<i64: 1, 16, 32>}]} {
    %c0 = arith.constant 0 : index
    %c0_0 = arith.constant 0 : index
    %c0_1 = arith.constant 0 : index
    %0 = vector.load %arg3[%c0, %c0_0, %c0_1] : memref<1x16x32xf32, #tpu.memory_space<vmem>>, vector<1x16x32xf32>
    %1 = vector.shape_cast %0 : vector<1x16x32xf32> to vector<16x32xf32>
    %c0_2 = arith.constant 0 : index
    %c0_3 = arith.constant 0 : index
    %c0_4 = arith.constant 0 : index
    %c0_5 = arith.constant 0 : index
    %2 = vector.load %arg4[%c0_2, %c0_3, %c0_4, %c0_5] : memref<1x1x16x32xi32, #tpu.memory_space<vmem>>, vector<1x1x16x32xi32>
    %3 = vector.shape_cast %2 : vector<1x1x16x32xi32> to vector<16x32xi32>
    %c0_i32 = arith.constant 0 : i32
    %4 = vector.broadcast %c0_i32 : i32 to vector<16x32xi32>
    %5 = arith.cmpi eq, %3, %4 : vector<16x32xi32>
    %c0_i32_6 = arith.constant 0 : i32
    %6 = arith.cmpi eq, %arg1, %c0_i32_6 : i32
    %7 = arith.extui %6 : i1 to i32
    %c0_i32_7 = arith.constant 0 : i32
    %8 = arith.cmpi ne, %7, %c0_i32_7 : i32
    scf.if %8 {
      %c0_60 = arith.constant 0 : index
      %c0_61 = arith.constant 0 : index
      %c0_62 = arith.constant 0 : index
      %107 = vector.load %arg2[%c0_60, %c0_61, %c0_62] : memref<1x32x32xf32, #tpu.memory_space<vmem>>, vector<1x32x32xf32>
      %108 = vector.shape_cast %107 : vector<1x32x32xf32> to vector<32x32xf32>
      %c0_63 = arith.constant 0 : index
      %c0_64 = arith.constant 0 : index
      %109 = vector.load %arg7[%c0_63, %c0_64] : memref<32x64xf32, #tpu.memory_space<vmem>>, vector<32x64xf32>
      %cst_65 = arith.constant dense<0.000000e+00> : vector<32x64xf32>
      %110 = tpu.matmul %108, %109, %cst_65 {dimension_numbers = #tpu.dot_dimension_numbers<[1], [0], [0], [1], [0, 0, 1, 1], [], []>} : vector<32x32xf32>, vector<32x64xf32>, vector<32x64xf32> -> vector<32x64xf32>
      %c0_66 = arith.constant 0 : index
      %c0_67 = arith.constant 0 : index
      %111 = vector.load %arg8[%c0_66, %c0_67] : memref<1x64xf32, #tpu.memory_space<vmem>>, vector<1x64xf32>
      %112 = vector.broadcast %111 : vector<1x64xf32> to vector<32x64xf32>
      %113 = arith.addf %110, %112 : vector<32x64xf32>
      %114 = vector.extract_strided_slice %113 {offsets = [0, 0], sizes = [32, 32], strides = [1, 1]} : vector<32x64xf32> to vector<32x32xf32>
      %115 = vector.shape_cast %114 : vector<32x32xf32> to vector<32x4x8xf32>
      %116 = vector.extract_strided_slice %113 {offsets = [0, 32], sizes = [32, 32], strides = [1, 1]} : vector<32x64xf32> to vector<32x32xf32>
      %117 = vector.shape_cast %116 : vector<32x32xf32> to vector<32x4x8xf32>
      %118 = tpu.transpose %115, [1, 0, 2] : vector<32x4x8xf32> -> vector<4x32x8xf32>
      %c0_68 = arith.constant 0 : index
      %c0_69 = arith.constant 0 : index
      %c0_70 = arith.constant 0 : index
      %119 = vector.load %arg20[%c0_68, %c0_69, %c0_70] : memref<4x32x8xf32, #tpu.memory_space<vmem>>, vector<4x32x8xf32>
      tpu.vector_store %arg20[%c0_68, %c0_69, %c0_70], %118 {strides = array<i32>} : memref<4x32x8xf32, #tpu.memory_space<vmem>>, vector<4x32x8xf32>,
      %120 = tpu.transpose %117, [1, 0, 2] : vector<32x4x8xf32> -> vector<4x32x8xf32>
      %c0_71 = arith.constant 0 : index
      %c0_72 = arith.constant 0 : index
      %c0_73 = arith.constant 0 : index
      %121 = vector.load %arg21[%c0_71, %c0_72, %c0_73] : memref<4x32x8xf32, #tpu.memory_space<vmem>>, vector<4x32x8xf32>
      tpu.vector_store %arg21[%c0_71, %c0_72, %c0_73], %120 {strides = array<i32>} : memref<4x32x8xf32, #tpu.memory_space<vmem>>, vector<4x32x8xf32>,
    } else {
    }
    %c0_8 = arith.constant 0 : index
    %c0_9 = arith.constant 0 : index
    %9 = vector.load %arg5[%c0_8, %c0_9] : memref<32x32xf32, #tpu.memory_space<vmem>>, vector<32x32xf32>
    %cst = arith.constant dense<0.000000e+00> : vector<16x32xf32>
    %10 = tpu.matmul %1, %9, %cst {dimension_numbers = #tpu.dot_dimension_numbers<[1], [0], [0], [1], [0, 0, 1, 1], [], []>} : vector<16x32xf32>, vector<32x32xf32>, vector<16x32xf32> -> vector<16x32xf32>
    %c0_10 = arith.constant 0 : index
    %c0_11 = arith.constant 0 : index
    %11 = vector.load %arg6[%c0_10, %c0_11] : memref<1x32xf32, #tpu.memory_space<vmem>>, vector<1x32xf32>
    %12 = vector.broadcast %11 : vector<1x32xf32> to vector<16x32xf32>
    %13 = arith.addf %10, %12 : vector<16x32xf32>
    %14 = vector.shape_cast %13 : vector<16x32xf32> to vector<16x4x8xf32>
    %15 = tpu.transpose %14, [1, 0, 2] : vector<16x4x8xf32> -> vector<4x16x8xf32>
    %c0_12 = arith.constant 0 : index
    %c0_13 = arith.constant 0 : index
    %c0_14 = arith.constant 0 : index
    %16 = vector.load %arg20[%c0_12, %c0_13, %c0_14] : memref<4x32x8xf32, #tpu.memory_space<vmem>>, vector<4x32x8xf32>
    %c0_15 = arith.constant 0 : index
    %c0_16 = arith.constant 0 : index
    %c0_17 = arith.constant 0 : index
    %17 = vector.load %arg21[%c0_15, %c0_16, %c0_17] : memref<4x32x8xf32, #tpu.memory_space<vmem>>, vector<4x32x8xf32>
    "tpu.trace_start"() <{level = 10 : i32, message = "hqd,hkd->hqk"}> : () -> ()
    %cst_18 = arith.constant dense<0.000000e+00> : vector<4x16x32xf32>
    %18 = tpu.matmul %15, %16, %cst_18 {dimension_numbers = #tpu.dot_dimension_numbers<[2], [2], [1], [1], [0, 0, 0, 1, 1, 1], [0], [0]>} : vector<4x16x8xf32>, vector<4x32x8xf32>, vector<4x16x32xf32> -> vector<4x16x32xf32>
    "tpu.trace_stop"() : () -> ()
    %19 = vector.shape_cast %5 : vector<16x32xi1> to vector<1x16x32xi1>
    %cst_19 = arith.constant -1.000000e+09 : f32
    %20 = vector.shape_cast %19 : vector<1x16x32xi1> to vector<1x16x32xi1>
    %21 = vector.broadcast %20 : vector<1x16x32xi1> to vector<4x16x32xi1>
    %22 = vector.broadcast %cst_19 : f32 to vector<4x16x32xf32>
    %23 = arith.select %21, %22, %18 : vector<4x16x32xi1>, vector<4x16x32xf32>
    %cst_20 = arith.constant dense<0xFF800000> : vector<4x16xf32>
    %24 = vector.multi_reduction <maximumf>, %23, %cst_20 [2] : vector<4x16x32xf32> to vector<4x16xf32>
    %25 = vector.shape_cast %24 : vector<4x16xf32> to vector<4x16x1xf32>
    %26 = vector.broadcast %25 : vector<4x16x1xf32> to vector<4x16x32xf32>
    %27 = arith.subf %23, %26 : vector<4x16x32xf32>
    %28 = math.exp %27 : vector<4x16x32xf32>
    %cst_21 = arith.constant dense<0.000000e+00> : vector<4x16xf32>
    %29 = vector.multi_reduction <add>, %28, %cst_21 [2] : vector<4x16x32xf32> to vector<4x16xf32>
    %30 = vector.shape_cast %29 : vector<4x16xf32> to vector<4x16x1xf32>
    %31 = tpu.reciprocal %30 {approx = true} : vector<4x16x1xf32> -> vector<4x16x1xf32>
    %32 = vector.broadcast %31 : vector<4x16x1xf32> to vector<4x16x32xf32>
    %33 = arith.mulf %28, %32 : vector<4x16x32xf32>
    "tpu.trace_start"() <{level = 10 : i32, message = "hqk,hkd->hqd"}> : () -> ()
    %cst_22 = arith.constant dense<0.000000e+00> : vector<4x16x8xf32>
    %34 = tpu.matmul %33, %17, %cst_22 {dimension_numbers = #tpu.dot_dimension_numbers<[2], [1], [1], [2], [0, 0, 0, 1, 1, 2], [0], [0]>} : vector<4x16x32xf32>, vector<4x32x8xf32>, vector<4x16x8xf32> -> vector<4x16x8xf32>
    "tpu.trace_stop"() : () -> ()
    %35 = tpu.transpose %34, [1, 0, 2] : vector<4x16x8xf32> -> vector<16x4x8xf32>
    %36 = vector.shape_cast %35 : vector<16x4x8xf32> to vector<16x32xf32>
    %c0_23 = arith.constant 0 : index
    %c0_24 = arith.constant 0 : index
    %37 = vector.load %arg9[%c0_23, %c0_24] : memref<32x32xf32, #tpu.memory_space<vmem>>, vector<32x32xf32>
    %cst_25 = arith.constant dense<0.000000e+00> : vector<16x32xf32>
    %38 = tpu.matmul %36, %37, %cst_25 {dimension_numbers = #tpu.dot_dimension_numbers<[1], [0], [0], [1], [0, 0, 1, 1], [], []>} : vector<16x32xf32>, vector<32x32xf32>, vector<16x32xf32> -> vector<16x32xf32>
    %c0_26 = arith.constant 0 : index
    %c0_27 = arith.constant 0 : index
    %39 = vector.load %arg10[%c0_26, %c0_27] : memref<1x32xf32, #tpu.memory_space<vmem>>, vector<1x32xf32>
    %40 = vector.broadcast %39 : vector<1x32xf32> to vector<16x32xf32>
    %41 = arith.addf %38, %40 : vector<16x32xf32>
    %42 = arith.addf %1, %41 : vector<16x32xf32>
    %cst_28 = arith.constant dense<0.000000e+00> : vector<16xf32>
    %43 = vector.multi_reduction <add>, %42, %cst_28 [1] : vector<16x32xf32> to vector<16xf32>
    %44 = vector.shape_cast %43 : vector<16xf32> to vector<16x1xf32>
    %cst_29 = arith.constant 3.200000e+01 : f32
    %45 = vector.broadcast %cst_29 : f32 to vector<16x1xf32>
    %46 = arith.divf %44, %45 : vector<16x1xf32>
    %47 = arith.mulf %42, %42 : vector<16x32xf32>
    %cst_30 = arith.constant dense<0.000000e+00> : vector<16xf32>
    %48 = vector.multi_reduction <add>, %47, %cst_30 [1] : vector<16x32xf32> to vector<16xf32>
    %49 = vector.shape_cast %48 : vector<16xf32> to vector<16x1xf32>
    %cst_31 = arith.constant 3.200000e+01 : f32
    %50 = vector.broadcast %cst_31 : f32 to vector<16x1xf32>
    %51 = arith.divf %49, %50 : vector<16x1xf32>
    %52 = arith.mulf %46, %46 : vector<16x1xf32>
    %53 = arith.subf %51, %52 : vector<16x1xf32>
    %54 = vector.broadcast %46 : vector<16x1xf32> to vector<16x32xf32>
    %55 = arith.subf %42, %54 : vector<16x32xf32>
    %cst_32 = arith.constant 9.99999974E-6 : f32
    %56 = vector.broadcast %cst_32 : f32 to vector<16x1xf32>
    %57 = arith.addf %53, %56 : vector<16x1xf32>
    %58 = math.rsqrt %57 : vector<16x1xf32>
    %59 = vector.broadcast %58 : vector<16x1xf32> to vector<16x32xf32>
    %60 = arith.mulf %55, %59 : vector<16x32xf32>
    %c0_33 = arith.constant 0 : index
    %c0_34 = arith.constant 0 : index
    %61 = vector.load %arg11[%c0_33, %c0_34] : memref<1x32xf32, #tpu.memory_space<vmem>>, vector<1x32xf32>
    %62 = vector.broadcast %61 : vector<1x32xf32> to vector<16x32xf32>
    %63 = arith.mulf %60, %62 : vector<16x32xf32>
    %c0_35 = arith.constant 0 : index
    %c0_36 = arith.constant 0 : index
    %64 = vector.load %arg12[%c0_35, %c0_36] : memref<1x32xf32, #tpu.memory_space<vmem>>, vector<1x32xf32>
    %65 = vector.broadcast %64 : vector<1x32xf32> to vector<16x32xf32>
    %66 = arith.addf %63, %65 : vector<16x32xf32>
    %c0_37 = arith.constant 0 : index
    %c0_38 = arith.constant 0 : index
    %67 = vector.load %arg13[%c0_37, %c0_38] : memref<32x64xf32, #tpu.memory_space<vmem>>, vector<32x64xf32>
    %cst_39 = arith.constant dense<0.000000e+00> : vector<16x64xf32>
    %68 = tpu.matmul %66, %67, %cst_39 {dimension_numbers = #tpu.dot_dimension_numbers<[1], [0], [0], [1], [0, 0, 1, 1], [], []>} : vector<16x32xf32>, vector<32x64xf32>, vector<16x64xf32> -> vector<16x64xf32>
    %c0_40 = arith.constant 0 : index
    %c0_41 = arith.constant 0 : index
    %69 = vector.load %arg14[%c0_40, %c0_41] : memref<1x64xf32, #tpu.memory_space<vmem>>, vector<1x64xf32>
    %70 = vector.broadcast %69 : vector<1x64xf32> to vector<16x64xf32>
    %71 = arith.addf %68, %70 : vector<16x64xf32>
    %cst_42 = arith.constant 0.000000e+00 : f32
    %72 = vector.broadcast %cst_42 : f32 to vector<16x64xf32>
    %73 = arith.maximumf %71, %72 : vector<16x64xf32>
    %c0_43 = arith.constant 0 : index
    %c0_44 = arith.constant 0 : index
    %74 = vector.load %arg15[%c0_43, %c0_44] : memref<64x32xf32, #tpu.memory_space<vmem>>, vector<64x32xf32>
    %cst_45 = arith.constant dense<0.000000e+00> : vector<16x32xf32>
    %75 = tpu.matmul %73, %74, %cst_45 {dimension_numbers = #tpu.dot_dimension_numbers<[1], [0], [0], [1], [0, 0, 1, 1], [], []>} : vector<16x64xf32>, vector<64x32xf32>, vector<16x32xf32> -> vector<16x32xf32>
    %c0_46 = arith.constant 0 : index
    %c0_47 = arith.constant 0 : index
    %76 = vector.load %arg16[%c0_46, %c0_47] : memref<1x32xf32, #tpu.memory_space<vmem>>, vector<1x32xf32>
    %77 = vector.broadcast %76 : vector<1x32xf32> to vector<16x32xf32>
    %78 = arith.addf %75, %77 : vector<16x32xf32>
    %79 = arith.addf %66, %78 : vector<16x32xf32>
    %cst_48 = arith.constant dense<0.000000e+00> : vector<16xf32>
    %80 = vector.multi_reduction <add>, %79, %cst_48 [1] : vector<16x32xf32> to vector<16xf32>
    %81 = vector.shape_cast %80 : vector<16xf32> to vector<16x1xf32>
    %cst_49 = arith.constant 3.200000e+01 : f32
    %82 = vector.broadcast %cst_49 : f32 to vector<16x1xf32>
    %83 = arith.divf %81, %82 : vector<16x1xf32>
    %84 = arith.mulf %79, %79 : vector<16x32xf32>
    %cst_50 = arith.constant dense<0.000000e+00> : vector<16xf32>
    %85 = vector.multi_reduction <add>, %84, %cst_50 [1] : vector<16x32xf32> to vector<16xf32>
    %86 = vector.shape_cast %85 : vector<16xf32> to vector<16x1xf32>
    %cst_51 = arith.constant 3.200000e+01 : f32
    %87 = vector.broadcast %cst_51 : f32 to vector<16x1xf32>
    %88 = arith.divf %86, %87 : vector<16x1xf32>
    %89 = arith.mulf %83, %83 : vector<16x1xf32>
    %90 = arith.subf %88, %89 : vector<16x1xf32>
    %91 = vector.broadcast %83 : vector<16x1xf32> to vector<16x32xf32>
    %92 = arith.subf %79, %91 : vector<16x32xf32>
    %cst_52 = arith.constant 9.99999974E-6 : f32
    %93 = vector.broadcast %cst_52 : f32 to vector<16x1xf32>
    %94 = arith.addf %90, %93 : vector<16x1xf32>
    %95 = math.rsqrt %94 : vector<16x1xf32>
    %96 = vector.broadcast %95 : vector<16x1xf32> to vector<16x32xf32>
    %97 = arith.mulf %92, %96 : vector<16x32xf32>
    %c0_53 = arith.constant 0 : index
    %c0_54 = arith.constant 0 : index
    %98 = vector.load %arg17[%c0_53, %c0_54] : memref<1x32xf32, #tpu.memory_space<vmem>>, vector<1x32xf32>
    %99 = vector.broadcast %98 : vector<1x32xf32> to vector<16x32xf32>
    %100 = arith.mulf %97, %99 : vector<16x32xf32>
    %c0_55 = arith.constant 0 : index
    %c0_56 = arith.constant 0 : index
    %101 = vector.load %arg18[%c0_55, %c0_56] : memref<1x32xf32, #tpu.memory_space<vmem>>, vector<1x32xf32>
    %102 = vector.broadcast %101 : vector<1x32xf32> to vector<16x32xf32>
    %103 = arith.addf %100, %102 : vector<16x32xf32>
    %c0_57 = arith.constant 0 : index
    %c0_58 = arith.constant 0 : index
    %c0_59 = arith.constant 0 : index
    %104 = vector.load %arg19[%c0_57, %c0_58, %c0_59] : memref<1x16x32xf32, #tpu.memory_space<vmem>>, vector<1x16x32xf32>
    %105 = vector.shape_cast %104 : vector<1x16x32xf32> to vector<16x32xf32>
    %106 = vector.shape_cast %103 : vector<16x32xf32> to vector<1x16x32xf32>
    tpu.vector_store %arg19[%c0_57, %c0_58, %c0_59], %106 {strides = array<i32>} : memref<1x16x32xf32, #tpu.memory_space<vmem>>, vector<1x16x32xf32>,
    return
  }
  func.func @transform_0(%arg0: i32, %arg1: i32) -> (i32, i32, i32) {
    %c0_i32 = arith.constant 0 : i32
    %c0_i32_0 = arith.constant 0 : i32
    %c0_i32_1 = arith.constant 0 : i32
    return %arg0, %c0_i32, %c0_i32_0 : i32, i32, i32
  }
  func.func @transform_1(%arg0: i32, %arg1: i32) -> (i32, i32, i32) {
    %c0_i32 = arith.constant 0 : i32
    %c0_i32_0 = arith.constant 0 : i32
    return %arg0, %arg1, %c0_i32 : i32, i32, i32
  }
  func.func @transform_2(%arg0: i32, %arg1: i32) -> (i32, i32, i32, i32) {
    %c0_i32 = arith.constant 0 : i32
    %c0_i32_0 = arith.constant 0 : i32
    %c0_i32_1 = arith.constant 0 : i32
    return %arg0, %c0_i32, %arg1, %c0_i32_0 : i32, i32, i32, i32
  }
  func.func @transform_3(%arg0: i32, %arg1: i32) -> (i32, i32) {
    %c0_i32 = arith.constant 0 : i32
    %c0_i32_0 = arith.constant 0 : i32
    %c0_i32_1 = arith.constant 0 : i32
    return %c0_i32, %c0_i32_0 : i32, i32
  }
  func.func @transform_4(%arg0: i32, %arg1: i32) -> (i32, i32) {
    %c0_i32 = arith.constant 0 : i32
    %c0_i32_0 = arith.constant 0 : i32
    %c0_i32_1 = arith.constant 0 : i32
    return %c0_i32, %c0_i32_0 : i32, i32
  }
  func.func @transform_5(%arg0: i32, %arg1: i32) -> (i32, i32) {
    %c0_i32 = arith.constant 0 : i32
    %c0_i32_0 = arith.constant 0 : i32
    %c0_i32_1 = arith.constant 0 : i32
    return %c0_i32, %c0_i32_0 : i32, i32
  }
  func.func @transform_6(%arg0: i32, %arg1: i32) -> (i32, i32) {
    %c0_i32 = arith.constant 0 : i32
    %c0_i32_0 = arith.constant 0 : i32
    %c0_i32_1 = arith.constant 0 : i32
    return %c0_i32, %c0_i32_0 : i32, i32
  }
  func.func @transform_7(%arg0: i32, %arg1: i32) -> (i32, i32) {
    %c0_i32 = arith.constant 0 : i32
    %c0_i32_0 = arith.constant 0 : i32
    %c0_i32_1 = arith.constant 0 : i32
    return %c0_i32, %c0_i32_0 : i32, i32
  }
  func.func @transform_8(%arg0: i32, %arg1: i32) -> (i32, i32) {
    %c0_i32 = arith.constant 0 : i32
    %c0_i32_0 = arith.constant 0 : i32
    %c0_i32_1 = arith.constant 0 : i32
    return %c0_i32, %c0_i32_0 : i32, i32
  }
  func.func @transform_9(%arg0: i32, %arg1: i32) -> (i32, i32) {
    %c0_i32 = arith.constant 0 : i32
    %c0_i32_0 = arith.constant 0 : i32
    %c0_i32_1 = arith.constant 0 : i32
    return %c0_i32, %c0_i32_0 : i32, i32
  }
  func.func @transform_10(%arg0: i32, %arg1: i32) -> (i32, i32) {
    %c0_i32 = arith.constant 0 : i32
    %c0_i32_0 = arith.constant 0 : i32
    %c0_i32_1 = arith.constant 0 : i32
    return %c0_i32, %c0_i32_0 : i32, i32
  }
  func.func @transform_11(%arg0: i32, %arg1: i32) -> (i32, i32) {
    %c0_i32 = arith.constant 0 : i32
    %c0_i32_0 = arith.constant 0 : i32
    %c0_i32_1 = arith.constant 0 : i32
    return %c0_i32, %c0_i32_0 : i32, i32
  }
  func.func @transform_12(%arg0: i32, %arg1: i32) -> (i32, i32) {
    %c0_i32 = arith.constant 0 : i32
    %c0_i32_0 = arith.constant 0 : i32
    %c0_i32_1 = arith.constant 0 : i32
    return %c0_i32, %c0_i32_0 : i32, i32
  }
  func.func @transform_13(%arg0: i32, %arg1: i32) -> (i32, i32) {
    %c0_i32 = arith.constant 0 : i32
    %c0_i32_0 = arith.constant 0 : i32
    %c0_i32_1 = arith.constant 0 : i32
    return %c0_i32, %c0_i32_0 : i32, i32
  }
  func.func @transform_14(%arg0: i32, %arg1: i32) -> (i32, i32) {
    %c0_i32 = arith.constant 0 : i32
    %c0_i32_0 = arith.constant 0 : i32
    %c0_i32_1 = arith.constant 0 : i32
    return %c0_i32, %c0_i32_0 : i32, i32
  }
  func.func @transform_15(%arg0: i32, %arg1: i32) -> (i32, i32) {
    %c0_i32 = arith.constant 0 : i32
    %c0_i32_0 = arith.constant 0 : i32
    %c0_i32_1 = arith.constant 0 : i32
    return %c0_i32, %c0_i32_0 : i32, i32
  }
  func.func @transform_16(%arg0: i32, %arg1: i32) -> (i32, i32) {
    %c0_i32 = arith.constant 0 : i32
    %c0_i32_0 = arith.constant 0 : i32
    %c0_i32_1 = arith.constant 0 : i32
    return %c0_i32, %c0_i32_0 : i32, i32
  }
  func.func @transform_17(%arg0: i32, %arg1: i32) -> (i32, i32, i32) {
    %c0_i32 = arith.constant 0 : i32
    %c0_i32_0 = arith.constant 0 : i32
    return %arg0, %arg1, %c0_i32 : i32, i32, i32
  }
}

module attributes {stable_mosaic.version = 11 : i64} {
  func.func @encoder_layer_kernel(%arg0: i32, %arg1: i32, %arg2: memref<1x32x32xf32, #tpu.memory_space<vmem>>, %arg3: memref<1x16x32xf32, #tpu.memory_space<vmem>>, %arg4: memref<1x1x16x32xi32, #tpu.memory_space<vmem>>, %arg5: memref<32x32xf32, #tpu.memory_space<vmem>>, %arg6: memref<1x32xf32, #tpu.memory_space<vmem>>, %arg7: memref<32x64xf32, #tpu.memory_space<vmem>>, %arg8: memref<1x64xf32, #tpu.memory_space<vmem>>, %arg9: memref<32x32xf32, #tpu.memory_space<vmem>>, %arg10: memref<1x32xf32, #tpu.memory_space<vmem>>, %arg11: memref<1x32xf32, #tpu.memory_space<vmem>>, %arg12: memref<1x32xf32, #tpu.memory_space<vmem>>, %arg13: memref<32x64xf32, #tpu.memory_space<vmem>>, %arg14: memref<1x64xf32, #tpu.memory_space<vmem>>, %arg15: memref<64x32xf32, #tpu.memory_space<vmem>>, %arg16: memref<1x32xf32, #tpu.memory_space<vmem>>, %arg17: memref<1x32xf32, #tpu.memory_space<vmem>>, %arg18: memref<1x32xf32, #tpu.memory_space<vmem>>, %arg19: memref<1x16x32xf32, #tpu.memory_space<vmem>>, %arg20: memref<4x32x8xf32, #tpu.memory_space<vmem>>, %arg21: memref<4x32x8xf32, #tpu.memory_space<vmem>>) attributes {dimension_semantics = [#tpu.dimension_semantics<parallel>, #tpu.dimension_semantics<arbitrary>], iteration_bounds = array<i64: 2, 2>, scalar_prefetch = 0 : i64, scratch_operands = 2 : i64, tpu.core_type = #tpu.core_type<tc>, window_params = [{transform_indices = @transform_0, window_bounds = array<i64: 1, 32, 32>}, {transform_indices = @transform_1, window_bounds = array<i64: 1, 16, 32>}, {transform_indices = @transform_2, window_bounds = array<i64: 1, 1, 16, 32>}, {pipeline_mode = #tpu.pipeline_mode<synchronous>, transform_indices = @transform_3, window_bounds = array<i64: 32, 32>}, {pipeline_mode = #tpu.pipeline_mode<synchronous>, transform_indices = @transform_4, window_bounds = array<i64: 1, 32>}, {pipeline_mode = #tpu.pipeline_mode<synchronous>, transform_indices = @transform_5, window_bounds = array<i64: 32, 64>}, {pipeline_mode = #tpu.pipeline_mode<synchronous>, transform_indices = @transform_6, window_bounds = array<i64: 1, 64>}, {pipeline_mode = #tpu.pipeline_mode<synchronous>, transform_indices = @transform_7, window_bounds = array<i64: 32, 32>}, {pipeline_mode = #tpu.pipeline_mode<synchronous>, transform_indices = @transform_8, window_bounds = array<i64: 1, 32>}, {pipeline_mode = #tpu.pipeline_mode<synchronous>, transform_indices = @transform_9, window_bounds = array<i64: 1, 32>}, {pipeline_mode = #tpu.pipeline_mode<synchronous>, transform_indices = @transform_10, window_bounds = array<i64: 1, 32>}, {pipeline_mode = #tpu.pipeline_mode<synchronous>, transform_indices = @transform_11, window_bounds = array<i64: 32, 64>}, {pipeline_mode = #tpu.pipeline_mode<synchronous>, transform_indices = @transform_12, window_bounds = array<i64: 1, 64>}, {pipeline_mode = #tpu.pipeline_mode<synchronous>, transform_indices = @transform_13, window_bounds = array<i64: 64, 32>}, {pipeline_mode = #tpu.pipeline_mode<synchronous>, transform_indices = @transform_14, window_bounds = array<i64: 1, 32>}, {pipeline_mode = #tpu.pipeline_mode<synchronous>, transform_indices = @transform_15, window_bounds = array<i64: 1, 32>}, {pipeline_mode = #tpu.pipeline_mode<synchronous>, transform_indices = @transform_16, window_bounds = array<i64: 1, 32>}, {transform_indices = @transform_17, window_bounds = array<i64: 1, 16, 32>}]} {
    %c0 = arith.constant 0 : index
    %c0_0 = arith.constant 0 : index
    %c0_1 = arith.constant 0 : index
    %0 = vector.load %arg3[%c0, %c0_0, %c0_1] : memref<1x16x32xf32, #tpu.memory_space<vmem>>, vector<1x16x32xf32>
    %1 = vector.shape_cast %0 : vector<1x16x32xf32> to vector<16x32xf32>
    %c0_2 = arith.constant 0 : index
    %c0_3 = arith.constant 0 : index
    %c0_4 = arith.constant 0 : index
    %c0_5 = arith.constant 0 : index
    %2 = vector.load %arg4[%c0_2, %c0_3, %c0_4, %c0_5] : memref<1x1x16x32xi32, #tpu.memory_space<vmem>>, vector<1x1x16x32xi32>
    %3 = vector.shape_cast %2 : vector<1x1x16x32xi32> to vector<16x32xi32>
    %c0_i32 = arith.constant 0 : i32
    %4 = vector.broadcast %c0_i32 : i32 to vector<16x32xi32>
    %5 = arith.cmpi eq, %3, %4 : vector<16x32xi32>
    %c0_i32_6 = arith.constant 0 : i32
    %6 = arith.cmpi eq, %arg1, %c0_i32_6 : i32
    %7 = arith.extui %6 : i1 to i32
    %c0_i32_7 = arith.constant 0 : i32
    %8 = arith.cmpi ne, %7, %c0_i32_7 : i32
    scf.if %8 {
      %c0_60 = arith.constant 0 : index
      %c0_61 = arith.constant 0 : index
      %c0_62 = arith.constant 0 : index
      %107 = vector.load %arg2[%c0_60, %c0_61, %c0_62] : memref<1x32x32xf32, #tpu.memory_space<vmem>>, vector<1x32x32xf32>
      %108 = vector.shape_cast %107 : vector<1x32x32xf32> to vector<32x32xf32>
      %c0_63 = arith.constant 0 : index
      %c0_64 = arith.constant 0 : index
      %109 = vector.load %arg7[%c0_63, %c0_64] : memref<32x64xf32, #tpu.memory_space<vmem>>, vector<32x64xf32>
      %cst_65 = arith.constant dense<0.000000e+00> : vector<32x64xf32>
      %110 = tpu.matmul %108, %109, %cst_65 {dimension_numbers = #tpu.dot_dimension_numbers<[1], [0], [0], [1], [0, 0, 1, 1], [], []>} : vector<32x32xf32>, vector<32x64xf32>, vector<32x64xf32> -> vector<32x64xf32>
      %c0_66 = arith.constant 0 : index
      %c0_67 = arith.constant 0 : index
      %111 = vector.load %arg8[%c0_66, %c0_67] : memref<1x64xf32, #tpu.memory_space<vmem>>, vector<1x64xf32>
      %112 = vector.broadcast %111 : vector<1x64xf32> to vector<32x64xf32>
      %113 = arith.addf %110, %112 : vector<32x64xf32>
      %114 = vector.extract_strided_slice %113 {offsets = [0, 0], sizes = [32, 32], strides = [1, 1]} : vector<32x64xf32> to vector<32x32xf32>
      %115 = vector.shape_cast %114 : vector<32x32xf32> to vector<32x4x8xf32>
      %116 = vector.extract_strided_slice %113 {offsets = [0, 32], sizes = [32, 32], strides = [1, 1]} : vector<32x64xf32> to vector<32x32xf32>
      %117 = vector.shape_cast %116 : vector<32x32xf32> to vector<32x4x8xf32>
      %118 = tpu.transpose %115, [1, 0, 2] : vector<32x4x8xf32> -> vector<4x32x8xf32>
      %c0_68 = arith.constant 0 : index
      %c0_69 = arith.constant 0 : index
      %c0_70 = arith.constant 0 : index
      %119 = vector.load %arg20[%c0_68, %c0_69, %c0_70] : memref<4x32x8xf32, #tpu.memory_space<vmem>>, vector<4x32x8xf32>
      tpu.vector_store %arg20[%c0_68, %c0_69, %c0_70], %118 {strides = array<i32>} : memref<4x32x8xf32, #tpu.memory_space<vmem>>, vector<4x32x8xf32>,
      %120 = tpu.transpose %117, [1, 0, 2] : vector<32x4x8xf32> -> vector<4x32x8xf32>
      %c0_71 = arith.constant 0 : index
      %c0_72 = arith.constant 0 : index
      %c0_73 = arith.constant 0 : index
      %121 = vector.load %arg21[%c0_71, %c0_72, %c0_73] : memref<4x32x8xf32, #tpu.memory_space<vmem>>, vector<4x32x8xf32>
      tpu.vector_store %arg21[%c0_71, %c0_72, %c0_73], %120 {strides = array<i32>} : memref<4x32x8xf32, #tpu.memory_space<vmem>>, vector<4x32x8xf32>,
    } else {
    }
    %c0_8 = arith.constant 0 : index
    %c0_9 = arith.constant 0 : index
    %9 = vector.load %arg5[%c0_8, %c0_9] : memref<32x32xf32, #tpu.memory_space<vmem>>, vector<32x32xf32>
    %cst = arith.constant dense<0.000000e+00> : vector<16x32xf32>
    %10 = tpu.matmul %1, %9, %cst {dimension_numbers = #tpu.dot_dimension_numbers<[1], [0], [0], [1], [0, 0, 1, 1], [], []>} : vector<16x32xf32>, vector<32x32xf32>, vector<16x32xf32> -> vector<16x32xf32>
    %c0_10 = arith.constant 0 : index
    %c0_11 = arith.constant 0 : index
    %11 = vector.load %arg6[%c0_10, %c0_11] : memref<1x32xf32, #tpu.memory_space<vmem>>, vector<1x32xf32>
    %12 = vector.broadcast %11 : vector<1x32xf32> to vector<16x32xf32>
    %13 = arith.addf %10, %12 : vector<16x32xf32>
    %14 = vector.shape_cast %13 : vector<16x32xf32> to vector<16x4x8xf32>
    %15 = tpu.transpose %14, [1, 0, 2] : vector<16x4x8xf32> -> vector<4x16x8xf32>
    %c0_12 = arith.constant 0 : index
    %c0_13 = arith.constant 0 : index
    %c0_14 = arith.constant 0 : index
    %16 = vector.load %arg20[%c0_12, %c0_13, %c0_14] : memref<4x32x8xf32, #tpu.memory_space<vmem>>, vector<4x32x8xf32>
    %c0_15 = arith.constant 0 : index
    %c0_16 = arith.constant 0 : index
    %c0_17 = arith.constant 0 : index
    %17 = vector.load %arg21[%c0_15, %c0_16, %c0_17] : memref<4x32x8xf32, #tpu.memory_space<vmem>>, vector<4x32x8xf32>
    "tpu.trace_start"() <{level = 10 : i32, message = "hqd,hkd->hqk"}> : () -> ()
    %cst_18 = arith.constant dense<0.000000e+00> : vector<4x16x32xf32>
    %18 = tpu.matmul %15, %16, %cst_18 {dimension_numbers = #tpu.dot_dimension_numbers<[2], [2], [1], [1], [0, 0, 0, 1, 1, 1], [0], [0]>} : vector<4x16x8xf32>, vector<4x32x8xf32>, vector<4x16x32xf32> -> vector<4x16x32xf32>
    "tpu.trace_stop"() : () -> ()
    %19 = vector.shape_cast %5 : vector<16x32xi1> to vector<1x16x32xi1>
    %cst_19 = arith.constant -1.000000e+09 : f32
    %20 = vector.shape_cast %19 : vector<1x16x32xi1> to vector<1x16x32xi1>
    %21 = vector.broadcast %20 : vector<1x16x32xi1> to vector<4x16x32xi1>
    %22 = vector.broadcast %cst_19 : f32 to vector<4x16x32xf32>
    %23 = arith.select %21, %22, %18 : vector<4x16x32xi1>, vector<4x16x32xf32>
    %cst_20 = arith.constant dense<0xFF800000> : vector<4x16xf32>
    %24 = vector.multi_reduction <maximumf>, %23, %cst_20 [2] : vector<4x16x32xf32> to vector<4x16xf32>
    %25 = vector.shape_cast %24 : vector<4x16xf32> to vector<4x16x1xf32>
    %26 = vector.broadcast %25 : vector<4x16x1xf32> to vector<4x16x32xf32>
    %27 = arith.subf %23, %26 : vector<4x16x32xf32>
    %28 = math.exp %27 : vector<4x16x32xf32>
    %cst_21 = arith.constant dense<0.000000e+00> : vector<4x16xf32>
    %29 = vector.multi_reduction <add>, %28, %cst_21 [2] : vector<4x16x32xf32> to vector<4x16xf32>
    %30 = vector.shape_cast %29 : vector<4x16xf32> to vector<4x16x1xf32>
    %31 = tpu.reciprocal %30 {approx = true} : vector<4x16x1xf32> -> vector<4x16x1xf32>
    %32 = vector.broadcast %31 : vector<4x16x1xf32> to vector<4x16x32xf32>
    %33 = arith.mulf %28, %32 : vector<4x16x32xf32>
    "tpu.trace_start"() <{level = 10 : i32, message = "hqk,hkd->hqd"}> : () -> ()
    %cst_22 = arith.constant dense<0.000000e+00> : vector<4x16x8xf32>
    %34 = tpu.matmul %33, %17, %cst_22 {dimension_numbers = #tpu.dot_dimension_numbers<[2], [1], [1], [2], [0, 0, 0, 1, 1, 2], [0], [0]>} : vector<4x16x32xf32>, vector<4x32x8xf32>, vector<4x16x8xf32> -> vector<4x16x8xf32>
    "tpu.trace_stop"() : () -> ()
    %35 = tpu.transpose %34, [1, 0, 2] : vector<4x16x8xf32> -> vector<16x4x8xf32>
    %36 = vector.shape_cast %35 : vector<16x4x8xf32> to vector<16x32xf32>
    %c0_23 = arith.constant 0 : index
    %c0_24 = arith.constant 0 : index
    %37 = vector.load %arg9[%c0_23, %c0_24] : memref<32x32xf32, #tpu.memory_space<vmem>>, vector<32x32xf32>
    %cst_25 = arith.constant dense<0.000000e+00> : vector<16x32xf32>
    %38 = tpu.matmul %36, %37, %cst_25 {dimension_numbers = #tpu.dot_dimension_numbers<[1], [0], [0], [1], [0, 0, 1, 1], [], []>} : vector<16x32xf32>, vector<32x32xf32>, vector<16x32xf32> -> vector<16x32xf32>
    %c0_26 = arith.constant 0 : index
    %c0_27 = arith.constant 0 : index
    %39 = vector.load %arg10[%c0_26, %c0_27] : memref<1x32xf32, #tpu.memory_space<vmem>>, vector<1x32xf32>
    %40 = vector.broadcast %39 : vector<1x32xf32> to vector<16x32xf32>
    %41 = arith.addf %38, %40 : vector<16x32xf32>
    %42 = arith.addf %1, %41 : vector<16x32xf32>
    %cst_28 = arith.constant dense<0.000000e+00> : vector<16xf32>
    %43 = vector.multi_reduction <add>, %42, %cst_28 [1] : vector<16x32xf32> to vector<16xf32>
    %44 = vector.shape_cast %43 : vector<16xf32> to vector<16x1xf32>
    %cst_29 = arith.constant 3.200000e+01 : f32
    %45 = vector.broadcast %cst_29 : f32 to vector<16x1xf32>
    %46 = arith.divf %44, %45 : vector<16x1xf32>
    %47 = arith.mulf %42, %42 : vector<16x32xf32>
    %cst_30 = arith.constant dense<0.000000e+00> : vector<16xf32>
    %48 = vector.multi_reduction <add>, %47, %cst_30 [1] : vector<16x32xf32> to vector<16xf32>
    %49 = vector.shape_cast %48 : vector<16xf32> to vector<16x1xf32>
    %cst_31 = arith.constant 3.200000e+01 : f32
    %50 = vector.broadcast %cst_31 : f32 to vector<16x1xf32>
    %51 = arith.divf %49, %50 : vector<16x1xf32>
    %52 = arith.mulf %46, %46 : vector<16x1xf32>
    %53 = arith.subf %51, %52 : vector<16x1xf32>
    %54 = vector.broadcast %46 : vector<16x1xf32> to vector<16x32xf32>
    %55 = arith.subf %42, %54 : vector<16x32xf32>
    %cst_32 = arith.constant 9.99999974E-6 : f32
    %56 = vector.broadcast %cst_32 : f32 to vector<16x1xf32>
    %57 = arith.addf %53, %56 : vector<16x1xf32>
    %58 = math.rsqrt %57 : vector<16x1xf32>
    %59 = vector.broadcast %58 : vector<16x1xf32> to vector<16x32xf32>
    %60 = arith.mulf %55, %59 : vector<16x32xf32>
    %c0_33 = arith.constant 0 : index
    %c0_34 = arith.constant 0 : index
    %61 = vector.load %arg11[%c0_33, %c0_34] : memref<1x32xf32, #tpu.memory_space<vmem>>, vector<1x32xf32>
    %62 = vector.broadcast %61 : vector<1x32xf32> to vector<16x32xf32>
    %63 = arith.mulf %60, %62 : vector<16x32xf32>
    %c0_35 = arith.constant 0 : index
    %c0_36 = arith.constant 0 : index
    %64 = vector.load %arg12[%c0_35, %c0_36] : memref<1x32xf32, #tpu.memory_space<vmem>>, vector<1x32xf32>
    %65 = vector.broadcast %64 : vector<1x32xf32> to vector<16x32xf32>
    %66 = arith.addf %63, %65 : vector<16x32xf32>
    %c0_37 = arith.constant 0 : index
    %c0_38 = arith.constant 0 : index
    %67 = vector.load %arg13[%c0_37, %c0_38] : memref<32x64xf32, #tpu.memory_space<vmem>>, vector<32x64xf32>
    %cst_39 = arith.constant dense<0.000000e+00> : vector<16x64xf32>
    %68 = tpu.matmul %66, %67, %cst_39 {dimension_numbers = #tpu.dot_dimension_numbers<[1], [0], [0], [1], [0, 0, 1, 1], [], []>} : vector<16x32xf32>, vector<32x64xf32>, vector<16x64xf32> -> vector<16x64xf32>
    %c0_40 = arith.constant 0 : index
    %c0_41 = arith.constant 0 : index
    %69 = vector.load %arg14[%c0_40, %c0_41] : memref<1x64xf32, #tpu.memory_space<vmem>>, vector<1x64xf32>
    %70 = vector.broadcast %69 : vector<1x64xf32> to vector<16x64xf32>
    %71 = arith.addf %68, %70 : vector<16x64xf32>
    %cst_42 = arith.constant 0.000000e+00 : f32
    %72 = vector.broadcast %cst_42 : f32 to vector<16x64xf32>
    %73 = arith.maximumf %71, %72 : vector<16x64xf32>
    %c0_43 = arith.constant 0 : index
    %c0_44 = arith.constant 0 : index
    %74 = vector.load %arg15[%c0_43, %c0_44] : memref<64x32xf32, #tpu.memory_space<vmem>>, vector<64x32xf32>
    %cst_45 = arith.constant dense<0.000000e+00> : vector<16x32xf32>
    %75 = tpu.matmul %73, %74, %cst_45 {dimension_numbers = #tpu.dot_dimension_numbers<[1], [0], [0], [1], [0, 0, 1, 1], [], []>} : vector<16x64xf32>, vector<64x32xf32>, vector<16x32xf32> -> vector<16x32xf32>
    %c0_46 = arith.constant 0 : index
    %c0_47 = arith.constant 0 : index
    %76 = vector.load %arg16[%c0_46, %c0_47] : memref<1x32xf32, #tpu.memory_space<vmem>>, vector<1x32xf32>
    %77 = vector.broadcast %76 : vector<1x32xf32> to vector<16x32xf32>
    %78 = arith.addf %75, %77 : vector<16x32xf32>
    %79 = arith.addf %66, %78 : vector<16x32xf32>
    %cst_48 = arith.constant dense<0.000000e+00> : vector<16xf32>
    %80 = vector.multi_reduction <add>, %79, %cst_48 [1] : vector<16x32xf32> to vector<16xf32>
    %81 = vector.shape_cast %80 : vector<16xf32> to vector<16x1xf32>
    %cst_49 = arith.constant 3.200000e+01 : f32
    %82 = vector.broadcast %cst_49 : f32 to vector<16x1xf32>
    %83 = arith.divf %81, %82 : vector<16x1xf32>
    %84 = arith.mulf %79, %79 : vector<16x32xf32>
    %cst_50 = arith.constant dense<0.000000e+00> : vector<16xf32>
    %85 = vector.multi_reduction <add>, %84, %cst_50 [1] : vector<16x32xf32> to vector<16xf32>
    %86 = vector.shape_cast %85 : vector<16xf32> to vector<16x1xf32>
    %cst_51 = arith.constant 3.200000e+01 : f32
    %87 = vector.broadcast %cst_51 : f32 to vector<16x1xf32>
    %88 = arith.divf %86, %87 : vector<16x1xf32>
    %89 = arith.mulf %83, %83 : vector<16x1xf32>
    %90 = arith.subf %88, %89 : vector<16x1xf32>
    %91 = vector.broadcast %83 : vector<16x1xf32> to vector<16x32xf32>
    %92 = arith.subf %79, %91 : vector<16x32xf32>
    %cst_52 = arith.constant 9.99999974E-6 : f32
    %93 = vector.broadcast %cst_52 : f32 to vector<16x1xf32>
    %94 = arith.addf %90, %93 : vector<16x1xf32>
    %95 = math.rsqrt %94 : vector<16x1xf32>
    %96 = vector.broadcast %95 : vector<16x1xf32> to vector<16x32xf32>
    %97 = arith.mulf %92, %96 : vector<16x32xf32>
    %c0_53 = arith.constant 0 : index
    %c0_54 = arith.constant 0 : index
    %98 = vector.load %arg17[%c0_53, %c0_54] : memref<1x32xf32, #tpu.memory_space<vmem>>, vector<1x32xf32>
    %99 = vector.broadcast %98 : vector<1x32xf32> to vector<16x32xf32>
    %100 = arith.mulf %97, %99 : vector<16x32xf32>
    %c0_55 = arith.constant 0 : index
    %c0_56 = arith.constant 0 : index
    %101 = vector.load %arg18[%c0_55, %c0_56] : memref<1x32xf32, #tpu.memory_space<vmem>>, vector<1x32xf32>
    %102 = vector.broadcast %101 : vector<1x32xf32> to vector<16x32xf32>
    %103 = arith.addf %100, %102 : vector<16x32xf32>
    %c0_57 = arith.constant 0 : index
    %c0_58 = arith.constant 0 : index
    %c0_59 = arith.constant 0 : index
    %104 = vector.load %arg19[%c0_57, %c0_58, %c0_59] : memref<1x16x32xf32, #tpu.memory_space<vmem>>, vector<1x16x32xf32>
    %105 = vector.shape_cast %104 : vector<1x16x32xf32> to vector<16x32xf32>
    %106 = vector.shape_cast %103 : vector<16x32xf32> to vector<1x16x32xf32>
    tpu.vector_store %arg19[%c0_57, %c0_58, %c0_59], %106 {strides = array<i32>} : memref<1x16x32xf32, #tpu.memory_space<vmem>>, vector<1x16x32xf32>,
    return
  }
  func.func @transform_0(%arg0: i32, %arg1: i32) -> (i32, i32, i32) {
    %c0_i32 = arith.constant 0 : i32
    %c0_i32_0 = arith.constant 0 : i32
    %c0_i32_1 = arith.constant 0 : i32
    return %arg0, %c0_i32, %c0_i32_0 : i32, i32, i32
  }
  func.func @transform_1(%arg0: i32, %arg1: i32) -> (i32, i32, i32) {
    %c0_i32 = arith.constant 0 : i32
    %c0_i32_0 = arith.constant 0 : i32
    return %arg0, %arg1, %c0_i32 : i32, i32, i32
  }
  func.func @transform_2(%arg0: i32, %arg1: i32) -> (i32, i32, i32, i32) {
    %c0_i32 = arith.constant 0 : i32
    %c0_i32_0 = arith.constant 0 : i32
    %c0_i32_1 = arith.constant 0 : i32
    return %arg0, %c0_i32, %arg1, %c0_i32_0 : i32, i32, i32, i32
  }
  func.func @transform_3(%arg0: i32, %arg1: i32) -> (i32, i32) {
    %c0_i32 = arith.constant 0 : i32
    %c0_i32_0 = arith.constant 0 : i32
    %c0_i32_1 = arith.constant 0 : i32
    return %c0_i32, %c0_i32_0 : i32, i32
  }
  func.func @transform_4(%arg0: i32, %arg1: i32) -> (i32, i32) {
    %c0_i32 = arith.constant 0 : i32
    %c0_i32_0 = arith.constant 0 : i32
    %c0_i32_1 = arith.constant 0 : i32
    return %c0_i32, %c0_i32_0 : i32, i32
  }
  func.func @transform_5(%arg0: i32, %arg1: i32) -> (i32, i32) {
    %c0_i32 = arith.constant 0 : i32
    %c0_i32_0 = arith.constant 0 : i32
    %c0_i32_1 = arith.constant 0 : i32
    return %c0_i32, %c0_i32_0 : i32, i32
  }
  func.func @transform_6(%arg0: i32, %arg1: i32) -> (i32, i32) {
    %c0_i32 = arith.constant 0 : i32
    %c0_i32_0 = arith.constant 0 : i32
    %c0_i32_1 = arith.constant 0 : i32
    return %c0_i32, %c0_i32_0 : i32, i32
  }
  func.func @transform_7(%arg0: i32, %arg1: i32) -> (i32, i32) {
    %c0_i32 = arith.constant 0 : i32
    %c0_i32_0 = arith.constant 0 : i32
    %c0_i32_1 = arith.constant 0 : i32
    return %c0_i32, %c0_i32_0 : i32, i32
  }
  func.func @transform_8(%arg0: i32, %arg1: i32) -> (i32, i32) {
    %c0_i32 = arith.constant 0 : i32
    %c0_i32_0 = arith.constant 0 : i32
    %c0_i32_1 = arith.constant 0 : i32
    return %c0_i32, %c0_i32_0 : i32, i32
  }
  func.func @transform_9(%arg0: i32, %arg1: i32) -> (i32, i32) {
    %c0_i32 = arith.constant 0 : i32
    %c0_i32_0 = arith.constant 0 : i32
    %c0_i32_1 = arith.constant 0 : i32
    return %c0_i32, %c0_i32_0 : i32, i32
  }
  func.func @transform_10(%arg0: i32, %arg1: i32) -> (i32, i32) {
    %c0_i32 = arith.constant 0 : i32
    %c0_i32_0 = arith.constant 0 : i32
    %c0_i32_1 = arith.constant 0 : i32
    return %c0_i32, %c0_i32_0 : i32, i32
  }
  func.func @transform_11(%arg0: i32, %arg1: i32) -> (i32, i32) {
    %c0_i32 = arith.constant 0 : i32
    %c0_i32_0 = arith.constant 0 : i32
    %c0_i32_1 = arith.constant 0 : i32
    return %c0_i32, %c0_i32_0 : i32, i32
  }
  func.func @transform_12(%arg0: i32, %arg1: i32) -> (i32, i32) {
    %c0_i32 = arith.constant 0 : i32
    %c0_i32_0 = arith.constant 0 : i32
    %c0_i32_1 = arith.constant 0 : i32
    return %c0_i32, %c0_i32_0 : i32, i32
  }
  func.func @transform_13(%arg0: i32, %arg1: i32) -> (i32, i32) {
    %c0_i32 = arith.constant 0 : i32
    %c0_i32_0 = arith.constant 0 : i32
    %c0_i32_1 = arith.constant 0 : i32
    return %c0_i32, %c0_i32_0 : i32, i32
  }
  func.func @transform_14(%arg0: i32, %arg1: i32) -> (i32, i32) {
    %c0_i32 = arith.constant 0 : i32
    %c0_i32_0 = arith.constant 0 : i32
    %c0_i32_1 = arith.constant 0 : i32
    return %c0_i32, %c0_i32_0 : i32, i32
  }
  func.func @transform_15(%arg0: i32, %arg1: i32) -> (i32, i32) {
    %c0_i32 = arith.constant 0 : i32
    %c0_i32_0 = arith.constant 0 : i32
    %c0_i32_1 = arith.constant 0 : i32
    return %c0_i32, %c0_i32_0 : i32, i32
  }
  func.func @transform_16(%arg0: i32, %arg1: i32) -> (i32, i32) {
    %c0_i32 = arith.constant 0 : i32
    %c0_i32_0 = arith.constant 0 : i32
    %c0_i32_1 = arith.constant 0 : i32
    return %c0_i32, %c0_i32_0 : i32, i32
  }
  func.func @transform_17(%arg0: i32, %arg1: i32) -> (i32, i32, i32) {
    %c0_i32 = arith.constant 0 : i32
    %c0_i32_0 = arith.constant 0 : i32
    return %arg0, %arg1, %c0_i32 : i32, i32, i32
  }
}

</mosaic_0001>

<llo_original>
// kernel: tpu_custom_call.1
$region0: #{tpu_custom_call.1}
  #allocation0 [shape = 'u32[]', space=smem, size = 0x4, offset = 0x4, fixed_abs, tag = 'smem constant byte address 0x4 - core index']
  #allocation1 [shape = 'u32[144,128]{1,0:T(1,128)}', space=vmem, size = 0x12000, scoped, tag = 'internal scratch']
  #allocation2 [shape = 'f32[4,32,8]{2,1,0:T(8,128)}', space=vmem, size = 0x10000, scoped, tag = 'scratch operand']
  #allocation3 [shape = 'f32[4,32,8]{2,1,0:T(8,128)}', space=vmem, size = 0x10000, scoped, tag = 'scratch operand']
  %s0 = inlined_call_operand.vmem [shape: f32[2,32,32], index: 0, kind: input, shape index: {}]
  %s1 = inlined_call_operand.hbm [shape: f32[2,32,32], index: 1, kind: input, shape index: {}]
  %s2 = inlined_call_operand.hbm [shape: s32[2,1,32,32], index: 2, kind: input, shape index: {}]
  %s3 = inlined_call_operand.vmem [shape: f32[32,32], index: 3, kind: input, shape index: {}]
  %s4 = inlined_call_operand.vmem [shape: f32[1,32], index: 4, kind: input, shape index: {}]
  %s5 = inlined_call_operand.hbm [shape: f32[32,64], index: 5, kind: input, shape index: {}]
  %s6 = inlined_call_operand.vmem [shape: f32[1,64], index: 6, kind: input, shape index: {}]
  %s7 = inlined_call_operand.hbm [shape: f32[32,32], index: 7, kind: input, shape index: {}]
  %s8 = inlined_call_operand.hbm [shape: f32[1,32], index: 8, kind: input, shape index: {}]
  %s9 = inlined_call_operand.hbm [shape: f32[1,32], index: 9, kind: input, shape index: {}]
  %s10 = inlined_call_operand.vmem [shape: f32[1,32], index: 10, kind: input, shape index: {}]
  %s11 = inlined_call_operand.vmem [shape: f32[32,64], index: 11, kind: input, shape index: {}]
  %s12 = inlined_call_operand.vmem [shape: f32[1,64], index: 12, kind: input, shape index: {}]
  %s13 = inlined_call_operand.vmem [shape: f32[64,32], index: 13, kind: input, shape index: {}]
  %s14 = inlined_call_operand.vmem [shape: f32[1,32], index: 14, kind: input, shape index: {}]
  %s15 = inlined_call_operand.vmem [shape: f32[1,32], index: 15, kind: input, shape index: {}]
  %s16 = inlined_call_operand.vmem [shape: f32[1,32], index: 16, kind: input, shape index: {}]
  %s17 = inlined_call_operand.hbm [shape: f32[2,32,32], index: 17, kind: output, shape index: {}]
  %s18 = sld [smem:[#allocation0]]
  $region129: #{tpu_custom_call.1} parent=0
    _
  %s20 = ssub.s32 1, %s18
  %s21 = scalar_select 0, %s20, %s18
  $region1: #{tpu_custom_call.1} parent=0
    #allocation4 [shape = 'u8[16384]{0}', space=vmem, size = 0x4000, scoped, tag = 'input window, operand 1']
    #allocation5 [shape = 's32[2]{0}', space=sflag, size = 0x8, scoped, tag = 'scoped memory for tpu_custom_call.1']
    #allocation6 [shape = 's32[2]{0}', space=sflag, size = 0x8, scoped, tag = 'scoped memory for tpu_custom_call.1']
    #allocation7 [shape = 'u8[16384]{0}', space=vmem, size = 0x4000, scoped, tag = 'input window, operand 2']
    #allocation8 [shape = 's32[2]{0}', space=sflag, size = 0x8, scoped, tag = 'scoped memory for tpu_custom_call.1']
    #allocation9 [shape = 'u8[16384]{0}', space=vmem, size = 0x4000, scoped, tag = 'input window, operand 5, single buffered']
    #allocation10 [shape = 'u8[16384]{0}', space=vmem, size = 0x4000, scoped, tag = 'input window, operand 7, single buffered']
    #allocation11 [shape = 's32[1]{0}', space=sflag, size = 0x4, scoped, tag = 'scoped memory for tpu_custom_call.1']
    #allocation12 [shape = 'u8[512]{0}', space=vmem, size = 0x400, scoped, tag = 'input window, operand 8, single buffered']
    #allocation13 [shape = 'u8[512]{0}', space=vmem, size = 0x400, scoped, tag = 'input window, operand 9, single buffered']
    #allocation14 [shape = 's32[1]{0}', space=sflag, size = 0x4, scoped, tag = 'scoped memory for tpu_custom_call.1']
    #allocation15 [shape = 'u8[16384]{0}', space=vmem, size = 0x4000, scoped, tag = 'output window, operand 0']
    %22 = vsyncpa [#allocation5], 0
    %s23 = scalar_lea.sflag [#allocation5], 1
    %24 = vsyncpa %s23, 0
    %25 = vsyncpa [#allocation8], 0
    %s26 = scalar_lea.sflag [#allocation8], 1
    %27 = vsyncpa %s26, 0
    %28 = vsyncpa [#allocation11], 0
    %29 = vsyncpa [#allocation14], 0
    %30 = vsyncpa [#allocation6], 0
    %s31 = scalar_lea.sflag [#allocation6], 1
    %32 = vsyncpa %s31, 0
    loop: start=0, step=1, limit=6
    $region2: #{tpu_custom_call.1} parent=1 // loop_pre_header
      _
    $region3: #{tpu_custom_call.1} parent=1 // loop_header
      %s34 = sphi 0, %s38
      %p35 = scmp.ge.s32.totalorder %s34, 6
      %s41 = sphi 0, %s53
      %s42 = sphi 0, %s49
      %s43 = sphi 0, %s41
      %s44 = sphi 0, %s42
      %s45 = sphi 0, %s43
      %s46 = sphi 0, %s44
      %s56 = sphi 0, %s58
      %s59 = sphi 0, %s56
      %s60 = sphi 0, %s59
      %s76 = sphi 0, %s60
      %s84 = sphi 0, %s86
      %s87 = sphi 0, %s84
      %s88 = sphi 0, %s87
      %s104 = sphi 0, %s88
      %s112 = sphi 0, %s114
      %s115 = sphi 0, %s112
      %s116 = sphi 0, %s115
      %s132 = sphi 0, %s116
      %s136 = sphi 0, %s136
      %s138 = sphi 0, %s136
      %s139 = sphi 0, %s138
      %s153 = sphi 0, %s139
      %s157 = sphi 0, %s157
      %s159 = sphi 0, %s157
      %s160 = sphi 0, %s159
      %s174 = sphi 0, %s160
      %s178 = sphi 0, %s178
      %s180 = sphi 0, %s178
      %s181 = sphi 0, %s180
      %s195 = sphi 0, %s181
      %s199 = sphi 0, %s199
      %s201 = sphi 0, %s199
      %s202 = sphi 0, %s201
      %s216 = sphi 0, %s202
      %s220 = sphi 0, %s220
      %s222 = sphi 0, %s220
      %s223 = sphi 0, %s222
      %s237 = sphi 0, %s223
      %s241 = sphi 0, %s241
      %s243 = sphi 0, %s241
      %s244 = sphi 0, %s243
      %s258 = sphi 0, %s244
      %s262 = sphi 0, %s262
      %s264 = sphi 0, %s262
      %s265 = sphi 0, %s264
      %s279 = sphi 0, %s265
      %s283 = sphi 0, %s283
      %s285 = sphi 0, %s283
      %s286 = sphi 0, %s285
      %s300 = sphi 0, %s286
      %s304 = sphi 0, %s304
      %s306 = sphi 0, %s304
      %s307 = sphi 0, %s306
      %s321 = sphi 0, %s307
      %s325 = sphi 0, %s325
      %s327 = sphi 0, %s325
      %s328 = sphi 0, %s327
      %s342 = sphi 0, %s328
      %s346 = sphi 0, %s346
      %s348 = sphi 0, %s346
      %s349 = sphi 0, %s348
      %s363 = sphi 0, %s349
      %s367 = sphi 0, %s367
      %s369 = sphi 0, %s367
      %s370 = sphi 0, %s369
      %s384 = sphi 0, %s370
      %s388 = sphi 0, %s388
      %s390 = sphi 0, %s388
      %s391 = sphi 0, %s390
      %s405 = sphi 0, %s391
      %s409 = sphi 0, %s409
      %s411 = sphi 0, %s409
      %s412 = sphi 0, %s411
      %s426 = sphi 0, %s412
      %s434 = sphi 0, %s436
      %s437 = sphi 0, %s434
      %s438 = sphi 0, %s437
      %s454 = sphi 0, %s438
    $region4: #{tpu_custom_call.1} parent=1 // loop_header_branch
      %37 = sbr.rel (%p35) target = $region8
    $region5: #{tpu_custom_call.1} parent=1 // loop_body
      %s39 = ssub.s32 %s34, 1
      %s40 = ssub.s32 %s34, 2
      %s47 = sadd.s32 1, %s42
      %p48 = scmp.ge.s32.totalorder %s47, 2
      %s49 = scalar_select %p48, 0, %s47
      %s50 = sadd.s32 1, %s41
      %s51 = scalar_select %p48, %s50, %s41
      %p52 = scmp.ge.s32.totalorder %s51, 2
      %s53 = scalar_select %p52, 0, %s51
      %s54 = ssub.s32 %s41, %s53
      %p55 = scmp.eq.s32.totalorder %s54, 0
      %s57 = sadd.s32 %s56, 1
      %s58 = scalar_select %p55, %s56, %s57
      %p61 = pneg %p55
      %p62 = scmp.eq.s32.totalorder %s34, 3
      %p63 = por %p61, %p62
      %p64 = scmp.ne.s32.totalorder %s56, %s59
      %p65 = scmp.eq.s32.totalorder %s34, 0
      %p66 = por %p64, %p65
      %p67 = scmp.ne.s32.totalorder %s56, %s59
      %p68 = scmp.eq.s32.totalorder %s39, 3
      %p69 = por %p67, %p68
      %p70 = scmp.ne.s32.totalorder %s59, %s60
      %p71 = scmp.eq.s32.totalorder %s39, 0
      %p72 = por %p70, %p71
      %p73 = scmp.ne.s32.totalorder %s59, %s60
      %p74 = scmp.eq.s32.totalorder %s40, 3
      %p75 = por %p73, %p74
      %p77 = scmp.ne.s32.totalorder %s60, %s76
      %p78 = scmp.eq.s32.totalorder %s40, 0
      %p79 = por %p77, %p78
      %s80 = ssub.s32 %s41, %s53
      %s81 = ssub.s32 %s42, %s49
      %s82 = sor.u32 %s80, %s81
      %p83 = scmp.eq.s32.totalorder %s82, 0
      %s85 = sadd.s32 %s84, 1
      %s86 = scalar_select %p83, %s84, %s85
      %p89 = pneg %p83
      %p90 = scmp.eq.s32.totalorder %s34, 3
      %p91 = por %p89, %p90
      %p92 = scmp.ne.s32.totalorder %s84, %s87
      %p93 = scmp.eq.s32.totalorder %s34, 0
      %p94 = por %p92, %p93
      %p95 = scmp.ne.s32.totalorder %s84, %s87
      %p96 = scmp.eq.s32.totalorder %s39, 3
      %p97 = por %p95, %p96
      %p98 = scmp.ne.s32.totalorder %s87, %s88
      %p99 = scmp.eq.s32.totalorder %s39, 0
      %p100 = por %p98, %p99
      %p101 = scmp.ne.s32.totalorder %s87, %s88
      %p102 = scmp.eq.s32.totalorder %s40, 3
      %p103 = por %p101, %p102
      %p105 = scmp.ne.s32.totalorder %s88, %s104
      %p106 = scmp.eq.s32.totalorder %s40, 0
      %p107 = por %p105, %p106
      %s108 = ssub.s32 %s41, %s53
      %s109 = ssub.s32 %s42, %s49
      %s110 = sor.u32 %s108, %s109
      %p111 = scmp.eq.s32.totalorder %s110, 0
      %s113 = sadd.s32 %s112, 1
      %s114 = scalar_select %p111, %s112, %s113
      %p117 = pneg %p111
      %p118 = scmp.eq.s32.totalorder %s34, 3
      %p119 = por %p117, %p118
      %p120 = scmp.ne.s32.totalorder %s112, %s115
      %p121 = scmp.eq.s32.totalorder %s34, 0
      %p122 = por %p120, %p121
      %p123 = scmp.ne.s32.totalorder %s112, %s115
      %p124 = scmp.eq.s32.totalorder %s39, 3
      %p125 = por %p123, %p124
      %p126 = scmp.ne.s32.totalorder %s115, %s116
      %p127 = scmp.eq.s32.totalorder %s39, 0
      %p128 = por %p126, %p127
      %p129 = scmp.ne.s32.totalorder %s115, %s116
      %p130 = scmp.eq.s32.totalorder %s40, 3
      %p131 = por %p129, %p130
      %p133 = scmp.ne.s32.totalorder %s116, %s132
      %p134 = scmp.eq.s32.totalorder %s40, 0
      %p135 = por %p133, %p134
      %s137 = sadd.s32 %s136, 1
      %p140 = scmp.eq.s32.totalorder %s34, 3
      %p141 = scmp.ne.s32.totalorder %s136, %s138
      %p142 = scmp.eq.s32.totalorder %s34, 0
      %p143 = por %p141, %p142
      %p144 = scmp.ne.s32.totalorder %s136, %s138
      %p145 = scmp.eq.s32.totalorder %s39, 3
      %p146 = por %p144, %p145
      %p147 = scmp.ne.s32.totalorder %s138, %s139
      %p148 = scmp.eq.s32.totalorder %s39, 0
      %p149 = por %p147, %p148
      %p150 = scmp.ne.s32.totalorder %s138, %s139
      %p151 = scmp.eq.s32.totalorder %s40, 3
      %p152 = por %p150, %p151
      %p154 = scmp.ne.s32.totalorder %s139, %s153
      %p155 = scmp.eq.s32.totalorder %s40, 0
      %p156 = por %p154, %p155
      %s158 = sadd.s32 %s157, 1
      %p161 = scmp.eq.s32.totalorder %s34, 3
      %p162 = scmp.ne.s32.totalorder %s157, %s159
      %p163 = scmp.eq.s32.totalorder %s34, 0
      %p164 = por %p162, %p163
      %p165 = scmp.ne.s32.totalorder %s157, %s159
      %p166 = scmp.eq.s32.totalorder %s39, 3
      %p167 = por %p165, %p166
      %p168 = scmp.ne.s32.totalorder %s159, %s160
      %p169 = scmp.eq.s32.totalorder %s39, 0
      %p170 = por %p168, %p169
      %p171 = scmp.ne.s32.totalorder %s159, %s160
      %p172 = scmp.eq.s32.totalorder %s40, 3
      %p173 = por %p171, %p172
      %p175 = scmp.ne.s32.totalorder %s160, %s174
      %p176 = scmp.eq.s32.totalorder %s40, 0
      %p177 = por %p175, %p176
      %s179 = sadd.s32 %s178, 1
      %p182 = scmp.eq.s32.totalorder %s34, 3
      %p183 = scmp.ne.s32.totalorder %s178, %s180
      %p184 = scmp.eq.s32.totalorder %s34, 0
      %p185 = por %p183, %p184
      %p186 = scmp.ne.s32.totalorder %s178, %s180
      %p187 = scmp.eq.s32.totalorder %s39, 3
      %p188 = por %p186, %p187
      %p189 = scmp.ne.s32.totalorder %s180, %s181
      %p190 = scmp.eq.s32.totalorder %s39, 0
      %p191 = por %p189, %p190
      %p192 = scmp.ne.s32.totalorder %s180, %s181
      %p193 = scmp.eq.s32.totalorder %s40, 3
      %p194 = por %p192, %p193
      %p196 = scmp.ne.s32.totalorder %s181, %s195
      %p197 = scmp.eq.s32.totalorder %s40, 0
      %p198 = por %p196, %p197
      %s200 = sadd.s32 %s199, 1
      %p203 = scmp.eq.s32.totalorder %s34, 3
      %p204 = scmp.ne.s32.totalorder %s199, %s201
      %p205 = scmp.eq.s32.totalorder %s34, 0
      %p206 = por %p204, %p205
      %p207 = scmp.ne.s32.totalorder %s199, %s201
      %p208 = scmp.eq.s32.totalorder %s39, 3
      %p209 = por %p207, %p208
      %p210 = scmp.ne.s32.totalorder %s201, %s202
      %p211 = scmp.eq.s32.totalorder %s39, 0
      %p212 = por %p210, %p211
      %p213 = scmp.ne.s32.totalorder %s201, %s202
      %p214 = scmp.eq.s32.totalorder %s40, 3
      %p215 = por %p213, %p214
      %p217 = scmp.ne.s32.totalorder %s202, %s216
      %p218 = scmp.eq.s32.totalorder %s40, 0
      %p219 = por %p217, %p218
      %s221 = sadd.s32 %s220, 1
      %p224 = scmp.eq.s32.totalorder %s34, 3
      %p225 = scmp.ne.s32.totalorder %s220, %s222
      %p226 = scmp.eq.s32.totalorder %s34, 0
      %p227 = por %p225, %p226
      %p228 = scmp.ne.s32.totalorder %s220, %s222
      %p229 = scmp.eq.s32.totalorder %s39, 3
      %p230 = por %p228, %p229
      %p231 = scmp.ne.s32.totalorder %s222, %s223
      %p232 = scmp.eq.s32.totalorder %s39, 0
      %p233 = por %p231, %p232
      %p234 = scmp.ne.s32.totalorder %s222, %s223
      %p235 = scmp.eq.s32.totalorder %s40, 3
      %p236 = por %p234, %p235
      %p238 = scmp.ne.s32.totalorder %s223, %s237
      %p239 = scmp.eq.s32.totalorder %s40, 0
      %p240 = por %p238, %p239
      %s242 = sadd.s32 %s241, 1
      %p245 = scmp.eq.s32.totalorder %s34, 3
      %p246 = scmp.ne.s32.totalorder %s241, %s243
      %p247 = scmp.eq.s32.totalorder %s34, 0
      %p248 = por %p246, %p247
      %p249 = scmp.ne.s32.totalorder %s241, %s243
      %p250 = scmp.eq.s32.totalorder %s39, 3
      %p251 = por %p249, %p250
      %p252 = scmp.ne.s32.totalorder %s243, %s244
      %p253 = scmp.eq.s32.totalorder %s39, 0
      %p254 = por %p252, %p253
      %p255 = scmp.ne.s32.totalorder %s243, %s244
      %p256 = scmp.eq.s32.totalorder %s40, 3
      %p257 = por %p255, %p256
      %p259 = scmp.ne.s32.totalorder %s244, %s258
      %p260 = scmp.eq.s32.totalorder %s40, 0
      %p261 = por %p259, %p260
      %s263 = sadd.s32 %s262, 1
      %p266 = scmp.eq.s32.totalorder %s34, 3
      %p267 = scmp.ne.s32.totalorder %s262, %s264
      %p268 = scmp.eq.s32.totalorder %s34, 0
      %p269 = por %p267, %p268
      %p270 = scmp.ne.s32.totalorder %s262, %s264
      %p271 = scmp.eq.s32.totalorder %s39, 3
      %p272 = por %p270, %p271
      %p273 = scmp.ne.s32.totalorder %s264, %s265
      %p274 = scmp.eq.s32.totalorder %s39, 0
      %p275 = por %p273, %p274
      %p276 = scmp.ne.s32.totalorder %s264, %s265
      %p277 = scmp.eq.s32.totalorder %s40, 3
      %p278 = por %p276, %p277
      %p280 = scmp.ne.s32.totalorder %s265, %s279
      %p281 = scmp.eq.s32.totalorder %s40, 0
      %p282 = por %p280, %p281
      %s284 = sadd.s32 %s283, 1
      %p287 = scmp.eq.s32.totalorder %s34, 3
      %p288 = scmp.ne.s32.totalorder %s283, %s285
      %p289 = scmp.eq.s32.totalorder %s34, 0
      %p290 = por %p288, %p289
      %p291 = scmp.ne.s32.totalorder %s283, %s285
      %p292 = scmp.eq.s32.totalorder %s39, 3
      %p293 = por %p291, %p292
      %p294 = scmp.ne.s32.totalorder %s285, %s286
      %p295 = scmp.eq.s32.totalorder %s39, 0
      %p296 = por %p294, %p295
      %p297 = scmp.ne.s32.totalorder %s285, %s286
      %p298 = scmp.eq.s32.totalorder %s40, 3
      %p299 = por %p297, %p298
      %p301 = scmp.ne.s32.totalorder %s286, %s300
      %p302 = scmp.eq.s32.totalorder %s40, 0
      %p303 = por %p301, %p302
      %s305 = sadd.s32 %s304, 1
      %p308 = scmp.eq.s32.totalorder %s34, 3
      %p309 = scmp.ne.s32.totalorder %s304, %s306
      %p310 = scmp.eq.s32.totalorder %s34, 0
      %p311 = por %p309, %p310
      %p312 = scmp.ne.s32.totalorder %s304, %s306
      %p313 = scmp.eq.s32.totalorder %s39, 3
      %p314 = por %p312, %p313
      %p315 = scmp.ne.s32.totalorder %s306, %s307
      %p316 = scmp.eq.s32.totalorder %s39, 0
      %p317 = por %p315, %p316
      %p318 = scmp.ne.s32.totalorder %s306, %s307
      %p319 = scmp.eq.s32.totalorder %s40, 3
      %p320 = por %p318, %p319
      %p322 = scmp.ne.s32.totalorder %s307, %s321
      %p323 = scmp.eq.s32.totalorder %s40, 0
      %p324 = por %p322, %p323
      %s326 = sadd.s32 %s325, 1
      %p329 = scmp.eq.s32.totalorder %s34, 3
      %p330 = scmp.ne.s32.totalorder %s325, %s327
      %p331 = scmp.eq.s32.totalorder %s34, 0
      %p332 = por %p330, %p331
      %p333 = scmp.ne.s32.totalorder %s325, %s327
      %p334 = scmp.eq.s32.totalorder %s39, 3
      %p335 = por %p333, %p334
      %p336 = scmp.ne.s32.totalorder %s327, %s328
      %p337 = scmp.eq.s32.totalorder %s39, 0
      %p338 = por %p336, %p337
      %p339 = scmp.ne.s32.totalorder %s327, %s328
      %p340 = scmp.eq.s32.totalorder %s40, 3
      %p341 = por %p339, %p340
      %p343 = scmp.ne.s32.totalorder %s328, %s342
      %p344 = scmp.eq.s32.totalorder %s40, 0
      %p345 = por %p343, %p344
      %s347 = sadd.s32 %s346, 1
      %p350 = scmp.eq.s32.totalorder %s34, 3
      %p351 = scmp.ne.s32.totalorder %s346, %s348
      %p352 = scmp.eq.s32.totalorder %s34, 0
      %p353 = por %p351, %p352
      %p354 = scmp.ne.s32.totalorder %s346, %s348
      %p355 = scmp.eq.s32.totalorder %s39, 3
      %p356 = por %p354, %p355
      %p357 = scmp.ne.s32.totalorder %s348, %s349
      %p358 = scmp.eq.s32.totalorder %s39, 0
      %p359 = por %p357, %p358
      %p360 = scmp.ne.s32.totalorder %s348, %s349
      %p361 = scmp.eq.s32.totalorder %s40, 3
      %p362 = por %p360, %p361
      %p364 = scmp.ne.s32.totalorder %s349, %s363
      %p365 = scmp.eq.s32.totalorder %s40, 0
      %p366 = por %p364, %p365
      %s368 = sadd.s32 %s367, 1
      %p371 = scmp.eq.s32.totalorder %s34, 3
      %p372 = scmp.ne.s32.totalorder %s367, %s369
      %p373 = scmp.eq.s32.totalorder %s34, 0
      %p374 = por %p372, %p373
      %p375 = scmp.ne.s32.totalorder %s367, %s369
      %p376 = scmp.eq.s32.totalorder %s39, 3
      %p377 = por %p375, %p376
      %p378 = scmp.ne.s32.totalorder %s369, %s370
      %p379 = scmp.eq.s32.totalorder %s39, 0
      %p380 = por %p378, %p379
      %p381 = scmp.ne.s32.totalorder %s369, %s370
      %p382 = scmp.eq.s32.totalorder %s40, 3
      %p383 = por %p381, %p382
      %p385 = scmp.ne.s32.totalorder %s370, %s384
      %p386 = scmp.eq.s32.totalorder %s40, 0
      %p387 = por %p385, %p386
      %s389 = sadd.s32 %s388, 1
      %p392 = scmp.eq.s32.totalorder %s34, 3
      %p393 = scmp.ne.s32.totalorder %s388, %s390
      %p394 = scmp.eq.s32.totalorder %s34, 0
      %p395 = por %p393, %p394
      %p396 = scmp.ne.s32.totalorder %s388, %s390
      %p397 = scmp.eq.s32.totalorder %s39, 3
      %p398 = por %p396, %p397
      %p399 = scmp.ne.s32.totalorder %s390, %s391
      %p400 = scmp.eq.s32.totalorder %s39, 0
      %p401 = por %p399, %p400
      %p402 = scmp.ne.s32.totalorder %s390, %s391
      %p403 = scmp.eq.s32.totalorder %s40, 3
      %p404 = por %p402, %p403
      %p406 = scmp.ne.s32.totalorder %s391, %s405
      %p407 = scmp.eq.s32.totalorder %s40, 0
      %p408 = por %p406, %p407
      %s410 = sadd.s32 %s409, 1
      %p413 = scmp.eq.s32.totalorder %s34, 3
      %p414 = scmp.ne.s32.totalorder %s409, %s411
      %p415 = scmp.eq.s32.totalorder %s34, 0
      %p416 = por %p414, %p415
      %p417 = scmp.ne.s32.totalorder %s409, %s411
      %p418 = scmp.eq.s32.totalorder %s39, 3
      %p419 = por %p417, %p418
      %p420 = scmp.ne.s32.totalorder %s411, %s412
      %p421 = scmp.eq.s32.totalorder %s39, 0
      %p422 = por %p420, %p421
      %p423 = scmp.ne.s32.totalorder %s411, %s412
      %p424 = scmp.eq.s32.totalorder %s40, 3
      %p425 = por %p423, %p424
      %p427 = scmp.ne.s32.totalorder %s412, %s426
      %p428 = scmp.eq.s32.totalorder %s40, 0
      %p429 = por %p427, %p428
      %s430 = ssub.s32 %s41, %s53
      %s431 = ssub.s32 %s42, %s49
      %s432 = sor.u32 %s430, %s431
      %p433 = scmp.eq.s32.totalorder %s432, 0
      %s435 = sadd.s32 %s434, 1
      %s436 = scalar_select %p433, %s434, %s435
      %p439 = pneg %p433
      %p440 = scmp.eq.s32.totalorder %s34, 3
      %p441 = por %p439, %p440
      %p442 = scmp.ne.s32.totalorder %s434, %s437
      %p443 = scmp.eq.s32.totalorder %s34, 0
      %p444 = por %p442, %p443
      %p445 = scmp.ne.s32.totalorder %s434, %s437
      %p446 = scmp.eq.s32.totalorder %s39, 3
      %p447 = por %p445, %p446
      %p448 = scmp.ne.s32.totalorder %s437, %s438
      %p449 = scmp.eq.s32.totalorder %s39, 0
      %p450 = por %p448, %p449
      %p451 = scmp.ne.s32.totalorder %s437, %s438
      %p452 = scmp.eq.s32.totalorder %s40, 3
      %p453 = por %p451, %p452
      %p455 = scmp.ne.s32.totalorder %s438, %s454
      %p456 = scmp.eq.s32.totalorder %s40, 0
      %p457 = por %p455, %p456
      %p458 = scmp.le.s32.totalorder 1, %s34
      %p459 = scmp.lt.s32.totalorder %s34, 5
      %p460 = pnand %p458, %p459
      %p461 = pneg %p460
      // Predicated region
      $region9: #{tpu_custom_call.1} parent=5 // pred_check
        _
      $region10: #{tpu_custom_call.1} parent=5 // pred_check_branch
        %463 = sbr.rel (%p460) target = $region12
      $region11: #{tpu_custom_call.1} parent=5 // pred_region
        %s464 = ssub.s32 %s34, 1
        // Predicated region
        $region13: #{tpu_custom_call.1} parent=11 // pred_check
          %p465 = pneg %p149
        $region14: #{tpu_custom_call.1} parent=11 // pred_check_branch
          %467 = sbr.rel (%p465) target = $region16
        $region15: #{tpu_custom_call.1} parent=11 // pred_region
          _
        $region16: #{tpu_custom_call.1} parent=11 // pred_fallthru
          _
        // Predicated region
        $region17: #{tpu_custom_call.1} parent=11 // pred_check
          %p468 = pneg %p170
        $region18: #{tpu_custom_call.1} parent=11 // pred_check_branch
          %470 = sbr.rel (%p468) target = $region20
        $region19: #{tpu_custom_call.1} parent=11 // pred_region
          _
        $region20: #{tpu_custom_call.1} parent=11 // pred_fallthru
          _
        // Predicated region
        $region21: #{tpu_custom_call.1} parent=11 // pred_check
          %p471 = pneg %p191
        $region22: #{tpu_custom_call.1} parent=11 // pred_check_branch
          %473 = sbr.rel (%p471) target = $region24
        $region23: #{tpu_custom_call.1} parent=11 // pred_region
          %s475 = ssub.s32 512, 512
          %476 = vsyncadd [#allocation8], %s475
          %s477 = sshll.u32 [#allocation9], 4
          %s478 = int_to_ptr.vmem [resolvable:$true] %s477
          %483 = dma.hbm_to_vmem [thread:$0]  %s5, 512, %s478, [#allocation8], 128, 128, 8
        $region24: #{tpu_custom_call.1} parent=11 // pred_fallthru
          _
        // Predicated region
        $region25: #{tpu_custom_call.1} parent=11 // pred_check
          %p484 = pneg %p212
        $region26: #{tpu_custom_call.1} parent=11 // pred_check_branch
          %486 = sbr.rel (%p484) target = $region28
        $region27: #{tpu_custom_call.1} parent=11 // pred_region
          _
        $region28: #{tpu_custom_call.1} parent=11 // pred_fallthru
          _
        // Predicated region
        $region29: #{tpu_custom_call.1} parent=11 // pred_check
          %p487 = pneg %p233
        $region30: #{tpu_custom_call.1} parent=11 // pred_check_branch
          %489 = sbr.rel (%p487) target = $region32
        $region31: #{tpu_custom_call.1} parent=11 // pred_region
          %s491 = ssub.s32 512, 512
          %492 = vsyncadd [#allocation11], %s491
          %s493 = sshll.u32 [#allocation10], 4
          %s494 = int_to_ptr.vmem [resolvable:$true] %s493
          %499 = dma.hbm_to_vmem [thread:$0]  %s7, 512, %s494, [#allocation11], 128, 128, 8
        $region32: #{tpu_custom_call.1} parent=11 // pred_fallthru
          _
        // Predicated region
        $region33: #{tpu_custom_call.1} parent=11 // pred_check
          %p500 = pneg %p254
        $region34: #{tpu_custom_call.1} parent=11 // pred_check_branch
          %502 = sbr.rel (%p500) target = $region36
        $region35: #{tpu_custom_call.1} parent=11 // pred_region
          %s504 = ssub.s32 16, 16
          %505 = vsyncadd [#allocation11], %s504
          %s507 = sshll.u32 [#allocation12], 4
          %s508 = int_to_ptr.vmem [resolvable:$true] %s507
          %510 = dma.hbm_to_vmem [thread:$0]  %s8, 16, %s508, [#allocation11]
        $region36: #{tpu_custom_call.1} parent=11 // pred_fallthru
          _
        // Predicated region
        $region37: #{tpu_custom_call.1} parent=11 // pred_check
          %p511 = pneg %p275
        $region38: #{tpu_custom_call.1} parent=11 // pred_check_branch
          %513 = sbr.rel (%p511) target = $region40
        $region39: #{tpu_custom_call.1} parent=11 // pred_region
          %s515 = ssub.s32 16, 16
          %516 = vsyncadd [#allocation14], %s515
          %s518 = sshll.u32 [#allocation13], 4
          %s519 = int_to_ptr.vmem [resolvable:$true] %s518
          %521 = dma.hbm_to_vmem [thread:$0]  %s9, 16, %s519, [#allocation14]
        $region40: #{tpu_custom_call.1} parent=11 // pred_fallthru
          _
        // Predicated region
        $region41: #{tpu_custom_call.1} parent=11 // pred_check
          %p522 = pneg %p296
        $region42: #{tpu_custom_call.1} parent=11 // pred_check_branch
          %524 = sbr.rel (%p522) target = $region44
        $region43: #{tpu_custom_call.1} parent=11 // pred_region
          _
        $region44: #{tpu_custom_call.1} parent=11 // pred_fallthru
          _
        // Predicated region
        $region45: #{tpu_custom_call.1} parent=11 // pred_check
          %p525 = pneg %p317
        $region46: #{tpu_custom_call.1} parent=11 // pred_check_branch
          %527 = sbr.rel (%p525) target = $region48
        $region47: #{tpu_custom_call.1} parent=11 // pred_region
          _
        $region48: #{tpu_custom_call.1} parent=11 // pred_fallthru
          _
        // Predicated region
        $region49: #{tpu_custom_call.1} parent=11 // pred_check
          %p528 = pneg %p338
        $region50: #{tpu_custom_call.1} parent=11 // pred_check_branch
          %530 = sbr.rel (%p528) target = $region52
        $region51: #{tpu_custom_call.1} parent=11 // pred_region
          _
        $region52: #{tpu_custom_call.1} parent=11 // pred_fallthru
          _
        // Predicated region
        $region53: #{tpu_custom_call.1} parent=11 // pred_check
          %p531 = pneg %p359
        $region54: #{tpu_custom_call.1} parent=11 // pred_check_branch
          %533 = sbr.rel (%p531) target = $region56
        $region55: #{tpu_custom_call.1} parent=11 // pred_region
          _
        $region56: #{tpu_custom_call.1} parent=11 // pred_fallthru
          _
        // Predicated region
        $region57: #{tpu_custom_call.1} parent=11 // pred_check
          %p534 = pneg %p380
        $region58: #{tpu_custom_call.1} parent=11 // pred_check_branch
          %536 = sbr.rel (%p534) target = $region60
        $region59: #{tpu_custom_call.1} parent=11 // pred_region
          _
        $region60: #{tpu_custom_call.1} parent=11 // pred_fallthru
          _
        // Predicated region
        $region61: #{tpu_custom_call.1} parent=11 // pred_check
          %p537 = pneg %p401
        $region62: #{tpu_custom_call.1} parent=11 // pred_check_branch
          %539 = sbr.rel (%p537) target = $region64
        $region63: #{tpu_custom_call.1} parent=11 // pred_region
          _
        $region64: #{tpu_custom_call.1} parent=11 // pred_fallthru
          _
        // Predicated region
        $region65: #{tpu_custom_call.1} parent=11 // pred_check
          %p540 = pneg %p422
        $region66: #{tpu_custom_call.1} parent=11 // pred_check_branch
          %542 = sbr.rel (%p540) target = $region68
        $region67: #{tpu_custom_call.1} parent=11 // pred_region
          _
        $region68: #{tpu_custom_call.1} parent=11 // pred_fallthru
          _
      $region12: #{tpu_custom_call.1} parent=5 // pred_fallthru
        _
      %p543 = scmp.lt.s32.totalorder %s34, 4
      // Predicated region
      $region69: #{tpu_custom_call.1} parent=5 // pred_check
        %p544 = pneg %p543
      $region70: #{tpu_custom_call.1} parent=5 // pred_check_branch
        %546 = sbr.rel (%p544) target = $region72
      $region71: #{tpu_custom_call.1} parent=5 // pred_region
        // Predicated region
        $region73: #{tpu_custom_call.1} parent=71 // pred_check
          %p547 = pneg %p66
        $region74: #{tpu_custom_call.1} parent=71 // pred_check_branch
          %549 = sbr.rel (%p547) target = $region76
        $region75: #{tpu_custom_call.1} parent=71 // pred_region
          %p550 = scmp.lt.s32.totalorder %s41, 1
          %s551 = scalar_select %p550, %s41, 1
          %s552 = smul.addr %s551, 4
          %s553 = smul.addr %s552, 8
          %s554 = scalar_lea.vmem %s0, %s553
        $region76: #{tpu_custom_call.1} parent=71 // pred_fallthru
          _
        // Predicated region
        $region77: #{tpu_custom_call.1} parent=71 // pred_check
          %p555 = pneg %p94
        $region78: #{tpu_custom_call.1} parent=71 // pred_check_branch
          %557 = sbr.rel (%p555) target = $region80
        $region79: #{tpu_custom_call.1} parent=71 // pred_region
          %s558 = sand.u32 %s84, 1
          %s559 = scalar_lea.sflag [#allocation5], %s558
          %s560 = sand.u32 %s84, 1
          %s561 = smul.addr %s560, 16
          %s562 = scalar_lea.vmem [#allocation4], %s561
          %s563 = smul.u32 2, %s42
          %s565 = ssub.s32 256, 256
          %566 = vsyncadd %s559, %s565
          %s567 = smul.addr %s41, 4
          %s568 = sadd.s32 %s563, %s567
          %s569 = smul.addr %s568, 128
          %s570 = scalar_lea.hbm %s1, %s569
          %s571 = sshll.u32 %s562, 4
          %s572 = int_to_ptr.vmem [resolvable:$true] %s571
          %577 = dma.hbm_to_vmem [thread:$0]  %s570, 256, %s572, %s559, 128, 128, 8
        $region80: #{tpu_custom_call.1} parent=71 // pred_fallthru
          _
        // Predicated region
        $region81: #{tpu_custom_call.1} parent=71 // pred_check
          %p578 = pneg %p122
        $region82: #{tpu_custom_call.1} parent=71 // pred_check_branch
          %580 = sbr.rel (%p578) target = $region84
        $region83: #{tpu_custom_call.1} parent=71 // pred_region
          %s581 = sand.u32 %s34, 1
          %s582 = scalar_lea.sflag [#allocation8], %s581
          %s583 = sand.u32 %s112, 1
          %s584 = smul.addr %s583, 16
          %s585 = scalar_lea.vmem [#allocation7], %s584
          %s586 = smul.u32 2, %s42
          %s588 = ssub.s32 256, 256
          %589 = vsyncadd %s582, %s588
          %s590 = smul.addr %s41, 4
          %s591 = sadd.s32 %s586, %s590
          %s592 = smul.addr %s591, 128
          %s593 = scalar_lea.hbm %s2, %s592
          %s594 = sshll.u32 %s585, 4
          %s595 = int_to_ptr.vmem [resolvable:$true] %s594
          %600 = dma.hbm_to_vmem [thread:$0]  %s593, 256, %s595, %s582, 128, 128, 8
        $region84: #{tpu_custom_call.1} parent=71 // pred_fallthru
          _
      $region72: #{tpu_custom_call.1} parent=5 // pred_fallthru
        _
      %p601 = scmp.le.s32.totalorder 1, %s34
      %p602 = scmp.lt.s32.totalorder %s34, 5
      %p603 = pnand %p601, %p602
      %p604 = pneg %p603
      // Predicated region
      $region85: #{tpu_custom_call.1} parent=5 // pred_check
        _
      $region86: #{tpu_custom_call.1} parent=5 // pred_check_branch
        %606 = sbr.rel (%p603) target = $region88
      $region87: #{tpu_custom_call.1} parent=5 // pred_region
        %s607 = ssub.s32 %s34, 1
        %s608 = sand.u32 %s87, 1
        %s609 = scalar_lea.sflag [#allocation5], %s608
        %s610 = sand.u32 %s87, 1
        %s611 = smul.addr %s610, 16
        %s612 = scalar_lea.vmem [#allocation4], %s611
        // Predicated region
        $region89: #{tpu_custom_call.1} parent=87 // pred_check
          %p613 = pneg %p100
        $region90: #{tpu_custom_call.1} parent=87 // pred_check_branch
          %615 = sbr.rel (%p613) target = $region92
        $region91: #{tpu_custom_call.1} parent=87 // pred_region
          %616 = dma.done %s609, 256
        $region92: #{tpu_custom_call.1} parent=87 // pred_fallthru
          _
        %s617 = sand.u32 %s39, 1
        %s618 = scalar_lea.sflag [#allocation8], %s617
        %s619 = sand.u32 %s115, 1
        %s620 = smul.addr %s619, 16
        %s621 = scalar_lea.vmem [#allocation7], %s620
        // Predicated region
        $region93: #{tpu_custom_call.1} parent=87 // pred_check
          %p622 = pneg %p128
        $region94: #{tpu_custom_call.1} parent=87 // pred_check_branch
          %624 = sbr.rel (%p622) target = $region96
        $region95: #{tpu_custom_call.1} parent=87 // pred_region
          %625 = dma.done %s618, 256
        $region96: #{tpu_custom_call.1} parent=87 // pred_fallthru
          _
        // Predicated region
        $region97: #{tpu_custom_call.1} parent=87 // pred_check
          %p626 = pneg %p191
        $region98: #{tpu_custom_call.1} parent=87 // pred_check_branch
          %628 = sbr.rel (%p626) target = $region100
        $region99: #{tpu_custom_call.1} parent=87 // pred_region
          %629 = dma.done [#allocation8], 512
        $region100: #{tpu_custom_call.1} parent=87 // pred_fallthru
          _
        // Predicated region
        $region101: #{tpu_custom_call.1} parent=87 // pred_check
          %p630 = pneg %p233
        $region102: #{tpu_custom_call.1} parent=87 // pred_check_branch
          %632 = sbr.rel (%p630) target = $region104
        $region103: #{tpu_custom_call.1} parent=87 // pred_region
          %633 = dma.done [#allocation11], 512
        $region104: #{tpu_custom_call.1} parent=87 // pred_fallthru
          _
        // Predicated region
        $region105: #{tpu_custom_call.1} parent=87 // pred_check
          %p634 = pneg %p254
        $region106: #{tpu_custom_call.1} parent=87 // pred_check_branch
          %636 = sbr.rel (%p634) target = $region108
        $region107: #{tpu_custom_call.1} parent=87 // pred_region
          %637 = dma.done [#allocation11], 16
        $region108: #{tpu_custom_call.1} parent=87 // pred_fallthru
          _
        // Predicated region
        $region109: #{tpu_custom_call.1} parent=87 // pred_check
          %p638 = pneg %p275
        $region110: #{tpu_custom_call.1} parent=87 // pred_check_branch
          %640 = sbr.rel (%p638) target = $region112
        $region111: #{tpu_custom_call.1} parent=87 // pred_region
          %641 = dma.done [#allocation14], 16
        $region112: #{tpu_custom_call.1} parent=87 // pred_fallthru
          _
        %p642 = scmp.lt.s32.totalorder %s43, 1
        %s643 = scalar_select %p642, %s43, 1
        %s644 = smul.addr %s643, 4
        %s645 = smul.addr %s644, 8
        %s646 = scalar_lea.vmem %s0, %s645
        %p647 = pneg %p72
        %p648 = pneg %p69
        %s649 = sand.u32 %s87, 1
        %s650 = scalar_lea.sflag [#allocation5], %s649
        %s651 = sand.u32 %s87, 1
        %s652 = smul.addr %s651, 16
        %s653 = scalar_lea.vmem [#allocation4], %s652
        %p654 = pneg %p100
        %p655 = pneg %p97
        %s656 = sand.u32 %s39, 1
        %s657 = scalar_lea.sflag [#allocation8], %s656
        %s658 = sand.u32 %s115, 1
        %s659 = smul.addr %s658, 16
        %s660 = scalar_lea.vmem [#allocation7], %s659
        %p661 = pneg %p128
        %p662 = pneg %p125
        %p663 = pneg %p149
        %p664 = pneg %p146
        %p665 = pneg %p170
        %p666 = pneg %p167
        %p667 = pneg %p191
        %p668 = pneg %p188
        %p669 = pneg %p212
        %p670 = pneg %p209
        %p671 = pneg %p233
        %p672 = pneg %p230
        %p673 = pneg %p254
        %p674 = pneg %p251
        %p675 = pneg %p275
        %p676 = pneg %p272
        %p677 = pneg %p296
        %p678 = pneg %p293
        %p679 = pneg %p317
        %p680 = pneg %p314
        %p681 = pneg %p338
        %p682 = pneg %p335
        %p683 = pneg %p359
        %p684 = pneg %p356
        %p685 = pneg %p380
        %p686 = pneg %p377
        %p687 = pneg %p401
        %p688 = pneg %p398
        %p689 = pneg %p422
        %p690 = pneg %p419
        %p691 = pneg %p450
        %p692 = pneg %p447
        %s693 = sand.u32 %s437, 1
        %s694 = scalar_lea.sflag [#allocation6], %s693
        %s695 = sand.u32 %s437, 1
        %s696 = smul.addr %s695, 16
        %s697 = scalar_lea.vmem [#allocation15], %s696
        %p698 = scmp.lt.s32.totalorder %s43, 1
        %s699 = scalar_select %p698, %s43, 1
        %s700 = smul.addr %s699, 4
        %s701 = smul.addr %s700, 8
        %s702 = scalar_lea.vmem %s0, %s701
        %s703 = smul.u32 2, %s44
        %s704 = smul.u32 2, %s44
        %s705 = smul.u32 2, %s44
        %v706 = vld [vmem:[%s612] sm:$0xff]
        %v707 = vld [vmem:[%s612 + $0x8] sm:$0xff]
        %v708 = vld [vmem:[%s621] sm:$0xff]
        %v709 = vld [vmem:[%s621 + $0x8] sm:$0xff]
        %vm710 = vcmp.eq.s32.totalorder %v708, 0
        %vm711 = vcmp.eq.s32.totalorder %v709, 0
        %p712 = scmp.eq.s32.totalorder %s44, 0
        // Predicated region
        $region113: #{tpu_custom_call.1} parent=87 // pred_check
          %p713 = pneg %p712
        $region114: #{tpu_custom_call.1} parent=87 // pred_check_branch
          %715 = sbr.rel (%p713) target = $region116
        $region115: #{tpu_custom_call.1} parent=87 // pred_region
          %v716 = vld [vmem:[%s702] sm:$0xff]
          %v717 = vld [vmem:[%s702 + $0x8] sm:$0xff]
          %v718 = vld [vmem:[%s702 + $0x10] sm:$0xff]
          %v719 = vld [vmem:[%s702 + $0x18] sm:$0xff]
          %v720 = vld [vmem:[#allocation9] sm:$0xff]
          %v721 = vld [vmem:[#allocation9 + $0x8] sm:$0xff]
          %v722 = vld [vmem:[#allocation9 + $0x10] sm:$0xff]
          %v723 = vld [vmem:[#allocation9 + $0x18] sm:$0xff]
          %v724 = vld [vmem:[%s6] sm:$0x1]
          %v726 = vlaneseq
          %v727 = vshrl.u32 %v726, 7
          %v728 = vsub.s32 0, %v727
          %v729 = vrot.slane %v724, %v728
          %vm731 = vcmask 261120
          %v733 = vsel %vm731, %v716, 0
          %v736 = vsel %vm731, %v717, 0
          %v739 = vsel %vm731, %v718, 0
          %v742 = vsel %vm731, %v719, 0
          %744 = vmatprep.subr.mxu0 0.0
          %745 = vmatpush1.msra.mxu0 %v720
          %746 = vmatprep.subr.mxu0 0.0
          %747 = vmatpush1.msra.mxu0 %v721
          %748 = vmatprep.subr.mxu0 0.0
          %749 = vmatpush1.msra.mxu0 %v722
          %750 = vmatprep.subr.mxu0 0.0
          %751 = vmatpush1.msra.mxu0 %v723
          %752 = vmatprep.subr.mxu0 0.0
          %753 = vmatpush1.msra.mxu0 0.0
          %754 = vmatprep.subr.mxu0 0.0
          %755 = vmatpush1.msra.mxu0 0.0
          %756 = vmatprep.subr.mxu0 0.0
          %757 = vmatpush1.msra.mxu0 0.0
          %758 = vmatprep.subr.mxu0 0.0
          %759 = vmatpush1.msra.mxu0 0.0
          %760 = vmatprep.subr.mxu0 0.0
          %761 = vmatpush1.msra.mxu0 0.0
          %762 = vmatprep.subr.mxu0 0.0
          %763 = vmatpush1.msra.mxu0 0.0
          %764 = vmatprep.subr.mxu0 0.0
          %765 = vmatpush1.msra.mxu0 0.0
          %766 = vmatprep.subr.mxu0 0.0
          %767 = vmatpush1.msra.mxu0 0.0
          %768 = vmatprep.subr.mxu0 0.0
          %769 = vmatpush1.msra.mxu0 0.0
          %770 = vmatprep.subr.mxu0 0.0
          %771 = vmatpush1.msra.mxu0 0.0
          %772 = vmatprep.subr.mxu0 0.0
          %773 = vmatpush1.msra.mxu0 0.0
          %774 = vmatprep.subr.mxu0 0.0
          %775 = vmatpush1.msra.mxu0 0.0
          %776 = vmatprep.subr.mxu0 0.0
          %777 = vmatpush1.msra.mxu0 0.0
          %778 = vmatprep.subr.mxu0 0.0
          %779 = vmatpush1.msra.mxu0 0.0
          %780 = vmatprep.subr.mxu0 0.0
          %781 = vmatpush1.msra.mxu0 0.0
          %782 = vmatprep.subr.mxu0 0.0
          %783 = vmatpush1.msra.mxu0 0.0
          %784 = vmatprep.subr.mxu0 0.0
          %785 = vmatpush1.msra.mxu0 0.0
          %786 = vmatprep.subr.mxu0 0.0
          %787 = vmatpush1.msra.mxu0 0.0
          %788 = vmatprep.subr.mxu0 0.0
          %789 = vmatpush1.msra.mxu0 0.0
          %790 = vmatprep.subr.mxu0 0.0
          %791 = vmatpush1.msra.mxu0 0.0
          %792 = vmatprep.subr.mxu0 0.0
          %793 = vmatpush1.msra.mxu0 0.0
          %794 = vmatprep.subr.mxu0 0.0
          %795 = vmatpush1.msra.mxu0 0.0
          %796 = vmatprep.subr.mxu0 0.0
          %797 = vmatpush1.msra.mxu0 0.0
          %798 = vmatprep.subr.mxu0 0.0
          %799 = vmatpush1.msra.mxu0 0.0
          %800 = vmatprep.subr.mxu0 0.0
          %801 = vmatpush1.msra.mxu0 0.0
          %802 = vmatprep.subr.mxu0 0.0
          %803 = vmatpush1.msra.mxu0 0.0
          %804 = vmatprep.subr.mxu0 0.0
          %805 = vmatpush1.msra.mxu0 0.0
          %806 = vmatprep.subr.mxu0 0.0
          %807 = vmatpush1.msra.mxu0 0.0
          %808 = vmatprep.mubr.f32.mxu0 0.0
          %809 = vmatmul.mubr.f32.gmra.mrb[0].mxu0 %v733
          %v810 = vpop.f32.mrb[0].mxu0
          %v811 = vadd.f32 %v729, %v810
          %v812 = vpop.f32.mrb[0].mxu0
          %813 = vmatprep.mubr.f32.mxu0 0.0
          %814 = vmatmul.mubr.f32.gmra.mrb[0].mxu0 %v736
          %v815 = vpop.f32.mrb[0].mxu0
          %v816 = vadd.f32 %v729, %v815
          %v817 = vpop.f32.mrb[0].mxu0
          %818 = vmatprep.mubr.f32.mxu0 0.0
          %819 = vmatmul.mubr.f32.gmra.mrb[0].mxu0 %v739
          %v820 = vpop.f32.mrb[0].mxu0
          %v821 = vadd.f32 %v729, %v820
          %v822 = vpop.f32.mrb[0].mxu0
          %823 = vmatprep.mubr.f32.mxu0 0.0
          %824 = vmatmul.mubr.f32.gmra.mrb[0].mxu0 %v742
          %v825 = vpop.f32.mrb[0].mxu0
          %v826 = vadd.f32 %v729, %v825
          %v827 = vpop.f32.mrb[0].mxu0
          %828 = vdwg.mxu0
          %833 = vrot.lane.b32.xlu0 %v811, 120
          %v834 = vpop.permute.xlu0 %833
          %835 = vrot.lane.b32.xlu0 %v816, 120
          %v836 = vpop.permute.xlu0 %835
          %837 = vrot.lane.b32.xlu0 %v821, 120
          %v838 = vpop.permute.xlu0 %837
          %839 = vrot.lane.b32.xlu0 %v826, 120
          %v840 = vpop.permute.xlu0 %839
          %845 = vrot.lane.b32.xlu0 %v811, 112
          %v846 = vpop.permute.xlu0 %845
          %847 = vrot.lane.b32.xlu0 %v816, 112
          %v848 = vpop.permute.xlu0 %847
          %849 = vrot.lane.b32.xlu0 %v821, 112
          %v850 = vpop.permute.xlu0 %849
          %851 = vrot.lane.b32.xlu0 %v826, 112
          %v852 = vpop.permute.xlu0 %851
          %857 = vrot.lane.b32.xlu0 %v811, 104
          %v858 = vpop.permute.xlu0 %857
          %859 = vrot.lane.b32.xlu0 %v816, 104
          %v860 = vpop.permute.xlu0 %859
          %861 = vrot.lane.b32.xlu0 %v821, 104
          %v862 = vpop.permute.xlu0 %861
          %863 = vrot.lane.b32.xlu0 %v826, 104
          %v864 = vpop.permute.xlu0 %863
          %v869 = vcombine.low %v811, %v846
          %v870 = vcombine.high %v811, %v846
          %v872 = vunpack.c.l.s4 1983009808
          %v873 = vunpack.c.0.s8 %v872
          %v874 = vlaneseq
          %v875 = vshrl.u32 %v874, 7
          %v876 = vsub.s32 %v873, %v875
          %v877 = vrot.slane %v869, %v876
          %v879 = vunpack.c.l.s4 1983009808
          %v880 = vunpack.c.0.s8 %v879
          %v881 = vlaneseq
          %v882 = vshrl.u32 %v881, 7
          %v883 = vsub.s32 %v880, %v882
          %v884 = vrot.slane %v870, %v883
          %v885 = vcombine.low %v834, %v858
          %v886 = vcombine.high %v834, %v858
          %v888 = vunpack.c.l.s4 1983009808
          %v889 = vunpack.c.0.s8 %v888
          %v890 = vlaneseq
          %v891 = vshrl.u32 %v890, 7
          %v892 = vsub.s32 %v889, %v891
          %v893 = vrot.slane %v885, %v892
          %v895 = vunpack.c.l.s4 1983009808
          %v896 = vunpack.c.0.s8 %v895
          %v897 = vlaneseq
          %v898 = vshrl.u32 %v897, 7
          %v899 = vsub.s32 %v896, %v898
          %v900 = vrot.slane %v886, %v899
          %v901 = vcombine.low %v877, %v893
          %v902 = vcombine.high %v877, %v893
          %v904 = vunpack.c.l.s4 1934713408
          %v905 = vunpack.c.0.s8 %v904
          %v906 = vlaneseq
          %v907 = vshrl.u32 %v906, 7
          %v908 = vsub.s32 %v905, %v907
          %v909 = vrot.slane %v901, %v908
          %v911 = vunpack.c.l.s4 1934713408
          %v912 = vunpack.c.0.s8 %v911
          %v913 = vlaneseq
          %v914 = vshrl.u32 %v913, 7
          %v915 = vsub.s32 %v912, %v914
          %v916 = vrot.slane %v902, %v915
          %v917 = vcombine.low %v884, %v900
          %v918 = vcombine.high %v884, %v900
          %v920 = vunpack.c.l.s4 1934713408
          %v921 = vunpack.c.0.s8 %v920
          %v922 = vlaneseq
          %v923 = vshrl.u32 %v922, 7
          %v924 = vsub.s32 %v921, %v923
          %v925 = vrot.slane %v917, %v924
          %v927 = vunpack.c.l.s4 1934713408
          %v928 = vunpack.c.0.s8 %v927
          %v929 = vlaneseq
          %v930 = vshrl.u32 %v929, 7
          %v931 = vsub.s32 %v928, %v930
          %v932 = vrot.slane %v918, %v931
          %v933 = vcombine.high %v909, 0.0
          %v934 = vcombine.high %v916, 0.0
          %v935 = vcombine.high %v925, 0.0
          %v936 = vcombine.high %v932, 0.0
          %v937 = vcombine.low %v816, %v848
          %v938 = vcombine.high %v816, %v848
          %v940 = vunpack.c.l.s4 1983009808
          %v941 = vunpack.c.0.s8 %v940
          %v942 = vlaneseq
          %v943 = vshrl.u32 %v942, 7
          %v944 = vsub.s32 %v941, %v943
          %v945 = vrot.slane %v937, %v944
          %v947 = vunpack.c.l.s4 1983009808
          %v948 = vunpack.c.0.s8 %v947
          %v949 = vlaneseq
          %v950 = vshrl.u32 %v949, 7
          %v951 = vsub.s32 %v948, %v950
          %v952 = vrot.slane %v938, %v951
          %v953 = vcombine.low %v836, %v860
          %v954 = vcombine.high %v836, %v860
          %v956 = vunpack.c.l.s4 1983009808
          %v957 = vunpack.c.0.s8 %v956
          %v958 = vlaneseq
          %v959 = vshrl.u32 %v958, 7
          %v960 = vsub.s32 %v957, %v959
          %v961 = vrot.slane %v953, %v960
          %v963 = vunpack.c.l.s4 1983009808
          %v964 = vunpack.c.0.s8 %v963
          %v965 = vlaneseq
          %v966 = vshrl.u32 %v965, 7
          %v967 = vsub.s32 %v964, %v966
          %v968 = vrot.slane %v954, %v967
          %v969 = vcombine.low %v945, %v961
          %v970 = vcombine.high %v945, %v961
          %v972 = vunpack.c.l.s4 1934713408
          %v973 = vunpack.c.0.s8 %v972
          %v974 = vlaneseq
          %v975 = vshrl.u32 %v974, 7
          %v976 = vsub.s32 %v973, %v975
          %v977 = vrot.slane %v969, %v976
          %v979 = vunpack.c.l.s4 1934713408
          %v980 = vunpack.c.0.s8 %v979
          %v981 = vlaneseq
          %v982 = vshrl.u32 %v981, 7
          %v983 = vsub.s32 %v980, %v982
          %v984 = vrot.slane %v970, %v983
          %v985 = vcombine.low %v952, %v968
          %v986 = vcombine.high %v952, %v968
          %v988 = vunpack.c.l.s4 1934713408
          %v989 = vunpack.c.0.s8 %v988
          %v990 = vlaneseq
          %v991 = vshrl.u32 %v990, 7
          %v992 = vsub.s32 %v989, %v991
          %v993 = vrot.slane %v985, %v992
          %v995 = vunpack.c.l.s4 1934713408
          %v996 = vunpack.c.0.s8 %v995
          %v997 = vlaneseq
          %v998 = vshrl.u32 %v997, 7
          %v999 = vsub.s32 %v996, %v998
          %v1000 = vrot.slane %v986, %v999
          %v1001 = vcombine.high %v977, 0.0
          %v1002 = vcombine.high %v984, 0.0
          %v1003 = vcombine.high %v993, 0.0
          %v1004 = vcombine.high %v1000, 0.0
          %v1005 = vcombine.low %v821, %v850
          %v1006 = vcombine.high %v821, %v850
          %v1008 = vunpack.c.l.s4 1983009808
          %v1009 = vunpack.c.0.s8 %v1008
          %v1010 = vlaneseq
          %v1011 = vshrl.u32 %v1010, 7
          %v1012 = vsub.s32 %v1009, %v1011
          %v1013 = vrot.slane %v1005, %v1012
          %v1015 = vunpack.c.l.s4 1983009808
          %v1016 = vunpack.c.0.s8 %v1015
          %v1017 = vlaneseq
          %v1018 = vshrl.u32 %v1017, 7
          %v1019 = vsub.s32 %v1016, %v1018
          %v1020 = vrot.slane %v1006, %v1019
          %v1021 = vcombine.low %v838, %v862
          %v1022 = vcombine.high %v838, %v862
          %v1024 = vunpack.c.l.s4 1983009808
          %v1025 = vunpack.c.0.s8 %v1024
          %v1026 = vlaneseq
          %v1027 = vshrl.u32 %v1026, 7
          %v1028 = vsub.s32 %v1025, %v1027
          %v1029 = vrot.slane %v1021, %v1028
          %v1031 = vunpack.c.l.s4 1983009808
          %v1032 = vunpack.c.0.s8 %v1031
          %v1033 = vlaneseq
          %v1034 = vshrl.u32 %v1033, 7
          %v1035 = vsub.s32 %v1032, %v1034
          %v1036 = vrot.slane %v1022, %v1035
          %v1037 = vcombine.low %v1013, %v1029
          %v1038 = vcombine.high %v1013, %v1029
          %v1040 = vunpack.c.l.s4 1934713408
          %v1041 = vunpack.c.0.s8 %v1040
          %v1042 = vlaneseq
          %v1043 = vshrl.u32 %v1042, 7
          %v1044 = vsub.s32 %v1041, %v1043
          %v1045 = vrot.slane %v1037, %v1044
          %v1047 = vunpack.c.l.s4 1934713408
          %v1048 = vunpack.c.0.s8 %v1047
          %v1049 = vlaneseq
          %v1050 = vshrl.u32 %v1049, 7
          %v1051 = vsub.s32 %v1048, %v1050
          %v1052 = vrot.slane %v1038, %v1051
          %v1053 = vcombine.low %v1020, %v1036
          %v1054 = vcombine.high %v1020, %v1036
          %v1056 = vunpack.c.l.s4 1934713408
          %v1057 = vunpack.c.0.s8 %v1056
          %v1058 = vlaneseq
          %v1059 = vshrl.u32 %v1058, 7
          %v1060 = vsub.s32 %v1057, %v1059
          %v1061 = vrot.slane %v1053, %v1060
          %v1063 = vunpack.c.l.s4 1934713408
          %v1064 = vunpack.c.0.s8 %v1063
          %v1065 = vlaneseq
          %v1066 = vshrl.u32 %v1065, 7
          %v1067 = vsub.s32 %v1064, %v1066
          %v1068 = vrot.slane %v1054, %v1067
          %v1069 = vcombine.high %v1045, 0.0
          %v1070 = vcombine.high %v1052, 0.0
          %v1071 = vcombine.high %v1061, 0.0
          %v1072 = vcombine.high %v1068, 0.0
          %v1073 = vcombine.low %v826, %v852
          %v1074 = vcombine.high %v826, %v852
          %v1076 = vunpack.c.l.s4 1983009808
          %v1077 = vunpack.c.0.s8 %v1076
          %v1078 = vlaneseq
          %v1079 = vshrl.u32 %v1078, 7
          %v1080 = vsub.s32 %v1077, %v1079
          %v1081 = vrot.slane %v1073, %v1080
          %v1083 = vunpack.c.l.s4 1983009808
          %v1084 = vunpack.c.0.s8 %v1083
          %v1085 = vlaneseq
          %v1086 = vshrl.u32 %v1085, 7
          %v1087 = vsub.s32 %v1084, %v1086
          %v1088 = vrot.slane %v1074, %v1087
          %v1089 = vcombine.low %v840, %v864
          %v1090 = vcombine.high %v840, %v864
          %v1092 = vunpack.c.l.s4 1983009808
          %v1093 = vunpack.c.0.s8 %v1092
          %v1094 = vlaneseq
          %v1095 = vshrl.u32 %v1094, 7
          %v1096 = vsub.s32 %v1093, %v1095
          %v1097 = vrot.slane %v1089, %v1096
          %v1099 = vunpack.c.l.s4 1983009808
          %v1100 = vunpack.c.0.s8 %v1099
          %v1101 = vlaneseq
          %v1102 = vshrl.u32 %v1101, 7
          %v1103 = vsub.s32 %v1100, %v1102
          %v1104 = vrot.slane %v1090, %v1103
          %v1105 = vcombine.low %v1081, %v1097
          %v1106 = vcombine.high %v1081, %v1097
          %v1108 = vunpack.c.l.s4 1934713408
          %v1109 = vunpack.c.0.s8 %v1108
          %v1110 = vlaneseq
          %v1111 = vshrl.u32 %v1110, 7
          %v1112 = vsub.s32 %v1109, %v1111
          %v1113 = vrot.slane %v1105, %v1112
          %v1115 = vunpack.c.l.s4 1934713408
          %v1116 = vunpack.c.0.s8 %v1115
          %v1117 = vlaneseq
          %v1118 = vshrl.u32 %v1117, 7
          %v1119 = vsub.s32 %v1116, %v1118
          %v1120 = vrot.slane %v1106, %v1119
          %v1121 = vcombine.low %v1088, %v1104
          %v1122 = vcombine.high %v1088, %v1104
          %v1124 = vunpack.c.l.s4 1934713408
          %v1125 = vunpack.c.0.s8 %v1124
          %v1126 = vlaneseq
          %v1127 = vshrl.u32 %v1126, 7
          %v1128 = vsub.s32 %v1125, %v1127
          %v1129 = vrot.slane %v1121, %v1128
          %v1131 = vunpack.c.l.s4 1934713408
          %v1132 = vunpack.c.0.s8 %v1131
          %v1133 = vlaneseq
          %v1134 = vshrl.u32 %v1133, 7
          %v1135 = vsub.s32 %v1132, %v1134
          %v1136 = vrot.slane %v1122, %v1135
          %v1137 = vcombine.high %v1113, 0.0
          %v1138 = vcombine.high %v1120, 0.0
          %v1139 = vcombine.high %v1129, 0.0
          %v1140 = vcombine.high %v1136, 0.0
          %1141 = vrot.lane.b32.xlu0 %v811, 96
          %v1142 = vpop.permute.xlu0 %1141
          %1143 = vrot.lane.b32.xlu0 %v816, 96
          %v1144 = vpop.permute.xlu0 %1143
          %1145 = vrot.lane.b32.xlu0 %v821, 96
          %v1146 = vpop.permute.xlu0 %1145
          %1147 = vrot.lane.b32.xlu0 %v826, 96
          %v1148 = vpop.permute.xlu0 %1147
          %1149 = vrot.lane.b32.xlu0 %v834, 96
          %v1150 = vpop.permute.xlu0 %1149
          %1151 = vrot.lane.b32.xlu0 %v836, 96
          %v1152 = vpop.permute.xlu0 %1151
          %1153 = vrot.lane.b32.xlu0 %v838, 96
          %v1154 = vpop.permute.xlu0 %1153
          %1155 = vrot.lane.b32.xlu0 %v840, 96
          %v1156 = vpop.permute.xlu0 %1155
          %1157 = vrot.lane.b32.xlu0 %v846, 96
          %v1158 = vpop.permute.xlu0 %1157
          %1159 = vrot.lane.b32.xlu0 %v848, 96
          %v1160 = vpop.permute.xlu0 %1159
          %1161 = vrot.lane.b32.xlu0 %v850, 96
          %v1162 = vpop.permute.xlu0 %1161
          %1163 = vrot.lane.b32.xlu0 %v852, 96
          %v1164 = vpop.permute.xlu0 %1163
          %1165 = vrot.lane.b32.xlu0 %v858, 96
          %v1166 = vpop.permute.xlu0 %1165
          %1167 = vrot.lane.b32.xlu0 %v860, 96
          %v1168 = vpop.permute.xlu0 %1167
          %1169 = vrot.lane.b32.xlu0 %v862, 96
          %v1170 = vpop.permute.xlu0 %1169
          %1171 = vrot.lane.b32.xlu0 %v864, 96
          %v1172 = vpop.permute.xlu0 %1171
          %v1189 = vcombine.low %v1142, %v1158
          %v1190 = vcombine.high %v1142, %v1158
          %v1192 = vunpack.c.l.s4 1983009808
          %v1193 = vunpack.c.0.s8 %v1192
          %v1194 = vlaneseq
          %v1195 = vshrl.u32 %v1194, 7
          %v1196 = vsub.s32 %v1193, %v1195
          %v1197 = vrot.slane %v1189, %v1196
          %v1199 = vunpack.c.l.s4 1983009808
          %v1200 = vunpack.c.0.s8 %v1199
          %v1201 = vlaneseq
          %v1202 = vshrl.u32 %v1201, 7
          %v1203 = vsub.s32 %v1200, %v1202
          %v1204 = vrot.slane %v1190, %v1203
          %v1205 = vcombine.low %v1150, %v1166
          %v1206 = vcombine.high %v1150, %v1166
          %v1208 = vunpack.c.l.s4 1983009808
          %v1209 = vunpack.c.0.s8 %v1208
          %v1210 = vlaneseq
          %v1211 = vshrl.u32 %v1210, 7
          %v1212 = vsub.s32 %v1209, %v1211
          %v1213 = vrot.slane %v1205, %v1212
          %v1215 = vunpack.c.l.s4 1983009808
          %v1216 = vunpack.c.0.s8 %v1215
          %v1217 = vlaneseq
          %v1218 = vshrl.u32 %v1217, 7
          %v1219 = vsub.s32 %v1216, %v1218
          %v1220 = vrot.slane %v1206, %v1219
          %v1221 = vcombine.low %v1197, %v1213
          %v1222 = vcombine.high %v1197, %v1213
          %v1224 = vunpack.c.l.s4 1934713408
          %v1225 = vunpack.c.0.s8 %v1224
          %v1226 = vlaneseq
          %v1227 = vshrl.u32 %v1226, 7
          %v1228 = vsub.s32 %v1225, %v1227
          %v1229 = vrot.slane %v1221, %v1228
          %v1231 = vunpack.c.l.s4 1934713408
          %v1232 = vunpack.c.0.s8 %v1231
          %v1233 = vlaneseq
          %v1234 = vshrl.u32 %v1233, 7
          %v1235 = vsub.s32 %v1232, %v1234
          %v1236 = vrot.slane %v1222, %v1235
          %v1237 = vcombine.low %v1204, %v1220
          %v1238 = vcombine.high %v1204, %v1220
          %v1240 = vunpack.c.l.s4 1934713408
          %v1241 = vunpack.c.0.s8 %v1240
          %v1242 = vlaneseq
          %v1243 = vshrl.u32 %v1242, 7
          %v1244 = vsub.s32 %v1241, %v1243
          %v1245 = vrot.slane %v1237, %v1244
          %v1247 = vunpack.c.l.s4 1934713408
          %v1248 = vunpack.c.0.s8 %v1247
          %v1249 = vlaneseq
          %v1250 = vshrl.u32 %v1249, 7
          %v1251 = vsub.s32 %v1248, %v1250
          %v1252 = vrot.slane %v1238, %v1251
          %v1253 = vcombine.high %v1229, 0.0
          %v1254 = vcombine.high %v1236, 0.0
          %v1255 = vcombine.high %v1245, 0.0
          %v1256 = vcombine.high %v1252, 0.0
          %v1257 = vcombine.low %v1144, %v1160
          %v1258 = vcombine.high %v1144, %v1160
          %v1260 = vunpack.c.l.s4 1983009808
          %v1261 = vunpack.c.0.s8 %v1260
          %v1262 = vlaneseq
          %v1263 = vshrl.u32 %v1262, 7
          %v1264 = vsub.s32 %v1261, %v1263
          %v1265 = vrot.slane %v1257, %v1264
          %v1267 = vunpack.c.l.s4 1983009808
          %v1268 = vunpack.c.0.s8 %v1267
          %v1269 = vlaneseq
          %v1270 = vshrl.u32 %v1269, 7
          %v1271 = vsub.s32 %v1268, %v1270
          %v1272 = vrot.slane %v1258, %v1271
          %v1273 = vcombine.low %v1152, %v1168
          %v1274 = vcombine.high %v1152, %v1168
          %v1276 = vunpack.c.l.s4 1983009808
          %v1277 = vunpack.c.0.s8 %v1276
          %v1278 = vlaneseq
          %v1279 = vshrl.u32 %v1278, 7
          %v1280 = vsub.s32 %v1277, %v1279
          %v1281 = vrot.slane %v1273, %v1280
          %v1283 = vunpack.c.l.s4 1983009808
          %v1284 = vunpack.c.0.s8 %v1283
          %v1285 = vlaneseq
          %v1286 = vshrl.u32 %v1285, 7
          %v1287 = vsub.s32 %v1284, %v1286
          %v1288 = vrot.slane %v1274, %v1287
          %v1289 = vcombine.low %v1265, %v1281
          %v1290 = vcombine.high %v1265, %v1281
          %v1292 = vunpack.c.l.s4 1934713408
          %v1293 = vunpack.c.0.s8 %v1292
          %v1294 = vlaneseq
          %v1295 = vshrl.u32 %v1294, 7
          %v1296 = vsub.s32 %v1293, %v1295
          %v1297 = vrot.slane %v1289, %v1296
          %v1299 = vunpack.c.l.s4 1934713408
          %v1300 = vunpack.c.0.s8 %v1299
          %v1301 = vlaneseq
          %v1302 = vshrl.u32 %v1301, 7
          %v1303 = vsub.s32 %v1300, %v1302
          %v1304 = vrot.slane %v1290, %v1303
          %v1305 = vcombine.low %v1272, %v1288
          %v1306 = vcombine.high %v1272, %v1288
          %v1308 = vunpack.c.l.s4 1934713408
          %v1309 = vunpack.c.0.s8 %v1308
          %v1310 = vlaneseq
          %v1311 = vshrl.u32 %v1310, 7
          %v1312 = vsub.s32 %v1309, %v1311
          %v1313 = vrot.slane %v1305, %v1312
          %v1315 = vunpack.c.l.s4 1934713408
          %v1316 = vunpack.c.0.s8 %v1315
          %v1317 = vlaneseq
          %v1318 = vshrl.u32 %v1317, 7
          %v1319 = vsub.s32 %v1316, %v1318
          %v1320 = vrot.slane %v1306, %v1319
          %v1321 = vcombine.high %v1297, 0.0
          %v1322 = vcombine.high %v1304, 0.0
          %v1323 = vcombine.high %v1313, 0.0
          %v1324 = vcombine.high %v1320, 0.0
          %v1325 = vcombine.low %v1146, %v1162
          %v1326 = vcombine.high %v1146, %v1162
          %v1328 = vunpack.c.l.s4 1983009808
          %v1329 = vunpack.c.0.s8 %v1328
          %v1330 = vlaneseq
          %v1331 = vshrl.u32 %v1330, 7
          %v1332 = vsub.s32 %v1329, %v1331
          %v1333 = vrot.slane %v1325, %v1332
          %v1335 = vunpack.c.l.s4 1983009808
          %v1336 = vunpack.c.0.s8 %v1335
          %v1337 = vlaneseq
          %v1338 = vshrl.u32 %v1337, 7
          %v1339 = vsub.s32 %v1336, %v1338
          %v1340 = vrot.slane %v1326, %v1339
          %v1341 = vcombine.low %v1154, %v1170
          %v1342 = vcombine.high %v1154, %v1170
          %v1344 = vunpack.c.l.s4 1983009808
          %v1345 = vunpack.c.0.s8 %v1344
          %v1346 = vlaneseq
          %v1347 = vshrl.u32 %v1346, 7
          %v1348 = vsub.s32 %v1345, %v1347
          %v1349 = vrot.slane %v1341, %v1348
          %v1351 = vunpack.c.l.s4 1983009808
          %v1352 = vunpack.c.0.s8 %v1351
          %v1353 = vlaneseq
          %v1354 = vshrl.u32 %v1353, 7
          %v1355 = vsub.s32 %v1352, %v1354
          %v1356 = vrot.slane %v1342, %v1355
          %v1357 = vcombine.low %v1333, %v1349
          %v1358 = vcombine.high %v1333, %v1349
          %v1360 = vunpack.c.l.s4 1934713408
          %v1361 = vunpack.c.0.s8 %v1360
          %v1362 = vlaneseq
          %v1363 = vshrl.u32 %v1362, 7
          %v1364 = vsub.s32 %v1361, %v1363
          %v1365 = vrot.slane %v1357, %v1364
          %v1367 = vunpack.c.l.s4 1934713408
          %v1368 = vunpack.c.0.s8 %v1367
          %v1369 = vlaneseq
          %v1370 = vshrl.u32 %v1369, 7
          %v1371 = vsub.s32 %v1368, %v1370
          %v1372 = vrot.slane %v1358, %v1371
          %v1373 = vcombine.low %v1340, %v1356
          %v1374 = vcombine.high %v1340, %v1356
          %v1376 = vunpack.c.l.s4 1934713408
          %v1377 = vunpack.c.0.s8 %v1376
          %v1378 = vlaneseq
          %v1379 = vshrl.u32 %v1378, 7
          %v1380 = vsub.s32 %v1377, %v1379
          %v1381 = vrot.slane %v1373, %v1380
          %v1383 = vunpack.c.l.s4 1934713408
          %v1384 = vunpack.c.0.s8 %v1383
          %v1385 = vlaneseq
          %v1386 = vshrl.u32 %v1385, 7
          %v1387 = vsub.s32 %v1384, %v1386
          %v1388 = vrot.slane %v1374, %v1387
          %v1389 = vcombine.high %v1365, 0.0
          %v1390 = vcombine.high %v1372, 0.0
          %v1391 = vcombine.high %v1381, 0.0
          %v1392 = vcombine.high %v1388, 0.0
          %v1393 = vcombine.low %v1148, %v1164
          %v1394 = vcombine.high %v1148, %v1164
          %v1396 = vunpack.c.l.s4 1983009808
          %v1397 = vunpack.c.0.s8 %v1396
          %v1398 = vlaneseq
          %v1399 = vshrl.u32 %v1398, 7
          %v1400 = vsub.s32 %v1397, %v1399
          %v1401 = vrot.slane %v1393, %v1400
          %v1403 = vunpack.c.l.s4 1983009808
          %v1404 = vunpack.c.0.s8 %v1403
          %v1405 = vlaneseq
          %v1406 = vshrl.u32 %v1405, 7
          %v1407 = vsub.s32 %v1404, %v1406
          %v1408 = vrot.slane %v1394, %v1407
          %v1409 = vcombine.low %v1156, %v1172
          %v1410 = vcombine.high %v1156, %v1172
          %v1412 = vunpack.c.l.s4 1983009808
          %v1413 = vunpack.c.0.s8 %v1412
          %v1414 = vlaneseq
          %v1415 = vshrl.u32 %v1414, 7
          %v1416 = vsub.s32 %v1413, %v1415
          %v1417 = vrot.slane %v1409, %v1416
          %v1419 = vunpack.c.l.s4 1983009808
          %v1420 = vunpack.c.0.s8 %v1419
          %v1421 = vlaneseq
          %v1422 = vshrl.u32 %v1421, 7
          %v1423 = vsub.s32 %v1420, %v1422
          %v1424 = vrot.slane %v1410, %v1423
          %v1425 = vcombine.low %v1401, %v1417
          %v1426 = vcombine.high %v1401, %v1417
          %v1428 = vunpack.c.l.s4 1934713408
          %v1429 = vunpack.c.0.s8 %v1428
          %v1430 = vlaneseq
          %v1431 = vshrl.u32 %v1430, 7
          %v1432 = vsub.s32 %v1429, %v1431
          %v1433 = vrot.slane %v1425, %v1432
          %v1435 = vunpack.c.l.s4 1934713408
          %v1436 = vunpack.c.0.s8 %v1435
          %v1437 = vlaneseq
          %v1438 = vshrl.u32 %v1437, 7
          %v1439 = vsub.s32 %v1436, %v1438
          %v1440 = vrot.slane %v1426, %v1439
          %v1441 = vcombine.low %v1408, %v1424
          %v1442 = vcombine.high %v1408, %v1424
          %v1444 = vunpack.c.l.s4 1934713408
          %v1445 = vunpack.c.0.s8 %v1444
          %v1446 = vlaneseq
          %v1447 = vshrl.u32 %v1446, 7
          %v1448 = vsub.s32 %v1445, %v1447
          %v1449 = vrot.slane %v1441, %v1448
          %v1451 = vunpack.c.l.s4 1934713408
          %v1452 = vunpack.c.0.s8 %v1451
          %v1453 = vlaneseq
          %v1454 = vshrl.u32 %v1453, 7
          %v1455 = vsub.s32 %v1452, %v1454
          %v1456 = vrot.slane %v1442, %v1455
          %v1457 = vcombine.high %v1433, 0.0
          %v1458 = vcombine.high %v1440, 0.0
          %v1459 = vcombine.high %v1449, 0.0
          %v1460 = vcombine.high %v1456, 0.0
          %v1461 = vcombine.low %v909, %v916
          %v1463 = vunpack.c.l.s4 1983009808
          %v1464 = vunpack.c.0.s8 %v1463
          %v1465 = vlaneseq
          %v1466 = vshrl.u32 %v1465, 7
          %v1467 = vsub.s32 %v1464, %v1466
          %v1468 = vrot.slane %v1461, %v1467
          %v1469 = vcombine.low %v933, %v934
          %v1471 = vunpack.c.l.s4 1983009808
          %v1472 = vunpack.c.0.s8 %v1471
          %v1473 = vlaneseq
          %v1474 = vshrl.u32 %v1473, 7
          %v1475 = vsub.s32 %v1472, %v1474
          %v1476 = vrot.slane %v1469, %v1475
          %v1477 = vcombine.low %v925, %v932
          %v1479 = vunpack.c.l.s4 1983009808
          %v1480 = vunpack.c.0.s8 %v1479
          %v1481 = vlaneseq
          %v1482 = vshrl.u32 %v1481, 7
          %v1483 = vsub.s32 %v1480, %v1482
          %v1484 = vrot.slane %v1477, %v1483
          %v1485 = vcombine.low %v935, %v936
          %v1487 = vunpack.c.l.s4 1983009808
          %v1488 = vunpack.c.0.s8 %v1487
          %v1489 = vlaneseq
          %v1490 = vshrl.u32 %v1489, 7
          %v1491 = vsub.s32 %v1488, %v1490
          %v1492 = vrot.slane %v1485, %v1491
          %v1493 = vcombine.low %v1468, %v1476
          %v1494 = vcombine.high %v1468, %v1476
          %v1496 = vunpack.c.l.s4 1934713408
          %v1497 = vunpack.c.0.s8 %v1496
          %v1498 = vlaneseq
          %v1499 = vshrl.u32 %v1498, 7
          %v1500 = vsub.s32 %v1497, %v1499
          %v1501 = vrot.slane %v1493, %v1500
          %v1503 = vunpack.c.l.s4 1934713408
          %v1504 = vunpack.c.0.s8 %v1503
          %v1505 = vlaneseq
          %v1506 = vshrl.u32 %v1505, 7
          %v1507 = vsub.s32 %v1504, %v1506
          %v1508 = vrot.slane %v1494, %v1507
          %v1509 = vcombine.low %v1484, %v1492
          %v1510 = vcombine.high %v1484, %v1492
          %v1512 = vunpack.c.l.s4 1934713408
          %v1513 = vunpack.c.0.s8 %v1512
          %v1514 = vlaneseq
          %v1515 = vshrl.u32 %v1514, 7
          %v1516 = vsub.s32 %v1513, %v1515
          %v1517 = vrot.slane %v1509, %v1516
          %v1519 = vunpack.c.l.s4 1934713408
          %v1520 = vunpack.c.0.s8 %v1519
          %v1521 = vlaneseq
          %v1522 = vshrl.u32 %v1521, 7
          %v1523 = vsub.s32 %v1520, %v1522
          %v1524 = vrot.slane %v1510, %v1523
          %v1525 = vcombine.low %v1501, %v1517
          %v1526 = vcombine.high %v1501, %v1517
          %v1527 = vcombine.low %v1508, %v1524
          %v1528 = vcombine.high %v1508, %v1524
          %v1529 = vcombine.low %v977, %v984
          %v1531 = vunpack.c.l.s4 1983009808
          %v1532 = vunpack.c.0.s8 %v1531
          %v1533 = vlaneseq
          %v1534 = vshrl.u32 %v1533, 7
          %v1535 = vsub.s32 %v1532, %v1534
          %v1536 = vrot.slane %v1529, %v1535
          %v1537 = vcombine.low %v1001, %v1002
          %v1539 = vunpack.c.l.s4 1983009808
          %v1540 = vunpack.c.0.s8 %v1539
          %v1541 = vlaneseq
          %v1542 = vshrl.u32 %v1541, 7
          %v1543 = vsub.s32 %v1540, %v1542
          %v1544 = vrot.slane %v1537, %v1543
          %v1545 = vcombine.low %v993, %v1000
          %v1547 = vunpack.c.l.s4 1983009808
          %v1548 = vunpack.c.0.s8 %v1547
          %v1549 = vlaneseq
          %v1550 = vshrl.u32 %v1549, 7
          %v1551 = vsub.s32 %v1548, %v1550
          %v1552 = vrot.slane %v1545, %v1551
          %v1553 = vcombine.low %v1003, %v1004
          %v1555 = vunpack.c.l.s4 1983009808
          %v1556 = vunpack.c.0.s8 %v1555
          %v1557 = vlaneseq
          %v1558 = vshrl.u32 %v1557, 7
          %v1559 = vsub.s32 %v1556, %v1558
          %v1560 = vrot.slane %v1553, %v1559
          %v1561 = vcombine.low %v1536, %v1544
          %v1562 = vcombine.high %v1536, %v1544
          %v1564 = vunpack.c.l.s4 1934713408
          %v1565 = vunpack.c.0.s8 %v1564
          %v1566 = vlaneseq
          %v1567 = vshrl.u32 %v1566, 7
          %v1568 = vsub.s32 %v1565, %v1567
          %v1569 = vrot.slane %v1561, %v1568
          %v1571 = vunpack.c.l.s4 1934713408
          %v1572 = vunpack.c.0.s8 %v1571
          %v1573 = vlaneseq
          %v1574 = vshrl.u32 %v1573, 7
          %v1575 = vsub.s32 %v1572, %v1574
          %v1576 = vrot.slane %v1562, %v1575
          %v1577 = vcombine.low %v1552, %v1560
          %v1578 = vcombine.high %v1552, %v1560
          %v1580 = vunpack.c.l.s4 1934713408
          %v1581 = vunpack.c.0.s8 %v1580
          %v1582 = vlaneseq
          %v1583 = vshrl.u32 %v1582, 7
          %v1584 = vsub.s32 %v1581, %v1583
          %v1585 = vrot.slane %v1577, %v1584
          %v1587 = vunpack.c.l.s4 1934713408
          %v1588 = vunpack.c.0.s8 %v1587
          %v1589 = vlaneseq
          %v1590 = vshrl.u32 %v1589, 7
          %v1591 = vsub.s32 %v1588, %v1590
          %v1592 = vrot.slane %v1578, %v1591
          %v1593 = vcombine.low %v1569, %v1585
          %v1594 = vcombine.high %v1569, %v1585
          %v1595 = vcombine.low %v1576, %v1592
          %v1596 = vcombine.high %v1576, %v1592
          %v1597 = vcombine.low %v1045, %v1052
          %v1599 = vunpack.c.l.s4 1983009808
          %v1600 = vunpack.c.0.s8 %v1599
          %v1601 = vlaneseq
          %v1602 = vshrl.u32 %v1601, 7
          %v1603 = vsub.s32 %v1600, %v1602
          %v1604 = vrot.slane %v1597, %v1603
          %v1605 = vcombine.low %v1069, %v1070
          %v1607 = vunpack.c.l.s4 1983009808
          %v1608 = vunpack.c.0.s8 %v1607
          %v1609 = vlaneseq
          %v1610 = vshrl.u32 %v1609, 7
          %v1611 = vsub.s32 %v1608, %v1610
          %v1612 = vrot.slane %v1605, %v1611
          %v1613 = vcombine.low %v1061, %v1068
          %v1615 = vunpack.c.l.s4 1983009808
          %v1616 = vunpack.c.0.s8 %v1615
          %v1617 = vlaneseq
          %v1618 = vshrl.u32 %v1617, 7
          %v1619 = vsub.s32 %v1616, %v1618
          %v1620 = vrot.slane %v1613, %v1619
          %v1621 = vcombine.low %v1071, %v1072
          %v1623 = vunpack.c.l.s4 1983009808
          %v1624 = vunpack.c.0.s8 %v1623
          %v1625 = vlaneseq
          %v1626 = vshrl.u32 %v1625, 7
          %v1627 = vsub.s32 %v1624, %v1626
          %v1628 = vrot.slane %v1621, %v1627
          %v1629 = vcombine.low %v1604, %v1612
          %v1630 = vcombine.high %v1604, %v1612
          %v1632 = vunpack.c.l.s4 1934713408
          %v1633 = vunpack.c.0.s8 %v1632
          %v1634 = vlaneseq
          %v1635 = vshrl.u32 %v1634, 7
          %v1636 = vsub.s32 %v1633, %v1635
          %v1637 = vrot.slane %v1629, %v1636
          %v1639 = vunpack.c.l.s4 1934713408
          %v1640 = vunpack.c.0.s8 %v1639
          %v1641 = vlaneseq
          %v1642 = vshrl.u32 %v1641, 7
          %v1643 = vsub.s32 %v1640, %v1642
          %v1644 = vrot.slane %v1630, %v1643
          %v1645 = vcombine.low %v1620, %v1628
          %v1646 = vcombine.high %v1620, %v1628
          %v1648 = vunpack.c.l.s4 1934713408
          %v1649 = vunpack.c.0.s8 %v1648
          %v1650 = vlaneseq
          %v1651 = vshrl.u32 %v1650, 7
          %v1652 = vsub.s32 %v1649, %v1651
          %v1653 = vrot.slane %v1645, %v1652
          %v1655 = vunpack.c.l.s4 1934713408
          %v1656 = vunpack.c.0.s8 %v1655
          %v1657 = vlaneseq
          %v1658 = vshrl.u32 %v1657, 7
          %v1659 = vsub.s32 %v1656, %v1658
          %v1660 = vrot.slane %v1646, %v1659
          %v1661 = vcombine.low %v1637, %v1653
          %v1662 = vcombine.high %v1637, %v1653
          %v1663 = vcombine.low %v1644, %v1660
          %v1664 = vcombine.high %v1644, %v1660
          %v1665 = vcombine.low %v1113, %v1120
          %v1667 = vunpack.c.l.s4 1983009808
          %v1668 = vunpack.c.0.s8 %v1667
          %v1669 = vlaneseq
          %v1670 = vshrl.u32 %v1669, 7
          %v1671 = vsub.s32 %v1668, %v1670
          %v1672 = vrot.slane %v1665, %v1671
          %v1673 = vcombine.low %v1137, %v1138
          %v1675 = vunpack.c.l.s4 1983009808
          %v1676 = vunpack.c.0.s8 %v1675
          %v1677 = vlaneseq
          %v1678 = vshrl.u32 %v1677, 7
          %v1679 = vsub.s32 %v1676, %v1678
          %v1680 = vrot.slane %v1673, %v1679
          %v1681 = vcombine.low %v1129, %v1136
          %v1683 = vunpack.c.l.s4 1983009808
          %v1684 = vunpack.c.0.s8 %v1683
          %v1685 = vlaneseq
          %v1686 = vshrl.u32 %v1685, 7
          %v1687 = vsub.s32 %v1684, %v1686
          %v1688 = vrot.slane %v1681, %v1687
          %v1689 = vcombine.low %v1139, %v1140
          %v1691 = vunpack.c.l.s4 1983009808
          %v1692 = vunpack.c.0.s8 %v1691
          %v1693 = vlaneseq
          %v1694 = vshrl.u32 %v1693, 7
          %v1695 = vsub.s32 %v1692, %v1694
          %v1696 = vrot.slane %v1689, %v1695
          %v1697 = vcombine.low %v1672, %v1680
          %v1698 = vcombine.high %v1672, %v1680
          %v1700 = vunpack.c.l.s4 1934713408
          %v1701 = vunpack.c.0.s8 %v1700
          %v1702 = vlaneseq
          %v1703 = vshrl.u32 %v1702, 7
          %v1704 = vsub.s32 %v1701, %v1703
          %v1705 = vrot.slane %v1697, %v1704
          %v1707 = vunpack.c.l.s4 1934713408
          %v1708 = vunpack.c.0.s8 %v1707
          %v1709 = vlaneseq
          %v1710 = vshrl.u32 %v1709, 7
          %v1711 = vsub.s32 %v1708, %v1710
          %v1712 = vrot.slane %v1698, %v1711
          %v1713 = vcombine.low %v1688, %v1696
          %v1714 = vcombine.high %v1688, %v1696
          %v1716 = vunpack.c.l.s4 1934713408
          %v1717 = vunpack.c.0.s8 %v1716
          %v1718 = vlaneseq
          %v1719 = vshrl.u32 %v1718, 7
          %v1720 = vsub.s32 %v1717, %v1719
          %v1721 = vrot.slane %v1713, %v1720
          %v1723 = vunpack.c.l.s4 1934713408
          %v1724 = vunpack.c.0.s8 %v1723
          %v1725 = vlaneseq
          %v1726 = vshrl.u32 %v1725, 7
          %v1727 = vsub.s32 %v1724, %v1726
          %v1728 = vrot.slane %v1714, %v1727
          %v1729 = vcombine.low %v1705, %v1721
          %v1730 = vcombine.high %v1705, %v1721
          %v1731 = vcombine.low %v1712, %v1728
          %v1732 = vcombine.high %v1712, %v1728
          %vm1733 = vcmask 64512
          %1734 = vst.msk [vmem:[#allocation2] sm:$0xff] %vm1733, %v1525
          %1735 = vst.msk [vmem:[#allocation2 + $0x8] sm:$0xff] %vm1733, %v1593
          %1736 = vst.msk [vmem:[#allocation2 + $0x10] sm:$0xff] %vm1733, %v1661
          %1737 = vst.msk [vmem:[#allocation2 + $0x18] sm:$0xff] %vm1733, %v1729
          %1738 = vst.msk [vmem:[#allocation2 + $0x20] sm:$0xff] %vm1733, %v1526
          %1739 = vst.msk [vmem:[#allocation2 + $0x28] sm:$0xff] %vm1733, %v1594
          %1740 = vst.msk [vmem:[#allocation2 + $0x30] sm:$0xff] %vm1733, %v1662
          %1741 = vst.msk [vmem:[#allocation2 + $0x38] sm:$0xff] %vm1733, %v1730
          %1742 = vst.msk [vmem:[#allocation2 + $0x40] sm:$0xff] %vm1733, %v1527
          %1743 = vst.msk [vmem:[#allocation2 + $0x48] sm:$0xff] %vm1733, %v1595
          %1744 = vst.msk [vmem:[#allocation2 + $0x50] sm:$0xff] %vm1733, %v1663
          %1745 = vst.msk [vmem:[#allocation2 + $0x58] sm:$0xff] %vm1733, %v1731
          %1746 = vst.msk [vmem:[#allocation2 + $0x60] sm:$0xff] %vm1733, %v1528
          %1747 = vst.msk [vmem:[#allocation2 + $0x68] sm:$0xff] %vm1733, %v1596
          %1748 = vst.msk [vmem:[#allocation2 + $0x70] sm:$0xff] %vm1733, %v1664
          %1749 = vst.msk [vmem:[#allocation2 + $0x78] sm:$0xff] %vm1733, %v1732
          %v1750 = vcombine.low %v1229, %v1236
          %v1752 = vunpack.c.l.s4 1983009808
          %v1753 = vunpack.c.0.s8 %v1752
          %v1754 = vlaneseq
          %v1755 = vshrl.u32 %v1754, 7
          %v1756 = vsub.s32 %v1753, %v1755
          %v1757 = vrot.slane %v1750, %v1756
          %v1758 = vcombine.low %v1253, %v1254
          %v1760 = vunpack.c.l.s4 1983009808
          %v1761 = vunpack.c.0.s8 %v1760
          %v1762 = vlaneseq
          %v1763 = vshrl.u32 %v1762, 7
          %v1764 = vsub.s32 %v1761, %v1763
          %v1765 = vrot.slane %v1758, %v1764
          %v1766 = vcombine.low %v1245, %v1252
          %v1768 = vunpack.c.l.s4 1983009808
          %v1769 = vunpack.c.0.s8 %v1768
          %v1770 = vlaneseq
          %v1771 = vshrl.u32 %v1770, 7
          %v1772 = vsub.s32 %v1769, %v1771
          %v1773 = vrot.slane %v1766, %v1772
          %v1774 = vcombine.low %v1255, %v1256
          %v1776 = vunpack.c.l.s4 1983009808
          %v1777 = vunpack.c.0.s8 %v1776
          %v1778 = vlaneseq
          %v1779 = vshrl.u32 %v1778, 7
          %v1780 = vsub.s32 %v1777, %v1779
          %v1781 = vrot.slane %v1774, %v1780
          %v1782 = vcombine.low %v1757, %v1765
          %v1783 = vcombine.high %v1757, %v1765
          %v1785 = vunpack.c.l.s4 1934713408
          %v1786 = vunpack.c.0.s8 %v1785
          %v1787 = vlaneseq
          %v1788 = vshrl.u32 %v1787, 7
          %v1789 = vsub.s32 %v1786, %v1788
          %v1790 = vrot.slane %v1782, %v1789
          %v1792 = vunpack.c.l.s4 1934713408
          %v1793 = vunpack.c.0.s8 %v1792
          %v1794 = vlaneseq
          %v1795 = vshrl.u32 %v1794, 7
          %v1796 = vsub.s32 %v1793, %v1795
          %v1797 = vrot.slane %v1783, %v1796
          %v1798 = vcombine.low %v1773, %v1781
          %v1799 = vcombine.high %v1773, %v1781
          %v1801 = vunpack.c.l.s4 1934713408
          %v1802 = vunpack.c.0.s8 %v1801
          %v1803 = vlaneseq
          %v1804 = vshrl.u32 %v1803, 7
          %v1805 = vsub.s32 %v1802, %v1804
          %v1806 = vrot.slane %v1798, %v1805
          %v1808 = vunpack.c.l.s4 1934713408
          %v1809 = vunpack.c.0.s8 %v1808
          %v1810 = vlaneseq
          %v1811 = vshrl.u32 %v1810, 7
          %v1812 = vsub.s32 %v1809, %v1811
          %v1813 = vrot.slane %v1799, %v1812
          %v1814 = vcombine.low %v1790, %v1806
          %v1815 = vcombine.high %v1790, %v1806
          %v1816 = vcombine.low %v1797, %v1813
          %v1817 = vcombine.high %v1797, %v1813
          %v1818 = vcombine.low %v1297, %v1304
          %v1820 = vunpack.c.l.s4 1983009808
          %v1821 = vunpack.c.0.s8 %v1820
          %v1822 = vlaneseq
          %v1823 = vshrl.u32 %v1822, 7
          %v1824 = vsub.s32 %v1821, %v1823
          %v1825 = vrot.slane %v1818, %v1824
          %v1826 = vcombine.low %v1321, %v1322
          %v1828 = vunpack.c.l.s4 1983009808
          %v1829 = vunpack.c.0.s8 %v1828
          %v1830 = vlaneseq
          %v1831 = vshrl.u32 %v1830, 7
          %v1832 = vsub.s32 %v1829, %v1831
          %v1833 = vrot.slane %v1826, %v1832
          %v1834 = vcombine.low %v1313, %v1320
          %v1836 = vunpack.c.l.s4 1983009808
          %v1837 = vunpack.c.0.s8 %v1836
          %v1838 = vlaneseq
          %v1839 = vshrl.u32 %v1838, 7
          %v1840 = vsub.s32 %v1837, %v1839
          %v1841 = vrot.slane %v1834, %v1840
          %v1842 = vcombine.low %v1323, %v1324
          %v1844 = vunpack.c.l.s4 1983009808
          %v1845 = vunpack.c.0.s8 %v1844
          %v1846 = vlaneseq
          %v1847 = vshrl.u32 %v1846, 7
          %v1848 = vsub.s32 %v1845, %v1847
          %v1849 = vrot.slane %v1842, %v1848
          %v1850 = vcombine.low %v1825, %v1833
          %v1851 = vcombine.high %v1825, %v1833
          %v1853 = vunpack.c.l.s4 1934713408
          %v1854 = vunpack.c.0.s8 %v1853
          %v1855 = vlaneseq
          %v1856 = vshrl.u32 %v1855, 7
          %v1857 = vsub.s32 %v1854, %v1856
          %v1858 = vrot.slane %v1850, %v1857
          %v1860 = vunpack.c.l.s4 1934713408
          %v1861 = vunpack.c.0.s8 %v1860
          %v1862 = vlaneseq
          %v1863 = vshrl.u32 %v1862, 7
          %v1864 = vsub.s32 %v1861, %v1863
          %v1865 = vrot.slane %v1851, %v1864
          %v1866 = vcombine.low %v1841, %v1849
          %v1867 = vcombine.high %v1841, %v1849
          %v1869 = vunpack.c.l.s4 1934713408
          %v1870 = vunpack.c.0.s8 %v1869
          %v1871 = vlaneseq
          %v1872 = vshrl.u32 %v1871, 7
          %v1873 = vsub.s32 %v1870, %v1872
          %v1874 = vrot.slane %v1866, %v1873
          %v1876 = vunpack.c.l.s4 1934713408
          %v1877 = vunpack.c.0.s8 %v1876
          %v1878 = vlaneseq
          %v1879 = vshrl.u32 %v1878, 7
          %v1880 = vsub.s32 %v1877, %v1879
          %v1881 = vrot.slane %v1867, %v1880
          %v1882 = vcombine.low %v1858, %v1874
          %v1883 = vcombine.high %v1858, %v1874
          %v1884 = vcombine.low %v1865, %v1881
          %v1885 = vcombine.high %v1865, %v1881
          %v1886 = vcombine.low %v1365, %v1372
          %v1888 = vunpack.c.l.s4 1983009808
          %v1889 = vunpack.c.0.s8 %v1888
          %v1890 = vlaneseq
          %v1891 = vshrl.u32 %v1890, 7
          %v1892 = vsub.s32 %v1889, %v1891
          %v1893 = vrot.slane %v1886, %v1892
          %v1894 = vcombine.low %v1389, %v1390
          %v1896 = vunpack.c.l.s4 1983009808
          %v1897 = vunpack.c.0.s8 %v1896
          %v1898 = vlaneseq
          %v1899 = vshrl.u32 %v1898, 7
          %v1900 = vsub.s32 %v1897, %v1899
          %v1901 = vrot.slane %v1894, %v1900
          %v1902 = vcombine.low %v1381, %v1388
          %v1904 = vunpack.c.l.s4 1983009808
          %v1905 = vunpack.c.0.s8 %v1904
          %v1906 = vlaneseq
          %v1907 = vshrl.u32 %v1906, 7
          %v1908 = vsub.s32 %v1905, %v1907
          %v1909 = vrot.slane %v1902, %v1908
          %v1910 = vcombine.low %v1391, %v1392
          %v1912 = vunpack.c.l.s4 1983009808
          %v1913 = vunpack.c.0.s8 %v1912
          %v1914 = vlaneseq
          %v1915 = vshrl.u32 %v1914, 7
          %v1916 = vsub.s32 %v1913, %v1915
          %v1917 = vrot.slane %v1910, %v1916
          %v1918 = vcombine.low %v1893, %v1901
          %v1919 = vcombine.high %v1893, %v1901
          %v1921 = vunpack.c.l.s4 1934713408
          %v1922 = vunpack.c.0.s8 %v1921
          %v1923 = vlaneseq
          %v1924 = vshrl.u32 %v1923, 7
          %v1925 = vsub.s32 %v1922, %v1924
          %v1926 = vrot.slane %v1918, %v1925
          %v1928 = vunpack.c.l.s4 1934713408
          %v1929 = vunpack.c.0.s8 %v1928
          %v1930 = vlaneseq
          %v1931 = vshrl.u32 %v1930, 7
          %v1932 = vsub.s32 %v1929, %v1931
          %v1933 = vrot.slane %v1919, %v1932
          %v1934 = vcombine.low %v1909, %v1917
          %v1935 = vcombine.high %v1909, %v1917
          %v1937 = vunpack.c.l.s4 1934713408
          %v1938 = vunpack.c.0.s8 %v1937
          %v1939 = vlaneseq
          %v1940 = vshrl.u32 %v1939, 7
          %v1941 = vsub.s32 %v1938, %v1940
          %v1942 = vrot.slane %v1934, %v1941
          %v1944 = vunpack.c.l.s4 1934713408
          %v1945 = vunpack.c.0.s8 %v1944
          %v1946 = vlaneseq
          %v1947 = vshrl.u32 %v1946, 7
          %v1948 = vsub.s32 %v1945, %v1947
          %v1949 = vrot.slane %v1935, %v1948
          %v1950 = vcombine.low %v1926, %v1942
          %v1951 = vcombine.high %v1926, %v1942
          %v1952 = vcombine.low %v1933, %v1949
          %v1953 = vcombine.high %v1933, %v1949
          %v1954 = vcombine.low %v1433, %v1440
          %v1956 = vunpack.c.l.s4 1983009808
          %v1957 = vunpack.c.0.s8 %v1956
          %v1958 = vlaneseq
          %v1959 = vshrl.u32 %v1958, 7
          %v1960 = vsub.s32 %v1957, %v1959
          %v1961 = vrot.slane %v1954, %v1960
          %v1962 = vcombine.low %v1457, %v1458
          %v1964 = vunpack.c.l.s4 1983009808
          %v1965 = vunpack.c.0.s8 %v1964
          %v1966 = vlaneseq
          %v1967 = vshrl.u32 %v1966, 7
          %v1968 = vsub.s32 %v1965, %v1967
          %v1969 = vrot.slane %v1962, %v1968
          %v1970 = vcombine.low %v1449, %v1456
          %v1972 = vunpack.c.l.s4 1983009808
          %v1973 = vunpack.c.0.s8 %v1972
          %v1974 = vlaneseq
          %v1975 = vshrl.u32 %v1974, 7
          %v1976 = vsub.s32 %v1973, %v1975
          %v1977 = vrot.slane %v1970, %v1976
          %v1978 = vcombine.low %v1459, %v1460
          %v1980 = vunpack.c.l.s4 1983009808
          %v1981 = vunpack.c.0.s8 %v1980
          %v1982 = vlaneseq
          %v1983 = vshrl.u32 %v1982, 7
          %v1984 = vsub.s32 %v1981, %v1983
          %v1985 = vrot.slane %v1978, %v1984
          %v1986 = vcombine.low %v1961, %v1969
          %v1987 = vcombine.high %v1961, %v1969
          %v1989 = vunpack.c.l.s4 1934713408
          %v1990 = vunpack.c.0.s8 %v1989
          %v1991 = vlaneseq
          %v1992 = vshrl.u32 %v1991, 7
          %v1993 = vsub.s32 %v1990, %v1992
          %v1994 = vrot.slane %v1986, %v1993
          %v1996 = vunpack.c.l.s4 1934713408
          %v1997 = vunpack.c.0.s8 %v1996
          %v1998 = vlaneseq
          %v1999 = vshrl.u32 %v1998, 7
          %v2000 = vsub.s32 %v1997, %v1999
          %v2001 = vrot.slane %v1987, %v2000
          %v2002 = vcombine.low %v1977, %v1985
          %v2003 = vcombine.high %v1977, %v1985
          %v2005 = vunpack.c.l.s4 1934713408
          %v2006 = vunpack.c.0.s8 %v2005
          %v2007 = vlaneseq
          %v2008 = vshrl.u32 %v2007, 7
          %v2009 = vsub.s32 %v2006, %v2008
          %v2010 = vrot.slane %v2002, %v2009
          %v2012 = vunpack.c.l.s4 1934713408
          %v2013 = vunpack.c.0.s8 %v2012
          %v2014 = vlaneseq
          %v2015 = vshrl.u32 %v2014, 7
          %v2016 = vsub.s32 %v2013, %v2015
          %v2017 = vrot.slane %v2003, %v2016
          %v2018 = vcombine.low %v1994, %v2010
          %v2019 = vcombine.high %v1994, %v2010
          %v2020 = vcombine.low %v2001, %v2017
          %v2021 = vcombine.high %v2001, %v2017
          %2022 = vst.msk [vmem:[#allocation3] sm:$0xff] %vm1733, %v1814
          %2023 = vst.msk [vmem:[#allocation3 + $0x8] sm:$0xff] %vm1733, %v1882
          %2024 = vst.msk [vmem:[#allocation3 + $0x10] sm:$0xff] %vm1733, %v1950
          %2025 = vst.msk [vmem:[#allocation3 + $0x18] sm:$0xff] %vm1733, %v2018
          %2026 = vst.msk [vmem:[#allocation3 + $0x20] sm:$0xff] %vm1733, %v1815
          %2027 = vst.msk [vmem:[#allocation3 + $0x28] sm:$0xff] %vm1733, %v1883
          %2028 = vst.msk [vmem:[#allocation3 + $0x30] sm:$0xff] %vm1733, %v1951
          %2029 = vst.msk [vmem:[#allocation3 + $0x38] sm:$0xff] %vm1733, %v2019
          %2030 = vst.msk [vmem:[#allocation3 + $0x40] sm:$0xff] %vm1733, %v1816
          %2031 = vst.msk [vmem:[#allocation3 + $0x48] sm:$0xff] %vm1733, %v1884
          %2032 = vst.msk [vmem:[#allocation3 + $0x50] sm:$0xff] %vm1733, %v1952
          %2033 = vst.msk [vmem:[#allocation3 + $0x58] sm:$0xff] %vm1733, %v2020
          %2034 = vst.msk [vmem:[#allocation3 + $0x60] sm:$0xff] %vm1733, %v1817
          %2035 = vst.msk [vmem:[#allocation3 + $0x68] sm:$0xff] %vm1733, %v1885
          %2036 = vst.msk [vmem:[#allocation3 + $0x70] sm:$0xff] %vm1733, %v1953
          %2037 = vst.msk [vmem:[#allocation3 + $0x78] sm:$0xff] %vm1733, %v2021
        $region116: #{tpu_custom_call.1} parent=87 // pred_fallthru
          _
        %v2038 = vld [vmem:[%s3] sm:$0xff]
        %v2039 = vld [vmem:[%s3 + $0x8] sm:$0xff]
        %v2040 = vld [vmem:[%s3 + $0x10] sm:$0xff]
        %v2041 = vld [vmem:[%s3 + $0x18] sm:$0xff]
        %v2042 = vld [vmem:[%s4] sm:$0x1]
        %v2044 = vlaneseq
        %v2045 = vshrl.u32 %v2044, 7
        %v2046 = vsub.s32 0, %v2045
        %v2047 = vrot.slane %v2042, %v2046
        %vm2049 = vcmask 261120
        %v2051 = vsel %vm2049, %v706, 0
        %v2054 = vsel %vm2049, %v707, 0
        %2056 = vmatprep.subr.mxu0 0.0
        %2057 = vmatpush1.msra.mxu0 %v2038
        %2058 = vmatprep.subr.mxu0 0.0
        %2059 = vmatpush1.msra.mxu0 %v2039
        %2060 = vmatprep.subr.mxu0 0.0
        %2061 = vmatpush1.msra.mxu0 %v2040
        %2062 = vmatprep.subr.mxu0 0.0
        %2063 = vmatpush1.msra.mxu0 %v2041
        %2064 = vmatprep.subr.mxu0 0.0
        %2065 = vmatpush1.msra.mxu0 0.0
        %2066 = vmatprep.subr.mxu0 0.0
        %2067 = vmatpush1.msra.mxu0 0.0
        %2068 = vmatprep.subr.mxu0 0.0
        %2069 = vmatpush1.msra.mxu0 0.0
        %2070 = vmatprep.subr.mxu0 0.0
        %2071 = vmatpush1.msra.mxu0 0.0
        %2072 = vmatprep.subr.mxu0 0.0
        %2073 = vmatpush1.msra.mxu0 0.0
        %2074 = vmatprep.subr.mxu0 0.0
        %2075 = vmatpush1.msra.mxu0 0.0
        %2076 = vmatprep.subr.mxu0 0.0
        %2077 = vmatpush1.msra.mxu0 0.0
        %2078 = vmatprep.subr.mxu0 0.0
        %2079 = vmatpush1.msra.mxu0 0.0
        %2080 = vmatprep.subr.mxu0 0.0
        %2081 = vmatpush1.msra.mxu0 0.0
        %2082 = vmatprep.subr.mxu0 0.0
        %2083 = vmatpush1.msra.mxu0 0.0
        %2084 = vmatprep.subr.mxu0 0.0
        %2085 = vmatpush1.msra.mxu0 0.0
        %2086 = vmatprep.subr.mxu0 0.0
        %2087 = vmatpush1.msra.mxu0 0.0
        %2088 = vmatprep.subr.mxu0 0.0
        %2089 = vmatpush1.msra.mxu0 0.0
        %2090 = vmatprep.subr.mxu0 0.0
        %2091 = vmatpush1.msra.mxu0 0.0
        %2092 = vmatprep.subr.mxu0 0.0
        %2093 = vmatpush1.msra.mxu0 0.0
        %2094 = vmatprep.subr.mxu0 0.0
        %2095 = vmatpush1.msra.mxu0 0.0
        %2096 = vmatprep.subr.mxu0 0.0
        %2097 = vmatpush1.msra.mxu0 0.0
        %2098 = vmatprep.subr.mxu0 0.0
        %2099 = vmatpush1.msra.mxu0 0.0
        %2100 = vmatprep.subr.mxu0 0.0
        %2101 = vmatpush1.msra.mxu0 0.0
        %2102 = vmatprep.subr.mxu0 0.0
        %2103 = vmatpush1.msra.mxu0 0.0
        %2104 = vmatprep.subr.mxu0 0.0
        %2105 = vmatpush1.msra.mxu0 0.0
        %2106 = vmatprep.subr.mxu0 0.0
        %2107 = vmatpush1.msra.mxu0 0.0
        %2108 = vmatprep.subr.mxu0 0.0
        %2109 = vmatpush1.msra.mxu0 0.0
        %2110 = vmatprep.subr.mxu0 0.0
        %2111 = vmatpush1.msra.mxu0 0.0
        %2112 = vmatprep.subr.mxu0 0.0
        %2113 = vmatpush1.msra.mxu0 0.0
        %2114 = vmatprep.subr.mxu0 0.0
        %2115 = vmatpush1.msra.mxu0 0.0
        %2116 = vmatprep.subr.mxu0 0.0
        %2117 = vmatpush1.msra.mxu0 0.0
        %2118 = vmatprep.subr.mxu0 0.0
        %2119 = vmatpush1.msra.mxu0 0.0
        %2120 = vmatprep.mubr.f32.mxu0 0.0
        %2121 = vmatmul.mubr.f32.gmra.mrb[0].mxu0 %v2051
        %v2122 = vpop.f32.mrb[0].mxu0
        %v2123 = vadd.f32 %v2047, %v2122
        %v2124 = vpop.f32.mrb[0].mxu0
        %2125 = vmatprep.mubr.f32.mxu0 0.0
        %2126 = vmatmul.mubr.f32.gmra.mrb[0].mxu0 %v2054
        %v2127 = vpop.f32.mrb[0].mxu0
        %v2128 = vadd.f32 %v2047, %v2127
        %v2129 = vpop.f32.mrb[0].mxu0
        %2130 = vdwg.mxu0
        %2133 = vrot.lane.b32.xlu0 %v2123, 120
        %v2134 = vpop.permute.xlu0 %2133
        %2135 = vrot.lane.b32.xlu0 %v2128, 120
        %v2136 = vpop.permute.xlu0 %2135
        %2139 = vrot.lane.b32.xlu0 %v2123, 112
        %v2140 = vpop.permute.xlu0 %2139
        %2141 = vrot.lane.b32.xlu0 %v2128, 112
        %v2142 = vpop.permute.xlu0 %2141
        %2145 = vrot.lane.b32.xlu0 %v2123, 104
        %v2146 = vpop.permute.xlu0 %2145
        %2147 = vrot.lane.b32.xlu0 %v2128, 104
        %v2148 = vpop.permute.xlu0 %2147
        %v2151 = vcombine.low %v2123, %v2140
        %v2152 = vcombine.high %v2123, %v2140
        %v2154 = vunpack.c.l.s4 1983009808
        %v2155 = vunpack.c.0.s8 %v2154
        %v2156 = vlaneseq
        %v2157 = vshrl.u32 %v2156, 7
        %v2158 = vsub.s32 %v2155, %v2157
        %v2159 = vrot.slane %v2151, %v2158
        %v2161 = vunpack.c.l.s4 1983009808
        %v2162 = vunpack.c.0.s8 %v2161
        %v2163 = vlaneseq
        %v2164 = vshrl.u32 %v2163, 7
        %v2165 = vsub.s32 %v2162, %v2164
        %v2166 = vrot.slane %v2152, %v2165
        %v2167 = vcombine.low %v2134, %v2146
        %v2168 = vcombine.high %v2134, %v2146
        %v2170 = vunpack.c.l.s4 1983009808
        %v2171 = vunpack.c.0.s8 %v2170
        %v2172 = vlaneseq
        %v2173 = vshrl.u32 %v2172, 7
        %v2174 = vsub.s32 %v2171, %v2173
        %v2175 = vrot.slane %v2167, %v2174
        %v2177 = vunpack.c.l.s4 1983009808
        %v2178 = vunpack.c.0.s8 %v2177
        %v2179 = vlaneseq
        %v2180 = vshrl.u32 %v2179, 7
        %v2181 = vsub.s32 %v2178, %v2180
        %v2182 = vrot.slane %v2168, %v2181
        %v2183 = vcombine.low %v2159, %v2175
        %v2184 = vcombine.high %v2159, %v2175
        %v2186 = vunpack.c.l.s4 1934713408
        %v2187 = vunpack.c.0.s8 %v2186
        %v2188 = vlaneseq
        %v2189 = vshrl.u32 %v2188, 7
        %v2190 = vsub.s32 %v2187, %v2189
        %v2191 = vrot.slane %v2183, %v2190
        %v2193 = vunpack.c.l.s4 1934713408
        %v2194 = vunpack.c.0.s8 %v2193
        %v2195 = vlaneseq
        %v2196 = vshrl.u32 %v2195, 7
        %v2197 = vsub.s32 %v2194, %v2196
        %v2198 = vrot.slane %v2184, %v2197
        %v2199 = vcombine.low %v2166, %v2182
        %v2200 = vcombine.high %v2166, %v2182
        %v2202 = vunpack.c.l.s4 1934713408
        %v2203 = vunpack.c.0.s8 %v2202
        %v2204 = vlaneseq
        %v2205 = vshrl.u32 %v2204, 7
        %v2206 = vsub.s32 %v2203, %v2205
        %v2207 = vrot.slane %v2199, %v2206
        %v2209 = vunpack.c.l.s4 1934713408
        %v2210 = vunpack.c.0.s8 %v2209
        %v2211 = vlaneseq
        %v2212 = vshrl.u32 %v2211, 7
        %v2213 = vsub.s32 %v2210, %v2212
        %v2214 = vrot.slane %v2200, %v2213
        %v2215 = vcombine.high %v2191, 0.0
        %v2216 = vcombine.high %v2198, 0.0
        %v2217 = vcombine.high %v2207, 0.0
        %v2218 = vcombine.high %v2214, 0.0
        %v2219 = vcombine.low %v2128, %v2142
        %v2220 = vcombine.high %v2128, %v2142
        %v2222 = vunpack.c.l.s4 1983009808
        %v2223 = vunpack.c.0.s8 %v2222
        %v2224 = vlaneseq
        %v2225 = vshrl.u32 %v2224, 7
        %v2226 = vsub.s32 %v2223, %v2225
        %v2227 = vrot.slane %v2219, %v2226
        %v2229 = vunpack.c.l.s4 1983009808
        %v2230 = vunpack.c.0.s8 %v2229
        %v2231 = vlaneseq
        %v2232 = vshrl.u32 %v2231, 7
        %v2233 = vsub.s32 %v2230, %v2232
        %v2234 = vrot.slane %v2220, %v2233
        %v2235 = vcombine.low %v2136, %v2148
        %v2236 = vcombine.high %v2136, %v2148
        %v2238 = vunpack.c.l.s4 1983009808
        %v2239 = vunpack.c.0.s8 %v2238
        %v2240 = vlaneseq
        %v2241 = vshrl.u32 %v2240, 7
        %v2242 = vsub.s32 %v2239, %v2241
        %v2243 = vrot.slane %v2235, %v2242
        %v2245 = vunpack.c.l.s4 1983009808
        %v2246 = vunpack.c.0.s8 %v2245
        %v2247 = vlaneseq
        %v2248 = vshrl.u32 %v2247, 7
        %v2249 = vsub.s32 %v2246, %v2248
        %v2250 = vrot.slane %v2236, %v2249
        %v2251 = vcombine.low %v2227, %v2243
        %v2252 = vcombine.high %v2227, %v2243
        %v2254 = vunpack.c.l.s4 1934713408
        %v2255 = vunpack.c.0.s8 %v2254
        %v2256 = vlaneseq
        %v2257 = vshrl.u32 %v2256, 7
        %v2258 = vsub.s32 %v2255, %v2257
        %v2259 = vrot.slane %v2251, %v2258
        %v2261 = vunpack.c.l.s4 1934713408
        %v2262 = vunpack.c.0.s8 %v2261
        %v2263 = vlaneseq
        %v2264 = vshrl.u32 %v2263, 7
        %v2265 = vsub.s32 %v2262, %v2264
        %v2266 = vrot.slane %v2252, %v2265
        %v2267 = vcombine.low %v2234, %v2250
        %v2268 = vcombine.high %v2234, %v2250
        %v2270 = vunpack.c.l.s4 1934713408
        %v2271 = vunpack.c.0.s8 %v2270
        %v2272 = vlaneseq
        %v2273 = vshrl.u32 %v2272, 7
        %v2274 = vsub.s32 %v2271, %v2273
        %v2275 = vrot.slane %v2267, %v2274
        %v2277 = vunpack.c.l.s4 1934713408
        %v2278 = vunpack.c.0.s8 %v2277
        %v2279 = vlaneseq
        %v2280 = vshrl.u32 %v2279, 7
        %v2281 = vsub.s32 %v2278, %v2280
        %v2282 = vrot.slane %v2268, %v2281
        %v2283 = vcombine.high %v2259, 0.0
        %v2284 = vcombine.high %v2266, 0.0
        %v2285 = vcombine.high %v2275, 0.0
        %v2286 = vcombine.high %v2282, 0.0
        %v2287 = vcombine.low %v2191, %v2198
        %v2289 = vunpack.c.l.s4 1983009808
        %v2290 = vunpack.c.0.s8 %v2289
        %v2291 = vlaneseq
        %v2292 = vshrl.u32 %v2291, 7
        %v2293 = vsub.s32 %v2290, %v2292
        %v2294 = vrot.slane %v2287, %v2293
        %v2295 = vcombine.low %v2215, %v2216
        %v2297 = vunpack.c.l.s4 1983009808
        %v2298 = vunpack.c.0.s8 %v2297
        %v2299 = vlaneseq
        %v2300 = vshrl.u32 %v2299, 7
        %v2301 = vsub.s32 %v2298, %v2300
        %v2302 = vrot.slane %v2295, %v2301
        %v2303 = vcombine.low %v2207, %v2214
        %v2305 = vunpack.c.l.s4 1983009808
        %v2306 = vunpack.c.0.s8 %v2305
        %v2307 = vlaneseq
        %v2308 = vshrl.u32 %v2307, 7
        %v2309 = vsub.s32 %v2306, %v2308
        %v2310 = vrot.slane %v2303, %v2309
        %v2311 = vcombine.low %v2217, %v2218
        %v2313 = vunpack.c.l.s4 1983009808
        %v2314 = vunpack.c.0.s8 %v2313
        %v2315 = vlaneseq
        %v2316 = vshrl.u32 %v2315, 7
        %v2317 = vsub.s32 %v2314, %v2316
        %v2318 = vrot.slane %v2311, %v2317
        %v2319 = vcombine.low %v2294, %v2302
        %v2320 = vcombine.high %v2294, %v2302
        %v2322 = vunpack.c.l.s4 1934713408
        %v2323 = vunpack.c.0.s8 %v2322
        %v2324 = vlaneseq
        %v2325 = vshrl.u32 %v2324, 7
        %v2326 = vsub.s32 %v2323, %v2325
        %v2327 = vrot.slane %v2319, %v2326
        %v2329 = vunpack.c.l.s4 1934713408
        %v2330 = vunpack.c.0.s8 %v2329
        %v2331 = vlaneseq
        %v2332 = vshrl.u32 %v2331, 7
        %v2333 = vsub.s32 %v2330, %v2332
        %v2334 = vrot.slane %v2320, %v2333
        %v2335 = vcombine.low %v2310, %v2318
        %v2336 = vcombine.high %v2310, %v2318
        %v2338 = vunpack.c.l.s4 1934713408
        %v2339 = vunpack.c.0.s8 %v2338
        %v2340 = vlaneseq
        %v2341 = vshrl.u32 %v2340, 7
        %v2342 = vsub.s32 %v2339, %v2341
        %v2343 = vrot.slane %v2335, %v2342
        %v2345 = vunpack.c.l.s4 1934713408
        %v2346 = vunpack.c.0.s8 %v2345
        %v2347 = vlaneseq
        %v2348 = vshrl.u32 %v2347, 7
        %v2349 = vsub.s32 %v2346, %v2348
        %v2350 = vrot.slane %v2336, %v2349
        %v2351 = vcombine.low %v2327, %v2343
        %v2352 = vcombine.high %v2327, %v2343
        %v2353 = vcombine.low %v2334, %v2350
        %v2354 = vcombine.high %v2334, %v2350
        %v2355 = vcombine.low %v2259, %v2266
        %v2357 = vunpack.c.l.s4 1983009808
        %v2358 = vunpack.c.0.s8 %v2357
        %v2359 = vlaneseq
        %v2360 = vshrl.u32 %v2359, 7
        %v2361 = vsub.s32 %v2358, %v2360
        %v2362 = vrot.slane %v2355, %v2361
        %v2363 = vcombine.low %v2283, %v2284
        %v2365 = vunpack.c.l.s4 1983009808
        %v2366 = vunpack.c.0.s8 %v2365
        %v2367 = vlaneseq
        %v2368 = vshrl.u32 %v2367, 7
        %v2369 = vsub.s32 %v2366, %v2368
        %v2370 = vrot.slane %v2363, %v2369
        %v2371 = vcombine.low %v2275, %v2282
        %v2373 = vunpack.c.l.s4 1983009808
        %v2374 = vunpack.c.0.s8 %v2373
        %v2375 = vlaneseq
        %v2376 = vshrl.u32 %v2375, 7
        %v2377 = vsub.s32 %v2374, %v2376
        %v2378 = vrot.slane %v2371, %v2377
        %v2379 = vcombine.low %v2285, %v2286
        %v2381 = vunpack.c.l.s4 1983009808
        %v2382 = vunpack.c.0.s8 %v2381
        %v2383 = vlaneseq
        %v2384 = vshrl.u32 %v2383, 7
        %v2385 = vsub.s32 %v2382, %v2384
        %v2386 = vrot.slane %v2379, %v2385
        %v2387 = vcombine.low %v2362, %v2370
        %v2388 = vcombine.high %v2362, %v2370
        %v2390 = vunpack.c.l.s4 1934713408
        %v2391 = vunpack.c.0.s8 %v2390
        %v2392 = vlaneseq
        %v2393 = vshrl.u32 %v2392, 7
        %v2394 = vsub.s32 %v2391, %v2393
        %v2395 = vrot.slane %v2387, %v2394
        %v2397 = vunpack.c.l.s4 1934713408
        %v2398 = vunpack.c.0.s8 %v2397
        %v2399 = vlaneseq
        %v2400 = vshrl.u32 %v2399, 7
        %v2401 = vsub.s32 %v2398, %v2400
        %v2402 = vrot.slane %v2388, %v2401
        %v2403 = vcombine.low %v2378, %v2386
        %v2404 = vcombine.high %v2378, %v2386
        %v2406 = vunpack.c.l.s4 1934713408
        %v2407 = vunpack.c.0.s8 %v2406
        %v2408 = vlaneseq
        %v2409 = vshrl.u32 %v2408, 7
        %v2410 = vsub.s32 %v2407, %v2409
        %v2411 = vrot.slane %v2403, %v2410
        %v2413 = vunpack.c.l.s4 1934713408
        %v2414 = vunpack.c.0.s8 %v2413
        %v2415 = vlaneseq
        %v2416 = vshrl.u32 %v2415, 7
        %v2417 = vsub.s32 %v2414, %v2416
        %v2418 = vrot.slane %v2404, %v2417
        %v2419 = vcombine.low %v2395, %v2411
        %v2420 = vcombine.high %v2395, %v2411
        %v2421 = vcombine.low %v2402, %v2418
        %v2422 = vcombine.high %v2402, %v2418
        %v2423 = vld [vmem:[#allocation2] sm:$0xff]
        %v2424 = vld [vmem:[#allocation2 + $0x8] sm:$0xff]
        %v2425 = vld [vmem:[#allocation2 + $0x10] sm:$0xff]
        %v2426 = vld [vmem:[#allocation2 + $0x18] sm:$0xff]
        %v2427 = vld [vmem:[#allocation2 + $0x20] sm:$0xff]
        %v2428 = vld [vmem:[#allocation2 + $0x28] sm:$0xff]
        %v2429 = vld [vmem:[#allocation2 + $0x30] sm:$0xff]
        %v2430 = vld [vmem:[#allocation2 + $0x38] sm:$0xff]
        %v2431 = vld [vmem:[#allocation2 + $0x40] sm:$0xff]
        %v2432 = vld [vmem:[#allocation2 + $0x48] sm:$0xff]
        %v2433 = vld [vmem:[#allocation2 + $0x50] sm:$0xff]
        %v2434 = vld [vmem:[#allocation2 + $0x58] sm:$0xff]
        %v2435 = vld [vmem:[#allocation2 + $0x60] sm:$0xff]
        %v2436 = vld [vmem:[#allocation2 + $0x68] sm:$0xff]
        %v2437 = vld [vmem:[#allocation2 + $0x70] sm:$0xff]
        %v2438 = vld [vmem:[#allocation2 + $0x78] sm:$0xff]
        %v2439 = vld [vmem:[#allocation3] sm:$0xff]
        %v2440 = vld [vmem:[#allocation3 + $0x8] sm:$0xff]
        %v2441 = vld [vmem:[#allocation3 + $0x10] sm:$0xff]
        %v2442 = vld [vmem:[#allocation3 + $0x18] sm:$0xff]
        %v2443 = vld [vmem:[#allocation3 + $0x20] sm:$0xff]
        %v2444 = vld [vmem:[#allocation3 + $0x28] sm:$0xff]
        %v2445 = vld [vmem:[#allocation3 + $0x30] sm:$0xff]
        %v2446 = vld [vmem:[#allocation3 + $0x38] sm:$0xff]
        %v2447 = vld [vmem:[#allocation3 + $0x40] sm:$0xff]
        %v2448 = vld [vmem:[#allocation3 + $0x48] sm:$0xff]
        %v2449 = vld [vmem:[#allocation3 + $0x50] sm:$0xff]
        %v2450 = vld [vmem:[#allocation3 + $0x58] sm:$0xff]
        %v2451 = vld [vmem:[#allocation3 + $0x60] sm:$0xff]
        %v2452 = vld [vmem:[#allocation3 + $0x68] sm:$0xff]
        %v2453 = vld [vmem:[#allocation3 + $0x70] sm:$0xff]
        %v2454 = vld [vmem:[#allocation3 + $0x78] sm:$0xff]
        %vm2455 = vcmask 64512
        %v2457 = vsel %vm2455, %v2351, 0
        %v2460 = vsel %vm2455, %v2419, 0
        %v2463 = vsel %vm2455, %v2423, 0
        %v2466 = vsel %vm2455, %v2424, 0
        %v2469 = vsel %vm2455, %v2425, 0
        %v2472 = vsel %vm2455, %v2426, 0
        %2474 = vmatprep.subr.mxu0 0.0
        %2475 = vmatpush1.xpose.msra.mxu0 %v2463
        %2476 = vmatprep.subr.mxu0 0.0
        %2477 = vmatpush1.xpose.msra.mxu0 %v2466
        %2478 = vmatprep.subr.mxu0 0.0
        %2479 = vmatpush1.xpose.msra.mxu0 %v2469
        %2480 = vmatprep.subr.mxu0 0.0
        %2481 = vmatpush1.xpose.msra.mxu0 %v2472
        %2482 = vmatprep.subr.mxu0 0.0
        %2483 = vmatpush1.xpose.msra.mxu0 0.0
        %2484 = vmatprep.subr.mxu0 0.0
        %2485 = vmatpush1.xpose.msra.mxu0 0.0
        %2486 = vmatprep.subr.mxu0 0.0
        %2487 = vmatpush1.xpose.msra.mxu0 0.0
        %2488 = vmatprep.subr.mxu0 0.0
        %2489 = vmatpush1.xpose.msra.mxu0 0.0
        %2490 = vmatprep.subr.mxu0 0.0
        %2491 = vmatpush1.xpose.msra.mxu0 0.0
        %2492 = vmatprep.subr.mxu0 0.0
        %2493 = vmatpush1.xpose.msra.mxu0 0.0
        %2494 = vmatprep.subr.mxu0 0.0
        %2495 = vmatpush1.xpose.msra.mxu0 0.0
        %2496 = vmatprep.subr.mxu0 0.0
        %2497 = vmatpush1.xpose.msra.mxu0 0.0
        %2498 = vmatprep.subr.mxu0 0.0
        %2499 = vmatpush1.xpose.msra.mxu0 0.0
        %2500 = vmatprep.subr.mxu0 0.0
        %2501 = vmatpush1.xpose.msra.mxu0 0.0
        %2502 = vmatprep.subr.mxu0 0.0
        %2503 = vmatpush1.xpose.msra.mxu0 0.0
        %2504 = vmatprep.subr.mxu0 0.0
        %2505 = vmatpush1.xpose.msra.mxu0 0.0
        %2506 = vmatprep.subr.mxu0 0.0
        %2507 = vmatpush1.xpose.msra.mxu0 0.0
        %2508 = vmatprep.subr.mxu0 0.0
        %2509 = vmatpush1.xpose.msra.mxu0 0.0
        %2510 = vmatprep.subr.mxu0 0.0
        %2511 = vmatpush1.xpose.msra.mxu0 0.0
        %2512 = vmatprep.subr.mxu0 0.0
        %2513 = vmatpush1.xpose.msra.mxu0 0.0
        %2514 = vmatprep.subr.mxu0 0.0
        %2515 = vmatpush1.xpose.msra.mxu0 0.0
        %2516 = vmatprep.subr.mxu0 0.0
        %2517 = vmatpush1.xpose.msra.mxu0 0.0
        %2518 = vmatprep.subr.mxu0 0.0
        %2519 = vmatpush1.xpose.msra.mxu0 0.0
        %2520 = vmatprep.subr.mxu0 0.0
        %2521 = vmatpush1.xpose.msra.mxu0 0.0
        %2522 = vmatprep.subr.mxu0 0.0
        %2523 = vmatpush1.xpose.msra.mxu0 0.0
        %2524 = vmatprep.subr.mxu0 0.0
        %2525 = vmatpush1.xpose.msra.mxu0 0.0
        %2526 = vmatprep.subr.mxu0 0.0
        %2527 = vmatpush1.xpose.msra.mxu0 0.0
        %2528 = vmatprep.subr.mxu0 0.0
        %2529 = vmatpush1.xpose.msra.mxu0 0.0
        %2530 = vmatprep.subr.mxu0 0.0
        %2531 = vmatpush1.xpose.msra.mxu0 0.0
        %2532 = vmatprep.subr.mxu0 0.0
        %2533 = vmatpush1.xpose.msra.mxu0 0.0
        %2534 = vmatprep.subr.mxu0 0.0
        %2535 = vmatpush1.xpose.msra.mxu0 0.0
        %2536 = vmatprep.subr.mxu0 0.0
        %2537 = vmatpush1.xpose.msra.mxu0 0.0
        %2538 = vmatprep.mubr.f32.mxu0 0.0
        %2539 = vmatmul.mubr.f32.gmra.mrb[0].mxu0 %v2457
        %v2540 = vpop.f32.mrb[0].mxu0
        %v2541 = vadd.f32 0.0, %v2540
        %v2542 = vpop.f32.mrb[0].mxu0
        %2543 = vmatprep.mubr.f32.mxu0 0.0
        %2544 = vmatmul.mubr.f32.gmra.mrb[0].mxu0 %v2460
        %v2545 = vpop.f32.mrb[0].mxu0
        %v2546 = vadd.f32 0.0, %v2545
        %v2547 = vpop.f32.mrb[0].mxu0
        %2548 = vdwg.mxu0
        %v2550 = vsel %vm2455, %v2352, 0
        %v2553 = vsel %vm2455, %v2420, 0
        %v2556 = vsel %vm2455, %v2427, 0
        %v2559 = vsel %vm2455, %v2428, 0
        %v2562 = vsel %vm2455, %v2429, 0
        %v2565 = vsel %vm2455, %v2430, 0
        %2567 = vmatprep.subr.mxu0 0.0
        %2568 = vmatpush1.xpose.msra.mxu0 %v2556
        %2569 = vmatprep.subr.mxu0 0.0
        %2570 = vmatpush1.xpose.msra.mxu0 %v2559
        %2571 = vmatprep.subr.mxu0 0.0
        %2572 = vmatpush1.xpose.msra.mxu0 %v2562
        %2573 = vmatprep.subr.mxu0 0.0
        %2574 = vmatpush1.xpose.msra.mxu0 %v2565
        %2575 = vmatprep.subr.mxu0 0.0
        %2576 = vmatpush1.xpose.msra.mxu0 0.0
        %2577 = vmatprep.subr.mxu0 0.0
        %2578 = vmatpush1.xpose.msra.mxu0 0.0
        %2579 = vmatprep.subr.mxu0 0.0
        %2580 = vmatpush1.xpose.msra.mxu0 0.0
        %2581 = vmatprep.subr.mxu0 0.0
        %2582 = vmatpush1.xpose.msra.mxu0 0.0
        %2583 = vmatprep.subr.mxu0 0.0
        %2584 = vmatpush1.xpose.msra.mxu0 0.0
        %2585 = vmatprep.subr.mxu0 0.0
        %2586 = vmatpush1.xpose.msra.mxu0 0.0
        %2587 = vmatprep.subr.mxu0 0.0
        %2588 = vmatpush1.xpose.msra.mxu0 0.0
        %2589 = vmatprep.subr.mxu0 0.0
        %2590 = vmatpush1.xpose.msra.mxu0 0.0
        %2591 = vmatprep.subr.mxu0 0.0
        %2592 = vmatpush1.xpose.msra.mxu0 0.0
        %2593 = vmatprep.subr.mxu0 0.0
        %2594 = vmatpush1.xpose.msra.mxu0 0.0
        %2595 = vmatprep.subr.mxu0 0.0
        %2596 = vmatpush1.xpose.msra.mxu0 0.0
        %2597 = vmatprep.subr.mxu0 0.0
        %2598 = vmatpush1.xpose.msra.mxu0 0.0
        %2599 = vmatprep.subr.mxu0 0.0
        %2600 = vmatpush1.xpose.msra.mxu0 0.0
        %2601 = vmatprep.subr.mxu0 0.0
        %2602 = vmatpush1.xpose.msra.mxu0 0.0
        %2603 = vmatprep.subr.mxu0 0.0
        %2604 = vmatpush1.xpose.msra.mxu0 0.0
        %2605 = vmatprep.subr.mxu0 0.0
        %2606 = vmatpush1.xpose.msra.mxu0 0.0
        %2607 = vmatprep.subr.mxu0 0.0
        %2608 = vmatpush1.xpose.msra.mxu0 0.0
        %2609 = vmatprep.subr.mxu0 0.0
        %2610 = vmatpush1.xpose.msra.mxu0 0.0
        %2611 = vmatprep.subr.mxu0 0.0
        %2612 = vmatpush1.xpose.msra.mxu0 0.0
        %2613 = vmatprep.subr.mxu0 0.0
        %2614 = vmatpush1.xpose.msra.mxu0 0.0
        %2615 = vmatprep.subr.mxu0 0.0
        %2616 = vmatpush1.xpose.msra.mxu0 0.0
        %2617 = vmatprep.subr.mxu0 0.0
        %2618 = vmatpush1.xpose.msra.mxu0 0.0
        %2619 = vmatprep.subr.mxu0 0.0
        %2620 = vmatpush1.xpose.msra.mxu0 0.0
        %2621 = vmatprep.subr.mxu0 0.0
        %2622 = vmatpush1.xpose.msra.mxu0 0.0
        %2623 = vmatprep.subr.mxu0 0.0
        %2624 = vmatpush1.xpose.msra.mxu0 0.0
        %2625 = vmatprep.subr.mxu0 0.0
        %2626 = vmatpush1.xpose.msra.mxu0 0.0
        %2627 = vmatprep.subr.mxu0 0.0
        %2628 = vmatpush1.xpose.msra.mxu0 0.0
        %2629 = vmatprep.subr.mxu0 0.0
        %2630 = vmatpush1.xpose.msra.mxu0 0.0
        %2631 = vmatprep.mubr.f32.mxu0 0.0
        %2632 = vmatmul.mubr.f32.gmra.mrb[0].mxu0 %v2550
        %v2633 = vpop.f32.mrb[0].mxu0
        %v2634 = vadd.f32 0.0, %v2633
        %v2635 = vpop.f32.mrb[0].mxu0
        %2636 = vmatprep.mubr.f32.mxu0 0.0
        %2637 = vmatmul.mubr.f32.gmra.mrb[0].mxu0 %v2553
        %v2638 = vpop.f32.mrb[0].mxu0
        %v2639 = vadd.f32 0.0, %v2638
        %v2640 = vpop.f32.mrb[0].mxu0
        %2641 = vdwg.mxu0
        %v2643 = vsel %vm2455, %v2353, 0
        %v2646 = vsel %vm2455, %v2421, 0
        %v2649 = vsel %vm2455, %v2431, 0
        %v2652 = vsel %vm2455, %v2432, 0
        %v2655 = vsel %vm2455, %v2433, 0
        %v2658 = vsel %vm2455, %v2434, 0
        %2660 = vmatprep.subr.mxu0 0.0
        %2661 = vmatpush1.xpose.msra.mxu0 %v2649
        %2662 = vmatprep.subr.mxu0 0.0
        %2663 = vmatpush1.xpose.msra.mxu0 %v2652
        %2664 = vmatprep.subr.mxu0 0.0
        %2665 = vmatpush1.xpose.msra.mxu0 %v2655
        %2666 = vmatprep.subr.mxu0 0.0
        %2667 = vmatpush1.xpose.msra.mxu0 %v2658
        %2668 = vmatprep.subr.mxu0 0.0
        %2669 = vmatpush1.xpose.msra.mxu0 0.0
        %2670 = vmatprep.subr.mxu0 0.0
        %2671 = vmatpush1.xpose.msra.mxu0 0.0
        %2672 = vmatprep.subr.mxu0 0.0
        %2673 = vmatpush1.xpose.msra.mxu0 0.0
        %2674 = vmatprep.subr.mxu0 0.0
        %2675 = vmatpush1.xpose.msra.mxu0 0.0
        %2676 = vmatprep.subr.mxu0 0.0
        %2677 = vmatpush1.xpose.msra.mxu0 0.0
        %2678 = vmatprep.subr.mxu0 0.0
        %2679 = vmatpush1.xpose.msra.mxu0 0.0
        %2680 = vmatprep.subr.mxu0 0.0
        %2681 = vmatpush1.xpose.msra.mxu0 0.0
        %2682 = vmatprep.subr.mxu0 0.0
        %2683 = vmatpush1.xpose.msra.mxu0 0.0
        %2684 = vmatprep.subr.mxu0 0.0
        %2685 = vmatpush1.xpose.msra.mxu0 0.0
        %2686 = vmatprep.subr.mxu0 0.0
        %2687 = vmatpush1.xpose.msra.mxu0 0.0
        %2688 = vmatprep.subr.mxu0 0.0
        %2689 = vmatpush1.xpose.msra.mxu0 0.0
        %2690 = vmatprep.subr.mxu0 0.0
        %2691 = vmatpush1.xpose.msra.mxu0 0.0
        %2692 = vmatprep.subr.mxu0 0.0
        %2693 = vmatpush1.xpose.msra.mxu0 0.0
        %2694 = vmatprep.subr.mxu0 0.0
        %2695 = vmatpush1.xpose.msra.mxu0 0.0
        %2696 = vmatprep.subr.mxu0 0.0
        %2697 = vmatpush1.xpose.msra.mxu0 0.0
        %2698 = vmatprep.subr.mxu0 0.0
        %2699 = vmatpush1.xpose.msra.mxu0 0.0
        %2700 = vmatprep.subr.mxu0 0.0
        %2701 = vmatpush1.xpose.msra.mxu0 0.0
        %2702 = vmatprep.subr.mxu0 0.0
        %2703 = vmatpush1.xpose.msra.mxu0 0.0
        %2704 = vmatprep.subr.mxu0 0.0
        %2705 = vmatpush1.xpose.msra.mxu0 0.0
        %2706 = vmatprep.subr.mxu0 0.0
        %2707 = vmatpush1.xpose.msra.mxu0 0.0
        %2708 = vmatprep.subr.mxu0 0.0
        %2709 = vmatpush1.xpose.msra.mxu0 0.0
        %2710 = vmatprep.subr.mxu0 0.0
        %2711 = vmatpush1.xpose.msra.mxu0 0.0
        %2712 = vmatprep.subr.mxu0 0.0
        %2713 = vmatpush1.xpose.msra.mxu0 0.0
        %2714 = vmatprep.subr.mxu0 0.0
        %2715 = vmatpush1.xpose.msra.mxu0 0.0
        %2716 = vmatprep.subr.mxu0 0.0
        %2717 = vmatpush1.xpose.msra.mxu0 0.0
        %2718 = vmatprep.subr.mxu0 0.0
        %2719 = vmatpush1.xpose.msra.mxu0 0.0
        %2720 = vmatprep.subr.mxu0 0.0
        %2721 = vmatpush1.xpose.msra.mxu0 0.0
        %2722 = vmatprep.subr.mxu0 0.0
        %2723 = vmatpush1.xpose.msra.mxu0 0.0
        %2724 = vmatprep.mubr.f32.mxu0 0.0
        %2725 = vmatmul.mubr.f32.gmra.mrb[0].mxu0 %v2643
        %v2726 = vpop.f32.mrb[0].mxu0
        %v2727 = vadd.f32 0.0, %v2726
        %v2728 = vpop.f32.mrb[0].mxu0
        %2729 = vmatprep.mubr.f32.mxu0 0.0
        %2730 = vmatmul.mubr.f32.gmra.mrb[0].mxu0 %v2646
        %v2731 = vpop.f32.mrb[0].mxu0
        %v2732 = vadd.f32 0.0, %v2731
        %v2733 = vpop.f32.mrb[0].mxu0
        %2734 = vdwg.mxu0
        %v2736 = vsel %vm2455, %v2354, 0
        %v2739 = vsel %vm2455, %v2422, 0
        %v2742 = vsel %vm2455, %v2435, 0
        %v2745 = vsel %vm2455, %v2436, 0
        %v2748 = vsel %vm2455, %v2437, 0
        %v2751 = vsel %vm2455, %v2438, 0
        %2753 = vmatprep.subr.mxu0 0.0
        %2754 = vmatpush1.xpose.msra.mxu0 %v2742
        %2755 = vmatprep.subr.mxu0 0.0
        %2756 = vmatpush1.xpose.msra.mxu0 %v2745
        %2757 = vmatprep.subr.mxu0 0.0
        %2758 = vmatpush1.xpose.msra.mxu0 %v2748
        %2759 = vmatprep.subr.mxu0 0.0
        %2760 = vmatpush1.xpose.msra.mxu0 %v2751
        %2761 = vmatprep.subr.mxu0 0.0
        %2762 = vmatpush1.xpose.msra.mxu0 0.0
        %2763 = vmatprep.subr.mxu0 0.0
        %2764 = vmatpush1.xpose.msra.mxu0 0.0
        %2765 = vmatprep.subr.mxu0 0.0
        %2766 = vmatpush1.xpose.msra.mxu0 0.0
        %2767 = vmatprep.subr.mxu0 0.0
        %2768 = vmatpush1.xpose.msra.mxu0 0.0
        %2769 = vmatprep.subr.mxu0 0.0
        %2770 = vmatpush1.xpose.msra.mxu0 0.0
        %2771 = vmatprep.subr.mxu0 0.0
        %2772 = vmatpush1.xpose.msra.mxu0 0.0
        %2773 = vmatprep.subr.mxu0 0.0
        %2774 = vmatpush1.xpose.msra.mxu0 0.0
        %2775 = vmatprep.subr.mxu0 0.0
        %2776 = vmatpush1.xpose.msra.mxu0 0.0
        %2777 = vmatprep.subr.mxu0 0.0
        %2778 = vmatpush1.xpose.msra.mxu0 0.0
        %2779 = vmatprep.subr.mxu0 0.0
        %2780 = vmatpush1.xpose.msra.mxu0 0.0
        %2781 = vmatprep.subr.mxu0 0.0
        %2782 = vmatpush1.xpose.msra.mxu0 0.0
        %2783 = vmatprep.subr.mxu0 0.0
        %2784 = vmatpush1.xpose.msra.mxu0 0.0
        %2785 = vmatprep.subr.mxu0 0.0
        %2786 = vmatpush1.xpose.msra.mxu0 0.0
        %2787 = vmatprep.subr.mxu0 0.0
        %2788 = vmatpush1.xpose.msra.mxu0 0.0
        %2789 = vmatprep.subr.mxu0 0.0
        %2790 = vmatpush1.xpose.msra.mxu0 0.0
        %2791 = vmatprep.subr.mxu0 0.0
        %2792 = vmatpush1.xpose.msra.mxu0 0.0
        %2793 = vmatprep.subr.mxu0 0.0
        %2794 = vmatpush1.xpose.msra.mxu0 0.0
        %2795 = vmatprep.subr.mxu0 0.0
        %2796 = vmatpush1.xpose.msra.mxu0 0.0
        %2797 = vmatprep.subr.mxu0 0.0
        %2798 = vmatpush1.xpose.msra.mxu0 0.0
        %2799 = vmatprep.subr.mxu0 0.0
        %2800 = vmatpush1.xpose.msra.mxu0 0.0
        %2801 = vmatprep.subr.mxu0 0.0
        %2802 = vmatpush1.xpose.msra.mxu0 0.0
        %2803 = vmatprep.subr.mxu0 0.0
        %2804 = vmatpush1.xpose.msra.mxu0 0.0
        %2805 = vmatprep.subr.mxu0 0.0
        %2806 = vmatpush1.xpose.msra.mxu0 0.0
        %2807 = vmatprep.subr.mxu0 0.0
        %2808 = vmatpush1.xpose.msra.mxu0 0.0
        %2809 = vmatprep.subr.mxu0 0.0
        %2810 = vmatpush1.xpose.msra.mxu0 0.0
        %2811 = vmatprep.subr.mxu0 0.0
        %2812 = vmatpush1.xpose.msra.mxu0 0.0
        %2813 = vmatprep.subr.mxu0 0.0
        %2814 = vmatpush1.xpose.msra.mxu0 0.0
        %2815 = vmatprep.subr.mxu0 0.0
        %2816 = vmatpush1.xpose.msra.mxu0 0.0
        %2817 = vmatprep.mubr.f32.mxu0 0.0
        %2818 = vmatmul.mubr.f32.gmra.mrb[0].mxu0 %v2736
        %v2819 = vpop.f32.mrb[0].mxu0
        %v2820 = vadd.f32 0.0, %v2819
        %v2821 = vpop.f32.mrb[0].mxu0
        %2822 = vmatprep.mubr.f32.mxu0 0.0
        %2823 = vmatmul.mubr.f32.gmra.mrb[0].mxu0 %v2739
        %v2824 = vpop.f32.mrb[0].mxu0
        %v2825 = vadd.f32 0.0, %v2824
        %v2826 = vpop.f32.mrb[0].mxu0
        %2827 = vdwg.mxu0
        %v2828 = vsel %vm710, 1, 0
        %v2829 = vsel %vm711, 1, 0
        %vm2830 = vcmp.eq.s32.totalorder %v2828, 1
        %vm2831 = vcmp.eq.s32.totalorder %v2829, 1
        %v2832 = vsel %vm2830, -1e+09, %v2541
        %v2833 = vsel %vm2831, -1e+09, %v2546
        %v2834 = vsel %vm2830, -1e+09, %v2634
        %v2835 = vsel %vm2831, -1e+09, %v2639
        %v2836 = vsel %vm2830, -1e+09, %v2727
        %v2837 = vsel %vm2831, -1e+09, %v2732
        %v2838 = vsel %vm2830, -1e+09, %v2820
        %v2839 = vsel %vm2831, -1e+09, %v2825
        %v2840 = vsel %vm2049, %v2832, -inf
        %2841 = vmax.xlane.f32.xlu0 %v2840
        %v2842 = vpop.xlane.xlu0 %2841
        %v2843 = vsel %vm2049, %v2833, -inf
        %2844 = vmax.xlane.f32.xlu0 %v2843
        %v2845 = vpop.xlane.xlu0 %2844
        %v2846 = vsel %vm2049, %v2834, -inf
        %2847 = vmax.xlane.f32.xlu0 %v2846
        %v2848 = vpop.xlane.xlu0 %2847
        %v2849 = vsel %vm2049, %v2835, -inf
        %2850 = vmax.xlane.f32.xlu0 %v2849
        %v2851 = vpop.xlane.xlu0 %2850
        %v2852 = vsel %vm2049, %v2836, -inf
        %2853 = vmax.xlane.f32.xlu0 %v2852
        %v2854 = vpop.xlane.xlu0 %2853
        %v2855 = vsel %vm2049, %v2837, -inf
        %2856 = vmax.xlane.f32.xlu0 %v2855
        %v2857 = vpop.xlane.xlu0 %2856
        %v2858 = vsel %vm2049, %v2838, -inf
        %2859 = vmax.xlane.f32.xlu0 %v2858
        %v2860 = vpop.xlane.xlu0 %2859
        %v2861 = vsel %vm2049, %v2839, -inf
        %2862 = vmax.xlane.f32.xlu0 %v2861
        %v2863 = vpop.xlane.xlu0 %2862
        %v2864 = vsub.f32 %v2832, %v2842
        %v2865 = vsub.f32 %v2833, %v2845
        %v2866 = vsub.f32 %v2834, %v2848
        %v2867 = vsub.f32 %v2835, %v2851
        %v2868 = vsub.f32 %v2836, %v2854
        %v2869 = vsub.f32 %v2837, %v2857
        %v2870 = vsub.f32 %v2838, %v2860
        %v2871 = vsub.f32 %v2839, %v2863
        %v2872 = vmul.f32 %v2864, 1.442695
        %v2873 = vpow.pop %v2872
        %v2874 = vmul.f32 %v2865, 1.442695
        %v2875 = vpow.pop %v2874
        %v2876 = vmul.f32 %v2866, 1.442695
        %v2877 = vpow.pop %v2876
        %v2878 = vmul.f32 %v2867, 1.442695
        %v2879 = vpow.pop %v2878
        %v2880 = vmul.f32 %v2868, 1.442695
        %v2881 = vpow.pop %v2880
        %v2882 = vmul.f32 %v2869, 1.442695
        %v2883 = vpow.pop %v2882
        %v2884 = vmul.f32 %v2870, 1.442695
        %v2885 = vpow.pop %v2884
        %v2886 = vmul.f32 %v2871, 1.442695
        %v2887 = vpow.pop %v2886
        %v2888 = vsel %vm2049, %v2873, 0.0
        %2889 = vadd.xlane.f32.xlu0 %v2888
        %v2890 = vpop.xlane.xlu0 %2889
        %v2891 = vsel %vm2049, %v2875, 0.0
        %2892 = vadd.xlane.f32.xlu0 %v2891
        %v2893 = vpop.xlane.xlu0 %2892
        %v2894 = vsel %vm2049, %v2877, 0.0
        %2895 = vadd.xlane.f32.xlu0 %v2894
        %v2896 = vpop.xlane.xlu0 %2895
        %v2897 = vsel %vm2049, %v2879, 0.0
        %2898 = vadd.xlane.f32.xlu0 %v2897
        %v2899 = vpop.xlane.xlu0 %2898
        %v2900 = vsel %vm2049, %v2881, 0.0
        %2901 = vadd.xlane.f32.xlu0 %v2900
        %v2902 = vpop.xlane.xlu0 %2901
        %v2903 = vsel %vm2049, %v2883, 0.0
        %2904 = vadd.xlane.f32.xlu0 %v2903
        %v2905 = vpop.xlane.xlu0 %2904
        %v2906 = vsel %vm2049, %v2885, 0.0
        %2907 = vadd.xlane.f32.xlu0 %v2906
        %v2908 = vpop.xlane.xlu0 %2907
        %v2909 = vsel %vm2049, %v2887, 0.0
        %2910 = vadd.xlane.f32.xlu0 %v2909
        %v2911 = vpop.xlane.xlu0 %2910
        %v2912 = vrcp.pop %v2890
        %v2913 = vrcp.pop %v2893
        %v2914 = vrcp.pop %v2896
        %v2915 = vrcp.pop %v2899
        %v2916 = vrcp.pop %v2902
        %v2917 = vrcp.pop %v2905
        %v2918 = vrcp.pop %v2908
        %v2919 = vrcp.pop %v2911
        %v2920 = vmul.f32 %v2873, %v2912
        %v2921 = vmul.f32 %v2875, %v2913
        %v2922 = vmul.f32 %v2877, %v2914
        %v2923 = vmul.f32 %v2879, %v2915
        %v2924 = vmul.f32 %v2881, %v2916
        %v2925 = vmul.f32 %v2883, %v2917
        %v2926 = vmul.f32 %v2885, %v2918
        %v2927 = vmul.f32 %v2887, %v2919
        %v2929 = vsel %vm2049, %v2920, 0
        %v2932 = vsel %vm2049, %v2921, 0
        %2934 = vmatprep.subr.mxu0 0.0
        %2935 = vmatpush1.msra.mxu0 %v2439
        %2936 = vmatprep.subr.mxu0 0.0
        %2937 = vmatpush1.msra.mxu0 %v2440
        %2938 = vmatprep.subr.mxu0 0.0
        %2939 = vmatpush1.msra.mxu0 %v2441
        %2940 = vmatprep.subr.mxu0 0.0
        %2941 = vmatpush1.msra.mxu0 %v2442
        %2942 = vmatprep.subr.mxu0 0.0
        %2943 = vmatpush1.msra.mxu0 0.0
        %2944 = vmatprep.subr.mxu0 0.0
        %2945 = vmatpush1.msra.mxu0 0.0
        %2946 = vmatprep.subr.mxu0 0.0
        %2947 = vmatpush1.msra.mxu0 0.0
        %2948 = vmatprep.subr.mxu0 0.0
        %2949 = vmatpush1.msra.mxu0 0.0
        %2950 = vmatprep.subr.mxu0 0.0
        %2951 = vmatpush1.msra.mxu0 0.0
        %2952 = vmatprep.subr.mxu0 0.0
        %2953 = vmatpush1.msra.mxu0 0.0
        %2954 = vmatprep.subr.mxu0 0.0
        %2955 = vmatpush1.msra.mxu0 0.0
        %2956 = vmatprep.subr.mxu0 0.0
        %2957 = vmatpush1.msra.mxu0 0.0
        %2958 = vmatprep.subr.mxu0 0.0
        %2959 = vmatpush1.msra.mxu0 0.0
        %2960 = vmatprep.subr.mxu0 0.0
        %2961 = vmatpush1.msra.mxu0 0.0
        %2962 = vmatprep.subr.mxu0 0.0
        %2963 = vmatpush1.msra.mxu0 0.0
        %2964 = vmatprep.subr.mxu0 0.0
        %2965 = vmatpush1.msra.mxu0 0.0
        %2966 = vmatprep.subr.mxu0 0.0
        %2967 = vmatpush1.msra.mxu0 0.0
        %2968 = vmatprep.subr.mxu0 0.0
        %2969 = vmatpush1.msra.mxu0 0.0
        %2970 = vmatprep.subr.mxu0 0.0
        %2971 = vmatpush1.msra.mxu0 0.0
        %2972 = vmatprep.subr.mxu0 0.0
        %2973 = vmatpush1.msra.mxu0 0.0
        %2974 = vmatprep.subr.mxu0 0.0
        %2975 = vmatpush1.msra.mxu0 0.0
        %2976 = vmatprep.subr.mxu0 0.0
        %2977 = vmatpush1.msra.mxu0 0.0
        %2978 = vmatprep.subr.mxu0 0.0
        %2979 = vmatpush1.msra.mxu0 0.0
        %2980 = vmatprep.subr.mxu0 0.0
        %2981 = vmatpush1.msra.mxu0 0.0
        %2982 = vmatprep.subr.mxu0 0.0
        %2983 = vmatpush1.msra.mxu0 0.0
        %2984 = vmatprep.subr.mxu0 0.0
        %2985 = vmatpush1.msra.mxu0 0.0
        %2986 = vmatprep.subr.mxu0 0.0
        %2987 = vmatpush1.msra.mxu0 0.0
        %2988 = vmatprep.subr.mxu0 0.0
        %2989 = vmatpush1.msra.mxu0 0.0
        %2990 = vmatprep.subr.mxu0 0.0
        %2991 = vmatpush1.msra.mxu0 0.0
        %2992 = vmatprep.subr.mxu0 0.0
        %2993 = vmatpush1.msra.mxu0 0.0
        %2994 = vmatprep.subr.mxu0 0.0
        %2995 = vmatpush1.msra.mxu0 0.0
        %2996 = vmatprep.subr.mxu0 0.0
        %2997 = vmatpush1.msra.mxu0 0.0
        %2998 = vmatprep.mubr.f32.mxu0 0.0
        %2999 = vmatmul.mubr.f32.gmra.mrb[0].mxu0 %v2929
        %v3000 = vpop.f32.mrb[0].mxu0
        %v3001 = vadd.f32 0.0, %v3000
        %v3002 = vpop.f32.mrb[0].mxu0
        %3003 = vmatprep.mubr.f32.mxu0 0.0
        %3004 = vmatmul.mubr.f32.gmra.mrb[0].mxu0 %v2932
        %v3005 = vpop.f32.mrb[0].mxu0
        %v3006 = vadd.f32 0.0, %v3005
        %v3007 = vpop.f32.mrb[0].mxu0
        %3008 = vdwg.mxu0
        %v3010 = vsel %vm2049, %v2922, 0
        %v3013 = vsel %vm2049, %v2923, 0
        %3015 = vmatprep.subr.mxu0 0.0
        %3016 = vmatpush1.msra.mxu0 %v2443
        %3017 = vmatprep.subr.mxu0 0.0
        %3018 = vmatpush1.msra.mxu0 %v2444
        %3019 = vmatprep.subr.mxu0 0.0
        %3020 = vmatpush1.msra.mxu0 %v2445
        %3021 = vmatprep.subr.mxu0 0.0
        %3022 = vmatpush1.msra.mxu0 %v2446
        %3023 = vmatprep.subr.mxu0 0.0
        %3024 = vmatpush1.msra.mxu0 0.0
        %3025 = vmatprep.subr.mxu0 0.0
        %3026 = vmatpush1.msra.mxu0 0.0
        %3027 = vmatprep.subr.mxu0 0.0
        %3028 = vmatpush1.msra.mxu0 0.0
        %3029 = vmatprep.subr.mxu0 0.0
        %3030 = vmatpush1.msra.mxu0 0.0
        %3031 = vmatprep.subr.mxu0 0.0
        %3032 = vmatpush1.msra.mxu0 0.0
        %3033 = vmatprep.subr.mxu0 0.0
        %3034 = vmatpush1.msra.mxu0 0.0
        %3035 = vmatprep.subr.mxu0 0.0
        %3036 = vmatpush1.msra.mxu0 0.0
        %3037 = vmatprep.subr.mxu0 0.0
        %3038 = vmatpush1.msra.mxu0 0.0
        %3039 = vmatprep.subr.mxu0 0.0
        %3040 = vmatpush1.msra.mxu0 0.0
        %3041 = vmatprep.subr.mxu0 0.0
        %3042 = vmatpush1.msra.mxu0 0.0
        %3043 = vmatprep.subr.mxu0 0.0
        %3044 = vmatpush1.msra.mxu0 0.0
        %3045 = vmatprep.subr.mxu0 0.0
        %3046 = vmatpush1.msra.mxu0 0.0
        %3047 = vmatprep.subr.mxu0 0.0
        %3048 = vmatpush1.msra.mxu0 0.0
        %3049 = vmatprep.subr.mxu0 0.0
        %3050 = vmatpush1.msra.mxu0 0.0
        %3051 = vmatprep.subr.mxu0 0.0
        %3052 = vmatpush1.msra.mxu0 0.0
        %3053 = vmatprep.subr.mxu0 0.0
        %3054 = vmatpush1.msra.mxu0 0.0
        %3055 = vmatprep.subr.mxu0 0.0
        %3056 = vmatpush1.msra.mxu0 0.0
        %3057 = vmatprep.subr.mxu0 0.0
        %3058 = vmatpush1.msra.mxu0 0.0
        %3059 = vmatprep.subr.mxu0 0.0
        %3060 = vmatpush1.msra.mxu0 0.0
        %3061 = vmatprep.subr.mxu0 0.0
        %3062 = vmatpush1.msra.mxu0 0.0
        %3063 = vmatprep.subr.mxu0 0.0
        %3064 = vmatpush1.msra.mxu0 0.0
        %3065 = vmatprep.subr.mxu0 0.0
        %3066 = vmatpush1.msra.mxu0 0.0
        %3067 = vmatprep.subr.mxu0 0.0
        %3068 = vmatpush1.msra.mxu0 0.0
        %3069 = vmatprep.subr.mxu0 0.0
        %3070 = vmatpush1.msra.mxu0 0.0
        %3071 = vmatprep.subr.mxu0 0.0
        %3072 = vmatpush1.msra.mxu0 0.0
        %3073 = vmatprep.subr.mxu0 0.0
        %3074 = vmatpush1.msra.mxu0 0.0
        %3075 = vmatprep.subr.mxu0 0.0
        %3076 = vmatpush1.msra.mxu0 0.0
        %3077 = vmatprep.subr.mxu0 0.0
        %3078 = vmatpush1.msra.mxu0 0.0
        %3079 = vmatprep.mubr.f32.mxu0 0.0
        %3080 = vmatmul.mubr.f32.gmra.mrb[0].mxu0 %v3010
        %v3081 = vpop.f32.mrb[0].mxu0
        %v3082 = vadd.f32 0.0, %v3081
        %v3083 = vpop.f32.mrb[0].mxu0
        %3084 = vmatprep.mubr.f32.mxu0 0.0
        %3085 = vmatmul.mubr.f32.gmra.mrb[0].mxu0 %v3013
        %v3086 = vpop.f32.mrb[0].mxu0
        %v3087 = vadd.f32 0.0, %v3086
        %v3088 = vpop.f32.mrb[0].mxu0
        %3089 = vdwg.mxu0
        %v3091 = vsel %vm2049, %v2924, 0
        %v3094 = vsel %vm2049, %v2925, 0
        %3096 = vmatprep.subr.mxu0 0.0
        %3097 = vmatpush1.msra.mxu0 %v2447
        %3098 = vmatprep.subr.mxu0 0.0
        %3099 = vmatpush1.msra.mxu0 %v2448
        %3100 = vmatprep.subr.mxu0 0.0
        %3101 = vmatpush1.msra.mxu0 %v2449
        %3102 = vmatprep.subr.mxu0 0.0
        %3103 = vmatpush1.msra.mxu0 %v2450
        %3104 = vmatprep.subr.mxu0 0.0
        %3105 = vmatpush1.msra.mxu0 0.0
        %3106 = vmatprep.subr.mxu0 0.0
        %3107 = vmatpush1.msra.mxu0 0.0
        %3108 = vmatprep.subr.mxu0 0.0
        %3109 = vmatpush1.msra.mxu0 0.0
        %3110 = vmatprep.subr.mxu0 0.0
        %3111 = vmatpush1.msra.mxu0 0.0
        %3112 = vmatprep.subr.mxu0 0.0
        %3113 = vmatpush1.msra.mxu0 0.0
        %3114 = vmatprep.subr.mxu0 0.0
        %3115 = vmatpush1.msra.mxu0 0.0
        %3116 = vmatprep.subr.mxu0 0.0
        %3117 = vmatpush1.msra.mxu0 0.0
        %3118 = vmatprep.subr.mxu0 0.0
        %3119 = vmatpush1.msra.mxu0 0.0
        %3120 = vmatprep.subr.mxu0 0.0
        %3121 = vmatpush1.msra.mxu0 0.0
        %3122 = vmatprep.subr.mxu0 0.0
        %3123 = vmatpush1.msra.mxu0 0.0
        %3124 = vmatprep.subr.mxu0 0.0
        %3125 = vmatpush1.msra.mxu0 0.0
        %3126 = vmatprep.subr.mxu0 0.0
        %3127 = vmatpush1.msra.mxu0 0.0
        %3128 = vmatprep.subr.mxu0 0.0
        %3129 = vmatpush1.msra.mxu0 0.0
        %3130 = vmatprep.subr.mxu0 0.0
        %3131 = vmatpush1.msra.mxu0 0.0
        %3132 = vmatprep.subr.mxu0 0.0
        %3133 = vmatpush1.msra.mxu0 0.0
        %3134 = vmatprep.subr.mxu0 0.0
        %3135 = vmatpush1.msra.mxu0 0.0
        %3136 = vmatprep.subr.mxu0 0.0
        %3137 = vmatpush1.msra.mxu0 0.0
        %3138 = vmatprep.subr.mxu0 0.0
        %3139 = vmatpush1.msra.mxu0 0.0
        %3140 = vmatprep.subr.mxu0 0.0
        %3141 = vmatpush1.msra.mxu0 0.0
        %3142 = vmatprep.subr.mxu0 0.0
        %3143 = vmatpush1.msra.mxu0 0.0
        %3144 = vmatprep.subr.mxu0 0.0
        %3145 = vmatpush1.msra.mxu0 0.0
        %3146 = vmatprep.subr.mxu0 0.0
        %3147 = vmatpush1.msra.mxu0 0.0
        %3148 = vmatprep.subr.mxu0 0.0
        %3149 = vmatpush1.msra.mxu0 0.0
        %3150 = vmatprep.subr.mxu0 0.0
        %3151 = vmatpush1.msra.mxu0 0.0
        %3152 = vmatprep.subr.mxu0 0.0
        %3153 = vmatpush1.msra.mxu0 0.0
        %3154 = vmatprep.subr.mxu0 0.0
        %3155 = vmatpush1.msra.mxu0 0.0
        %3156 = vmatprep.subr.mxu0 0.0
        %3157 = vmatpush1.msra.mxu0 0.0
        %3158 = vmatprep.subr.mxu0 0.0
        %3159 = vmatpush1.msra.mxu0 0.0
        %3160 = vmatprep.mubr.f32.mxu0 0.0
        %3161 = vmatmul.mubr.f32.gmra.mrb[0].mxu0 %v3091
        %v3162 = vpop.f32.mrb[0].mxu0
        %v3163 = vadd.f32 0.0, %v3162
        %v3164 = vpop.f32.mrb[0].mxu0
        %3165 = vmatprep.mubr.f32.mxu0 0.0
        %3166 = vmatmul.mubr.f32.gmra.mrb[0].mxu0 %v3094
        %v3167 = vpop.f32.mrb[0].mxu0
        %v3168 = vadd.f32 0.0, %v3167
        %v3169 = vpop.f32.mrb[0].mxu0
        %3170 = vdwg.mxu0
        %v3172 = vsel %vm2049, %v2926, 0
        %v3175 = vsel %vm2049, %v2927, 0
        %3177 = vmatprep.subr.mxu0 0.0
        %3178 = vmatpush1.msra.mxu0 %v2451
        %3179 = vmatprep.subr.mxu0 0.0
        %3180 = vmatpush1.msra.mxu0 %v2452
        %3181 = vmatprep.subr.mxu0 0.0
        %3182 = vmatpush1.msra.mxu0 %v2453
        %3183 = vmatprep.subr.mxu0 0.0
        %3184 = vmatpush1.msra.mxu0 %v2454
        %3185 = vmatprep.subr.mxu0 0.0
        %3186 = vmatpush1.msra.mxu0 0.0
        %3187 = vmatprep.subr.mxu0 0.0
        %3188 = vmatpush1.msra.mxu0 0.0
        %3189 = vmatprep.subr.mxu0 0.0
        %3190 = vmatpush1.msra.mxu0 0.0
        %3191 = vmatprep.subr.mxu0 0.0
        %3192 = vmatpush1.msra.mxu0 0.0
        %3193 = vmatprep.subr.mxu0 0.0
        %3194 = vmatpush1.msra.mxu0 0.0
        %3195 = vmatprep.subr.mxu0 0.0
        %3196 = vmatpush1.msra.mxu0 0.0
        %3197 = vmatprep.subr.mxu0 0.0
        %3198 = vmatpush1.msra.mxu0 0.0
        %3199 = vmatprep.subr.mxu0 0.0
        %3200 = vmatpush1.msra.mxu0 0.0
        %3201 = vmatprep.subr.mxu0 0.0
        %3202 = vmatpush1.msra.mxu0 0.0
        %3203 = vmatprep.subr.mxu0 0.0
        %3204 = vmatpush1.msra.mxu0 0.0
        %3205 = vmatprep.subr.mxu0 0.0
        %3206 = vmatpush1.msra.mxu0 0.0
        %3207 = vmatprep.subr.mxu0 0.0
        %3208 = vmatpush1.msra.mxu0 0.0
        %3209 = vmatprep.subr.mxu0 0.0
        %3210 = vmatpush1.msra.mxu0 0.0
        %3211 = vmatprep.subr.mxu0 0.0
        %3212 = vmatpush1.msra.mxu0 0.0
        %3213 = vmatprep.subr.mxu0 0.0
        %3214 = vmatpush1.msra.mxu0 0.0
        %3215 = vmatprep.subr.mxu0 0.0
        %3216 = vmatpush1.msra.mxu0 0.0
        %3217 = vmatprep.subr.mxu0 0.0
        %3218 = vmatpush1.msra.mxu0 0.0
        %3219 = vmatprep.subr.mxu0 0.0
        %3220 = vmatpush1.msra.mxu0 0.0
        %3221 = vmatprep.subr.mxu0 0.0
        %3222 = vmatpush1.msra.mxu0 0.0
        %3223 = vmatprep.subr.mxu0 0.0
        %3224 = vmatpush1.msra.mxu0 0.0
        %3225 = vmatprep.subr.mxu0 0.0
        %3226 = vmatpush1.msra.mxu0 0.0
        %3227 = vmatprep.subr.mxu0 0.0
        %3228 = vmatpush1.msra.mxu0 0.0
        %3229 = vmatprep.subr.mxu0 0.0
        %3230 = vmatpush1.msra.mxu0 0.0
        %3231 = vmatprep.subr.mxu0 0.0
        %3232 = vmatpush1.msra.mxu0 0.0
        %3233 = vmatprep.subr.mxu0 0.0
        %3234 = vmatpush1.msra.mxu0 0.0
        %3235 = vmatprep.subr.mxu0 0.0
        %3236 = vmatpush1.msra.mxu0 0.0
        %3237 = vmatprep.subr.mxu0 0.0
        %3238 = vmatpush1.msra.mxu0 0.0
        %3239 = vmatprep.subr.mxu0 0.0
        %3240 = vmatpush1.msra.mxu0 0.0
        %3241 = vmatprep.mubr.f32.mxu0 0.0
        %3242 = vmatmul.mubr.f32.gmra.mrb[0].mxu0 %v3172
        %v3243 = vpop.f32.mrb[0].mxu0
        %v3244 = vadd.f32 0.0, %v3243
        %v3245 = vpop.f32.mrb[0].mxu0
        %3246 = vmatprep.mubr.f32.mxu0 0.0
        %3247 = vmatmul.mubr.f32.gmra.mrb[0].mxu0 %v3175
        %v3248 = vpop.f32.mrb[0].mxu0
        %v3249 = vadd.f32 0.0, %v3248
        %v3250 = vpop.f32.mrb[0].mxu0
        %3251 = vdwg.mxu0
        %v3252 = vcombine.low %v3001, %v3163
        %v3253 = vcombine.high %v3001, %v3163
        %v3255 = vunpack.c.l.s4 1983009808
        %v3256 = vunpack.c.0.s8 %v3255
        %v3257 = vlaneseq
        %v3258 = vshrl.u32 %v3257, 7
        %v3259 = vsub.s32 %v3256, %v3258
        %v3260 = vrot.slane %v3252, %v3259
        %v3262 = vunpack.c.l.s4 1983009808
        %v3263 = vunpack.c.0.s8 %v3262
        %v3264 = vlaneseq
        %v3265 = vshrl.u32 %v3264, 7
        %v3266 = vsub.s32 %v3263, %v3265
        %v3267 = vrot.slane %v3253, %v3266
        %v3268 = vcombine.low %v3082, %v3244
        %v3269 = vcombine.high %v3082, %v3244
        %v3271 = vunpack.c.l.s4 1983009808
        %v3272 = vunpack.c.0.s8 %v3271
        %v3273 = vlaneseq
        %v3274 = vshrl.u32 %v3273, 7
        %v3275 = vsub.s32 %v3272, %v3274
        %v3276 = vrot.slane %v3268, %v3275
        %v3278 = vunpack.c.l.s4 1983009808
        %v3279 = vunpack.c.0.s8 %v3278
        %v3280 = vlaneseq
        %v3281 = vshrl.u32 %v3280, 7
        %v3282 = vsub.s32 %v3279, %v3281
        %v3283 = vrot.slane %v3269, %v3282
        %v3284 = vcombine.low %v3260, %v3276
        %v3285 = vcombine.high %v3260, %v3276
        %v3287 = vunpack.c.l.s4 1934713408
        %v3288 = vunpack.c.0.s8 %v3287
        %v3289 = vlaneseq
        %v3290 = vshrl.u32 %v3289, 7
        %v3291 = vsub.s32 %v3288, %v3290
        %v3292 = vrot.slane %v3284, %v3291
        %v3294 = vunpack.c.l.s4 1934713408
        %v3295 = vunpack.c.0.s8 %v3294
        %v3296 = vlaneseq
        %v3297 = vshrl.u32 %v3296, 7
        %v3298 = vsub.s32 %v3295, %v3297
        %v3299 = vrot.slane %v3285, %v3298
        %v3300 = vcombine.low %v3267, %v3283
        %v3301 = vcombine.high %v3267, %v3283
        %v3303 = vunpack.c.l.s4 1934713408
        %v3304 = vunpack.c.0.s8 %v3303
        %v3305 = vlaneseq
        %v3306 = vshrl.u32 %v3305, 7
        %v3307 = vsub.s32 %v3304, %v3306
        %v3308 = vrot.slane %v3300, %v3307
        %v3310 = vunpack.c.l.s4 1934713408
        %v3311 = vunpack.c.0.s8 %v3310
        %v3312 = vlaneseq
        %v3313 = vshrl.u32 %v3312, 7
        %v3314 = vsub.s32 %v3311, %v3313
        %v3315 = vrot.slane %v3301, %v3314
        %v3316 = vcombine.high %v3292, 0.0
        %v3317 = vcombine.high %v3299, 0.0
        %v3318 = vcombine.high %v3308, 0.0
        %v3319 = vcombine.high %v3315, 0.0
        %v3320 = vcombine.low %v3006, %v3168
        %v3321 = vcombine.high %v3006, %v3168
        %v3323 = vunpack.c.l.s4 1983009808
        %v3324 = vunpack.c.0.s8 %v3323
        %v3325 = vlaneseq
        %v3326 = vshrl.u32 %v3325, 7
        %v3327 = vsub.s32 %v3324, %v3326
        %v3328 = vrot.slane %v3320, %v3327
        %v3330 = vunpack.c.l.s4 1983009808
        %v3331 = vunpack.c.0.s8 %v3330
        %v3332 = vlaneseq
        %v3333 = vshrl.u32 %v3332, 7
        %v3334 = vsub.s32 %v3331, %v3333
        %v3335 = vrot.slane %v3321, %v3334
        %v3336 = vcombine.low %v3087, %v3249
        %v3337 = vcombine.high %v3087, %v3249
        %v3339 = vunpack.c.l.s4 1983009808
        %v3340 = vunpack.c.0.s8 %v3339
        %v3341 = vlaneseq
        %v3342 = vshrl.u32 %v3341, 7
        %v3343 = vsub.s32 %v3340, %v3342
        %v3344 = vrot.slane %v3336, %v3343
        %v3346 = vunpack.c.l.s4 1983009808
        %v3347 = vunpack.c.0.s8 %v3346
        %v3348 = vlaneseq
        %v3349 = vshrl.u32 %v3348, 7
        %v3350 = vsub.s32 %v3347, %v3349
        %v3351 = vrot.slane %v3337, %v3350
        %v3352 = vcombine.low %v3328, %v3344
        %v3353 = vcombine.high %v3328, %v3344
        %v3355 = vunpack.c.l.s4 1934713408
        %v3356 = vunpack.c.0.s8 %v3355
        %v3357 = vlaneseq
        %v3358 = vshrl.u32 %v3357, 7
        %v3359 = vsub.s32 %v3356, %v3358
        %v3360 = vrot.slane %v3352, %v3359
        %v3362 = vunpack.c.l.s4 1934713408
        %v3363 = vunpack.c.0.s8 %v3362
        %v3364 = vlaneseq
        %v3365 = vshrl.u32 %v3364, 7
        %v3366 = vsub.s32 %v3363, %v3365
        %v3367 = vrot.slane %v3353, %v3366
        %v3368 = vcombine.low %v3335, %v3351
        %v3369 = vcombine.high %v3335, %v3351
        %v3371 = vunpack.c.l.s4 1934713408
        %v3372 = vunpack.c.0.s8 %v3371
        %v3373 = vlaneseq
        %v3374 = vshrl.u32 %v3373, 7
        %v3375 = vsub.s32 %v3372, %v3374
        %v3376 = vrot.slane %v3368, %v3375
        %v3378 = vunpack.c.l.s4 1934713408
        %v3379 = vunpack.c.0.s8 %v3378
        %v3380 = vlaneseq
        %v3381 = vshrl.u32 %v3380, 7
        %v3382 = vsub.s32 %v3379, %v3381
        %v3383 = vrot.slane %v3369, %v3382
        %v3384 = vcombine.high %v3360, 0.0
        %v3385 = vcombine.high %v3367, 0.0
        %v3386 = vcombine.high %v3376, 0.0
        %v3387 = vcombine.high %v3383, 0.0
        %v3388 = vcombine.low %v3292, %v3299
        %v3390 = vunpack.c.l.s4 1983009808
        %v3391 = vunpack.c.0.s8 %v3390
        %v3392 = vlaneseq
        %v3393 = vshrl.u32 %v3392, 7
        %v3394 = vsub.s32 %v3391, %v3393
        %v3395 = vrot.slane %v3388, %v3394
        %v3396 = vcombine.low %v3316, %v3317
        %v3398 = vunpack.c.l.s4 1983009808
        %v3399 = vunpack.c.0.s8 %v3398
        %v3400 = vlaneseq
        %v3401 = vshrl.u32 %v3400, 7
        %v3402 = vsub.s32 %v3399, %v3401
        %v3403 = vrot.slane %v3396, %v3402
        %v3404 = vcombine.low %v3308, %v3315
        %v3406 = vunpack.c.l.s4 1983009808
        %v3407 = vunpack.c.0.s8 %v3406
        %v3408 = vlaneseq
        %v3409 = vshrl.u32 %v3408, 7
        %v3410 = vsub.s32 %v3407, %v3409
        %v3411 = vrot.slane %v3404, %v3410
        %v3412 = vcombine.low %v3318, %v3319
        %v3414 = vunpack.c.l.s4 1983009808
        %v3415 = vunpack.c.0.s8 %v3414
        %v3416 = vlaneseq
        %v3417 = vshrl.u32 %v3416, 7
        %v3418 = vsub.s32 %v3415, %v3417
        %v3419 = vrot.slane %v3412, %v3418
        %v3420 = vcombine.low %v3395, %v3403
        %v3421 = vcombine.high %v3395, %v3403
        %v3423 = vunpack.c.l.s4 1934713408
        %v3424 = vunpack.c.0.s8 %v3423
        %v3425 = vlaneseq
        %v3426 = vshrl.u32 %v3425, 7
        %v3427 = vsub.s32 %v3424, %v3426
        %v3428 = vrot.slane %v3420, %v3427
        %v3430 = vunpack.c.l.s4 1934713408
        %v3431 = vunpack.c.0.s8 %v3430
        %v3432 = vlaneseq
        %v3433 = vshrl.u32 %v3432, 7
        %v3434 = vsub.s32 %v3431, %v3433
        %v3435 = vrot.slane %v3421, %v3434
        %v3436 = vcombine.low %v3411, %v3419
        %v3437 = vcombine.high %v3411, %v3419
        %v3439 = vunpack.c.l.s4 1934713408
        %v3440 = vunpack.c.0.s8 %v3439
        %v3441 = vlaneseq
        %v3442 = vshrl.u32 %v3441, 7
        %v3443 = vsub.s32 %v3440, %v3442
        %v3444 = vrot.slane %v3436, %v3443
        %v3446 = vunpack.c.l.s4 1934713408
        %v3447 = vunpack.c.0.s8 %v3446
        %v3448 = vlaneseq
        %v3449 = vshrl.u32 %v3448, 7
        %v3450 = vsub.s32 %v3447, %v3449
        %v3451 = vrot.slane %v3437, %v3450
        %v3452 = vcombine.low %v3428, %v3444
        %v3453 = vcombine.high %v3428, %v3444
        %v3454 = vcombine.low %v3435, %v3451
        %v3455 = vcombine.high %v3435, %v3451
        %v3456 = vcombine.low %v3360, %v3367
        %v3458 = vunpack.c.l.s4 1983009808
        %v3459 = vunpack.c.0.s8 %v3458
        %v3460 = vlaneseq
        %v3461 = vshrl.u32 %v3460, 7
        %v3462 = vsub.s32 %v3459, %v3461
        %v3463 = vrot.slane %v3456, %v3462
        %v3464 = vcombine.low %v3384, %v3385
        %v3466 = vunpack.c.l.s4 1983009808
        %v3467 = vunpack.c.0.s8 %v3466
        %v3468 = vlaneseq
        %v3469 = vshrl.u32 %v3468, 7
        %v3470 = vsub.s32 %v3467, %v3469
        %v3471 = vrot.slane %v3464, %v3470
        %v3472 = vcombine.low %v3376, %v3383
        %v3474 = vunpack.c.l.s4 1983009808
        %v3475 = vunpack.c.0.s8 %v3474
        %v3476 = vlaneseq
        %v3477 = vshrl.u32 %v3476, 7
        %v3478 = vsub.s32 %v3475, %v3477
        %v3479 = vrot.slane %v3472, %v3478
        %v3480 = vcombine.low %v3386, %v3387
        %v3482 = vunpack.c.l.s4 1983009808
        %v3483 = vunpack.c.0.s8 %v3482
        %v3484 = vlaneseq
        %v3485 = vshrl.u32 %v3484, 7
        %v3486 = vsub.s32 %v3483, %v3485
        %v3487 = vrot.slane %v3480, %v3486
        %v3488 = vcombine.low %v3463, %v3471
        %v3489 = vcombine.high %v3463, %v3471
        %v3491 = vunpack.c.l.s4 1934713408
        %v3492 = vunpack.c.0.s8 %v3491
        %v3493 = vlaneseq
        %v3494 = vshrl.u32 %v3493, 7
        %v3495 = vsub.s32 %v3492, %v3494
        %v3496 = vrot.slane %v3488, %v3495
        %v3498 = vunpack.c.l.s4 1934713408
        %v3499 = vunpack.c.0.s8 %v3498
        %v3500 = vlaneseq
        %v3501 = vshrl.u32 %v3500, 7
        %v3502 = vsub.s32 %v3499, %v3501
        %v3503 = vrot.slane %v3489, %v3502
        %v3504 = vcombine.low %v3479, %v3487
        %v3505 = vcombine.high %v3479, %v3487
        %v3507 = vunpack.c.l.s4 1934713408
        %v3508 = vunpack.c.0.s8 %v3507
        %v3509 = vlaneseq
        %v3510 = vshrl.u32 %v3509, 7
        %v3511 = vsub.s32 %v3508, %v3510
        %v3512 = vrot.slane %v3504, %v3511
        %v3514 = vunpack.c.l.s4 1934713408
        %v3515 = vunpack.c.0.s8 %v3514
        %v3516 = vlaneseq
        %v3517 = vshrl.u32 %v3516, 7
        %v3518 = vsub.s32 %v3515, %v3517
        %v3519 = vrot.slane %v3505, %v3518
        %v3520 = vcombine.low %v3496, %v3512
        %v3521 = vcombine.high %v3496, %v3512
        %v3522 = vcombine.low %v3503, %v3519
        %v3523 = vcombine.high %v3503, %v3519
        %3526 = vrot.lane.b32.xlu0 %v3453, 8
        %v3527 = vpop.permute.xlu0 %3526
        %3528 = vrot.lane.b32.xlu0 %v3521, 8
        %v3529 = vpop.permute.xlu0 %3528
        %3534 = vrot.lane.b32.xlu0 %v3454, 16
        %v3535 = vpop.permute.xlu0 %3534
        %3536 = vrot.lane.b32.xlu0 %v3522, 16
        %v3537 = vpop.permute.xlu0 %3536
        %3542 = vrot.lane.b32.xlu0 %v3455, 24
        %v3543 = vpop.permute.xlu0 %3542
        %3544 = vrot.lane.b32.xlu0 %v3523, 24
        %v3545 = vpop.permute.xlu0 %3544
        %v3548 = vsel %vm2455, %v3452, %v3527
        %v3549 = vsel %vm2455, %v3520, %v3529
        %vm3550 = vcmask 130048
        %v3551 = vsel %vm3550, %v3548, %v3535
        %v3552 = vsel %vm3550, %v3549, %v3537
        %vm3553 = vcmask 195584
        %v3554 = vsel %vm3553, %v3551, %v3543
        %v3555 = vsel %vm3553, %v3552, %v3545
        %v3556 = vld [vmem:[#allocation10] sm:$0xff]
        %v3557 = vld [vmem:[#allocation10 + $0x8] sm:$0xff]
        %v3558 = vld [vmem:[#allocation10 + $0x10] sm:$0xff]
        %v3559 = vld [vmem:[#allocation10 + $0x18] sm:$0xff]
        %v3560 = vld [vmem:[#allocation12] sm:$0x1]
        %v3562 = vlaneseq
        %v3563 = vshrl.u32 %v3562, 7
        %v3564 = vsub.s32 0, %v3563
        %v3565 = vrot.slane %v3560, %v3564
        %v3568 = vsel %vm2049, %v3554, 0
        %v3571 = vsel %vm2049, %v3555, 0
        %3573 = vmatprep.subr.mxu0 0.0
        %3574 = vmatpush1.msra.mxu0 %v3556
        %3575 = vmatprep.subr.mxu0 0.0
        %3576 = vmatpush1.msra.mxu0 %v3557
        %3577 = vmatprep.subr.mxu0 0.0
        %3578 = vmatpush1.msra.mxu0 %v3558
        %3579 = vmatprep.subr.mxu0 0.0
        %3580 = vmatpush1.msra.mxu0 %v3559
        %3581 = vmatprep.subr.mxu0 0.0
        %3582 = vmatpush1.msra.mxu0 0.0
        %3583 = vmatprep.subr.mxu0 0.0
        %3584 = vmatpush1.msra.mxu0 0.0
        %3585 = vmatprep.subr.mxu0 0.0
        %3586 = vmatpush1.msra.mxu0 0.0
        %3587 = vmatprep.subr.mxu0 0.0
        %3588 = vmatpush1.msra.mxu0 0.0
        %3589 = vmatprep.subr.mxu0 0.0
        %3590 = vmatpush1.msra.mxu0 0.0
        %3591 = vmatprep.subr.mxu0 0.0
        %3592 = vmatpush1.msra.mxu0 0.0
        %3593 = vmatprep.subr.mxu0 0.0
        %3594 = vmatpush1.msra.mxu0 0.0
        %3595 = vmatprep.subr.mxu0 0.0
        %3596 = vmatpush1.msra.mxu0 0.0
        %3597 = vmatprep.subr.mxu0 0.0
        %3598 = vmatpush1.msra.mxu0 0.0
        %3599 = vmatprep.subr.mxu0 0.0
        %3600 = vmatpush1.msra.mxu0 0.0
        %3601 = vmatprep.subr.mxu0 0.0
        %3602 = vmatpush1.msra.mxu0 0.0
        %3603 = vmatprep.subr.mxu0 0.0
        %3604 = vmatpush1.msra.mxu0 0.0
        %3605 = vmatprep.subr.mxu0 0.0
        %3606 = vmatpush1.msra.mxu0 0.0
        %3607 = vmatprep.subr.mxu0 0.0
        %3608 = vmatpush1.msra.mxu0 0.0
        %3609 = vmatprep.subr.mxu0 0.0
        %3610 = vmatpush1.msra.mxu0 0.0
        %3611 = vmatprep.subr.mxu0 0.0
        %3612 = vmatpush1.msra.mxu0 0.0
        %3613 = vmatprep.subr.mxu0 0.0
        %3614 = vmatpush1.msra.mxu0 0.0
        %3615 = vmatprep.subr.mxu0 0.0
        %3616 = vmatpush1.msra.mxu0 0.0
        %3617 = vmatprep.subr.mxu0 0.0
        %3618 = vmatpush1.msra.mxu0 0.0
        %3619 = vmatprep.subr.mxu0 0.0
        %3620 = vmatpush1.msra.mxu0 0.0
        %3621 = vmatprep.subr.mxu0 0.0
        %3622 = vmatpush1.msra.mxu0 0.0
        %3623 = vmatprep.subr.mxu0 0.0
        %3624 = vmatpush1.msra.mxu0 0.0
        %3625 = vmatprep.subr.mxu0 0.0
        %3626 = vmatpush1.msra.mxu0 0.0
        %3627 = vmatprep.subr.mxu0 0.0
        %3628 = vmatpush1.msra.mxu0 0.0
        %3629 = vmatprep.subr.mxu0 0.0
        %3630 = vmatpush1.msra.mxu0 0.0
        %3631 = vmatprep.subr.mxu0 0.0
        %3632 = vmatpush1.msra.mxu0 0.0
        %3633 = vmatprep.subr.mxu0 0.0
        %3634 = vmatpush1.msra.mxu0 0.0
        %3635 = vmatprep.subr.mxu0 0.0
        %3636 = vmatpush1.msra.mxu0 0.0
        %3637 = vmatprep.mubr.f32.mxu0 0.0
        %3638 = vmatmul.mubr.f32.gmra.mrb[0].mxu0 %v3568
        %v3639 = vpop.f32.mrb[0].mxu0
        %v3640 = vadd.f32 %v3565, %v3639
        %v3641 = vpop.f32.mrb[0].mxu0
        %3642 = vmatprep.mubr.f32.mxu0 0.0
        %3643 = vmatmul.mubr.f32.gmra.mrb[0].mxu0 %v3571
        %v3644 = vpop.f32.mrb[0].mxu0
        %v3645 = vadd.f32 %v3565, %v3644
        %v3646 = vpop.f32.mrb[0].mxu0
        %3647 = vdwg.mxu0
        %v3648 = vadd.f32 %v706, %v3640
        %v3649 = vadd.f32 %v707, %v3645
        %v3650 = vsel %vm2049, %v3648, 0.0
        %3651 = vadd.xlane.f32.xlu0 %v3650
        %v3652 = vpop.xlane.xlu0 %3651
        %v3653 = vsel %vm2049, %v3649, 0.0
        %3654 = vadd.xlane.f32.xlu0 %v3653
        %v3655 = vpop.xlane.xlu0 %3654
        %v3656 = vrcp.pop 32.0
        %v3657 = vmul.f32 %v3652, %v3656
        %v3658 = vmul.f32 %v3655, %v3656
        %v3659 = vmul.f32 %v3648, %v3648
        %v3660 = vmul.f32 %v3649, %v3649
        %v3661 = vsel %vm2049, %v3659, 0.0
        %3662 = vadd.xlane.f32.xlu0 %v3661
        %v3663 = vpop.xlane.xlu0 %3662
        %v3664 = vsel %vm2049, %v3660, 0.0
        %3665 = vadd.xlane.f32.xlu0 %v3664
        %v3666 = vpop.xlane.xlu0 %3665
        %v3667 = vmul.f32 %v3663, %v3656
        %v3668 = vmul.f32 %v3666, %v3656
        %v3669 = vmul.f32 %v3657, %v3657
        %v3670 = vmul.f32 %v3658, %v3658
        %v3671 = vsub.f32 %v3667, %v3669
        %v3672 = vsub.f32 %v3668, %v3670
        %v3673 = vsub.f32 %v3648, %v3657
        %v3674 = vsub.f32 %v3649, %v3658
        %v3675 = vadd.f32 %v3671, 1e-05
        %v3676 = vadd.f32 %v3672, 1e-05
        %v3677 = vrsqrt.pop %v3675
        %v3678 = vrsqrt.pop %v3676
        %v3679 = vmul.f32 %v3673, %v3677
        %v3680 = vmul.f32 %v3674, %v3678
        %v3681 = vld [vmem:[#allocation13] sm:$0x1]
        %v3683 = vlaneseq
        %v3684 = vshrl.u32 %v3683, 7
        %v3685 = vsub.s32 0, %v3684
        %v3686 = vrot.slane %v3681, %v3685
        %v3688 = vmul.f32 %v3679, %v3686
        %v3689 = vmul.f32 %v3680, %v3686
        %v3690 = vld [vmem:[%s10] sm:$0x1]
        %v3692 = vlaneseq
        %v3693 = vshrl.u32 %v3692, 7
        %v3694 = vsub.s32 0, %v3693
        %v3695 = vrot.slane %v3690, %v3694
        %v3697 = vadd.f32 %v3688, %v3695
        %v3698 = vadd.f32 %v3689, %v3695
        %v3699 = vld [vmem:[%s11] sm:$0xff]
        %v3700 = vld [vmem:[%s11 + $0x8] sm:$0xff]
        %v3701 = vld [vmem:[%s11 + $0x10] sm:$0xff]
        %v3702 = vld [vmem:[%s11 + $0x18] sm:$0xff]
        %v3703 = vld [vmem:[%s12] sm:$0x1]
        %v3705 = vlaneseq
        %v3706 = vshrl.u32 %v3705, 7
        %v3707 = vsub.s32 0, %v3706
        %v3708 = vrot.slane %v3703, %v3707
        %v3711 = vsel %vm2049, %v3697, 0
        %v3714 = vsel %vm2049, %v3698, 0
        %3716 = vmatprep.subr.mxu0 0.0
        %3717 = vmatpush1.msra.mxu0 %v3699
        %3718 = vmatprep.subr.mxu0 0.0
        %3719 = vmatpush1.msra.mxu0 %v3700
        %3720 = vmatprep.subr.mxu0 0.0
        %3721 = vmatpush1.msra.mxu0 %v3701
        %3722 = vmatprep.subr.mxu0 0.0
        %3723 = vmatpush1.msra.mxu0 %v3702
        %3724 = vmatprep.subr.mxu0 0.0
        %3725 = vmatpush1.msra.mxu0 0.0
        %3726 = vmatprep.subr.mxu0 0.0
        %3727 = vmatpush1.msra.mxu0 0.0
        %3728 = vmatprep.subr.mxu0 0.0
        %3729 = vmatpush1.msra.mxu0 0.0
        %3730 = vmatprep.subr.mxu0 0.0
        %3731 = vmatpush1.msra.mxu0 0.0
        %3732 = vmatprep.subr.mxu0 0.0
        %3733 = vmatpush1.msra.mxu0 0.0
        %3734 = vmatprep.subr.mxu0 0.0
        %3735 = vmatpush1.msra.mxu0 0.0
        %3736 = vmatprep.subr.mxu0 0.0
        %3737 = vmatpush1.msra.mxu0 0.0
        %3738 = vmatprep.subr.mxu0 0.0
        %3739 = vmatpush1.msra.mxu0 0.0
        %3740 = vmatprep.subr.mxu0 0.0
        %3741 = vmatpush1.msra.mxu0 0.0
        %3742 = vmatprep.subr.mxu0 0.0
        %3743 = vmatpush1.msra.mxu0 0.0
        %3744 = vmatprep.subr.mxu0 0.0
        %3745 = vmatpush1.msra.mxu0 0.0
        %3746 = vmatprep.subr.mxu0 0.0
        %3747 = vmatpush1.msra.mxu0 0.0
        %3748 = vmatprep.subr.mxu0 0.0
        %3749 = vmatpush1.msra.mxu0 0.0
        %3750 = vmatprep.subr.mxu0 0.0
        %3751 = vmatpush1.msra.mxu0 0.0
        %3752 = vmatprep.subr.mxu0 0.0
        %3753 = vmatpush1.msra.mxu0 0.0
        %3754 = vmatprep.subr.mxu0 0.0
        %3755 = vmatpush1.msra.mxu0 0.0
        %3756 = vmatprep.subr.mxu0 0.0
        %3757 = vmatpush1.msra.mxu0 0.0
        %3758 = vmatprep.subr.mxu0 0.0
        %3759 = vmatpush1.msra.mxu0 0.0
        %3760 = vmatprep.subr.mxu0 0.0
        %3761 = vmatpush1.msra.mxu0 0.0
        %3762 = vmatprep.subr.mxu0 0.0
        %3763 = vmatpush1.msra.mxu0 0.0
        %3764 = vmatprep.subr.mxu0 0.0
        %3765 = vmatpush1.msra.mxu0 0.0
        %3766 = vmatprep.subr.mxu0 0.0
        %3767 = vmatpush1.msra.mxu0 0.0
        %3768 = vmatprep.subr.mxu0 0.0
        %3769 = vmatpush1.msra.mxu0 0.0
        %3770 = vmatprep.subr.mxu0 0.0
        %3771 = vmatpush1.msra.mxu0 0.0
        %3772 = vmatprep.subr.mxu0 0.0
        %3773 = vmatpush1.msra.mxu0 0.0
        %3774 = vmatprep.subr.mxu0 0.0
        %3775 = vmatpush1.msra.mxu0 0.0
        %3776 = vmatprep.subr.mxu0 0.0
        %3777 = vmatpush1.msra.mxu0 0.0
        %3778 = vmatprep.subr.mxu0 0.0
        %3779 = vmatpush1.msra.mxu0 0.0
        %3780 = vmatprep.mubr.f32.mxu0 0.0
        %3781 = vmatmul.mubr.f32.gmra.mrb[0].mxu0 %v3711
        %v3782 = vpop.f32.mrb[0].mxu0
        %v3783 = vadd.f32 %v3708, %v3782
        %v3784 = vpop.f32.mrb[0].mxu0
        %3785 = vmatprep.mubr.f32.mxu0 0.0
        %3786 = vmatmul.mubr.f32.gmra.mrb[0].mxu0 %v3714
        %v3787 = vpop.f32.mrb[0].mxu0
        %v3788 = vadd.f32 %v3708, %v3787
        %v3789 = vpop.f32.mrb[0].mxu0
        %3790 = vdwg.mxu0
        %v3791 = vmax.f32 %v3783, 0.0
        %v3792 = vmax.f32 %v3788, 0.0
        %v3793 = vld [vmem:[%s13] sm:$0xff]
        %v3794 = vld [vmem:[%s13 + $0x8] sm:$0xff]
        %v3795 = vld [vmem:[%s13 + $0x10] sm:$0xff]
        %v3796 = vld [vmem:[%s13 + $0x18] sm:$0xff]
        %v3797 = vld [vmem:[%s13 + $0x20] sm:$0xff]
        %v3798 = vld [vmem:[%s13 + $0x28] sm:$0xff]
        %v3799 = vld [vmem:[%s13 + $0x30] sm:$0xff]
        %v3800 = vld [vmem:[%s13 + $0x38] sm:$0xff]
        %v3801 = vld [vmem:[%s14] sm:$0x1]
        %v3803 = vlaneseq
        %v3804 = vshrl.u32 %v3803, 7
        %v3805 = vsub.s32 0, %v3804
        %v3806 = vrot.slane %v3801, %v3805
        %vm3808 = vcmask 523264
        %v3810 = vsel %vm3808, %v3791, 0
        %v3813 = vsel %vm3808, %v3792, 0
        %3815 = vmatprep.subr.mxu0 0.0
        %3816 = vmatpush1.msra.mxu0 %v3793
        %3817 = vmatprep.subr.mxu0 0.0
        %3818 = vmatpush1.msra.mxu0 %v3794
        %3819 = vmatprep.subr.mxu0 0.0
        %3820 = vmatpush1.msra.mxu0 %v3795
        %3821 = vmatprep.subr.mxu0 0.0
        %3822 = vmatpush1.msra.mxu0 %v3796
        %3823 = vmatprep.subr.mxu0 0.0
        %3824 = vmatpush1.msra.mxu0 %v3797
        %3825 = vmatprep.subr.mxu0 0.0
        %3826 = vmatpush1.msra.mxu0 %v3798
        %3827 = vmatprep.subr.mxu0 0.0
        %3828 = vmatpush1.msra.mxu0 %v3799
        %3829 = vmatprep.subr.mxu0 0.0
        %3830 = vmatpush1.msra.mxu0 %v3800
        %3831 = vmatprep.subr.mxu0 0.0
        %3832 = vmatpush1.msra.mxu0 0.0
        %3833 = vmatprep.subr.mxu0 0.0
        %3834 = vmatpush1.msra.mxu0 0.0
        %3835 = vmatprep.subr.mxu0 0.0
        %3836 = vmatpush1.msra.mxu0 0.0
        %3837 = vmatprep.subr.mxu0 0.0
        %3838 = vmatpush1.msra.mxu0 0.0
        %3839 = vmatprep.subr.mxu0 0.0
        %3840 = vmatpush1.msra.mxu0 0.0
        %3841 = vmatprep.subr.mxu0 0.0
        %3842 = vmatpush1.msra.mxu0 0.0
        %3843 = vmatprep.subr.mxu0 0.0
        %3844 = vmatpush1.msra.mxu0 0.0
        %3845 = vmatprep.subr.mxu0 0.0
        %3846 = vmatpush1.msra.mxu0 0.0
        %3847 = vmatprep.subr.mxu0 0.0
        %3848 = vmatpush1.msra.mxu0 0.0
        %3849 = vmatprep.subr.mxu0 0.0
        %3850 = vmatpush1.msra.mxu0 0.0
        %3851 = vmatprep.subr.mxu0 0.0
        %3852 = vmatpush1.msra.mxu0 0.0
        %3853 = vmatprep.subr.mxu0 0.0
        %3854 = vmatpush1.msra.mxu0 0.0
        %3855 = vmatprep.subr.mxu0 0.0
        %3856 = vmatpush1.msra.mxu0 0.0
        %3857 = vmatprep.subr.mxu0 0.0
        %3858 = vmatpush1.msra.mxu0 0.0
        %3859 = vmatprep.subr.mxu0 0.0
        %3860 = vmatpush1.msra.mxu0 0.0
        %3861 = vmatprep.subr.mxu0 0.0
        %3862 = vmatpush1.msra.mxu0 0.0
        %3863 = vmatprep.subr.mxu0 0.0
        %3864 = vmatpush1.msra.mxu0 0.0
        %3865 = vmatprep.subr.mxu0 0.0
        %3866 = vmatpush1.msra.mxu0 0.0
        %3867 = vmatprep.subr.mxu0 0.0
        %3868 = vmatpush1.msra.mxu0 0.0
        %3869 = vmatprep.subr.mxu0 0.0
        %3870 = vmatpush1.msra.mxu0 0.0
        %3871 = vmatprep.subr.mxu0 0.0
        %3872 = vmatpush1.msra.mxu0 0.0
        %3873 = vmatprep.subr.mxu0 0.0
        %3874 = vmatpush1.msra.mxu0 0.0
        %3875 = vmatprep.subr.mxu0 0.0
        %3876 = vmatpush1.msra.mxu0 0.0
        %3877 = vmatprep.subr.mxu0 0.0
        %3878 = vmatpush1.msra.mxu0 0.0
        %3879 = vmatprep.mubr.f32.mxu0 0.0
        %3880 = vmatmul.mubr.f32.gmra.mrb[0].mxu0 %v3810
        %v3881 = vpop.f32.mrb[0].mxu0
        %v3882 = vadd.f32 %v3806, %v3881
        %v3883 = vpop.f32.mrb[0].mxu0
        %3884 = vmatprep.mubr.f32.mxu0 0.0
        %3885 = vmatmul.mubr.f32.gmra.mrb[0].mxu0 %v3813
        %v3886 = vpop.f32.mrb[0].mxu0
        %v3887 = vadd.f32 %v3806, %v3886
        %v3888 = vpop.f32.mrb[0].mxu0
        %3889 = vdwg.mxu0
        %v3890 = vadd.f32 %v3697, %v3882
        %v3891 = vadd.f32 %v3698, %v3887
        %v3892 = vsel %vm2049, %v3890, 0.0
        %3893 = vadd.xlane.f32.xlu0 %v3892
        %v3894 = vpop.xlane.xlu0 %3893
        %v3895 = vsel %vm2049, %v3891, 0.0
        %3896 = vadd.xlane.f32.xlu0 %v3895
        %v3897 = vpop.xlane.xlu0 %3896
        %v3898 = vmul.f32 %v3894, %v3656
        %v3899 = vmul.f32 %v3897, %v3656
        %v3900 = vmul.f32 %v3890, %v3890
        %v3901 = vmul.f32 %v3891, %v3891
        %v3902 = vsel %vm2049, %v3900, 0.0
        %3903 = vadd.xlane.f32.xlu0 %v3902
        %v3904 = vpop.xlane.xlu0 %3903
        %v3905 = vsel %vm2049, %v3901, 0.0
        %3906 = vadd.xlane.f32.xlu0 %v3905
        %v3907 = vpop.xlane.xlu0 %3906
        %v3908 = vmul.f32 %v3904, %v3656
        %v3909 = vmul.f32 %v3907, %v3656
        %v3910 = vmul.f32 %v3898, %v3898
        %v3911 = vmul.f32 %v3899, %v3899
        %v3912 = vsub.f32 %v3908, %v3910
        %v3913 = vsub.f32 %v3909, %v3911
        %v3914 = vsub.f32 %v3890, %v3898
        %v3915 = vsub.f32 %v3891, %v3899
        %v3916 = vadd.f32 %v3912, 1e-05
        %v3917 = vadd.f32 %v3913, 1e-05
        %v3918 = vrsqrt.pop %v3916
        %v3919 = vrsqrt.pop %v3917
        %v3920 = vmul.f32 %v3914, %v3918
        %v3921 = vmul.f32 %v3915, %v3919
        %v3922 = vld [vmem:[%s15] sm:$0x1]
        %v3924 = vlaneseq
        %v3925 = vshrl.u32 %v3924, 7
        %v3926 = vsub.s32 0, %v3925
        %v3927 = vrot.slane %v3922, %v3926
        %v3929 = vmul.f32 %v3920, %v3927
        %v3930 = vmul.f32 %v3921, %v3927
        %v3931 = vld [vmem:[%s16] sm:$0x1]
        %v3933 = vlaneseq
        %v3934 = vshrl.u32 %v3933, 7
        %v3935 = vsub.s32 0, %v3934
        %v3936 = vrot.slane %v3931, %v3935
        %v3938 = vadd.f32 %v3929, %v3936
        %v3939 = vadd.f32 %v3930, %v3936
        %3940 = vst.msk [vmem:[%s697] sm:$0xff] %vm2049, %v3938
        %3941 = vst.msk [vmem:[%s697 + $0x8] sm:$0xff] %vm2049, %v3939
        %s3942 = sand.u32 %s437, 1
        %s3943 = scalar_lea.sflag [#allocation6], %s3942
        %s3944 = sand.u32 %s437, 1
        %s3945 = smul.addr %s3944, 16
        %s3946 = scalar_lea.vmem [#allocation15], %s3945
        // Predicated region
        $region117: #{tpu_custom_call.1} parent=87 // pred_check
          %p3947 = pneg %p447
        $region118: #{tpu_custom_call.1} parent=87 // pred_check_branch
          %3949 = sbr.rel (%p3947) target = $region120
        $region119: #{tpu_custom_call.1} parent=87 // pred_region
          %s3950 = smul.u32 2, %s44
          %s3952 = ssub.s32 256, 256
          %3953 = vsyncadd %s3943, %s3952
          %s3954 = smul.addr %s43, 4
          %s3955 = sadd.s32 %s3950, %s3954
          %s3956 = smul.addr %s3955, 128
          %s3957 = scalar_lea.hbm %s17, %s3956
          %s3958 = sshll.u32 %s3946, 4
          %s3959 = int_to_ptr.vmem [resolvable:$true] %s3958
          %3964 = dma.vmem_to_hbm [thread:$0]  %s3959, 256, %s3957, %s3943, 128, 128, 8
        $region120: #{tpu_custom_call.1} parent=87 // pred_fallthru
          _
      $region88: #{tpu_custom_call.1} parent=5 // pred_fallthru
        _
      %p3965 = scmp.le.s32.totalorder 2, %s34
      // Predicated region
      $region121: #{tpu_custom_call.1} parent=5 // pred_check
        %p3966 = pneg %p3965
      $region122: #{tpu_custom_call.1} parent=5 // pred_check_branch
        %3968 = sbr.rel (%p3966) target = $region124
      $region123: #{tpu_custom_call.1} parent=5 // pred_region
        %s3969 = ssub.s32 %s34, 2
        // Predicated region
        $region125: #{tpu_custom_call.1} parent=123 // pred_check
          %p3970 = pneg %p453
        $region126: #{tpu_custom_call.1} parent=123 // pred_check_branch
          %3972 = sbr.rel (%p3970) target = $region128
        $region127: #{tpu_custom_call.1} parent=123 // pred_region
          %s3973 = sand.u32 %s438, 1
          %s3974 = scalar_lea.sflag [#allocation6], %s3973
          %s3975 = sand.u32 %s438, 1
          %s3976 = smul.addr %s3975, 16
          %s3977 = scalar_lea.vmem [#allocation15], %s3976
          %3978 = dma.done %s3974, 256
        $region128: #{tpu_custom_call.1} parent=123 // pred_fallthru
          _
      $region124: #{tpu_custom_call.1} parent=5 // pred_fallthru
        _
    $region6: #{tpu_custom_call.1} parent=1 // loop_footer
      %s38 = sadd.s32 1, %s34
    $region7: #{tpu_custom_call.1} parent=1 // loop_footer_branch
      %33 = sbr.rel target = $region3
    $region8: #{tpu_custom_call.1} parent=1 // loop_exit
      _
    %3979 = vsyncpa [#allocation5], 1
    %s3980 = scalar_lea.sflag [#allocation5], 1
    %3981 = vsyncpa %s3980, 1
    %3982 = vsyncpa [#allocation8], 1
    %s3983 = scalar_lea.sflag [#allocation8], 1
    %3984 = vsyncpa %s3983, 1
    %3985 = vsyncpa [#allocation11], 1
    %3986 = vsyncpa [#allocation14], 1
    %3987 = vsyncpa [#allocation6], 1
    %s3988 = scalar_lea.sflag [#allocation6], 1
    %3989 = vsyncpa %s3988, 1

// kernel: tpu_custom_call.1
$region0: #{tpu_custom_call.1}
  #allocation0 [shape = 'u32[]', space=smem, size = 0x4, offset = 0x4, fixed_abs, tag = 'smem constant byte address 0x4 - core index']
  #allocation1 [shape = 'u32[144,128]{1,0:T(1,128)}', space=vmem, size = 0x12000, scoped, tag = 'internal scratch']
  #allocation2 [shape = 'f32[4,32,8]{2,1,0:T(8,128)}', space=vmem, size = 0x10000, scoped, tag = 'scratch operand']
  #allocation3 [shape = 'f32[4,32,8]{2,1,0:T(8,128)}', space=vmem, size = 0x10000, scoped, tag = 'scratch operand']
  %s0 = inlined_call_operand.vmem [shape: f32[2,32,32], index: 0, kind: input, shape index: {}]
  %s1 = inlined_call_operand.hbm [shape: f32[2,32,32], index: 1, kind: input, shape index: {}]
  %s2 = inlined_call_operand.hbm [shape: s32[2,1,32,32], index: 2, kind: input, shape index: {}]
  %s3 = inlined_call_operand.vmem [shape: f32[32,32], index: 3, kind: input, shape index: {}]
  %s4 = inlined_call_operand.vmem [shape: f32[1,32], index: 4, kind: input, shape index: {}]
  %s5 = inlined_call_operand.hbm [shape: f32[32,64], index: 5, kind: input, shape index: {}]
  %s6 = inlined_call_operand.vmem [shape: f32[1,64], index: 6, kind: input, shape index: {}]
  %s7 = inlined_call_operand.hbm [shape: f32[32,32], index: 7, kind: input, shape index: {}]
  %s8 = inlined_call_operand.hbm [shape: f32[1,32], index: 8, kind: input, shape index: {}]
  %s9 = inlined_call_operand.hbm [shape: f32[1,32], index: 9, kind: input, shape index: {}]
  %s10 = inlined_call_operand.vmem [shape: f32[1,32], index: 10, kind: input, shape index: {}]
  %s11 = inlined_call_operand.vmem [shape: f32[32,64], index: 11, kind: input, shape index: {}]
  %s12 = inlined_call_operand.vmem [shape: f32[1,64], index: 12, kind: input, shape index: {}]
  %s13 = inlined_call_operand.vmem [shape: f32[64,32], index: 13, kind: input, shape index: {}]
  %s14 = inlined_call_operand.vmem [shape: f32[1,32], index: 14, kind: input, shape index: {}]
  %s15 = inlined_call_operand.vmem [shape: f32[1,32], index: 15, kind: input, shape index: {}]
  %s16 = inlined_call_operand.vmem [shape: f32[1,32], index: 16, kind: input, shape index: {}]
  %s17 = inlined_call_operand.hbm [shape: f32[2,32,32], index: 17, kind: output, shape index: {}]
  %s18 = sld [smem:[#allocation0]]
  $region129: #{tpu_custom_call.1} parent=0
    _
  %s20 = ssub.s32 1, %s18
  %s21 = scalar_select 0, %s20, %s18
  $region1: #{tpu_custom_call.1} parent=0
    #allocation4 [shape = 'u8[16384]{0}', space=vmem, size = 0x4000, scoped, tag = 'input window, operand 1']
    #allocation5 [shape = 's32[2]{0}', space=sflag, size = 0x8, scoped, tag = 'scoped memory for tpu_custom_call.1']
    #allocation6 [shape = 's32[2]{0}', space=sflag, size = 0x8, scoped, tag = 'scoped memory for tpu_custom_call.1']
    #allocation7 [shape = 'u8[16384]{0}', space=vmem, size = 0x4000, scoped, tag = 'input window, operand 2']
    #allocation8 [shape = 's32[2]{0}', space=sflag, size = 0x8, scoped, tag = 'scoped memory for tpu_custom_call.1']
    #allocation9 [shape = 'u8[16384]{0}', space=vmem, size = 0x4000, scoped, tag = 'input window, operand 5, single buffered']
    #allocation10 [shape = 'u8[16384]{0}', space=vmem, size = 0x4000, scoped, tag = 'input window, operand 7, single buffered']
    #allocation11 [shape = 's32[1]{0}', space=sflag, size = 0x4, scoped, tag = 'scoped memory for tpu_custom_call.1']
    #allocation12 [shape = 'u8[512]{0}', space=vmem, size = 0x400, scoped, tag = 'input window, operand 8, single buffered']
    #allocation13 [shape = 'u8[512]{0}', space=vmem, size = 0x400, scoped, tag = 'input window, operand 9, single buffered']
    #allocation14 [shape = 's32[1]{0}', space=sflag, size = 0x4, scoped, tag = 'scoped memory for tpu_custom_call.1']
    #allocation15 [shape = 'u8[16384]{0}', space=vmem, size = 0x4000, scoped, tag = 'output window, operand 0']
    %22 = vsyncpa [#allocation5], 0
    %s23 = scalar_lea.sflag [#allocation5], 1
    %24 = vsyncpa %s23, 0
    %25 = vsyncpa [#allocation8], 0
    %s26 = scalar_lea.sflag [#allocation8], 1
    %27 = vsyncpa %s26, 0
    %28 = vsyncpa [#allocation11], 0
    %29 = vsyncpa [#allocation14], 0
    %30 = vsyncpa [#allocation6], 0
    %s31 = scalar_lea.sflag [#allocation6], 1
    %32 = vsyncpa %s31, 0
    loop: start=0, step=1, limit=6
    $region2: #{tpu_custom_call.1} parent=1 // loop_pre_header
      _
    $region3: #{tpu_custom_call.1} parent=1 // loop_header
      %s34 = sphi 0, %s38
      %p35 = scmp.ge.s32.totalorder %s34, 6
      %s41 = sphi 0, %s53
      %s42 = sphi 0, %s49
      %s43 = sphi 0, %s41
      %s44 = sphi 0, %s42
      %s45 = sphi 0, %s43
      %s46 = sphi 0, %s44
      %s56 = sphi 0, %s58
      %s59 = sphi 0, %s56
      %s60 = sphi 0, %s59
      %s76 = sphi 0, %s60
      %s84 = sphi 0, %s86
      %s87 = sphi 0, %s84
      %s88 = sphi 0, %s87
      %s104 = sphi 0, %s88
      %s112 = sphi 0, %s114
      %s115 = sphi 0, %s112
      %s116 = sphi 0, %s115
      %s132 = sphi 0, %s116
      %s136 = sphi 0, %s136
      %s138 = sphi 0, %s136
      %s139 = sphi 0, %s138
      %s153 = sphi 0, %s139
      %s157 = sphi 0, %s157
      %s159 = sphi 0, %s157
      %s160 = sphi 0, %s159
      %s174 = sphi 0, %s160
      %s178 = sphi 0, %s178
      %s180 = sphi 0, %s178
      %s181 = sphi 0, %s180
      %s195 = sphi 0, %s181
      %s199 = sphi 0, %s199
      %s201 = sphi 0, %s199
      %s202 = sphi 0, %s201
      %s216 = sphi 0, %s202
      %s220 = sphi 0, %s220
      %s222 = sphi 0, %s220
      %s223 = sphi 0, %s222
      %s237 = sphi 0, %s223
      %s241 = sphi 0, %s241
      %s243 = sphi 0, %s241
      %s244 = sphi 0, %s243
      %s258 = sphi 0, %s244
      %s262 = sphi 0, %s262
      %s264 = sphi 0, %s262
      %s265 = sphi 0, %s264
      %s279 = sphi 0, %s265
      %s283 = sphi 0, %s283
      %s285 = sphi 0, %s283
      %s286 = sphi 0, %s285
      %s300 = sphi 0, %s286
      %s304 = sphi 0, %s304
      %s306 = sphi 0, %s304
      %s307 = sphi 0, %s306
      %s321 = sphi 0, %s307
      %s325 = sphi 0, %s325
      %s327 = sphi 0, %s325
      %s328 = sphi 0, %s327
      %s342 = sphi 0, %s328
      %s346 = sphi 0, %s346
      %s348 = sphi 0, %s346
      %s349 = sphi 0, %s348
      %s363 = sphi 0, %s349
      %s367 = sphi 0, %s367
      %s369 = sphi 0, %s367
      %s370 = sphi 0, %s369
      %s384 = sphi 0, %s370
      %s388 = sphi 0, %s388
      %s390 = sphi 0, %s388
      %s391 = sphi 0, %s390
      %s405 = sphi 0, %s391
      %s409 = sphi 0, %s409
      %s411 = sphi 0, %s409
      %s412 = sphi 0, %s411
      %s426 = sphi 0, %s412
      %s434 = sphi 0, %s436
      %s437 = sphi 0, %s434
      %s438 = sphi 0, %s437
      %s454 = sphi 0, %s438
    $region4: #{tpu_custom_call.1} parent=1 // loop_header_branch
      %37 = sbr.rel (%p35) target = $region8
    $region5: #{tpu_custom_call.1} parent=1 // loop_body
      %s39 = ssub.s32 %s34, 1
      %s40 = ssub.s32 %s34, 2
      %s47 = sadd.s32 1, %s42
      %p48 = scmp.ge.s32.totalorder %s47, 2
      %s49 = scalar_select %p48, 0, %s47
      %s50 = sadd.s32 1, %s41
      %s51 = scalar_select %p48, %s50, %s41
      %p52 = scmp.ge.s32.totalorder %s51, 2
      %s53 = scalar_select %p52, 0, %s51
      %s54 = ssub.s32 %s41, %s53
      %p55 = scmp.eq.s32.totalorder %s54, 0
      %s57 = sadd.s32 %s56, 1
      %s58 = scalar_select %p55, %s56, %s57
      %p61 = pneg %p55
      %p62 = scmp.eq.s32.totalorder %s34, 3
      %p63 = por %p61, %p62
      %p64 = scmp.ne.s32.totalorder %s56, %s59
      %p65 = scmp.eq.s32.totalorder %s34, 0
      %p66 = por %p64, %p65
      %p67 = scmp.ne.s32.totalorder %s56, %s59
      %p68 = scmp.eq.s32.totalorder %s39, 3
      %p69 = por %p67, %p68
      %p70 = scmp.ne.s32.totalorder %s59, %s60
      %p71 = scmp.eq.s32.totalorder %s39, 0
      %p72 = por %p70, %p71
      %p73 = scmp.ne.s32.totalorder %s59, %s60
      %p74 = scmp.eq.s32.totalorder %s40, 3
      %p75 = por %p73, %p74
      %p77 = scmp.ne.s32.totalorder %s60, %s76
      %p78 = scmp.eq.s32.totalorder %s40, 0
      %p79 = por %p77, %p78
      %s80 = ssub.s32 %s41, %s53
      %s81 = ssub.s32 %s42, %s49
      %s82 = sor.u32 %s80, %s81
      %p83 = scmp.eq.s32.totalorder %s82, 0
      %s85 = sadd.s32 %s84, 1
      %s86 = scalar_select %p83, %s84, %s85
      %p89 = pneg %p83
      %p90 = scmp.eq.s32.totalorder %s34, 3
      %p91 = por %p89, %p90
      %p92 = scmp.ne.s32.totalorder %s84, %s87
      %p93 = scmp.eq.s32.totalorder %s34, 0
      %p94 = por %p92, %p93
      %p95 = scmp.ne.s32.totalorder %s84, %s87
      %p96 = scmp.eq.s32.totalorder %s39, 3
      %p97 = por %p95, %p96
      %p98 = scmp.ne.s32.totalorder %s87, %s88
      %p99 = scmp.eq.s32.totalorder %s39, 0
      %p100 = por %p98, %p99
      %p101 = scmp.ne.s32.totalorder %s87, %s88
      %p102 = scmp.eq.s32.totalorder %s40, 3
      %p103 = por %p101, %p102
      %p105 = scmp.ne.s32.totalorder %s88, %s104
      %p106 = scmp.eq.s32.totalorder %s40, 0
      %p107 = por %p105, %p106
      %s108 = ssub.s32 %s41, %s53
      %s109 = ssub.s32 %s42, %s49
      %s110 = sor.u32 %s108, %s109
      %p111 = scmp.eq.s32.totalorder %s110, 0
      %s113 = sadd.s32 %s112, 1
      %s114 = scalar_select %p111, %s112, %s113
      %p117 = pneg %p111
      %p118 = scmp.eq.s32.totalorder %s34, 3
      %p119 = por %p117, %p118
      %p120 = scmp.ne.s32.totalorder %s112, %s115
      %p121 = scmp.eq.s32.totalorder %s34, 0
      %p122 = por %p120, %p121
      %p123 = scmp.ne.s32.totalorder %s112, %s115
      %p124 = scmp.eq.s32.totalorder %s39, 3
      %p125 = por %p123, %p124
      %p126 = scmp.ne.s32.totalorder %s115, %s116
      %p127 = scmp.eq.s32.totalorder %s39, 0
      %p128 = por %p126, %p127
      %p129 = scmp.ne.s32.totalorder %s115, %s116
      %p130 = scmp.eq.s32.totalorder %s40, 3
      %p131 = por %p129, %p130
      %p133 = scmp.ne.s32.totalorder %s116, %s132
      %p134 = scmp.eq.s32.totalorder %s40, 0
      %p135 = por %p133, %p134
      %s137 = sadd.s32 %s136, 1
      %p140 = scmp.eq.s32.totalorder %s34, 3
      %p141 = scmp.ne.s32.totalorder %s136, %s138
      %p142 = scmp.eq.s32.totalorder %s34, 0
      %p143 = por %p141, %p142
      %p144 = scmp.ne.s32.totalorder %s136, %s138
      %p145 = scmp.eq.s32.totalorder %s39, 3
      %p146 = por %p144, %p145
      %p147 = scmp.ne.s32.totalorder %s138, %s139
      %p148 = scmp.eq.s32.totalorder %s39, 0
      %p149 = por %p147, %p148
      %p150 = scmp.ne.s32.totalorder %s138, %s139
      %p151 = scmp.eq.s32.totalorder %s40, 3
      %p152 = por %p150, %p151
      %p154 = scmp.ne.s32.totalorder %s139, %s153
      %p155 = scmp.eq.s32.totalorder %s40, 0
      %p156 = por %p154, %p155
      %s158 = sadd.s32 %s157, 1
      %p161 = scmp.eq.s32.totalorder %s34, 3
      %p162 = scmp.ne.s32.totalorder %s157, %s159
      %p163 = scmp.eq.s32.totalorder %s34, 0
      %p164 = por %p162, %p163
      %p165 = scmp.ne.s32.totalorder %s157, %s159
      %p166 = scmp.eq.s32.totalorder %s39, 3
      %p167 = por %p165, %p166
      %p168 = scmp.ne.s32.totalorder %s159, %s160
      %p169 = scmp.eq.s32.totalorder %s39, 0
      %p170 = por %p168, %p169
      %p171 = scmp.ne.s32.totalorder %s159, %s160
      %p172 = scmp.eq.s32.totalorder %s40, 3
      %p173 = por %p171, %p172
      %p175 = scmp.ne.s32.totalorder %s160, %s174
      %p176 = scmp.eq.s32.totalorder %s40, 0
      %p177 = por %p175, %p176
      %s179 = sadd.s32 %s178, 1
      %p182 = scmp.eq.s32.totalorder %s34, 3
      %p183 = scmp.ne.s32.totalorder %s178, %s180
      %p184 = scmp.eq.s32.totalorder %s34, 0
      %p185 = por %p183, %p184
      %p186 = scmp.ne.s32.totalorder %s178, %s180
      %p187 = scmp.eq.s32.totalorder %s39, 3
      %p188 = por %p186, %p187
      %p189 = scmp.ne.s32.totalorder %s180, %s181
      %p190 = scmp.eq.s32.totalorder %s39, 0
      %p191 = por %p189, %p190
      %p192 = scmp.ne.s32.totalorder %s180, %s181
      %p193 = scmp.eq.s32.totalorder %s40, 3
      %p194 = por %p192, %p193
      %p196 = scmp.ne.s32.totalorder %s181, %s195
      %p197 = scmp.eq.s32.totalorder %s40, 0
      %p198 = por %p196, %p197
      %s200 = sadd.s32 %s199, 1
      %p203 = scmp.eq.s32.totalorder %s34, 3
      %p204 = scmp.ne.s32.totalorder %s199, %s201
      %p205 = scmp.eq.s32.totalorder %s34, 0
      %p206 = por %p204, %p205
      %p207 = scmp.ne.s32.totalorder %s199, %s201
      %p208 = scmp.eq.s32.totalorder %s39, 3
      %p209 = por %p207, %p208
      %p210 = scmp.ne.s32.totalorder %s201, %s202
      %p211 = scmp.eq.s32.totalorder %s39, 0
      %p212 = por %p210, %p211
      %p213 = scmp.ne.s32.totalorder %s201, %s202
      %p214 = scmp.eq.s32.totalorder %s40, 3
      %p215 = por %p213, %p214
      %p217 = scmp.ne.s32.totalorder %s202, %s216
      %p218 = scmp.eq.s32.totalorder %s40, 0
      %p219 = por %p217, %p218
      %s221 = sadd.s32 %s220, 1
      %p224 = scmp.eq.s32.totalorder %s34, 3
      %p225 = scmp.ne.s32.totalorder %s220, %s222
      %p226 = scmp.eq.s32.totalorder %s34, 0
      %p227 = por %p225, %p226
      %p228 = scmp.ne.s32.totalorder %s220, %s222
      %p229 = scmp.eq.s32.totalorder %s39, 3
      %p230 = por %p228, %p229
      %p231 = scmp.ne.s32.totalorder %s222, %s223
      %p232 = scmp.eq.s32.totalorder %s39, 0
      %p233 = por %p231, %p232
      %p234 = scmp.ne.s32.totalorder %s222, %s223
      %p235 = scmp.eq.s32.totalorder %s40, 3
      %p236 = por %p234, %p235
      %p238 = scmp.ne.s32.totalorder %s223, %s237
      %p239 = scmp.eq.s32.totalorder %s40, 0
      %p240 = por %p238, %p239
      %s242 = sadd.s32 %s241, 1
      %p245 = scmp.eq.s32.totalorder %s34, 3
      %p246 = scmp.ne.s32.totalorder %s241, %s243
      %p247 = scmp.eq.s32.totalorder %s34, 0
      %p248 = por %p246, %p247
      %p249 = scmp.ne.s32.totalorder %s241, %s243
      %p250 = scmp.eq.s32.totalorder %s39, 3
      %p251 = por %p249, %p250
      %p252 = scmp.ne.s32.totalorder %s243, %s244
      %p253 = scmp.eq.s32.totalorder %s39, 0
      %p254 = por %p252, %p253
      %p255 = scmp.ne.s32.totalorder %s243, %s244
      %p256 = scmp.eq.s32.totalorder %s40, 3
      %p257 = por %p255, %p256
      %p259 = scmp.ne.s32.totalorder %s244, %s258
      %p260 = scmp.eq.s32.totalorder %s40, 0
      %p261 = por %p259, %p260
      %s263 = sadd.s32 %s262, 1
      %p266 = scmp.eq.s32.totalorder %s34, 3
      %p267 = scmp.ne.s32.totalorder %s262, %s264
      %p268 = scmp.eq.s32.totalorder %s34, 0
      %p269 = por %p267, %p268
      %p270 = scmp.ne.s32.totalorder %s262, %s264
      %p271 = scmp.eq.s32.totalorder %s39, 3
      %p272 = por %p270, %p271
      %p273 = scmp.ne.s32.totalorder %s264, %s265
      %p274 = scmp.eq.s32.totalorder %s39, 0
      %p275 = por %p273, %p274
      %p276 = scmp.ne.s32.totalorder %s264, %s265
      %p277 = scmp.eq.s32.totalorder %s40, 3
      %p278 = por %p276, %p277
      %p280 = scmp.ne.s32.totalorder %s265, %s279
      %p281 = scmp.eq.s32.totalorder %s40, 0
      %p282 = por %p280, %p281
      %s284 = sadd.s32 %s283, 1
      %p287 = scmp.eq.s32.totalorder %s34, 3
      %p288 = scmp.ne.s32.totalorder %s283, %s285
      %p289 = scmp.eq.s32.totalorder %s34, 0
      %p290 = por %p288, %p289
      %p291 = scmp.ne.s32.totalorder %s283, %s285
      %p292 = scmp.eq.s32.totalorder %s39, 3
      %p293 = por %p291, %p292
      %p294 = scmp.ne.s32.totalorder %s285, %s286
      %p295 = scmp.eq.s32.totalorder %s39, 0
      %p296 = por %p294, %p295
      %p297 = scmp.ne.s32.totalorder %s285, %s286
      %p298 = scmp.eq.s32.totalorder %s40, 3
      %p299 = por %p297, %p298
      %p301 = scmp.ne.s32.totalorder %s286, %s300
      %p302 = scmp.eq.s32.totalorder %s40, 0
      %p303 = por %p301, %p302
      %s305 = sadd.s32 %s304, 1
      %p308 = scmp.eq.s32.totalorder %s34, 3
      %p309 = scmp.ne.s32.totalorder %s304, %s306
      %p310 = scmp.eq.s32.totalorder %s34, 0
      %p311 = por %p309, %p310
      %p312 = scmp.ne.s32.totalorder %s304, %s306
      %p313 = scmp.eq.s32.totalorder %s39, 3
      %p314 = por %p312, %p313
      %p315 = scmp.ne.s32.totalorder %s306, %s307
      %p316 = scmp.eq.s32.totalorder %s39, 0
      %p317 = por %p315, %p316
      %p318 = scmp.ne.s32.totalorder %s306, %s307
      %p319 = scmp.eq.s32.totalorder %s40, 3
      %p320 = por %p318, %p319
      %p322 = scmp.ne.s32.totalorder %s307, %s321
      %p323 = scmp.eq.s32.totalorder %s40, 0
      %p324 = por %p322, %p323
      %s326 = sadd.s32 %s325, 1
      %p329 = scmp.eq.s32.totalorder %s34, 3
      %p330 = scmp.ne.s32.totalorder %s325, %s327
      %p331 = scmp.eq.s32.totalorder %s34, 0
      %p332 = por %p330, %p331
      %p333 = scmp.ne.s32.totalorder %s325, %s327
      %p334 = scmp.eq.s32.totalorder %s39, 3
      %p335 = por %p333, %p334
      %p336 = scmp.ne.s32.totalorder %s327, %s328
      %p337 = scmp.eq.s32.totalorder %s39, 0
      %p338 = por %p336, %p337
      %p339 = scmp.ne.s32.totalorder %s327, %s328
      %p340 = scmp.eq.s32.totalorder %s40, 3
      %p341 = por %p339, %p340
      %p343 = scmp.ne.s32.totalorder %s328, %s342
      %p344 = scmp.eq.s32.totalorder %s40, 0
      %p345 = por %p343, %p344
      %s347 = sadd.s32 %s346, 1
      %p350 = scmp.eq.s32.totalorder %s34, 3
      %p351 = scmp.ne.s32.totalorder %s346, %s348
      %p352 = scmp.eq.s32.totalorder %s34, 0
      %p353 = por %p351, %p352
      %p354 = scmp.ne.s32.totalorder %s346, %s348
      %p355 = scmp.eq.s32.totalorder %s39, 3
      %p356 = por %p354, %p355
      %p357 = scmp.ne.s32.totalorder %s348, %s349
      %p358 = scmp.eq.s32.totalorder %s39, 0
      %p359 = por %p357, %p358
      %p360 = scmp.ne.s32.totalorder %s348, %s349
      %p361 = scmp.eq.s32.totalorder %s40, 3
      %p362 = por %p360, %p361
      %p364 = scmp.ne.s32.totalorder %s349, %s363
      %p365 = scmp.eq.s32.totalorder %s40, 0
      %p366 = por %p364, %p365
      %s368 = sadd.s32 %s367, 1
      %p371 = scmp.eq.s32.totalorder %s34, 3
      %p372 = scmp.ne.s32.totalorder %s367, %s369
      %p373 = scmp.eq.s32.totalorder %s34, 0
      %p374 = por %p372, %p373
      %p375 = scmp.ne.s32.totalorder %s367, %s369
      %p376 = scmp.eq.s32.totalorder %s39, 3
      %p377 = por %p375, %p376
      %p378 = scmp.ne.s32.totalorder %s369, %s370
      %p379 = scmp.eq.s32.totalorder %s39, 0
      %p380 = por %p378, %p379
      %p381 = scmp.ne.s32.totalorder %s369, %s370
      %p382 = scmp.eq.s32.totalorder %s40, 3
      %p383 = por %p381, %p382
      %p385 = scmp.ne.s32.totalorder %s370, %s384
      %p386 = scmp.eq.s32.totalorder %s40, 0
      %p387 = por %p385, %p386
      %s389 = sadd.s32 %s388, 1
      %p392 = scmp.eq.s32.totalorder %s34, 3
      %p393 = scmp.ne.s32.totalorder %s388, %s390
      %p394 = scmp.eq.s32.totalorder %s34, 0
      %p395 = por %p393, %p394
      %p396 = scmp.ne.s32.totalorder %s388, %s390
      %p397 = scmp.eq.s32.totalorder %s39, 3
      %p398 = por %p396, %p397
      %p399 = scmp.ne.s32.totalorder %s390, %s391
      %p400 = scmp.eq.s32.totalorder %s39, 0
      %p401 = por %p399, %p400
      %p402 = scmp.ne.s32.totalorder %s390, %s391
      %p403 = scmp.eq.s32.totalorder %s40, 3
      %p404 = por %p402, %p403
      %p406 = scmp.ne.s32.totalorder %s391, %s405
      %p407 = scmp.eq.s32.totalorder %s40, 0
      %p408 = por %p406, %p407
      %s410 = sadd.s32 %s409, 1
      %p413 = scmp.eq.s32.totalorder %s34, 3
      %p414 = scmp.ne.s32.totalorder %s409, %s411
      %p415 = scmp.eq.s32.totalorder %s34, 0
      %p416 = por %p414, %p415
      %p417 = scmp.ne.s32.totalorder %s409, %s411
      %p418 = scmp.eq.s32.totalorder %s39, 3
      %p419 = por %p417, %p418
      %p420 = scmp.ne.s32.totalorder %s411, %s412
      %p421 = scmp.eq.s32.totalorder %s39, 0
      %p422 = por %p420, %p421
      %p423 = scmp.ne.s32.totalorder %s411, %s412
      %p424 = scmp.eq.s32.totalorder %s40, 3
      %p425 = por %p423, %p424
      %p427 = scmp.ne.s32.totalorder %s412, %s426
      %p428 = scmp.eq.s32.totalorder %s40, 0
      %p429 = por %p427, %p428
      %s430 = ssub.s32 %s41, %s53
      %s431 = ssub.s32 %s42, %s49
      %s432 = sor.u32 %s430, %s431
      %p433 = scmp.eq.s32.totalorder %s432, 0
      %s435 = sadd.s32 %s434, 1
      %s436 = scalar_select %p433, %s434, %s435
      %p439 = pneg %p433
      %p440 = scmp.eq.s32.totalorder %s34, 3
      %p441 = por %p439, %p440
      %p442 = scmp.ne.s32.totalorder %s434, %s437
      %p443 = scmp.eq.s32.totalorder %s34, 0
      %p444 = por %p442, %p443
      %p445 = scmp.ne.s32.totalorder %s434, %s437
      %p446 = scmp.eq.s32.totalorder %s39, 3
      %p447 = por %p445, %p446
      %p448 = scmp.ne.s32.totalorder %s437, %s438
      %p449 = scmp.eq.s32.totalorder %s39, 0
      %p450 = por %p448, %p449
      %p451 = scmp.ne.s32.totalorder %s437, %s438
      %p452 = scmp.eq.s32.totalorder %s40, 3
      %p453 = por %p451, %p452
      %p455 = scmp.ne.s32.totalorder %s438, %s454
      %p456 = scmp.eq.s32.totalorder %s40, 0
      %p457 = por %p455, %p456
      %p458 = scmp.le.s32.totalorder 1, %s34
      %p459 = scmp.lt.s32.totalorder %s34, 5
      %p460 = pnand %p458, %p459
      %p461 = pneg %p460
      // Predicated region
      $region9: #{tpu_custom_call.1} parent=5 // pred_check
        _
      $region10: #{tpu_custom_call.1} parent=5 // pred_check_branch
        %463 = sbr.rel (%p460) target = $region12
      $region11: #{tpu_custom_call.1} parent=5 // pred_region
        %s464 = ssub.s32 %s34, 1
        // Predicated region
        $region13: #{tpu_custom_call.1} parent=11 // pred_check
          %p465 = pneg %p149
        $region14: #{tpu_custom_call.1} parent=11 // pred_check_branch
          %467 = sbr.rel (%p465) target = $region16
        $region15: #{tpu_custom_call.1} parent=11 // pred_region
          _
        $region16: #{tpu_custom_call.1} parent=11 // pred_fallthru
          _
        // Predicated region
        $region17: #{tpu_custom_call.1} parent=11 // pred_check
          %p468 = pneg %p170
        $region18: #{tpu_custom_call.1} parent=11 // pred_check_branch
          %470 = sbr.rel (%p468) target = $region20
        $region19: #{tpu_custom_call.1} parent=11 // pred_region
          _
        $region20: #{tpu_custom_call.1} parent=11 // pred_fallthru
          _
        // Predicated region
        $region21: #{tpu_custom_call.1} parent=11 // pred_check
          %p471 = pneg %p191
        $region22: #{tpu_custom_call.1} parent=11 // pred_check_branch
          %473 = sbr.rel (%p471) target = $region24
        $region23: #{tpu_custom_call.1} parent=11 // pred_region
          %s475 = ssub.s32 512, 512
          %476 = vsyncadd [#allocation8], %s475
          %s477 = sshll.u32 [#allocation9], 4
          %s478 = int_to_ptr.vmem [resolvable:$true] %s477
          %483 = dma.hbm_to_vmem [thread:$0]  %s5, 512, %s478, [#allocation8], 128, 128, 8
        $region24: #{tpu_custom_call.1} parent=11 // pred_fallthru
          _
        // Predicated region
        $region25: #{tpu_custom_call.1} parent=11 // pred_check
          %p484 = pneg %p212
        $region26: #{tpu_custom_call.1} parent=11 // pred_check_branch
          %486 = sbr.rel (%p484) target = $region28
        $region27: #{tpu_custom_call.1} parent=11 // pred_region
          _
        $region28: #{tpu_custom_call.1} parent=11 // pred_fallthru
          _
        // Predicated region
        $region29: #{tpu_custom_call.1} parent=11 // pred_check
          %p487 = pneg %p233
        $region30: #{tpu_custom_call.1} parent=11 // pred_check_branch
          %489 = sbr.rel (%p487) target = $region32
        $region31: #{tpu_custom_call.1} parent=11 // pred_region
          %s491 = ssub.s32 512, 512
          %492 = vsyncadd [#allocation11], %s491
          %s493 = sshll.u32 [#allocation10], 4
          %s494 = int_to_ptr.vmem [resolvable:$true] %s493
          %499 = dma.hbm_to_vmem [thread:$0]  %s7, 512, %s494, [#allocation11], 128, 128, 8
        $region32: #{tpu_custom_call.1} parent=11 // pred_fallthru
          _
        // Predicated region
        $region33: #{tpu_custom_call.1} parent=11 // pred_check
          %p500 = pneg %p254
        $region34: #{tpu_custom_call.1} parent=11 // pred_check_branch
          %502 = sbr.rel (%p500) target = $region36
        $region35: #{tpu_custom_call.1} parent=11 // pred_region
          %s504 = ssub.s32 16, 16
          %505 = vsyncadd [#allocation11], %s504
          %s507 = sshll.u32 [#allocation12], 4
          %s508 = int_to_ptr.vmem [resolvable:$true] %s507
          %510 = dma.hbm_to_vmem [thread:$0]  %s8, 16, %s508, [#allocation11]
        $region36: #{tpu_custom_call.1} parent=11 // pred_fallthru
          _
        // Predicated region
        $region37: #{tpu_custom_call.1} parent=11 // pred_check
          %p511 = pneg %p275
        $region38: #{tpu_custom_call.1} parent=11 // pred_check_branch
          %513 = sbr.rel (%p511) target = $region40
        $region39: #{tpu_custom_call.1} parent=11 // pred_region
          %s515 = ssub.s32 16, 16
          %516 = vsyncadd [#allocation14], %s515
          %s518 = sshll.u32 [#allocation13], 4
          %s519 = int_to_ptr.vmem [resolvable:$true] %s518
          %521 = dma.hbm_to_vmem [thread:$0]  %s9, 16, %s519, [#allocation14]
        $region40: #{tpu_custom_call.1} parent=11 // pred_fallthru
          _
        // Predicated region
        $region41: #{tpu_custom_call.1} parent=11 // pred_check
          %p522 = pneg %p296
        $region42: #{tpu_custom_call.1} parent=11 // pred_check_branch
          %524 = sbr.rel (%p522) target = $region44
        $region43: #{tpu_custom_call.1} parent=11 // pred_region
          _
        $region44: #{tpu_custom_call.1} parent=11 // pred_fallthru
          _
        // Predicated region
        $region45: #{tpu_custom_call.1} parent=11 // pred_check
          %p525 = pneg %p317
        $region46: #{tpu_custom_call.1} parent=11 // pred_check_branch
          %527 = sbr.rel (%p525) target = $region48
        $region47: #{tpu_custom_call.1} parent=11 // pred_region
          _
        $region48: #{tpu_custom_call.1} parent=11 // pred_fallthru
          _
        // Predicated region
        $region49: #{tpu_custom_call.1} parent=11 // pred_check
          %p528 = pneg %p338
        $region50: #{tpu_custom_call.1} parent=11 // pred_check_branch
          %530 = sbr.rel (%p528) target = $region52
        $region51: #{tpu_custom_call.1} parent=11 // pred_region
          _
        $region52: #{tpu_custom_call.1} parent=11 // pred_fallthru
          _
        // Predicated region
        $region53: #{tpu_custom_call.1} parent=11 // pred_check
          %p531 = pneg %p359
        $region54: #{tpu_custom_call.1} parent=11 // pred_check_branch
          %533 = sbr.rel (%p531) target = $region56
        $region55: #{tpu_custom_call.1} parent=11 // pred_region
          _
        $region56: #{tpu_custom_call.1} parent=11 // pred_fallthru
          _
        // Predicated region
        $region57: #{tpu_custom_call.1} parent=11 // pred_check
          %p534 = pneg %p380
        $region58: #{tpu_custom_call.1} parent=11 // pred_check_branch
          %536 = sbr.rel (%p534) target = $region60
        $region59: #{tpu_custom_call.1} parent=11 // pred_region
          _
        $region60: #{tpu_custom_call.1} parent=11 // pred_fallthru
          _
        // Predicated region
        $region61: #{tpu_custom_call.1} parent=11 // pred_check
          %p537 = pneg %p401
        $region62: #{tpu_custom_call.1} parent=11 // pred_check_branch
          %539 = sbr.rel (%p537) target = $region64
        $region63: #{tpu_custom_call.1} parent=11 // pred_region
          _
        $region64: #{tpu_custom_call.1} parent=11 // pred_fallthru
          _
        // Predicated region
        $region65: #{tpu_custom_call.1} parent=11 // pred_check
          %p540 = pneg %p422
        $region66: #{tpu_custom_call.1} parent=11 // pred_check_branch
          %542 = sbr.rel (%p540) target = $region68
        $region67: #{tpu_custom_call.1} parent=11 // pred_region
          _
        $region68: #{tpu_custom_call.1} parent=11 // pred_fallthru
          _
      $region12: #{tpu_custom_call.1} parent=5 // pred_fallthru
        _
      %p543 = scmp.lt.s32.totalorder %s34, 4
      // Predicated region
      $region69: #{tpu_custom_call.1} parent=5 // pred_check
        %p544 = pneg %p543
      $region70: #{tpu_custom_call.1} parent=5 // pred_check_branch
        %546 = sbr.rel (%p544) target = $region72
      $region71: #{tpu_custom_call.1} parent=5 // pred_region
        // Predicated region
        $region73: #{tpu_custom_call.1} parent=71 // pred_check
          %p547 = pneg %p66
        $region74: #{tpu_custom_call.1} parent=71 // pred_check_branch
          %549 = sbr.rel (%p547) target = $region76
        $region75: #{tpu_custom_call.1} parent=71 // pred_region
          %p550 = scmp.lt.s32.totalorder %s41, 1
          %s551 = scalar_select %p550, %s41, 1
          %s552 = smul.addr %s551, 4
          %s553 = smul.addr %s552, 8
          %s554 = scalar_lea.vmem %s0, %s553
        $region76: #{tpu_custom_call.1} parent=71 // pred_fallthru
          _
        // Predicated region
        $region77: #{tpu_custom_call.1} parent=71 // pred_check
          %p555 = pneg %p94
        $region78: #{tpu_custom_call.1} parent=71 // pred_check_branch
          %557 = sbr.rel (%p555) target = $region80
        $region79: #{tpu_custom_call.1} parent=71 // pred_region
          %s558 = sand.u32 %s84, 1
          %s559 = scalar_lea.sflag [#allocation5], %s558
          %s560 = sand.u32 %s84, 1
          %s561 = smul.addr %s560, 16
          %s562 = scalar_lea.vmem [#allocation4], %s561
          %s563 = smul.u32 2, %s42
          %s565 = ssub.s32 256, 256
          %566 = vsyncadd %s559, %s565
          %s567 = smul.addr %s41, 4
          %s568 = sadd.s32 %s563, %s567
          %s569 = smul.addr %s568, 128
          %s570 = scalar_lea.hbm %s1, %s569
          %s571 = sshll.u32 %s562, 4
          %s572 = int_to_ptr.vmem [resolvable:$true] %s571
          %577 = dma.hbm_to_vmem [thread:$0]  %s570, 256, %s572, %s559, 128, 128, 8
        $region80: #{tpu_custom_call.1} parent=71 // pred_fallthru
          _
        // Predicated region
        $region81: #{tpu_custom_call.1} parent=71 // pred_check
          %p578 = pneg %p122
        $region82: #{tpu_custom_call.1} parent=71 // pred_check_branch
          %580 = sbr.rel (%p578) target = $region84
        $region83: #{tpu_custom_call.1} parent=71 // pred_region
          %s581 = sand.u32 %s34, 1
          %s582 = scalar_lea.sflag [#allocation8], %s581
          %s583 = sand.u32 %s112, 1
          %s584 = smul.addr %s583, 16
          %s585 = scalar_lea.vmem [#allocation7], %s584
          %s586 = smul.u32 2, %s42
          %s588 = ssub.s32 256, 256
          %589 = vsyncadd %s582, %s588
          %s590 = smul.addr %s41, 4
          %s591 = sadd.s32 %s586, %s590
          %s592 = smul.addr %s591, 128
          %s593 = scalar_lea.hbm %s2, %s592
          %s594 = sshll.u32 %s585, 4
          %s595 = int_to_ptr.vmem [resolvable:$true] %s594
          %600 = dma.hbm_to_vmem [thread:$0]  %s593, 256, %s595, %s582, 128, 128, 8
        $region84: #{tpu_custom_call.1} parent=71 // pred_fallthru
          _
      $region72: #{tpu_custom_call.1} parent=5 // pred_fallthru
        _
      %p601 = scmp.le.s32.totalorder 1, %s34
      %p602 = scmp.lt.s32.totalorder %s34, 5
      %p603 = pnand %p601, %p602
      %p604 = pneg %p603
      // Predicated region
      $region85: #{tpu_custom_call.1} parent=5 // pred_check
        _
      $region86: #{tpu_custom_call.1} parent=5 // pred_check_branch
        %606 = sbr.rel (%p603) target = $region88
      $region87: #{tpu_custom_call.1} parent=5 // pred_region
        %s607 = ssub.s32 %s34, 1
        %s608 = sand.u32 %s87, 1
        %s609 = scalar_lea.sflag [#allocation5], %s608
        %s610 = sand.u32 %s87, 1
        %s611 = smul.addr %s610, 16
        %s612 = scalar_lea.vmem [#allocation4], %s611
        // Predicated region
        $region89: #{tpu_custom_call.1} parent=87 // pred_check
          %p613 = pneg %p100
        $region90: #{tpu_custom_call.1} parent=87 // pred_check_branch
          %615 = sbr.rel (%p613) target = $region92
        $region91: #{tpu_custom_call.1} parent=87 // pred_region
          %616 = dma.done %s609, 256
        $region92: #{tpu_custom_call.1} parent=87 // pred_fallthru
          _
        %s617 = sand.u32 %s39, 1
        %s618 = scalar_lea.sflag [#allocation8], %s617
        %s619 = sand.u32 %s115, 1
        %s620 = smul.addr %s619, 16
        %s621 = scalar_lea.vmem [#allocation7], %s620
        // Predicated region
        $region93: #{tpu_custom_call.1} parent=87 // pred_check
          %p622 = pneg %p128
        $region94: #{tpu_custom_call.1} parent=87 // pred_check_branch
          %624 = sbr.rel (%p622) target = $region96
        $region95: #{tpu_custom_call.1} parent=87 // pred_region
          %625 = dma.done %s618, 256
        $region96: #{tpu_custom_call.1} parent=87 // pred_fallthru
          _
        // Predicated region
        $region97: #{tpu_custom_call.1} parent=87 // pred_check
          %p626 = pneg %p191
        $region98: #{tpu_custom_call.1} parent=87 // pred_check_branch
          %628 = sbr.rel (%p626) target = $region100
        $region99: #{tpu_custom_call.1} parent=87 // pred_region
          %629 = dma.done [#allocation8], 512
        $region100: #{tpu_custom_call.1} parent=87 // pred_fallthru
          _
        // Predicated region
        $region101: #{tpu_custom_call.1} parent=87 // pred_check
          %p630 = pneg %p233
        $region102: #{tpu_custom_call.1} parent=87 // pred_check_branch
          %632 = sbr.rel (%p630) target = $region104
        $region103: #{tpu_custom_call.1} parent=87 // pred_region
          %633 = dma.done [#allocation11], 512
        $region104: #{tpu_custom_call.1} parent=87 // pred_fallthru
          _
        // Predicated region
        $region105: #{tpu_custom_call.1} parent=87 // pred_check
          %p634 = pneg %p254
        $region106: #{tpu_custom_call.1} parent=87 // pred_check_branch
          %636 = sbr.rel (%p634) target = $region108
        $region107: #{tpu_custom_call.1} parent=87 // pred_region
          %637 = dma.done [#allocation11], 16
        $region108: #{tpu_custom_call.1} parent=87 // pred_fallthru
          _
        // Predicated region
        $region109: #{tpu_custom_call.1} parent=87 // pred_check
          %p638 = pneg %p275
        $region110: #{tpu_custom_call.1} parent=87 // pred_check_branch
          %640 = sbr.rel (%p638) target = $region112
        $region111: #{tpu_custom_call.1} parent=87 // pred_region
          %641 = dma.done [#allocation14], 16
        $region112: #{tpu_custom_call.1} parent=87 // pred_fallthru
          _
        %p642 = scmp.lt.s32.totalorder %s43, 1
        %s643 = scalar_select %p642, %s43, 1
        %s644 = smul.addr %s643, 4
        %s645 = smul.addr %s644, 8
        %s646 = scalar_lea.vmem %s0, %s645
        %p647 = pneg %p72
        %p648 = pneg %p69
        %s649 = sand.u32 %s87, 1
        %s650 = scalar_lea.sflag [#allocation5], %s649
        %s651 = sand.u32 %s87, 1
        %s652 = smul.addr %s651, 16
        %s653 = scalar_lea.vmem [#allocation4], %s652
        %p654 = pneg %p100
        %p655 = pneg %p97
        %s656 = sand.u32 %s39, 1
        %s657 = scalar_lea.sflag [#allocation8], %s656
        %s658 = sand.u32 %s115, 1
        %s659 = smul.addr %s658, 16
        %s660 = scalar_lea.vmem [#allocation7], %s659
        %p661 = pneg %p128
        %p662 = pneg %p125
        %p663 = pneg %p149
        %p664 = pneg %p146
        %p665 = pneg %p170
        %p666 = pneg %p167
        %p667 = pneg %p191
        %p668 = pneg %p188
        %p669 = pneg %p212
        %p670 = pneg %p209
        %p671 = pneg %p233
        %p672 = pneg %p230
        %p673 = pneg %p254
        %p674 = pneg %p251
        %p675 = pneg %p275
        %p676 = pneg %p272
        %p677 = pneg %p296
        %p678 = pneg %p293
        %p679 = pneg %p317
        %p680 = pneg %p314
        %p681 = pneg %p338
        %p682 = pneg %p335
        %p683 = pneg %p359
        %p684 = pneg %p356
        %p685 = pneg %p380
        %p686 = pneg %p377
        %p687 = pneg %p401
        %p688 = pneg %p398
        %p689 = pneg %p422
        %p690 = pneg %p419
        %p691 = pneg %p450
        %p692 = pneg %p447
        %s693 = sand.u32 %s437, 1
        %s694 = scalar_lea.sflag [#allocation6], %s693
        %s695 = sand.u32 %s437, 1
        %s696 = smul.addr %s695, 16
        %s697 = scalar_lea.vmem [#allocation15], %s696
        %p698 = scmp.lt.s32.totalorder %s43, 1
        %s699 = scalar_select %p698, %s43, 1
        %s700 = smul.addr %s699, 4
        %s701 = smul.addr %s700, 8
        %s702 = scalar_lea.vmem %s0, %s701
        %s703 = smul.u32 2, %s44
        %s704 = smul.u32 2, %s44
        %s705 = smul.u32 2, %s44
        %v706 = vld [vmem:[%s612] sm:$0xff]
        %v707 = vld [vmem:[%s612 + $0x8] sm:$0xff]
        %v708 = vld [vmem:[%s621] sm:$0xff]
        %v709 = vld [vmem:[%s621 + $0x8] sm:$0xff]
        %vm710 = vcmp.eq.s32.totalorder %v708, 0
        %vm711 = vcmp.eq.s32.totalorder %v709, 0
        %p712 = scmp.eq.s32.totalorder %s44, 0
        // Predicated region
        $region113: #{tpu_custom_call.1} parent=87 // pred_check
          %p713 = pneg %p712
        $region114: #{tpu_custom_call.1} parent=87 // pred_check_branch
          %715 = sbr.rel (%p713) target = $region116
        $region115: #{tpu_custom_call.1} parent=87 // pred_region
          %v716 = vld [vmem:[%s702] sm:$0xff]
          %v717 = vld [vmem:[%s702 + $0x8] sm:$0xff]
          %v718 = vld [vmem:[%s702 + $0x10] sm:$0xff]
          %v719 = vld [vmem:[%s702 + $0x18] sm:$0xff]
          %v720 = vld [vmem:[#allocation9] sm:$0xff]
          %v721 = vld [vmem:[#allocation9 + $0x8] sm:$0xff]
          %v722 = vld [vmem:[#allocation9 + $0x10] sm:$0xff]
          %v723 = vld [vmem:[#allocation9 + $0x18] sm:$0xff]
          %v724 = vld [vmem:[%s6] sm:$0x1]
          %v726 = vlaneseq
          %v727 = vshrl.u32 %v726, 7
          %v728 = vsub.s32 0, %v727
          %v729 = vrot.slane %v724, %v728
          %vm731 = vcmask 261120
          %v733 = vsel %vm731, %v716, 0
          %v736 = vsel %vm731, %v717, 0
          %v739 = vsel %vm731, %v718, 0
          %v742 = vsel %vm731, %v719, 0
          %744 = vmatprep.subr.mxu0 0.0
          %745 = vmatpush1.msra.mxu0 %v720
          %746 = vmatprep.subr.mxu0 0.0
          %747 = vmatpush1.msra.mxu0 %v721
          %748 = vmatprep.subr.mxu0 0.0
          %749 = vmatpush1.msra.mxu0 %v722
          %750 = vmatprep.subr.mxu0 0.0
          %751 = vmatpush1.msra.mxu0 %v723
          %752 = vmatprep.subr.mxu0 0.0
          %753 = vmatpush1.msra.mxu0 0.0
          %754 = vmatprep.subr.mxu0 0.0
          %755 = vmatpush1.msra.mxu0 0.0
          %756 = vmatprep.subr.mxu0 0.0
          %757 = vmatpush1.msra.mxu0 0.0
          %758 = vmatprep.subr.mxu0 0.0
          %759 = vmatpush1.msra.mxu0 0.0
          %760 = vmatprep.subr.mxu0 0.0
          %761 = vmatpush1.msra.mxu0 0.0
          %762 = vmatprep.subr.mxu0 0.0
          %763 = vmatpush1.msra.mxu0 0.0
          %764 = vmatprep.subr.mxu0 0.0
          %765 = vmatpush1.msra.mxu0 0.0
          %766 = vmatprep.subr.mxu0 0.0
          %767 = vmatpush1.msra.mxu0 0.0
          %768 = vmatprep.subr.mxu0 0.0
          %769 = vmatpush1.msra.mxu0 0.0
          %770 = vmatprep.subr.mxu0 0.0
          %771 = vmatpush1.msra.mxu0 0.0
          %772 = vmatprep.subr.mxu0 0.0
          %773 = vmatpush1.msra.mxu0 0.0
          %774 = vmatprep.subr.mxu0 0.0
          %775 = vmatpush1.msra.mxu0 0.0
          %776 = vmatprep.subr.mxu0 0.0
          %777 = vmatpush1.msra.mxu0 0.0
          %778 = vmatprep.subr.mxu0 0.0
          %779 = vmatpush1.msra.mxu0 0.0
          %780 = vmatprep.subr.mxu0 0.0
          %781 = vmatpush1.msra.mxu0 0.0
          %782 = vmatprep.subr.mxu0 0.0
          %783 = vmatpush1.msra.mxu0 0.0
          %784 = vmatprep.subr.mxu0 0.0
          %785 = vmatpush1.msra.mxu0 0.0
          %786 = vmatprep.subr.mxu0 0.0
          %787 = vmatpush1.msra.mxu0 0.0
          %788 = vmatprep.subr.mxu0 0.0
          %789 = vmatpush1.msra.mxu0 0.0
          %790 = vmatprep.subr.mxu0 0.0
          %791 = vmatpush1.msra.mxu0 0.0
          %792 = vmatprep.subr.mxu0 0.0
          %793 = vmatpush1.msra.mxu0 0.0
          %794 = vmatprep.subr.mxu0 0.0
          %795 = vmatpush1.msra.mxu0 0.0
          %796 = vmatprep.subr.mxu0 0.0
          %797 = vmatpush1.msra.mxu0 0.0
          %798 = vmatprep.subr.mxu0 0.0
          %799 = vmatpush1.msra.mxu0 0.0
          %800 = vmatprep.subr.mxu0 0.0
          %801 = vmatpush1.msra.mxu0 0.0
          %802 = vmatprep.subr.mxu0 0.0
          %803 = vmatpush1.msra.mxu0 0.0
          %804 = vmatprep.subr.mxu0 0.0
          %805 = vmatpush1.msra.mxu0 0.0
          %806 = vmatprep.subr.mxu0 0.0
          %807 = vmatpush1.msra.mxu0 0.0
          %808 = vmatprep.mubr.f32.mxu0 0.0
          %809 = vmatmul.mubr.f32.gmra.mrb[0].mxu0 %v733
          %v810 = vpop.f32.mrb[0].mxu0
          %v811 = vadd.f32 %v729, %v810
          %v812 = vpop.f32.mrb[0].mxu0
          %813 = vmatprep.mubr.f32.mxu0 0.0
          %814 = vmatmul.mubr.f32.gmra.mrb[0].mxu0 %v736
          %v815 = vpop.f32.mrb[0].mxu0
          %v816 = vadd.f32 %v729, %v815
          %v817 = vpop.f32.mrb[0].mxu0
          %818 = vmatprep.mubr.f32.mxu0 0.0
          %819 = vmatmul.mubr.f32.gmra.mrb[0].mxu0 %v739
          %v820 = vpop.f32.mrb[0].mxu0
          %v821 = vadd.f32 %v729, %v820
          %v822 = vpop.f32.mrb[0].mxu0
          %823 = vmatprep.mubr.f32.mxu0 0.0
          %824 = vmatmul.mubr.f32.gmra.mrb[0].mxu0 %v742
          %v825 = vpop.f32.mrb[0].mxu0
          %v826 = vadd.f32 %v729, %v825
          %v827 = vpop.f32.mrb[0].mxu0
          %828 = vdwg.mxu0
          %833 = vrot.lane.b32.xlu0 %v811, 120
          %v834 = vpop.permute.xlu0 %833
          %835 = vrot.lane.b32.xlu0 %v816, 120
          %v836 = vpop.permute.xlu0 %835
          %837 = vrot.lane.b32.xlu0 %v821, 120
          %v838 = vpop.permute.xlu0 %837
          %839 = vrot.lane.b32.xlu0 %v826, 120
          %v840 = vpop.permute.xlu0 %839
          %845 = vrot.lane.b32.xlu0 %v811, 112
          %v846 = vpop.permute.xlu0 %845
          %847 = vrot.lane.b32.xlu0 %v816, 112
          %v848 = vpop.permute.xlu0 %847
          %849 = vrot.lane.b32.xlu0 %v821, 112
          %v850 = vpop.permute.xlu0 %849
          %851 = vrot.lane.b32.xlu0 %v826, 112
          %v852 = vpop.permute.xlu0 %851
          %857 = vrot.lane.b32.xlu0 %v811, 104
          %v858 = vpop.permute.xlu0 %857
          %859 = vrot.lane.b32.xlu0 %v816, 104
          %v860 = vpop.permute.xlu0 %859
          %861 = vrot.lane.b32.xlu0 %v821, 104
          %v862 = vpop.permute.xlu0 %861
          %863 = vrot.lane.b32.xlu0 %v826, 104
          %v864 = vpop.permute.xlu0 %863
          %v869 = vcombine.low %v811, %v846
          %v870 = vcombine.high %v811, %v846
          %v872 = vunpack.c.l.s4 1983009808
          %v873 = vunpack.c.0.s8 %v872
          %v874 = vlaneseq
          %v875 = vshrl.u32 %v874, 7
          %v876 = vsub.s32 %v873, %v875
          %v877 = vrot.slane %v869, %v876
          %v879 = vunpack.c.l.s4 1983009808
          %v880 = vunpack.c.0.s8 %v879
          %v881 = vlaneseq
          %v882 = vshrl.u32 %v881, 7
          %v883 = vsub.s32 %v880, %v882
          %v884 = vrot.slane %v870, %v883
          %v885 = vcombine.low %v834, %v858
          %v886 = vcombine.high %v834, %v858
          %v888 = vunpack.c.l.s4 1983009808
          %v889 = vunpack.c.0.s8 %v888
          %v890 = vlaneseq
          %v891 = vshrl.u32 %v890, 7
          %v892 = vsub.s32 %v889, %v891
          %v893 = vrot.slane %v885, %v892
          %v895 = vunpack.c.l.s4 1983009808
          %v896 = vunpack.c.0.s8 %v895
          %v897 = vlaneseq
          %v898 = vshrl.u32 %v897, 7
          %v899 = vsub.s32 %v896, %v898
          %v900 = vrot.slane %v886, %v899
          %v901 = vcombine.low %v877, %v893
          %v902 = vcombine.high %v877, %v893
          %v904 = vunpack.c.l.s4 1934713408
          %v905 = vunpack.c.0.s8 %v904
          %v906 = vlaneseq
          %v907 = vshrl.u32 %v906, 7
          %v908 = vsub.s32 %v905, %v907
          %v909 = vrot.slane %v901, %v908
          %v911 = vunpack.c.l.s4 1934713408
          %v912 = vunpack.c.0.s8 %v911
          %v913 = vlaneseq
          %v914 = vshrl.u32 %v913, 7
          %v915 = vsub.s32 %v912, %v914
          %v916 = vrot.slane %v902, %v915
          %v917 = vcombine.low %v884, %v900
          %v918 = vcombine.high %v884, %v900
          %v920 = vunpack.c.l.s4 1934713408
          %v921 = vunpack.c.0.s8 %v920
          %v922 = vlaneseq
          %v923 = vshrl.u32 %v922, 7
          %v924 = vsub.s32 %v921, %v923
          %v925 = vrot.slane %v917, %v924
          %v927 = vunpack.c.l.s4 1934713408
          %v928 = vunpack.c.0.s8 %v927
          %v929 = vlaneseq
          %v930 = vshrl.u32 %v929, 7
          %v931 = vsub.s32 %v928, %v930
          %v932 = vrot.slane %v918, %v931
          %v933 = vcombine.high %v909, 0.0
          %v934 = vcombine.high %v916, 0.0
          %v935 = vcombine.high %v925, 0.0
          %v936 = vcombine.high %v932, 0.0
          %v937 = vcombine.low %v816, %v848
          %v938 = vcombine.high %v816, %v848
          %v940 = vunpack.c.l.s4 1983009808
          %v941 = vunpack.c.0.s8 %v940
          %v942 = vlaneseq
          %v943 = vshrl.u32 %v942, 7
          %v944 = vsub.s32 %v941, %v943
          %v945 = vrot.slane %v937, %v944
          %v947 = vunpack.c.l.s4 1983009808
          %v948 = vunpack.c.0.s8 %v947
          %v949 = vlaneseq
          %v950 = vshrl.u32 %v949, 7
          %v951 = vsub.s32 %v948, %v950
          %v952 = vrot.slane %v938, %v951
          %v953 = vcombine.low %v836, %v860
          %v954 = vcombine.high %v836, %v860
          %v956 = vunpack.c.l.s4 1983009808
          %v957 = vunpack.c.0.s8 %v956
          %v958 = vlaneseq
          %v959 = vshrl.u32 %v958, 7
          %v960 = vsub.s32 %v957, %v959
          %v961 = vrot.slane %v953, %v960
          %v963 = vunpack.c.l.s4 1983009808
          %v964 = vunpack.c.0.s8 %v963
          %v965 = vlaneseq
          %v966 = vshrl.u32 %v965, 7
          %v967 = vsub.s32 %v964, %v966
          %v968 = vrot.slane %v954, %v967
          %v969 = vcombine.low %v945, %v961
          %v970 = vcombine.high %v945, %v961
          %v972 = vunpack.c.l.s4 1934713408
          %v973 = vunpack.c.0.s8 %v972
          %v974 = vlaneseq
          %v975 = vshrl.u32 %v974, 7
          %v976 = vsub.s32 %v973, %v975
          %v977 = vrot.slane %v969, %v976
          %v979 = vunpack.c.l.s4 1934713408
          %v980 = vunpack.c.0.s8 %v979
          %v981 = vlaneseq
          %v982 = vshrl.u32 %v981, 7
          %v983 = vsub.s32 %v980, %v982
          %v984 = vrot.slane %v970, %v983
          %v985 = vcombine.low %v952, %v968
          %v986 = vcombine.high %v952, %v968
          %v988 = vunpack.c.l.s4 1934713408
          %v989 = vunpack.c.0.s8 %v988
          %v990 = vlaneseq
          %v991 = vshrl.u32 %v990, 7
          %v992 = vsub.s32 %v989, %v991
          %v993 = vrot.slane %v985, %v992
          %v995 = vunpack.c.l.s4 1934713408
          %v996 = vunpack.c.0.s8 %v995
          %v997 = vlaneseq
          %v998 = vshrl.u32 %v997, 7
          %v999 = vsub.s32 %v996, %v998
          %v1000 = vrot.slane %v986, %v999
          %v1001 = vcombine.high %v977, 0.0
          %v1002 = vcombine.high %v984, 0.0
          %v1003 = vcombine.high %v993, 0.0
          %v1004 = vcombine.high %v1000, 0.0
          %v1005 = vcombine.low %v821, %v850
          %v1006 = vcombine.high %v821, %v850
          %v1008 = vunpack.c.l.s4 1983009808
          %v1009 = vunpack.c.0.s8 %v1008
          %v1010 = vlaneseq
          %v1011 = vshrl.u32 %v1010, 7
          %v1012 = vsub.s32 %v1009, %v1011
          %v1013 = vrot.slane %v1005, %v1012
          %v1015 = vunpack.c.l.s4 1983009808
          %v1016 = vunpack.c.0.s8 %v1015
          %v1017 = vlaneseq
          %v1018 = vshrl.u32 %v1017, 7
          %v1019 = vsub.s32 %v1016, %v1018
          %v1020 = vrot.slane %v1006, %v1019
          %v1021 = vcombine.low %v838, %v862
          %v1022 = vcombine.high %v838, %v862
          %v1024 = vunpack.c.l.s4 1983009808
          %v1025 = vunpack.c.0.s8 %v1024
          %v1026 = vlaneseq
          %v1027 = vshrl.u32 %v1026, 7
          %v1028 = vsub.s32 %v1025, %v1027
          %v1029 = vrot.slane %v1021, %v1028
          %v1031 = vunpack.c.l.s4 1983009808
          %v1032 = vunpack.c.0.s8 %v1031
          %v1033 = vlaneseq
          %v1034 = vshrl.u32 %v1033, 7
          %v1035 = vsub.s32 %v1032, %v1034
          %v1036 = vrot.slane %v1022, %v1035
          %v1037 = vcombine.low %v1013, %v1029
          %v1038 = vcombine.high %v1013, %v1029
          %v1040 = vunpack.c.l.s4 1934713408
          %v1041 = vunpack.c.0.s8 %v1040
          %v1042 = vlaneseq
          %v1043 = vshrl.u32 %v1042, 7
          %v1044 = vsub.s32 %v1041, %v1043
          %v1045 = vrot.slane %v1037, %v1044
          %v1047 = vunpack.c.l.s4 1934713408
          %v1048 = vunpack.c.0.s8 %v1047
          %v1049 = vlaneseq
          %v1050 = vshrl.u32 %v1049, 7
          %v1051 = vsub.s32 %v1048, %v1050
          %v1052 = vrot.slane %v1038, %v1051
          %v1053 = vcombine.low %v1020, %v1036
          %v1054 = vcombine.high %v1020, %v1036
          %v1056 = vunpack.c.l.s4 1934713408
          %v1057 = vunpack.c.0.s8 %v1056
          %v1058 = vlaneseq
          %v1059 = vshrl.u32 %v1058, 7
          %v1060 = vsub.s32 %v1057, %v1059
          %v1061 = vrot.slane %v1053, %v1060
          %v1063 = vunpack.c.l.s4 1934713408
          %v1064 = vunpack.c.0.s8 %v1063
          %v1065 = vlaneseq
          %v1066 = vshrl.u32 %v1065, 7
          %v1067 = vsub.s32 %v1064, %v1066
          %v1068 = vrot.slane %v1054, %v1067
          %v1069 = vcombine.high %v1045, 0.0
          %v1070 = vcombine.high %v1052, 0.0
          %v1071 = vcombine.high %v1061, 0.0
          %v1072 = vcombine.high %v1068, 0.0
          %v1073 = vcombine.low %v826, %v852
          %v1074 = vcombine.high %v826, %v852
          %v1076 = vunpack.c.l.s4 1983009808
          %v1077 = vunpack.c.0.s8 %v1076
          %v1078 = vlaneseq
          %v1079 = vshrl.u32 %v1078, 7
          %v1080 = vsub.s32 %v1077, %v1079
          %v1081 = vrot.slane %v1073, %v1080
          %v1083 = vunpack.c.l.s4 1983009808
          %v1084 = vunpack.c.0.s8 %v1083
          %v1085 = vlaneseq
          %v1086 = vshrl.u32 %v1085, 7
          %v1087 = vsub.s32 %v1084, %v1086
          %v1088 = vrot.slane %v1074, %v1087
          %v1089 = vcombine.low %v840, %v864
          %v1090 = vcombine.high %v840, %v864
          %v1092 = vunpack.c.l.s4 1983009808
          %v1093 = vunpack.c.0.s8 %v1092
          %v1094 = vlaneseq
          %v1095 = vshrl.u32 %v1094, 7
          %v1096 = vsub.s32 %v1093, %v1095
          %v1097 = vrot.slane %v1089, %v1096
          %v1099 = vunpack.c.l.s4 1983009808
          %v1100 = vunpack.c.0.s8 %v1099
          %v1101 = vlaneseq
          %v1102 = vshrl.u32 %v1101, 7
          %v1103 = vsub.s32 %v1100, %v1102
          %v1104 = vrot.slane %v1090, %v1103
          %v1105 = vcombine.low %v1081, %v1097
          %v1106 = vcombine.high %v1081, %v1097
          %v1108 = vunpack.c.l.s4 1934713408
          %v1109 = vunpack.c.0.s8 %v1108
          %v1110 = vlaneseq
          %v1111 = vshrl.u32 %v1110, 7
          %v1112 = vsub.s32 %v1109, %v1111
          %v1113 = vrot.slane %v1105, %v1112
          %v1115 = vunpack.c.l.s4 1934713408
          %v1116 = vunpack.c.0.s8 %v1115
          %v1117 = vlaneseq
          %v1118 = vshrl.u32 %v1117, 7
          %v1119 = vsub.s32 %v1116, %v1118
          %v1120 = vrot.slane %v1106, %v1119
          %v1121 = vcombine.low %v1088, %v1104
          %v1122 = vcombine.high %v1088, %v1104
          %v1124 = vunpack.c.l.s4 1934713408
          %v1125 = vunpack.c.0.s8 %v1124
          %v1126 = vlaneseq
          %v1127 = vshrl.u32 %v1126, 7
          %v1128 = vsub.s32 %v1125, %v1127
          %v1129 = vrot.slane %v1121, %v1128
          %v1131 = vunpack.c.l.s4 1934713408
          %v1132 = vunpack.c.0.s8 %v1131
          %v1133 = vlaneseq
          %v1134 = vshrl.u32 %v1133, 7
          %v1135 = vsub.s32 %v1132, %v1134
          %v1136 = vrot.slane %v1122, %v1135
          %v1137 = vcombine.high %v1113, 0.0
          %v1138 = vcombine.high %v1120, 0.0
          %v1139 = vcombine.high %v1129, 0.0
          %v1140 = vcombine.high %v1136, 0.0
          %1141 = vrot.lane.b32.xlu0 %v811, 96
          %v1142 = vpop.permute.xlu0 %1141
          %1143 = vrot.lane.b32.xlu0 %v816, 96
          %v1144 = vpop.permute.xlu0 %1143
          %1145 = vrot.lane.b32.xlu0 %v821, 96
          %v1146 = vpop.permute.xlu0 %1145
          %1147 = vrot.lane.b32.xlu0 %v826, 96
          %v1148 = vpop.permute.xlu0 %1147
          %1149 = vrot.lane.b32.xlu0 %v834, 96
          %v1150 = vpop.permute.xlu0 %1149
          %1151 = vrot.lane.b32.xlu0 %v836, 96
          %v1152 = vpop.permute.xlu0 %1151
          %1153 = vrot.lane.b32.xlu0 %v838, 96
          %v1154 = vpop.permute.xlu0 %1153
          %1155 = vrot.lane.b32.xlu0 %v840, 96
          %v1156 = vpop.permute.xlu0 %1155
          %1157 = vrot.lane.b32.xlu0 %v846, 96
          %v1158 = vpop.permute.xlu0 %1157
          %1159 = vrot.lane.b32.xlu0 %v848, 96
          %v1160 = vpop.permute.xlu0 %1159
          %1161 = vrot.lane.b32.xlu0 %v850, 96
          %v1162 = vpop.permute.xlu0 %1161
          %1163 = vrot.lane.b32.xlu0 %v852, 96
          %v1164 = vpop.permute.xlu0 %1163
          %1165 = vrot.lane.b32.xlu0 %v858, 96
          %v1166 = vpop.permute.xlu0 %1165
          %1167 = vrot.lane.b32.xlu0 %v860, 96
          %v1168 = vpop.permute.xlu0 %1167
          %1169 = vrot.lane.b32.xlu0 %v862, 96
          %v1170 = vpop.permute.xlu0 %1169
          %1171 = vrot.lane.b32.xlu0 %v864, 96
          %v1172 = vpop.permute.xlu0 %1171
          %v1189 = vcombine.low %v1142, %v1158
          %v1190 = vcombine.high %v1142, %v1158
          %v1192 = vunpack.c.l.s4 1983009808
          %v1193 = vunpack.c.0.s8 %v1192
          %v1194 = vlaneseq
          %v1195 = vshrl.u32 %v1194, 7
          %v1196 = vsub.s32 %v1193, %v1195
          %v1197 = vrot.slane %v1189, %v1196
          %v1199 = vunpack.c.l.s4 1983009808
          %v1200 = vunpack.c.0.s8 %v1199
          %v1201 = vlaneseq
          %v1202 = vshrl.u32 %v1201, 7
          %v1203 = vsub.s32 %v1200, %v1202
          %v1204 = vrot.slane %v1190, %v1203
          %v1205 = vcombine.low %v1150, %v1166
          %v1206 = vcombine.high %v1150, %v1166
          %v1208 = vunpack.c.l.s4 1983009808
          %v1209 = vunpack.c.0.s8 %v1208
          %v1210 = vlaneseq
          %v1211 = vshrl.u32 %v1210, 7
          %v1212 = vsub.s32 %v1209, %v1211
          %v1213 = vrot.slane %v1205, %v1212
          %v1215 = vunpack.c.l.s4 1983009808
          %v1216 = vunpack.c.0.s8 %v1215
          %v1217 = vlaneseq
          %v1218 = vshrl.u32 %v1217, 7
          %v1219 = vsub.s32 %v1216, %v1218
          %v1220 = vrot.slane %v1206, %v1219
          %v1221 = vcombine.low %v1197, %v1213
          %v1222 = vcombine.high %v1197, %v1213
          %v1224 = vunpack.c.l.s4 1934713408
          %v1225 = vunpack.c.0.s8 %v1224
          %v1226 = vlaneseq
          %v1227 = vshrl.u32 %v1226, 7
          %v1228 = vsub.s32 %v1225, %v1227
          %v1229 = vrot.slane %v1221, %v1228
          %v1231 = vunpack.c.l.s4 1934713408
          %v1232 = vunpack.c.0.s8 %v1231
          %v1233 = vlaneseq
          %v1234 = vshrl.u32 %v1233, 7
          %v1235 = vsub.s32 %v1232, %v1234
          %v1236 = vrot.slane %v1222, %v1235
          %v1237 = vcombine.low %v1204, %v1220
          %v1238 = vcombine.high %v1204, %v1220
          %v1240 = vunpack.c.l.s4 1934713408
          %v1241 = vunpack.c.0.s8 %v1240
          %v1242 = vlaneseq
          %v1243 = vshrl.u32 %v1242, 7
          %v1244 = vsub.s32 %v1241, %v1243
          %v1245 = vrot.slane %v1237, %v1244
          %v1247 = vunpack.c.l.s4 1934713408
          %v1248 = vunpack.c.0.s8 %v1247
          %v1249 = vlaneseq
          %v1250 = vshrl.u32 %v1249, 7
          %v1251 = vsub.s32 %v1248, %v1250
          %v1252 = vrot.slane %v1238, %v1251
          %v1253 = vcombine.high %v1229, 0.0
          %v1254 = vcombine.high %v1236, 0.0
          %v1255 = vcombine.high %v1245, 0.0
          %v1256 = vcombine.high %v1252, 0.0
          %v1257 = vcombine.low %v1144, %v1160
          %v1258 = vcombine.high %v1144, %v1160
          %v1260 = vunpack.c.l.s4 1983009808
          %v1261 = vunpack.c.0.s8 %v1260
          %v1262 = vlaneseq
          %v1263 = vshrl.u32 %v1262, 7
          %v1264 = vsub.s32 %v1261, %v1263
          %v1265 = vrot.slane %v1257, %v1264
          %v1267 = vunpack.c.l.s4 1983009808
          %v1268 = vunpack.c.0.s8 %v1267
          %v1269 = vlaneseq
          %v1270 = vshrl.u32 %v1269, 7
          %v1271 = vsub.s32 %v1268, %v1270
          %v1272 = vrot.slane %v1258, %v1271
          %v1273 = vcombine.low %v1152, %v1168
          %v1274 = vcombine.high %v1152, %v1168
          %v1276 = vunpack.c.l.s4 1983009808
          %v1277 = vunpack.c.0.s8 %v1276
          %v1278 = vlaneseq
          %v1279 = vshrl.u32 %v1278, 7
          %v1280 = vsub.s32 %v1277, %v1279
          %v1281 = vrot.slane %v1273, %v1280
          %v1283 = vunpack.c.l.s4 1983009808
          %v1284 = vunpack.c.0.s8 %v1283
          %v1285 = vlaneseq
          %v1286 = vshrl.u32 %v1285, 7
          %v1287 = vsub.s32 %v1284, %v1286
          %v1288 = vrot.slane %v1274, %v1287
          %v1289 = vcombine.low %v1265, %v1281
          %v1290 = vcombine.high %v1265, %v1281
          %v1292 = vunpack.c.l.s4 1934713408
          %v1293 = vunpack.c.0.s8 %v1292
          %v1294 = vlaneseq
          %v1295 = vshrl.u32 %v1294, 7
          %v1296 = vsub.s32 %v1293, %v1295
          %v1297 = vrot.slane %v1289, %v1296
          %v1299 = vunpack.c.l.s4 1934713408
          %v1300 = vunpack.c.0.s8 %v1299
          %v1301 = vlaneseq
          %v1302 = vshrl.u32 %v1301, 7
          %v1303 = vsub.s32 %v1300, %v1302
          %v1304 = vrot.slane %v1290, %v1303
          %v1305 = vcombine.low %v1272, %v1288
          %v1306 = vcombine.high %v1272, %v1288
          %v1308 = vunpack.c.l.s4 1934713408
          %v1309 = vunpack.c.0.s8 %v1308
          %v1310 = vlaneseq
          %v1311 = vshrl.u32 %v1310, 7
          %v1312 = vsub.s32 %v1309, %v1311
          %v1313 = vrot.slane %v1305, %v1312
          %v1315 = vunpack.c.l.s4 1934713408
          %v1316 = vunpack.c.0.s8 %v1315
          %v1317 = vlaneseq
          %v1318 = vshrl.u32 %v1317, 7
          %v1319 = vsub.s32 %v1316, %v1318
          %v1320 = vrot.slane %v1306, %v1319
          %v1321 = vcombine.high %v1297, 0.0
          %v1322 = vcombine.high %v1304, 0.0
          %v1323 = vcombine.high %v1313, 0.0
          %v1324 = vcombine.high %v1320, 0.0
          %v1325 = vcombine.low %v1146, %v1162
          %v1326 = vcombine.high %v1146, %v1162
          %v1328 = vunpack.c.l.s4 1983009808
          %v1329 = vunpack.c.0.s8 %v1328
          %v1330 = vlaneseq
          %v1331 = vshrl.u32 %v1330, 7
          %v1332 = vsub.s32 %v1329, %v1331
          %v1333 = vrot.slane %v1325, %v1332
          %v1335 = vunpack.c.l.s4 1983009808
          %v1336 = vunpack.c.0.s8 %v1335
          %v1337 = vlaneseq
          %v1338 = vshrl.u32 %v1337, 7
          %v1339 = vsub.s32 %v1336, %v1338
          %v1340 = vrot.slane %v1326, %v1339
          %v1341 = vcombine.low %v1154, %v1170
          %v1342 = vcombine.high %v1154, %v1170
          %v1344 = vunpack.c.l.s4 1983009808
          %v1345 = vunpack.c.0.s8 %v1344
          %v1346 = vlaneseq
          %v1347 = vshrl.u32 %v1346, 7
          %v1348 = vsub.s32 %v1345, %v1347
          %v1349 = vrot.slane %v1341, %v1348
          %v1351 = vunpack.c.l.s4 1983009808
          %v1352 = vunpack.c.0.s8 %v1351
          %v1353 = vlaneseq
          %v1354 = vshrl.u32 %v1353, 7
          %v1355 = vsub.s32 %v1352, %v1354
          %v1356 = vrot.slane %v1342, %v1355
          %v1357 = vcombine.low %v1333, %v1349
          %v1358 = vcombine.high %v1333, %v1349
          %v1360 = vunpack.c.l.s4 1934713408
          %v1361 = vunpack.c.0.s8 %v1360
          %v1362 = vlaneseq
          %v1363 = vshrl.u32 %v1362, 7
          %v1364 = vsub.s32 %v1361, %v1363
          %v1365 = vrot.slane %v1357, %v1364
          %v1367 = vunpack.c.l.s4 1934713408
          %v1368 = vunpack.c.0.s8 %v1367
          %v1369 = vlaneseq
          %v1370 = vshrl.u32 %v1369, 7
          %v1371 = vsub.s32 %v1368, %v1370
          %v1372 = vrot.slane %v1358, %v1371
          %v1373 = vcombine.low %v1340, %v1356
          %v1374 = vcombine.high %v1340, %v1356
          %v1376 = vunpack.c.l.s4 1934713408
          %v1377 = vunpack.c.0.s8 %v1376
          %v1378 = vlaneseq
          %v1379 = vshrl.u32 %v1378, 7
          %v1380 = vsub.s32 %v1377, %v1379
          %v1381 = vrot.slane %v1373, %v1380
          %v1383 = vunpack.c.l.s4 1934713408
          %v1384 = vunpack.c.0.s8 %v1383
          %v1385 = vlaneseq
          %v1386 = vshrl.u32 %v1385, 7
          %v1387 = vsub.s32 %v1384, %v1386
          %v1388 = vrot.slane %v1374, %v1387
          %v1389 = vcombine.high %v1365, 0.0
          %v1390 = vcombine.high %v1372, 0.0
          %v1391 = vcombine.high %v1381, 0.0
          %v1392 = vcombine.high %v1388, 0.0
          %v1393 = vcombine.low %v1148, %v1164
          %v1394 = vcombine.high %v1148, %v1164
          %v1396 = vunpack.c.l.s4 1983009808
          %v1397 = vunpack.c.0.s8 %v1396
          %v1398 = vlaneseq
          %v1399 = vshrl.u32 %v1398, 7
          %v1400 = vsub.s32 %v1397, %v1399
          %v1401 = vrot.slane %v1393, %v1400
          %v1403 = vunpack.c.l.s4 1983009808
          %v1404 = vunpack.c.0.s8 %v1403
          %v1405 = vlaneseq
          %v1406 = vshrl.u32 %v1405, 7
          %v1407 = vsub.s32 %v1404, %v1406
          %v1408 = vrot.slane %v1394, %v1407
          %v1409 = vcombine.low %v1156, %v1172
          %v1410 = vcombine.high %v1156, %v1172
          %v1412 = vunpack.c.l.s4 1983009808
          %v1413 = vunpack.c.0.s8 %v1412
          %v1414 = vlaneseq
          %v1415 = vshrl.u32 %v1414, 7
          %v1416 = vsub.s32 %v1413, %v1415
          %v1417 = vrot.slane %v1409, %v1416
          %v1419 = vunpack.c.l.s4 1983009808
          %v1420 = vunpack.c.0.s8 %v1419
          %v1421 = vlaneseq
          %v1422 = vshrl.u32 %v1421, 7
          %v1423 = vsub.s32 %v1420, %v1422
          %v1424 = vrot.slane %v1410, %v1423
          %v1425 = vcombine.low %v1401, %v1417
          %v1426 = vcombine.high %v1401, %v1417
          %v1428 = vunpack.c.l.s4 1934713408
          %v1429 = vunpack.c.0.s8 %v1428
          %v1430 = vlaneseq
          %v1431 = vshrl.u32 %v1430, 7
          %v1432 = vsub.s32 %v1429, %v1431
          %v1433 = vrot.slane %v1425, %v1432
          %v1435 = vunpack.c.l.s4 1934713408
          %v1436 = vunpack.c.0.s8 %v1435
          %v1437 = vlaneseq
          %v1438 = vshrl.u32 %v1437, 7
          %v1439 = vsub.s32 %v1436, %v1438
          %v1440 = vrot.slane %v1426, %v1439
          %v1441 = vcombine.low %v1408, %v1424
          %v1442 = vcombine.high %v1408, %v1424
          %v1444 = vunpack.c.l.s4 1934713408
          %v1445 = vunpack.c.0.s8 %v1444
          %v1446 = vlaneseq
          %v1447 = vshrl.u32 %v1446, 7
          %v1448 = vsub.s32 %v1445, %v1447
          %v1449 = vrot.slane %v1441, %v1448
          %v1451 = vunpack.c.l.s4 1934713408
          %v1452 = vunpack.c.0.s8 %v1451
          %v1453 = vlaneseq
          %v1454 = vshrl.u32 %v1453, 7
          %v1455 = vsub.s32 %v1452, %v1454
          %v1456 = vrot.slane %v1442, %v1455
          %v1457 = vcombine.high %v1433, 0.0
          %v1458 = vcombine.high %v1440, 0.0
          %v1459 = vcombine.high %v1449, 0.0
          %v1460 = vcombine.high %v1456, 0.0
          %v1461 = vcombine.low %v909, %v916
          %v1463 = vunpack.c.l.s4 1983009808
          %v1464 = vunpack.c.0.s8 %v1463
          %v1465 = vlaneseq
          %v1466 = vshrl.u32 %v1465, 7
          %v1467 = vsub.s32 %v1464, %v1466
          %v1468 = vrot.slane %v1461, %v1467
          %v1469 = vcombine.low %v933, %v934
          %v1471 = vunpack.c.l.s4 1983009808
          %v1472 = vunpack.c.0.s8 %v1471
          %v1473 = vlaneseq
          %v1474 = vshrl.u32 %v1473, 7
          %v1475 = vsub.s32 %v1472, %v1474
          %v1476 = vrot.slane %v1469, %v1475
          %v1477 = vcombine.low %v925, %v932
          %v1479 = vunpack.c.l.s4 1983009808
          %v1480 = vunpack.c.0.s8 %v1479
          %v1481 = vlaneseq
          %v1482 = vshrl.u32 %v1481, 7
          %v1483 = vsub.s32 %v1480, %v1482
          %v1484 = vrot.slane %v1477, %v1483
          %v1485 = vcombine.low %v935, %v936
          %v1487 = vunpack.c.l.s4 1983009808
          %v1488 = vunpack.c.0.s8 %v1487
          %v1489 = vlaneseq
          %v1490 = vshrl.u32 %v1489, 7
          %v1491 = vsub.s32 %v1488, %v1490
          %v1492 = vrot.slane %v1485, %v1491
          %v1493 = vcombine.low %v1468, %v1476
          %v1494 = vcombine.high %v1468, %v1476
          %v1496 = vunpack.c.l.s4 1934713408
          %v1497 = vunpack.c.0.s8 %v1496
          %v1498 = vlaneseq
          %v1499 = vshrl.u32 %v1498, 7
          %v1500 = vsub.s32 %v1497, %v1499
          %v1501 = vrot.slane %v1493, %v1500
          %v1503 = vunpack.c.l.s4 1934713408
          %v1504 = vunpack.c.0.s8 %v1503
          %v1505 = vlaneseq
          %v1506 = vshrl.u32 %v1505, 7
          %v1507 = vsub.s32 %v1504, %v1506
          %v1508 = vrot.slane %v1494, %v1507
          %v1509 = vcombine.low %v1484, %v1492
          %v1510 = vcombine.high %v1484, %v1492
          %v1512 = vunpack.c.l.s4 1934713408
          %v1513 = vunpack.c.0.s8 %v1512
          %v1514 = vlaneseq
          %v1515 = vshrl.u32 %v1514, 7
          %v1516 = vsub.s32 %v1513, %v1515
          %v1517 = vrot.slane %v1509, %v1516
          %v1519 = vunpack.c.l.s4 1934713408
          %v1520 = vunpack.c.0.s8 %v1519
          %v1521 = vlaneseq
          %v1522 = vshrl.u32 %v1521, 7
          %v1523 = vsub.s32 %v1520, %v1522
          %v1524 = vrot.slane %v1510, %v1523
          %v1525 = vcombine.low %v1501, %v1517
          %v1526 = vcombine.high %v1501, %v1517
          %v1527 = vcombine.low %v1508, %v1524
          %v1528 = vcombine.high %v1508, %v1524
          %v1529 = vcombine.low %v977, %v984
          %v1531 = vunpack.c.l.s4 1983009808
          %v1532 = vunpack.c.0.s8 %v1531
          %v1533 = vlaneseq
          %v1534 = vshrl.u32 %v1533, 7
          %v1535 = vsub.s32 %v1532, %v1534
          %v1536 = vrot.slane %v1529, %v1535
          %v1537 = vcombine.low %v1001, %v1002
          %v1539 = vunpack.c.l.s4 1983009808
          %v1540 = vunpack.c.0.s8 %v1539
          %v1541 = vlaneseq
          %v1542 = vshrl.u32 %v1541, 7
          %v1543 = vsub.s32 %v1540, %v1542
          %v1544 = vrot.slane %v1537, %v1543
          %v1545 = vcombine.low %v993, %v1000
          %v1547 = vunpack.c.l.s4 1983009808
          %v1548 = vunpack.c.0.s8 %v1547
          %v1549 = vlaneseq
          %v1550 = vshrl.u32 %v1549, 7
          %v1551 = vsub.s32 %v1548, %v1550
          %v1552 = vrot.slane %v1545, %v1551
          %v1553 = vcombine.low %v1003, %v1004
          %v1555 = vunpack.c.l.s4 1983009808
          %v1556 = vunpack.c.0.s8 %v1555
          %v1557 = vlaneseq
          %v1558 = vshrl.u32 %v1557, 7
          %v1559 = vsub.s32 %v1556, %v1558
          %v1560 = vrot.slane %v1553, %v1559
          %v1561 = vcombine.low %v1536, %v1544
          %v1562 = vcombine.high %v1536, %v1544
          %v1564 = vunpack.c.l.s4 1934713408
          %v1565 = vunpack.c.0.s8 %v1564
          %v1566 = vlaneseq
          %v1567 = vshrl.u32 %v1566, 7
          %v1568 = vsub.s32 %v1565, %v1567
          %v1569 = vrot.slane %v1561, %v1568
          %v1571 = vunpack.c.l.s4 1934713408
          %v1572 = vunpack.c.0.s8 %v1571
          %v1573 = vlaneseq
          %v1574 = vshrl.u32 %v1573, 7
          %v1575 = vsub.s32 %v1572, %v1574
          %v1576 = vrot.slane %v1562, %v1575
          %v1577 = vcombine.low %v1552, %v1560
          %v1578 = vcombine.high %v1552, %v1560
          %v1580 = vunpack.c.l.s4 1934713408
          %v1581 = vunpack.c.0.s8 %v1580
          %v1582 = vlaneseq
          %v1583 = vshrl.u32 %v1582, 7
          %v1584 = vsub.s32 %v1581, %v1583
          %v1585 = vrot.slane %v1577, %v1584
          %v1587 = vunpack.c.l.s4 1934713408
          %v1588 = vunpack.c.0.s8 %v1587
          %v1589 = vlaneseq
          %v1590 = vshrl.u32 %v1589, 7
          %v1591 = vsub.s32 %v1588, %v1590
          %v1592 = vrot.slane %v1578, %v1591
          %v1593 = vcombine.low %v1569, %v1585
          %v1594 = vcombine.high %v1569, %v1585
          %v1595 = vcombine.low %v1576, %v1592
          %v1596 = vcombine.high %v1576, %v1592
          %v1597 = vcombine.low %v1045, %v1052
          %v1599 = vunpack.c.l.s4 1983009808
          %v1600 = vunpack.c.0.s8 %v1599
          %v1601 = vlaneseq
          %v1602 = vshrl.u32 %v1601, 7
          %v1603 = vsub.s32 %v1600, %v1602
          %v1604 = vrot.slane %v1597, %v1603
          %v1605 = vcombine.low %v1069, %v1070
          %v1607 = vunpack.c.l.s4 1983009808
          %v1608 = vunpack.c.0.s8 %v1607
          %v1609 = vlaneseq
          %v1610 = vshrl.u32 %v1609, 7
          %v1611 = vsub.s32 %v1608, %v1610
          %v1612 = vrot.slane %v1605, %v1611
          %v1613 = vcombine.low %v1061, %v1068
          %v1615 = vunpack.c.l.s4 1983009808
          %v1616 = vunpack.c.0.s8 %v1615
          %v1617 = vlaneseq
          %v1618 = vshrl.u32 %v1617, 7
          %v1619 = vsub.s32 %v1616, %v1618
          %v1620 = vrot.slane %v1613, %v1619
          %v1621 = vcombine.low %v1071, %v1072
          %v1623 = vunpack.c.l.s4 1983009808
          %v1624 = vunpack.c.0.s8 %v1623
          %v1625 = vlaneseq
          %v1626 = vshrl.u32 %v1625, 7
          %v1627 = vsub.s32 %v1624, %v1626
          %v1628 = vrot.slane %v1621, %v1627
          %v1629 = vcombine.low %v1604, %v1612
          %v1630 = vcombine.high %v1604, %v1612
          %v1632 = vunpack.c.l.s4 1934713408
          %v1633 = vunpack.c.0.s8 %v1632
          %v1634 = vlaneseq
          %v1635 = vshrl.u32 %v1634, 7
          %v1636 = vsub.s32 %v1633, %v1635
          %v1637 = vrot.slane %v1629, %v1636
          %v1639 = vunpack.c.l.s4 1934713408
          %v1640 = vunpack.c.0.s8 %v1639
          %v1641 = vlaneseq
          %v1642 = vshrl.u32 %v1641, 7
          %v1643 = vsub.s32 %v1640, %v1642
          %v1644 = vrot.slane %v1630, %v1643
          %v1645 = vcombine.low %v1620, %v1628
          %v1646 = vcombine.high %v1620, %v1628
          %v1648 = vunpack.c.l.s4 1934713408
          %v1649 = vunpack.c.0.s8 %v1648
          %v1650 = vlaneseq
          %v1651 = vshrl.u32 %v1650, 7
          %v1652 = vsub.s32 %v1649, %v1651
          %v1653 = vrot.slane %v1645, %v1652
          %v1655 = vunpack.c.l.s4 1934713408
          %v1656 = vunpack.c.0.s8 %v1655
          %v1657 = vlaneseq
          %v1658 = vshrl.u32 %v1657, 7
          %v1659 = vsub.s32 %v1656, %v1658
          %v1660 = vrot.slane %v1646, %v1659
          %v1661 = vcombine.low %v1637, %v1653
          %v1662 = vcombine.high %v1637, %v1653
          %v1663 = vcombine.low %v1644, %v1660
          %v1664 = vcombine.high %v1644, %v1660
          %v1665 = vcombine.low %v1113, %v1120
          %v1667 = vunpack.c.l.s4 1983009808
          %v1668 = vunpack.c.0.s8 %v1667
          %v1669 = vlaneseq
          %v1670 = vshrl.u32 %v1669, 7
          %v1671 = vsub.s32 %v1668, %v1670
          %v1672 = vrot.slane %v1665, %v1671
          %v1673 = vcombine.low %v1137, %v1138
          %v1675 = vunpack.c.l.s4 1983009808
          %v1676 = vunpack.c.0.s8 %v1675
          %v1677 = vlaneseq
          %v1678 = vshrl.u32 %v1677, 7
          %v1679 = vsub.s32 %v1676, %v1678
          %v1680 = vrot.slane %v1673, %v1679
          %v1681 = vcombine.low %v1129, %v1136
          %v1683 = vunpack.c.l.s4 1983009808
          %v1684 = vunpack.c.0.s8 %v1683
          %v1685 = vlaneseq
          %v1686 = vshrl.u32 %v1685, 7
          %v1687 = vsub.s32 %v1684, %v1686
          %v1688 = vrot.slane %v1681, %v1687
          %v1689 = vcombine.low %v1139, %v1140
          %v1691 = vunpack.c.l.s4 1983009808
          %v1692 = vunpack.c.0.s8 %v1691
          %v1693 = vlaneseq
          %v1694 = vshrl.u32 %v1693, 7
          %v1695 = vsub.s32 %v1692, %v1694
          %v1696 = vrot.slane %v1689, %v1695
          %v1697 = vcombine.low %v1672, %v1680
          %v1698 = vcombine.high %v1672, %v1680
          %v1700 = vunpack.c.l.s4 1934713408
          %v1701 = vunpack.c.0.s8 %v1700
          %v1702 = vlaneseq
          %v1703 = vshrl.u32 %v1702, 7
          %v1704 = vsub.s32 %v1701, %v1703
          %v1705 = vrot.slane %v1697, %v1704
          %v1707 = vunpack.c.l.s4 1934713408
          %v1708 = vunpack.c.0.s8 %v1707
          %v1709 = vlaneseq
          %v1710 = vshrl.u32 %v1709, 7
          %v1711 = vsub.s32 %v1708, %v1710
          %v1712 = vrot.slane %v1698, %v1711
          %v1713 = vcombine.low %v1688, %v1696
          %v1714 = vcombine.high %v1688, %v1696
          %v1716 = vunpack.c.l.s4 1934713408
          %v1717 = vunpack.c.0.s8 %v1716
          %v1718 = vlaneseq
          %v1719 = vshrl.u32 %v1718, 7
          %v1720 = vsub.s32 %v1717, %v1719
          %v1721 = vrot.slane %v1713, %v1720
          %v1723 = vunpack.c.l.s4 1934713408
          %v1724 = vunpack.c.0.s8 %v1723
          %v1725 = vlaneseq
          %v1726 = vshrl.u32 %v1725, 7
          %v1727 = vsub.s32 %v1724, %v1726
          %v1728 = vrot.slane %v1714, %v1727
          %v1729 = vcombine.low %v1705, %v1721
          %v1730 = vcombine.high %v1705, %v1721
          %v1731 = vcombine.low %v1712, %v1728
          %v1732 = vcombine.high %v1712, %v1728
          %vm1733 = vcmask 64512
          %1734 = vst.msk [vmem:[#allocation2] sm:$0xff] %vm1733, %v1525
          %1735 = vst.msk [vmem:[#allocation2 + $0x8] sm:$0xff] %vm1733, %v1593
          %1736 = vst.msk [vmem:[#allocation2 + $0x10] sm:$0xff] %vm1733, %v1661
          %1737 = vst.msk [vmem:[#allocation2 + $0x18] sm:$0xff] %vm1733, %v1729
          %1738 = vst.msk [vmem:[#allocation2 + $0x20] sm:$0xff] %vm1733, %v1526
          %1739 = vst.msk [vmem:[#allocation2 + $0x28] sm:$0xff] %vm1733, %v1594
          %1740 = vst.msk [vmem:[#allocation2 + $0x30] sm:$0xff] %vm1733, %v1662
          %1741 = vst.msk [vmem:[#allocation2 + $0x38] sm:$0xff] %vm1733, %v1730
          %1742 = vst.msk [vmem:[#allocation2 + $0x40] sm:$0xff] %vm1733, %v1527
          %1743 = vst.msk [vmem:[#allocation2 + $0x48] sm:$0xff] %vm1733, %v1595
          %1744 = vst.msk [vmem:[#allocation2 + $0x50] sm:$0xff] %vm1733, %v1663
          %1745 = vst.msk [vmem:[#allocation2 + $0x58] sm:$0xff] %vm1733, %v1731
          %1746 = vst.msk [vmem:[#allocation2 + $0x60] sm:$0xff] %vm1733, %v1528
          %1747 = vst.msk [vmem:[#allocation2 + $0x68] sm:$0xff] %vm1733, %v1596
          %1748 = vst.msk [vmem:[#allocation2 + $0x70] sm:$0xff] %vm1733, %v1664
          %1749 = vst.msk [vmem:[#allocation2 + $0x78] sm:$0xff] %vm1733, %v1732
          %v1750 = vcombine.low %v1229, %v1236
          %v1752 = vunpack.c.l.s4 1983009808
          %v1753 = vunpack.c.0.s8 %v1752
          %v1754 = vlaneseq
          %v1755 = vshrl.u32 %v1754, 7
          %v1756 = vsub.s32 %v1753, %v1755
          %v1757 = vrot.slane %v1750, %v1756
          %v1758 = vcombine.low %v1253, %v1254
          %v1760 = vunpack.c.l.s4 1983009808
          %v1761 = vunpack.c.0.s8 %v1760
          %v1762 = vlaneseq
          %v1763 = vshrl.u32 %v1762, 7
          %v1764 = vsub.s32 %v1761, %v1763
          %v1765 = vrot.slane %v1758, %v1764
          %v1766 = vcombine.low %v1245, %v1252
          %v1768 = vunpack.c.l.s4 1983009808
          %v1769 = vunpack.c.0.s8 %v1768
          %v1770 = vlaneseq
          %v1771 = vshrl.u32 %v1770, 7
          %v1772 = vsub.s32 %v1769, %v1771
          %v1773 = vrot.slane %v1766, %v1772
          %v1774 = vcombine.low %v1255, %v1256
          %v1776 = vunpack.c.l.s4 1983009808
          %v1777 = vunpack.c.0.s8 %v1776
          %v1778 = vlaneseq
          %v1779 = vshrl.u32 %v1778, 7
          %v1780 = vsub.s32 %v1777, %v1779
          %v1781 = vrot.slane %v1774, %v1780
          %v1782 = vcombine.low %v1757, %v1765
          %v1783 = vcombine.high %v1757, %v1765
          %v1785 = vunpack.c.l.s4 1934713408
          %v1786 = vunpack.c.0.s8 %v1785
          %v1787 = vlaneseq
          %v1788 = vshrl.u32 %v1787, 7
          %v1789 = vsub.s32 %v1786, %v1788
          %v1790 = vrot.slane %v1782, %v1789
          %v1792 = vunpack.c.l.s4 1934713408
          %v1793 = vunpack.c.0.s8 %v1792
          %v1794 = vlaneseq
          %v1795 = vshrl.u32 %v1794, 7
          %v1796 = vsub.s32 %v1793, %v1795
          %v1797 = vrot.slane %v1783, %v1796
          %v1798 = vcombine.low %v1773, %v1781
          %v1799 = vcombine.high %v1773, %v1781
          %v1801 = vunpack.c.l.s4 1934713408
          %v1802 = vunpack.c.0.s8 %v1801
          %v1803 = vlaneseq
          %v1804 = vshrl.u32 %v1803, 7
          %v1805 = vsub.s32 %v1802, %v1804
          %v1806 = vrot.slane %v1798, %v1805
          %v1808 = vunpack.c.l.s4 1934713408
          %v1809 = vunpack.c.0.s8 %v1808
          %v1810 = vlaneseq
          %v1811 = vshrl.u32 %v1810, 7
          %v1812 = vsub.s32 %v1809, %v1811
          %v1813 = vrot.slane %v1799, %v1812
          %v1814 = vcombine.low %v1790, %v1806
          %v1815 = vcombine.high %v1790, %v1806
          %v1816 = vcombine.low %v1797, %v1813
          %v1817 = vcombine.high %v1797, %v1813
          %v1818 = vcombine.low %v1297, %v1304
          %v1820 = vunpack.c.l.s4 1983009808
          %v1821 = vunpack.c.0.s8 %v1820
          %v1822 = vlaneseq
          %v1823 = vshrl.u32 %v1822, 7
          %v1824 = vsub.s32 %v1821, %v1823
          %v1825 = vrot.slane %v1818, %v1824
          %v1826 = vcombine.low %v1321, %v1322
          %v1828 = vunpack.c.l.s4 1983009808
          %v1829 = vunpack.c.0.s8 %v1828
          %v1830 = vlaneseq
          %v1831 = vshrl.u32 %v1830, 7
          %v1832 = vsub.s32 %v1829, %v1831
          %v1833 = vrot.slane %v1826, %v1832
          %v1834 = vcombine.low %v1313, %v1320
          %v1836 = vunpack.c.l.s4 1983009808
          %v1837 = vunpack.c.0.s8 %v1836
          %v1838 = vlaneseq
          %v1839 = vshrl.u32 %v1838, 7
          %v1840 = vsub.s32 %v1837, %v1839
          %v1841 = vrot.slane %v1834, %v1840
          %v1842 = vcombine.low %v1323, %v1324
          %v1844 = vunpack.c.l.s4 1983009808
          %v1845 = vunpack.c.0.s8 %v1844
          %v1846 = vlaneseq
          %v1847 = vshrl.u32 %v1846, 7
          %v1848 = vsub.s32 %v1845, %v1847
          %v1849 = vrot.slane %v1842, %v1848
          %v1850 = vcombine.low %v1825, %v1833
          %v1851 = vcombine.high %v1825, %v1833
          %v1853 = vunpack.c.l.s4 1934713408
          %v1854 = vunpack.c.0.s8 %v1853
          %v1855 = vlaneseq
          %v1856 = vshrl.u32 %v1855, 7
          %v1857 = vsub.s32 %v1854, %v1856
          %v1858 = vrot.slane %v1850, %v1857
          %v1860 = vunpack.c.l.s4 1934713408
          %v1861 = vunpack.c.0.s8 %v1860
          %v1862 = vlaneseq
          %v1863 = vshrl.u32 %v1862, 7
          %v1864 = vsub.s32 %v1861, %v1863
          %v1865 = vrot.slane %v1851, %v1864
          %v1866 = vcombine.low %v1841, %v1849
          %v1867 = vcombine.high %v1841, %v1849
          %v1869 = vunpack.c.l.s4 1934713408
          %v1870 = vunpack.c.0.s8 %v1869
          %v1871 = vlaneseq
          %v1872 = vshrl.u32 %v1871, 7
          %v1873 = vsub.s32 %v1870, %v1872
          %v1874 = vrot.slane %v1866, %v1873
          %v1876 = vunpack.c.l.s4 1934713408
          %v1877 = vunpack.c.0.s8 %v1876
          %v1878 = vlaneseq
          %v1879 = vshrl.u32 %v1878, 7
          %v1880 = vsub.s32 %v1877, %v1879
          %v1881 = vrot.slane %v1867, %v1880
          %v1882 = vcombine.low %v1858, %v1874
          %v1883 = vcombine.high %v1858, %v1874
          %v1884 = vcombine.low %v1865, %v1881
          %v1885 = vcombine.high %v1865, %v1881
          %v1886 = vcombine.low %v1365, %v1372
          %v1888 = vunpack.c.l.s4 1983009808
          %v1889 = vunpack.c.0.s8 %v1888
          %v1890 = vlaneseq
          %v1891 = vshrl.u32 %v1890, 7
          %v1892 = vsub.s32 %v1889, %v1891
          %v1893 = vrot.slane %v1886, %v1892
          %v1894 = vcombine.low %v1389, %v1390
          %v1896 = vunpack.c.l.s4 1983009808
          %v1897 = vunpack.c.0.s8 %v1896
          %v1898 = vlaneseq
          %v1899 = vshrl.u32 %v1898, 7
          %v1900 = vsub.s32 %v1897, %v1899
          %v1901 = vrot.slane %v1894, %v1900
          %v1902 = vcombine.low %v1381, %v1388
          %v1904 = vunpack.c.l.s4 1983009808
          %v1905 = vunpack.c.0.s8 %v1904
          %v1906 = vlaneseq
          %v1907 = vshrl.u32 %v1906, 7
          %v1908 = vsub.s32 %v1905, %v1907
          %v1909 = vrot.slane %v1902, %v1908
          %v1910 = vcombine.low %v1391, %v1392
          %v1912 = vunpack.c.l.s4 1983009808
          %v1913 = vunpack.c.0.s8 %v1912
          %v1914 = vlaneseq
          %v1915 = vshrl.u32 %v1914, 7
          %v1916 = vsub.s32 %v1913, %v1915
          %v1917 = vrot.slane %v1910, %v1916
          %v1918 = vcombine.low %v1893, %v1901
          %v1919 = vcombine.high %v1893, %v1901
          %v1921 = vunpack.c.l.s4 1934713408
          %v1922 = vunpack.c.0.s8 %v1921
          %v1923 = vlaneseq
          %v1924 = vshrl.u32 %v1923, 7
          %v1925 = vsub.s32 %v1922, %v1924
          %v1926 = vrot.slane %v1918, %v1925
          %v1928 = vunpack.c.l.s4 1934713408
          %v1929 = vunpack.c.0.s8 %v1928
          %v1930 = vlaneseq
          %v1931 = vshrl.u32 %v1930, 7
          %v1932 = vsub.s32 %v1929, %v1931
          %v1933 = vrot.slane %v1919, %v1932
          %v1934 = vcombine.low %v1909, %v1917
          %v1935 = vcombine.high %v1909, %v1917
          %v1937 = vunpack.c.l.s4 1934713408
          %v1938 = vunpack.c.0.s8 %v1937
          %v1939 = vlaneseq
          %v1940 = vshrl.u32 %v1939, 7
          %v1941 = vsub.s32 %v1938, %v1940
          %v1942 = vrot.slane %v1934, %v1941
          %v1944 = vunpack.c.l.s4 1934713408
          %v1945 = vunpack.c.0.s8 %v1944
          %v1946 = vlaneseq
          %v1947 = vshrl.u32 %v1946, 7
          %v1948 = vsub.s32 %v1945, %v1947
          %v1949 = vrot.slane %v1935, %v1948
          %v1950 = vcombine.low %v1926, %v1942
          %v1951 = vcombine.high %v1926, %v1942
          %v1952 = vcombine.low %v1933, %v1949
          %v1953 = vcombine.high %v1933, %v1949
          %v1954 = vcombine.low %v1433, %v1440
          %v1956 = vunpack.c.l.s4 1983009808
          %v1957 = vunpack.c.0.s8 %v1956
          %v1958 = vlaneseq
          %v1959 = vshrl.u32 %v1958, 7
          %v1960 = vsub.s32 %v1957, %v1959
          %v1961 = vrot.slane %v1954, %v1960
          %v1962 = vcombine.low %v1457, %v1458
          %v1964 = vunpack.c.l.s4 1983009808
          %v1965 = vunpack.c.0.s8 %v1964
          %v1966 = vlaneseq
          %v1967 = vshrl.u32 %v1966, 7
          %v1968 = vsub.s32 %v1965, %v1967
          %v1969 = vrot.slane %v1962, %v1968
          %v1970 = vcombine.low %v1449, %v1456
          %v1972 = vunpack.c.l.s4 1983009808
          %v1973 = vunpack.c.0.s8 %v1972
          %v1974 = vlaneseq
          %v1975 = vshrl.u32 %v1974, 7
          %v1976 = vsub.s32 %v1973, %v1975
          %v1977 = vrot.slane %v1970, %v1976
          %v1978 = vcombine.low %v1459, %v1460
          %v1980 = vunpack.c.l.s4 1983009808
          %v1981 = vunpack.c.0.s8 %v1980
          %v1982 = vlaneseq
          %v1983 = vshrl.u32 %v1982, 7
          %v1984 = vsub.s32 %v1981, %v1983
          %v1985 = vrot.slane %v1978, %v1984
          %v1986 = vcombine.low %v1961, %v1969
          %v1987 = vcombine.high %v1961, %v1969
          %v1989 = vunpack.c.l.s4 1934713408
          %v1990 = vunpack.c.0.s8 %v1989
          %v1991 = vlaneseq
          %v1992 = vshrl.u32 %v1991, 7
          %v1993 = vsub.s32 %v1990, %v1992
          %v1994 = vrot.slane %v1986, %v1993
          %v1996 = vunpack.c.l.s4 1934713408
          %v1997 = vunpack.c.0.s8 %v1996
          %v1998 = vlaneseq
          %v1999 = vshrl.u32 %v1998, 7
          %v2000 = vsub.s32 %v1997, %v1999
          %v2001 = vrot.slane %v1987, %v2000
          %v2002 = vcombine.low %v1977, %v1985
          %v2003 = vcombine.high %v1977, %v1985
          %v2005 = vunpack.c.l.s4 1934713408
          %v2006 = vunpack.c.0.s8 %v2005
          %v2007 = vlaneseq
          %v2008 = vshrl.u32 %v2007, 7
          %v2009 = vsub.s32 %v2006, %v2008
          %v2010 = vrot.slane %v2002, %v2009
          %v2012 = vunpack.c.l.s4 1934713408
          %v2013 = vunpack.c.0.s8 %v2012
          %v2014 = vlaneseq
          %v2015 = vshrl.u32 %v2014, 7
          %v2016 = vsub.s32 %v2013, %v2015
          %v2017 = vrot.slane %v2003, %v2016
          %v2018 = vcombine.low %v1994, %v2010
          %v2019 = vcombine.high %v1994, %v2010
          %v2020 = vcombine.low %v2001, %v2017
          %v2021 = vcombine.high %v2001, %v2017
          %2022 = vst.msk [vmem:[#allocation3] sm:$0xff] %vm1733, %v1814
          %2023 = vst.msk [vmem:[#allocation3 + $0x8] sm:$0xff] %vm1733, %v1882
          %2024 = vst.msk [vmem:[#allocation3 + $0x10] sm:$0xff] %vm1733, %v1950
          %2025 = vst.msk [vmem:[#allocation3 + $0x18] sm:$0xff] %vm1733, %v2018
          %2026 = vst.msk [vmem:[#allocation3 + $0x20] sm:$0xff] %vm1733, %v1815
          %2027 = vst.msk [vmem:[#allocation3 + $0x28] sm:$0xff] %vm1733, %v1883
          %2028 = vst.msk [vmem:[#allocation3 + $0x30] sm:$0xff] %vm1733, %v1951
          %2029 = vst.msk [vmem:[#allocation3 + $0x38] sm:$0xff] %vm1733, %v2019
          %2030 = vst.msk [vmem:[#allocation3 + $0x40] sm:$0xff] %vm1733, %v1816
          %2031 = vst.msk [vmem:[#allocation3 + $0x48] sm:$0xff] %vm1733, %v1884
          %2032 = vst.msk [vmem:[#allocation3 + $0x50] sm:$0xff] %vm1733, %v1952
          %2033 = vst.msk [vmem:[#allocation3 + $0x58] sm:$0xff] %vm1733, %v2020
          %2034 = vst.msk [vmem:[#allocation3 + $0x60] sm:$0xff] %vm1733, %v1817
          %2035 = vst.msk [vmem:[#allocation3 + $0x68] sm:$0xff] %vm1733, %v1885
          %2036 = vst.msk [vmem:[#allocation3 + $0x70] sm:$0xff] %vm1733, %v1953
          %2037 = vst.msk [vmem:[#allocation3 + $0x78] sm:$0xff] %vm1733, %v2021
        $region116: #{tpu_custom_call.1} parent=87 // pred_fallthru
          _
        %v2038 = vld [vmem:[%s3] sm:$0xff]
        %v2039 = vld [vmem:[%s3 + $0x8] sm:$0xff]
        %v2040 = vld [vmem:[%s3 + $0x10] sm:$0xff]
        %v2041 = vld [vmem:[%s3 + $0x18] sm:$0xff]
        %v2042 = vld [vmem:[%s4] sm:$0x1]
        %v2044 = vlaneseq
        %v2045 = vshrl.u32 %v2044, 7
        %v2046 = vsub.s32 0, %v2045
        %v2047 = vrot.slane %v2042, %v2046
        %vm2049 = vcmask 261120
        %v2051 = vsel %vm2049, %v706, 0
        %v2054 = vsel %vm2049, %v707, 0
        %2056 = vmatprep.subr.mxu0 0.0
        %2057 = vmatpush1.msra.mxu0 %v2038
        %2058 = vmatprep.subr.mxu0 0.0
        %2059 = vmatpush1.msra.mxu0 %v2039
        %2060 = vmatprep.subr.mxu0 0.0
        %2061 = vmatpush1.msra.mxu0 %v2040
        %2062 = vmatprep.subr.mxu0 0.0
        %2063 = vmatpush1.msra.mxu0 %v2041
        %2064 = vmatprep.subr.mxu0 0.0
        %2065 = vmatpush1.msra.mxu0 0.0
        %2066 = vmatprep.subr.mxu0 0.0
        %2067 = vmatpush1.msra.mxu0 0.0
        %2068 = vmatprep.subr.mxu0 0.0
        %2069 = vmatpush1.msra.mxu0 0.0
        %2070 = vmatprep.subr.mxu0 0.0
        %2071 = vmatpush1.msra.mxu0 0.0
        %2072 = vmatprep.subr.mxu0 0.0
        %2073 = vmatpush1.msra.mxu0 0.0
        %2074 = vmatprep.subr.mxu0 0.0
        %2075 = vmatpush1.msra.mxu0 0.0
        %2076 = vmatprep.subr.mxu0 0.0
        %2077 = vmatpush1.msra.mxu0 0.0
        %2078 = vmatprep.subr.mxu0 0.0
        %2079 = vmatpush1.msra.mxu0 0.0
        %2080 = vmatprep.subr.mxu0 0.0
        %2081 = vmatpush1.msra.mxu0 0.0
        %2082 = vmatprep.subr.mxu0 0.0
        %2083 = vmatpush1.msra.mxu0 0.0
        %2084 = vmatprep.subr.mxu0 0.0
        %2085 = vmatpush1.msra.mxu0 0.0
        %2086 = vmatprep.subr.mxu0 0.0
        %2087 = vmatpush1.msra.mxu0 0.0
        %2088 = vmatprep.subr.mxu0 0.0
        %2089 = vmatpush1.msra.mxu0 0.0
        %2090 = vmatprep.subr.mxu0 0.0
        %2091 = vmatpush1.msra.mxu0 0.0
        %2092 = vmatprep.subr.mxu0 0.0
        %2093 = vmatpush1.msra.mxu0 0.0
        %2094 = vmatprep.subr.mxu0 0.0
        %2095 = vmatpush1.msra.mxu0 0.0
        %2096 = vmatprep.subr.mxu0 0.0
        %2097 = vmatpush1.msra.mxu0 0.0
        %2098 = vmatprep.subr.mxu0 0.0
        %2099 = vmatpush1.msra.mxu0 0.0
        %2100 = vmatprep.subr.mxu0 0.0
        %2101 = vmatpush1.msra.mxu0 0.0
        %2102 = vmatprep.subr.mxu0 0.0
        %2103 = vmatpush1.msra.mxu0 0.0
        %2104 = vmatprep.subr.mxu0 0.0
        %2105 = vmatpush1.msra.mxu0 0.0
        %2106 = vmatprep.subr.mxu0 0.0
        %2107 = vmatpush1.msra.mxu0 0.0
        %2108 = vmatprep.subr.mxu0 0.0
        %2109 = vmatpush1.msra.mxu0 0.0
        %2110 = vmatprep.subr.mxu0 0.0
        %2111 = vmatpush1.msra.mxu0 0.0
        %2112 = vmatprep.subr.mxu0 0.0
        %2113 = vmatpush1.msra.mxu0 0.0
        %2114 = vmatprep.subr.mxu0 0.0
        %2115 = vmatpush1.msra.mxu0 0.0
        %2116 = vmatprep.subr.mxu0 0.0
        %2117 = vmatpush1.msra.mxu0 0.0
        %2118 = vmatprep.subr.mxu0 0.0
        %2119 = vmatpush1.msra.mxu0 0.0
        %2120 = vmatprep.mubr.f32.mxu0 0.0
        %2121 = vmatmul.mubr.f32.gmra.mrb[0].mxu0 %v2051
        %v2122 = vpop.f32.mrb[0].mxu0
        %v2123 = vadd.f32 %v2047, %v2122
        %v2124 = vpop.f32.mrb[0].mxu0
        %2125 = vmatprep.mubr.f32.mxu0 0.0
        %2126 = vmatmul.mubr.f32.gmra.mrb[0].mxu0 %v2054
        %v2127 = vpop.f32.mrb[0].mxu0
        %v2128 = vadd.f32 %v2047, %v2127
        %v2129 = vpop.f32.mrb[0].mxu0
        %2130 = vdwg.mxu0
        %2133 = vrot.lane.b32.xlu0 %v2123, 120
        %v2134 = vpop.permute.xlu0 %2133
        %2135 = vrot.lane.b32.xlu0 %v2128, 120
        %v2136 = vpop.permute.xlu0 %2135
        %2139 = vrot.lane.b32.xlu0 %v2123, 112
        %v2140 = vpop.permute.xlu0 %2139
        %2141 = vrot.lane.b32.xlu0 %v2128, 112
        %v2142 = vpop.permute.xlu0 %2141
        %2145 = vrot.lane.b32.xlu0 %v2123, 104
        %v2146 = vpop.permute.xlu0 %2145
        %2147 = vrot.lane.b32.xlu0 %v2128, 104
        %v2148 = vpop.permute.xlu0 %2147
        %v2151 = vcombine.low %v2123, %v2140
        %v2152 = vcombine.high %v2123, %v2140
        %v2154 = vunpack.c.l.s4 1983009808
        %v2155 = vunpack.c.0.s8 %v2154
        %v2156 = vlaneseq
        %v2157 = vshrl.u32 %v2156, 7
        %v2158 = vsub.s32 %v2155, %v2157
        %v2159 = vrot.slane %v2151, %v2158
        %v2161 = vunpack.c.l.s4 1983009808
        %v2162 = vunpack.c.0.s8 %v2161
        %v2163 = vlaneseq
        %v2164 = vshrl.u32 %v2163, 7
        %v2165 = vsub.s32 %v2162, %v2164
        %v2166 = vrot.slane %v2152, %v2165
        %v2167 = vcombine.low %v2134, %v2146
        %v2168 = vcombine.high %v2134, %v2146
        %v2170 = vunpack.c.l.s4 1983009808
        %v2171 = vunpack.c.0.s8 %v2170
        %v2172 = vlaneseq
        %v2173 = vshrl.u32 %v2172, 7
        %v2174 = vsub.s32 %v2171, %v2173
        %v2175 = vrot.slane %v2167, %v2174
        %v2177 = vunpack.c.l.s4 1983009808
        %v2178 = vunpack.c.0.s8 %v2177
        %v2179 = vlaneseq
        %v2180 = vshrl.u32 %v2179, 7
        %v2181 = vsub.s32 %v2178, %v2180
        %v2182 = vrot.slane %v2168, %v2181
        %v2183 = vcombine.low %v2159, %v2175
        %v2184 = vcombine.high %v2159, %v2175
        %v2186 = vunpack.c.l.s4 1934713408
        %v2187 = vunpack.c.0.s8 %v2186
        %v2188 = vlaneseq
        %v2189 = vshrl.u32 %v2188, 7
        %v2190 = vsub.s32 %v2187, %v2189
        %v2191 = vrot.slane %v2183, %v2190
        %v2193 = vunpack.c.l.s4 1934713408
        %v2194 = vunpack.c.0.s8 %v2193
        %v2195 = vlaneseq
        %v2196 = vshrl.u32 %v2195, 7
        %v2197 = vsub.s32 %v2194, %v2196
        %v2198 = vrot.slane %v2184, %v2197
        %v2199 = vcombine.low %v2166, %v2182
        %v2200 = vcombine.high %v2166, %v2182
        %v2202 = vunpack.c.l.s4 1934713408
        %v2203 = vunpack.c.0.s8 %v2202
        %v2204 = vlaneseq
        %v2205 = vshrl.u32 %v2204, 7
        %v2206 = vsub.s32 %v2203, %v2205
        %v2207 = vrot.slane %v2199, %v2206
        %v2209 = vunpack.c.l.s4 1934713408
        %v2210 = vunpack.c.0.s8 %v2209
        %v2211 = vlaneseq
        %v2212 = vshrl.u32 %v2211, 7
        %v2213 = vsub.s32 %v2210, %v2212
        %v2214 = vrot.slane %v2200, %v2213
        %v2215 = vcombine.high %v2191, 0.0
        %v2216 = vcombine.high %v2198, 0.0
        %v2217 = vcombine.high %v2207, 0.0
        %v2218 = vcombine.high %v2214, 0.0
        %v2219 = vcombine.low %v2128, %v2142
        %v2220 = vcombine.high %v2128, %v2142
        %v2222 = vunpack.c.l.s4 1983009808
        %v2223 = vunpack.c.0.s8 %v2222
        %v2224 = vlaneseq
        %v2225 = vshrl.u32 %v2224, 7
        %v2226 = vsub.s32 %v2223, %v2225
        %v2227 = vrot.slane %v2219, %v2226
        %v2229 = vunpack.c.l.s4 1983009808
        %v2230 = vunpack.c.0.s8 %v2229
        %v2231 = vlaneseq
        %v2232 = vshrl.u32 %v2231, 7
        %v2233 = vsub.s32 %v2230, %v2232
        %v2234 = vrot.slane %v2220, %v2233
        %v2235 = vcombine.low %v2136, %v2148
        %v2236 = vcombine.high %v2136, %v2148
        %v2238 = vunpack.c.l.s4 1983009808
        %v2239 = vunpack.c.0.s8 %v2238
        %v2240 = vlaneseq
        %v2241 = vshrl.u32 %v2240, 7
        %v2242 = vsub.s32 %v2239, %v2241
        %v2243 = vrot.slane %v2235, %v2242
        %v2245 = vunpack.c.l.s4 1983009808
        %v2246 = vunpack.c.0.s8 %v2245
        %v2247 = vlaneseq
        %v2248 = vshrl.u32 %v2247, 7
        %v2249 = vsub.s32 %v2246, %v2248
        %v2250 = vrot.slane %v2236, %v2249
        %v2251 = vcombine.low %v2227, %v2243
        %v2252 = vcombine.high %v2227, %v2243
        %v2254 = vunpack.c.l.s4 1934713408
        %v2255 = vunpack.c.0.s8 %v2254
        %v2256 = vlaneseq
        %v2257 = vshrl.u32 %v2256, 7
        %v2258 = vsub.s32 %v2255, %v2257
        %v2259 = vrot.slane %v2251, %v2258
        %v2261 = vunpack.c.l.s4 1934713408
        %v2262 = vunpack.c.0.s8 %v2261
        %v2263 = vlaneseq
        %v2264 = vshrl.u32 %v2263, 7
        %v2265 = vsub.s32 %v2262, %v2264
        %v2266 = vrot.slane %v2252, %v2265
        %v2267 = vcombine.low %v2234, %v2250
        %v2268 = vcombine.high %v2234, %v2250
        %v2270 = vunpack.c.l.s4 1934713408
        %v2271 = vunpack.c.0.s8 %v2270
        %v2272 = vlaneseq
        %v2273 = vshrl.u32 %v2272, 7
        %v2274 = vsub.s32 %v2271, %v2273
        %v2275 = vrot.slane %v2267, %v2274
        %v2277 = vunpack.c.l.s4 1934713408
        %v2278 = vunpack.c.0.s8 %v2277
        %v2279 = vlaneseq
        %v2280 = vshrl.u32 %v2279, 7
        %v2281 = vsub.s32 %v2278, %v2280
        %v2282 = vrot.slane %v2268, %v2281
        %v2283 = vcombine.high %v2259, 0.0
        %v2284 = vcombine.high %v2266, 0.0
        %v2285 = vcombine.high %v2275, 0.0
        %v2286 = vcombine.high %v2282, 0.0
        %v2287 = vcombine.low %v2191, %v2198
        %v2289 = vunpack.c.l.s4 1983009808
        %v2290 = vunpack.c.0.s8 %v2289
        %v2291 = vlaneseq
        %v2292 = vshrl.u32 %v2291, 7
        %v2293 = vsub.s32 %v2290, %v2292
        %v2294 = vrot.slane %v2287, %v2293
        %v2295 = vcombine.low %v2215, %v2216
        %v2297 = vunpack.c.l.s4 1983009808
        %v2298 = vunpack.c.0.s8 %v2297
        %v2299 = vlaneseq
        %v2300 = vshrl.u32 %v2299, 7
        %v2301 = vsub.s32 %v2298, %v2300
        %v2302 = vrot.slane %v2295, %v2301
        %v2303 = vcombine.low %v2207, %v2214
        %v2305 = vunpack.c.l.s4 1983009808
        %v2306 = vunpack.c.0.s8 %v2305
        %v2307 = vlaneseq
        %v2308 = vshrl.u32 %v2307, 7
        %v2309 = vsub.s32 %v2306, %v2308
        %v2310 = vrot.slane %v2303, %v2309
        %v2311 = vcombine.low %v2217, %v2218
        %v2313 = vunpack.c.l.s4 1983009808
        %v2314 = vunpack.c.0.s8 %v2313
        %v2315 = vlaneseq
        %v2316 = vshrl.u32 %v2315, 7
        %v2317 = vsub.s32 %v2314, %v2316
        %v2318 = vrot.slane %v2311, %v2317
        %v2319 = vcombine.low %v2294, %v2302
        %v2320 = vcombine.high %v2294, %v2302
        %v2322 = vunpack.c.l.s4 1934713408
        %v2323 = vunpack.c.0.s8 %v2322
        %v2324 = vlaneseq
        %v2325 = vshrl.u32 %v2324, 7
        %v2326 = vsub.s32 %v2323, %v2325
        %v2327 = vrot.slane %v2319, %v2326
        %v2329 = vunpack.c.l.s4 1934713408
        %v2330 = vunpack.c.0.s8 %v2329
        %v2331 = vlaneseq
        %v2332 = vshrl.u32 %v2331, 7
        %v2333 = vsub.s32 %v2330, %v2332
        %v2334 = vrot.slane %v2320, %v2333
        %v2335 = vcombine.low %v2310, %v2318
        %v2336 = vcombine.high %v2310, %v2318
        %v2338 = vunpack.c.l.s4 1934713408
        %v2339 = vunpack.c.0.s8 %v2338
        %v2340 = vlaneseq
        %v2341 = vshrl.u32 %v2340, 7
        %v2342 = vsub.s32 %v2339, %v2341
        %v2343 = vrot.slane %v2335, %v2342
        %v2345 = vunpack.c.l.s4 1934713408
        %v2346 = vunpack.c.0.s8 %v2345
        %v2347 = vlaneseq
        %v2348 = vshrl.u32 %v2347, 7
        %v2349 = vsub.s32 %v2346, %v2348
        %v2350 = vrot.slane %v2336, %v2349
        %v2351 = vcombine.low %v2327, %v2343
        %v2352 = vcombine.high %v2327, %v2343
        %v2353 = vcombine.low %v2334, %v2350
        %v2354 = vcombine.high %v2334, %v2350
        %v2355 = vcombine.low %v2259, %v2266
        %v2357 = vunpack.c.l.s4 1983009808
        %v2358 = vunpack.c.0.s8 %v2357
        %v2359 = vlaneseq
        %v2360 = vshrl.u32 %v2359, 7
        %v2361 = vsub.s32 %v2358, %v2360
        %v2362 = vrot.slane %v2355, %v2361
        %v2363 = vcombine.low %v2283, %v2284
        %v2365 = vunpack.c.l.s4 1983009808
        %v2366 = vunpack.c.0.s8 %v2365
        %v2367 = vlaneseq
        %v2368 = vshrl.u32 %v2367, 7
        %v2369 = vsub.s32 %v2366, %v2368
        %v2370 = vrot.slane %v2363, %v2369
        %v2371 = vcombine.low %v2275, %v2282
        %v2373 = vunpack.c.l.s4 1983009808
        %v2374 = vunpack.c.0.s8 %v2373
        %v2375 = vlaneseq
        %v2376 = vshrl.u32 %v2375, 7
        %v2377 = vsub.s32 %v2374, %v2376
        %v2378 = vrot.slane %v2371, %v2377
        %v2379 = vcombine.low %v2285, %v2286
        %v2381 = vunpack.c.l.s4 1983009808
        %v2382 = vunpack.c.0.s8 %v2381
        %v2383 = vlaneseq
        %v2384 = vshrl.u32 %v2383, 7
        %v2385 = vsub.s32 %v2382, %v2384
        %v2386 = vrot.slane %v2379, %v2385
        %v2387 = vcombine.low %v2362, %v2370
        %v2388 = vcombine.high %v2362, %v2370
        %v2390 = vunpack.c.l.s4 1934713408
        %v2391 = vunpack.c.0.s8 %v2390
        %v2392 = vlaneseq
        %v2393 = vshrl.u32 %v2392, 7
        %v2394 = vsub.s32 %v2391, %v2393
        %v2395 = vrot.slane %v2387, %v2394
        %v2397 = vunpack.c.l.s4 1934713408
        %v2398 = vunpack.c.0.s8 %v2397
        %v2399 = vlaneseq
        %v2400 = vshrl.u32 %v2399, 7
        %v2401 = vsub.s32 %v2398, %v2400
        %v2402 = vrot.slane %v2388, %v2401
        %v2403 = vcombine.low %v2378, %v2386
        %v2404 = vcombine.high %v2378, %v2386
        %v2406 = vunpack.c.l.s4 1934713408
        %v2407 = vunpack.c.0.s8 %v2406
        %v2408 = vlaneseq
        %v2409 = vshrl.u32 %v2408, 7
        %v2410 = vsub.s32 %v2407, %v2409
        %v2411 = vrot.slane %v2403, %v2410
        %v2413 = vunpack.c.l.s4 1934713408
        %v2414 = vunpack.c.0.s8 %v2413
        %v2415 = vlaneseq
        %v2416 = vshrl.u32 %v2415, 7
        %v2417 = vsub.s32 %v2414, %v2416
        %v2418 = vrot.slane %v2404, %v2417
        %v2419 = vcombine.low %v2395, %v2411
        %v2420 = vcombine.high %v2395, %v2411
        %v2421 = vcombine.low %v2402, %v2418
        %v2422 = vcombine.high %v2402, %v2418
        %v2423 = vld [vmem:[#allocation2] sm:$0xff]
        %v2424 = vld [vmem:[#allocation2 + $0x8] sm:$0xff]
        %v2425 = vld [vmem:[#allocation2 + $0x10] sm:$0xff]
        %v2426 = vld [vmem:[#allocation2 + $0x18] sm:$0xff]
        %v2427 = vld [vmem:[#allocation2 + $0x20] sm:$0xff]
        %v2428 = vld [vmem:[#allocation2 + $0x28] sm:$0xff]
        %v2429 = vld [vmem:[#allocation2 + $0x30] sm:$0xff]
        %v2430 = vld [vmem:[#allocation2 + $0x38] sm:$0xff]
        %v2431 = vld [vmem:[#allocation2 + $0x40] sm:$0xff]
        %v2432 = vld [vmem:[#allocation2 + $0x48] sm:$0xff]
        %v2433 = vld [vmem:[#allocation2 + $0x50] sm:$0xff]
        %v2434 = vld [vmem:[#allocation2 + $0x58] sm:$0xff]
        %v2435 = vld [vmem:[#allocation2 + $0x60] sm:$0xff]
        %v2436 = vld [vmem:[#allocation2 + $0x68] sm:$0xff]
        %v2437 = vld [vmem:[#allocation2 + $0x70] sm:$0xff]
        %v2438 = vld [vmem:[#allocation2 + $0x78] sm:$0xff]
        %v2439 = vld [vmem:[#allocation3] sm:$0xff]
        %v2440 = vld [vmem:[#allocation3 + $0x8] sm:$0xff]
        %v2441 = vld [vmem:[#allocation3 + $0x10] sm:$0xff]
        %v2442 = vld [vmem:[#allocation3 + $0x18] sm:$0xff]
        %v2443 = vld [vmem:[#allocation3 + $0x20] sm:$0xff]
        %v2444 = vld [vmem:[#allocation3 + $0x28] sm:$0xff]
        %v2445 = vld [vmem:[#allocation3 + $0x30] sm:$0xff]
        %v2446 = vld [vmem:[#allocation3 + $0x38] sm:$0xff]
        %v2447 = vld [vmem:[#allocation3 + $0x40] sm:$0xff]
        %v2448 = vld [vmem:[#allocation3 + $0x48] sm:$0xff]
        %v2449 = vld [vmem:[#allocation3 + $0x50] sm:$0xff]
        %v2450 = vld [vmem:[#allocation3 + $0x58] sm:$0xff]
        %v2451 = vld [vmem:[#allocation3 + $0x60] sm:$0xff]
        %v2452 = vld [vmem:[#allocation3 + $0x68] sm:$0xff]
        %v2453 = vld [vmem:[#allocation3 + $0x70] sm:$0xff]
        %v2454 = vld [vmem:[#allocation3 + $0x78] sm:$0xff]
        %vm2455 = vcmask 64512
        %v2457 = vsel %vm2455, %v2351, 0
        %v2460 = vsel %vm2455, %v2419, 0
        %v2463 = vsel %vm2455, %v2423, 0
        %v2466 = vsel %vm2455, %v2424, 0
        %v2469 = vsel %vm2455, %v2425, 0
        %v2472 = vsel %vm2455, %v2426, 0
        %2474 = vmatprep.subr.mxu0 0.0
        %2475 = vmatpush1.xpose.msra.mxu0 %v2463
        %2476 = vmatprep.subr.mxu0 0.0
        %2477 = vmatpush1.xpose.msra.mxu0 %v2466
        %2478 = vmatprep.subr.mxu0 0.0
        %2479 = vmatpush1.xpose.msra.mxu0 %v2469
        %2480 = vmatprep.subr.mxu0 0.0
        %2481 = vmatpush1.xpose.msra.mxu0 %v2472
        %2482 = vmatprep.subr.mxu0 0.0
        %2483 = vmatpush1.xpose.msra.mxu0 0.0
        %2484 = vmatprep.subr.mxu0 0.0
        %2485 = vmatpush1.xpose.msra.mxu0 0.0
        %2486 = vmatprep.subr.mxu0 0.0
        %2487 = vmatpush1.xpose.msra.mxu0 0.0
        %2488 = vmatprep.subr.mxu0 0.0
        %2489 = vmatpush1.xpose.msra.mxu0 0.0
        %2490 = vmatprep.subr.mxu0 0.0
        %2491 = vmatpush1.xpose.msra.mxu0 0.0
        %2492 = vmatprep.subr.mxu0 0.0
        %2493 = vmatpush1.xpose.msra.mxu0 0.0
        %2494 = vmatprep.subr.mxu0 0.0
        %2495 = vmatpush1.xpose.msra.mxu0 0.0
        %2496 = vmatprep.subr.mxu0 0.0
        %2497 = vmatpush1.xpose.msra.mxu0 0.0
        %2498 = vmatprep.subr.mxu0 0.0
        %2499 = vmatpush1.xpose.msra.mxu0 0.0
        %2500 = vmatprep.subr.mxu0 0.0
        %2501 = vmatpush1.xpose.msra.mxu0 0.0
        %2502 = vmatprep.subr.mxu0 0.0
        %2503 = vmatpush1.xpose.msra.mxu0 0.0
        %2504 = vmatprep.subr.mxu0 0.0
        %2505 = vmatpush1.xpose.msra.mxu0 0.0
        %2506 = vmatprep.subr.mxu0 0.0
        %2507 = vmatpush1.xpose.msra.mxu0 0.0
        %2508 = vmatprep.subr.mxu0 0.0
        %2509 = vmatpush1.xpose.msra.mxu0 0.0
        %2510 = vmatprep.subr.mxu0 0.0
        %2511 = vmatpush1.xpose.msra.mxu0 0.0
        %2512 = vmatprep.subr.mxu0 0.0
        %2513 = vmatpush1.xpose.msra.mxu0 0.0
        %2514 = vmatprep.subr.mxu0 0.0
        %2515 = vmatpush1.xpose.msra.mxu0 0.0
        %2516 = vmatprep.subr.mxu0 0.0
        %2517 = vmatpush1.xpose.msra.mxu0 0.0
        %2518 = vmatprep.subr.mxu0 0.0
        %2519 = vmatpush1.xpose.msra.mxu0 0.0
        %2520 = vmatprep.subr.mxu0 0.0
        %2521 = vmatpush1.xpose.msra.mxu0 0.0
        %2522 = vmatprep.subr.mxu0 0.0
        %2523 = vmatpush1.xpose.msra.mxu0 0.0
        %2524 = vmatprep.subr.mxu0 0.0
        %2525 = vmatpush1.xpose.msra.mxu0 0.0
        %2526 = vmatprep.subr.mxu0 0.0
        %2527 = vmatpush1.xpose.msra.mxu0 0.0
        %2528 = vmatprep.subr.mxu0 0.0
        %2529 = vmatpush1.xpose.msra.mxu0 0.0
        %2530 = vmatprep.subr.mxu0 0.0
        %2531 = vmatpush1.xpose.msra.mxu0 0.0
        %2532 = vmatprep.subr.mxu0 0.0
        %2533 = vmatpush1.xpose.msra.mxu0 0.0
        %2534 = vmatprep.subr.mxu0 0.0
        %2535 = vmatpush1.xpose.msra.mxu0 0.0
        %2536 = vmatprep.subr.mxu0 0.0
        %2537 = vmatpush1.xpose.msra.mxu0 0.0
        %2538 = vmatprep.mubr.f32.mxu0 0.0
        %2539 = vmatmul.mubr.f32.gmra.mrb[0].mxu0 %v2457
        %v2540 = vpop.f32.mrb[0].mxu0
        %v2541 = vadd.f32 0.0, %v2540
        %v2542 = vpop.f32.mrb[0].mxu0
        %2543 = vmatprep.mubr.f32.mxu0 0.0
        %2544 = vmatmul.mubr.f32.gmra.mrb[0].mxu0 %v2460
        %v2545 = vpop.f32.mrb[0].mxu0
        %v2546 = vadd.f32 0.0, %v2545
        %v2547 = vpop.f32.mrb[0].mxu0
        %2548 = vdwg.mxu0
        %v2550 = vsel %vm2455, %v2352, 0
        %v2553 = vsel %vm2455, %v2420, 0
        %v2556 = vsel %vm2455, %v2427, 0
        %v2559 = vsel %vm2455, %v2428, 0
        %v2562 = vsel %vm2455, %v2429, 0
        %v2565 = vsel %vm2455, %v2430, 0
        %2567 = vmatprep.subr.mxu0 0.0
        %2568 = vmatpush1.xpose.msra.mxu0 %v2556
        %2569 = vmatprep.subr.mxu0 0.0
        %2570 = vmatpush1.xpose.msra.mxu0 %v2559
        %2571 = vmatprep.subr.mxu0 0.0
        %2572 = vmatpush1.xpose.msra.mxu0 %v2562
        %2573 = vmatprep.subr.mxu0 0.0
        %2574 = vmatpush1.xpose.msra.mxu0 %v2565
        %2575 = vmatprep.subr.mxu0 0.0
        %2576 = vmatpush1.xpose.msra.mxu0 0.0
        %2577 = vmatprep.subr.mxu0 0.0
        %2578 = vmatpush1.xpose.msra.mxu0 0.0
        %2579 = vmatprep.subr.mxu0 0.0
        %2580 = vmatpush1.xpose.msra.mxu0 0.0
        %2581 = vmatprep.subr.mxu0 0.0
        %2582 = vmatpush1.xpose.msra.mxu0 0.0
        %2583 = vmatprep.subr.mxu0 0.0
        %2584 = vmatpush1.xpose.msra.mxu0 0.0
        %2585 = vmatprep.subr.mxu0 0.0
        %2586 = vmatpush1.xpose.msra.mxu0 0.0
        %2587 = vmatprep.subr.mxu0 0.0
        %2588 = vmatpush1.xpose.msra.mxu0 0.0
        %2589 = vmatprep.subr.mxu0 0.0
        %2590 = vmatpush1.xpose.msra.mxu0 0.0
        %2591 = vmatprep.subr.mxu0 0.0
        %2592 = vmatpush1.xpose.msra.mxu0 0.0
        %2593 = vmatprep.subr.mxu0 0.0
        %2594 = vmatpush1.xpose.msra.mxu0 0.0
        %2595 = vmatprep.subr.mxu0 0.0
        %2596 = vmatpush1.xpose.msra.mxu0 0.0
        %2597 = vmatprep.subr.mxu0 0.0
        %2598 = vmatpush1.xpose.msra.mxu0 0.0
        %2599 = vmatprep.subr.mxu0 0.0
        %2600 = vmatpush1.xpose.msra.mxu0 0.0
        %2601 = vmatprep.subr.mxu0 0.0
        %2602 = vmatpush1.xpose.msra.mxu0 0.0
        %2603 = vmatprep.subr.mxu0 0.0
        %2604 = vmatpush1.xpose.msra.mxu0 0.0
        %2605 = vmatprep.subr.mxu0 0.0
        %2606 = vmatpush1.xpose.msra.mxu0 0.0
        %2607 = vmatprep.subr.mxu0 0.0
        %2608 = vmatpush1.xpose.msra.mxu0 0.0
        %2609 = vmatprep.subr.mxu0 0.0
        %2610 = vmatpush1.xpose.msra.mxu0 0.0
        %2611 = vmatprep.subr.mxu0 0.0
        %2612 = vmatpush1.xpose.msra.mxu0 0.0
        %2613 = vmatprep.subr.mxu0 0.0
        %2614 = vmatpush1.xpose.msra.mxu0 0.0
        %2615 = vmatprep.subr.mxu0 0.0
        %2616 = vmatpush1.xpose.msra.mxu0 0.0
        %2617 = vmatprep.subr.mxu0 0.0
        %2618 = vmatpush1.xpose.msra.mxu0 0.0
        %2619 = vmatprep.subr.mxu0 0.0
        %2620 = vmatpush1.xpose.msra.mxu0 0.0
        %2621 = vmatprep.subr.mxu0 0.0
        %2622 = vmatpush1.xpose.msra.mxu0 0.0
        %2623 = vmatprep.subr.mxu0 0.0
        %2624 = vmatpush1.xpose.msra.mxu0 0.0
        %2625 = vmatprep.subr.mxu0 0.0
        %2626 = vmatpush1.xpose.msra.mxu0 0.0
        %2627 = vmatprep.subr.mxu0 0.0
        %2628 = vmatpush1.xpose.msra.mxu0 0.0
        %2629 = vmatprep.subr.mxu0 0.0
        %2630 = vmatpush1.xpose.msra.mxu0 0.0
        %2631 = vmatprep.mubr.f32.mxu0 0.0
        %2632 = vmatmul.mubr.f32.gmra.mrb[0].mxu0 %v2550
        %v2633 = vpop.f32.mrb[0].mxu0
        %v2634 = vadd.f32 0.0, %v2633
        %v2635 = vpop.f32.mrb[0].mxu0
        %2636 = vmatprep.mubr.f32.mxu0 0.0
        %2637 = vmatmul.mubr.f32.gmra.mrb[0].mxu0 %v2553
        %v2638 = vpop.f32.mrb[0].mxu0
        %v2639 = vadd.f32 0.0, %v2638
        %v2640 = vpop.f32.mrb[0].mxu0
        %2641 = vdwg.mxu0
        %v2643 = vsel %vm2455, %v2353, 0
        %v2646 = vsel %vm2455, %v2421, 0
        %v2649 = vsel %vm2455, %v2431, 0
        %v2652 = vsel %vm2455, %v2432, 0
        %v2655 = vsel %vm2455, %v2433, 0
        %v2658 = vsel %vm2455, %v2434, 0
        %2660 = vmatprep.subr.mxu0 0.0
        %2661 = vmatpush1.xpose.msra.mxu0 %v2649
        %2662 = vmatprep.subr.mxu0 0.0
        %2663 = vmatpush1.xpose.msra.mxu0 %v2652
        %2664 = vmatprep.subr.mxu0 0.0
        %2665 = vmatpush1.xpose.msra.mxu0 %v2655
        %2666 = vmatprep.subr.mxu0 0.0
        %2667 = vmatpush1.xpose.msra.mxu0 %v2658
        %2668 = vmatprep.subr.mxu0 0.0
        %2669 = vmatpush1.xpose.msra.mxu0 0.0
        %2670 = vmatprep.subr.mxu0 0.0
        %2671 = vmatpush1.xpose.msra.mxu0 0.0
        %2672 = vmatprep.subr.mxu0 0.0
        %2673 = vmatpush1.xpose.msra.mxu0 0.0
        %2674 = vmatprep.subr.mxu0 0.0
        %2675 = vmatpush1.xpose.msra.mxu0 0.0
        %2676 = vmatprep.subr.mxu0 0.0
        %2677 = vmatpush1.xpose.msra.mxu0 0.0
        %2678 = vmatprep.subr.mxu0 0.0
        %2679 = vmatpush1.xpose.msra.mxu0 0.0
        %2680 = vmatprep.subr.mxu0 0.0
        %2681 = vmatpush1.xpose.msra.mxu0 0.0
        %2682 = vmatprep.subr.mxu0 0.0
        %2683 = vmatpush1.xpose.msra.mxu0 0.0
        %2684 = vmatprep.subr.mxu0 0.0
        %2685 = vmatpush1.xpose.msra.mxu0 0.0
        %2686 = vmatprep.subr.mxu0 0.0
        %2687 = vmatpush1.xpose.msra.mxu0 0.0
        %2688 = vmatprep.subr.mxu0 0.0
        %2689 = vmatpush1.xpose.msra.mxu0 0.0
        %2690 = vmatprep.subr.mxu0 0.0
        %2691 = vmatpush1.xpose.msra.mxu0 0.0
        %2692 = vmatprep.subr.mxu0 0.0
        %2693 = vmatpush1.xpose.msra.mxu0 0.0
        %2694 = vmatprep.subr.mxu0 0.0
        %2695 = vmatpush1.xpose.msra.mxu0 0.0
        %2696 = vmatprep.subr.mxu0 0.0
        %2697 = vmatpush1.xpose.msra.mxu0 0.0
        %2698 = vmatprep.subr.mxu0 0.0
        %2699 = vmatpush1.xpose.msra.mxu0 0.0
        %2700 = vmatprep.subr.mxu0 0.0
        %2701 = vmatpush1.xpose.msra.mxu0 0.0
        %2702 = vmatprep.subr.mxu0 0.0
        %2703 = vmatpush1.xpose.msra.mxu0 0.0
        %2704 = vmatprep.subr.mxu0 0.0
        %2705 = vmatpush1.xpose.msra.mxu0 0.0
        %2706 = vmatprep.subr.mxu0 0.0
        %2707 = vmatpush1.xpose.msra.mxu0 0.0
        %2708 = vmatprep.subr.mxu0 0.0
        %2709 = vmatpush1.xpose.msra.mxu0 0.0
        %2710 = vmatprep.subr.mxu0 0.0
        %2711 = vmatpush1.xpose.msra.mxu0 0.0
        %2712 = vmatprep.subr.mxu0 0.0
        %2713 = vmatpush1.xpose.msra.mxu0 0.0
        %2714 = vmatprep.subr.mxu0 0.0
        %2715 = vmatpush1.xpose.msra.mxu0 0.0
        %2716 = vmatprep.subr.mxu0 0.0
        %2717 = vmatpush1.xpose.msra.mxu0 0.0
        %2718 = vmatprep.subr.mxu0 0.0
        %2719 = vmatpush1.xpose.msra.mxu0 0.0
        %2720 = vmatprep.subr.mxu0 0.0
        %2721 = vmatpush1.xpose.msra.mxu0 0.0
        %2722 = vmatprep.subr.mxu0 0.0
        %2723 = vmatpush1.xpose.msra.mxu0 0.0
        %2724 = vmatprep.mubr.f32.mxu0 0.0
        %2725 = vmatmul.mubr.f32.gmra.mrb[0].mxu0 %v2643
        %v2726 = vpop.f32.mrb[0].mxu0
        %v2727 = vadd.f32 0.0, %v2726
        %v2728 = vpop.f32.mrb[0].mxu0
        %2729 = vmatprep.mubr.f32.mxu0 0.0
        %2730 = vmatmul.mubr.f32.gmra.mrb[0].mxu0 %v2646
        %v2731 = vpop.f32.mrb[0].mxu0
        %v2732 = vadd.f32 0.0, %v2731
        %v2733 = vpop.f32.mrb[0].mxu0
        %2734 = vdwg.mxu0
        %v2736 = vsel %vm2455, %v2354, 0
        %v2739 = vsel %vm2455, %v2422, 0
        %v2742 = vsel %vm2455, %v2435, 0
        %v2745 = vsel %vm2455, %v2436, 0
        %v2748 = vsel %vm2455, %v2437, 0
        %v2751 = vsel %vm2455, %v2438, 0
        %2753 = vmatprep.subr.mxu0 0.0
        %2754 = vmatpush1.xpose.msra.mxu0 %v2742
        %2755 = vmatprep.subr.mxu0 0.0
        %2756 = vmatpush1.xpose.msra.mxu0 %v2745
        %2757 = vmatprep.subr.mxu0 0.0
        %2758 = vmatpush1.xpose.msra.mxu0 %v2748
        %2759 = vmatprep.subr.mxu0 0.0
        %2760 = vmatpush1.xpose.msra.mxu0 %v2751
        %2761 = vmatprep.subr.mxu0 0.0
        %2762 = vmatpush1.xpose.msra.mxu0 0.0
        %2763 = vmatprep.subr.mxu0 0.0
        %2764 = vmatpush1.xpose.msra.mxu0 0.0
        %2765 = vmatprep.subr.mxu0 0.0
        %2766 = vmatpush1.xpose.msra.mxu0 0.0
        %2767 = vmatprep.subr.mxu0 0.0
        %2768 = vmatpush1.xpose.msra.mxu0 0.0
        %2769 = vmatprep.subr.mxu0 0.0
        %2770 = vmatpush1.xpose.msra.mxu0 0.0
        %2771 = vmatprep.subr.mxu0 0.0
        %2772 = vmatpush1.xpose.msra.mxu0 0.0
        %2773 = vmatprep.subr.mxu0 0.0
        %2774 = vmatpush1.xpose.msra.mxu0 0.0
        %2775 = vmatprep.subr.mxu0 0.0
        %2776 = vmatpush1.xpose.msra.mxu0 0.0
        %2777 = vmatprep.subr.mxu0 0.0
        %2778 = vmatpush1.xpose.msra.mxu0 0.0
        %2779 = vmatprep.subr.mxu0 0.0
        %2780 = vmatpush1.xpose.msra.mxu0 0.0
        %2781 = vmatprep.subr.mxu0 0.0
        %2782 = vmatpush1.xpose.msra.mxu0 0.0
        %2783 = vmatprep.subr.mxu0 0.0
        %2784 = vmatpush1.xpose.msra.mxu0 0.0
        %2785 = vmatprep.subr.mxu0 0.0
        %2786 = vmatpush1.xpose.msra.mxu0 0.0
        %2787 = vmatprep.subr.mxu0 0.0
        %2788 = vmatpush1.xpose.msra.mxu0 0.0
        %2789 = vmatprep.subr.mxu0 0.0
        %2790 = vmatpush1.xpose.msra.mxu0 0.0
        %2791 = vmatprep.subr.mxu0 0.0
        %2792 = vmatpush1.xpose.msra.mxu0 0.0
        %2793 = vmatprep.subr.mxu0 0.0
        %2794 = vmatpush1.xpose.msra.mxu0 0.0
        %2795 = vmatprep.subr.mxu0 0.0
        %2796 = vmatpush1.xpose.msra.mxu0 0.0
        %2797 = vmatprep.subr.mxu0 0.0
        %2798 = vmatpush1.xpose.msra.mxu0 0.0
        %2799 = vmatprep.subr.mxu0 0.0
        %2800 = vmatpush1.xpose.msra.mxu0 0.0
        %2801 = vmatprep.subr.mxu0 0.0
        %2802 = vmatpush1.xpose.msra.mxu0 0.0
        %2803 = vmatprep.subr.mxu0 0.0
        %2804 = vmatpush1.xpose.msra.mxu0 0.0
        %2805 = vmatprep.subr.mxu0 0.0
        %2806 = vmatpush1.xpose.msra.mxu0 0.0
        %2807 = vmatprep.subr.mxu0 0.0
        %2808 = vmatpush1.xpose.msra.mxu0 0.0
        %2809 = vmatprep.subr.mxu0 0.0
        %2810 = vmatpush1.xpose.msra.mxu0 0.0
        %2811 = vmatprep.subr.mxu0 0.0
        %2812 = vmatpush1.xpose.msra.mxu0 0.0
        %2813 = vmatprep.subr.mxu0 0.0
        %2814 = vmatpush1.xpose.msra.mxu0 0.0
        %2815 = vmatprep.subr.mxu0 0.0
        %2816 = vmatpush1.xpose.msra.mxu0 0.0
        %2817 = vmatprep.mubr.f32.mxu0 0.0
        %2818 = vmatmul.mubr.f32.gmra.mrb[0].mxu0 %v2736
        %v2819 = vpop.f32.mrb[0].mxu0
        %v2820 = vadd.f32 0.0, %v2819
        %v2821 = vpop.f32.mrb[0].mxu0
        %2822 = vmatprep.mubr.f32.mxu0 0.0
        %2823 = vmatmul.mubr.f32.gmra.mrb[0].mxu0 %v2739
        %v2824 = vpop.f32.mrb[0].mxu0
        %v2825 = vadd.f32 0.0, %v2824
        %v2826 = vpop.f32.mrb[0].mxu0
        %2827 = vdwg.mxu0
        %v2828 = vsel %vm710, 1, 0
        %v2829 = vsel %vm711, 1, 0
        %vm2830 = vcmp.eq.s32.totalorder %v2828, 1
        %vm2831 = vcmp.eq.s32.totalorder %v2829, 1
        %v2832 = vsel %vm2830, -1e+09, %v2541
        %v2833 = vsel %vm2831, -1e+09, %v2546
        %v2834 = vsel %vm2830, -1e+09, %v2634
        %v2835 = vsel %vm2831, -1e+09, %v2639
        %v2836 = vsel %vm2830, -1e+09, %v2727
        %v2837 = vsel %vm2831, -1e+09, %v2732
        %v2838 = vsel %vm2830, -1e+09, %v2820
        %v2839 = vsel %vm2831, -1e+09, %v2825
        %v2840 = vsel %vm2049, %v2832, -inf
        %2841 = vmax.xlane.f32.xlu0 %v2840
        %v2842 = vpop.xlane.xlu0 %2841
        %v2843 = vsel %vm2049, %v2833, -inf
        %2844 = vmax.xlane.f32.xlu0 %v2843
        %v2845 = vpop.xlane.xlu0 %2844
        %v2846 = vsel %vm2049, %v2834, -inf
        %2847 = vmax.xlane.f32.xlu0 %v2846
        %v2848 = vpop.xlane.xlu0 %2847
        %v2849 = vsel %vm2049, %v2835, -inf
        %2850 = vmax.xlane.f32.xlu0 %v2849
        %v2851 = vpop.xlane.xlu0 %2850
        %v2852 = vsel %vm2049, %v2836, -inf
        %2853 = vmax.xlane.f32.xlu0 %v2852
        %v2854 = vpop.xlane.xlu0 %2853
        %v2855 = vsel %vm2049, %v2837, -inf
        %2856 = vmax.xlane.f32.xlu0 %v2855
        %v2857 = vpop.xlane.xlu0 %2856
        %v2858 = vsel %vm2049, %v2838, -inf
        %2859 = vmax.xlane.f32.xlu0 %v2858
        %v2860 = vpop.xlane.xlu0 %2859
        %v2861 = vsel %vm2049, %v2839, -inf
        %2862 = vmax.xlane.f32.xlu0 %v2861
        %v2863 = vpop.xlane.xlu0 %2862
        %v2864 = vsub.f32 %v2832, %v2842
        %v2865 = vsub.f32 %v2833, %v2845
        %v2866 = vsub.f32 %v2834, %v2848
        %v2867 = vsub.f32 %v2835, %v2851
        %v2868 = vsub.f32 %v2836, %v2854
        %v2869 = vsub.f32 %v2837, %v2857
        %v2870 = vsub.f32 %v2838, %v2860
        %v2871 = vsub.f32 %v2839, %v2863
        %v2872 = vmul.f32 %v2864, 1.442695
        %v2873 = vpow.pop %v2872
        %v2874 = vmul.f32 %v2865, 1.442695
        %v2875 = vpow.pop %v2874
        %v2876 = vmul.f32 %v2866, 1.442695
        %v2877 = vpow.pop %v2876
        %v2878 = vmul.f32 %v2867, 1.442695
        %v2879 = vpow.pop %v2878
        %v2880 = vmul.f32 %v2868, 1.442695
        %v2881 = vpow.pop %v2880
        %v2882 = vmul.f32 %v2869, 1.442695
        %v2883 = vpow.pop %v2882
        %v2884 = vmul.f32 %v2870, 1.442695
        %v2885 = vpow.pop %v2884
        %v2886 = vmul.f32 %v2871, 1.442695
        %v2887 = vpow.pop %v2886
        %v2888 = vsel %vm2049, %v2873, 0.0
        %2889 = vadd.xlane.f32.xlu0 %v2888
        %v2890 = vpop.xlane.xlu0 %2889
        %v2891 = vsel %vm2049, %v2875, 0.0
        %2892 = vadd.xlane.f32.xlu0 %v2891
        %v2893 = vpop.xlane.xlu0 %2892
        %v2894 = vsel %vm2049, %v2877, 0.0
        %2895 = vadd.xlane.f32.xlu0 %v2894
        %v2896 = vpop.xlane.xlu0 %2895
        %v2897 = vsel %vm2049, %v2879, 0.0
        %2898 = vadd.xlane.f32.xlu0 %v2897
        %v2899 = vpop.xlane.xlu0 %2898
        %v2900 = vsel %vm2049, %v2881, 0.0
        %2901 = vadd.xlane.f32.xlu0 %v2900
        %v2902 = vpop.xlane.xlu0 %2901
        %v2903 = vsel %vm2049, %v2883, 0.0
        %2904 = vadd.xlane.f32.xlu0 %v2903
        %v2905 = vpop.xlane.xlu0 %2904
        %v2906 = vsel %vm2049, %v2885, 0.0
        %2907 = vadd.xlane.f32.xlu0 %v2906
        %v2908 = vpop.xlane.xlu0 %2907
        %v2909 = vsel %vm2049, %v2887, 0.0
        %2910 = vadd.xlane.f32.xlu0 %v2909
        %v2911 = vpop.xlane.xlu0 %2910
        %v2912 = vrcp.pop %v2890
        %v2913 = vrcp.pop %v2893
        %v2914 = vrcp.pop %v2896
        %v2915 = vrcp.pop %v2899
        %v2916 = vrcp.pop %v2902
        %v2917 = vrcp.pop %v2905
        %v2918 = vrcp.pop %v2908
        %v2919 = vrcp.pop %v2911
        %v2920 = vmul.f32 %v2873, %v2912
        %v2921 = vmul.f32 %v2875, %v2913
        %v2922 = vmul.f32 %v2877, %v2914
        %v2923 = vmul.f32 %v2879, %v2915
        %v2924 = vmul.f32 %v2881, %v2916
        %v2925 = vmul.f32 %v2883, %v2917
        %v2926 = vmul.f32 %v2885, %v2918
        %v2927 = vmul.f32 %v2887, %v2919
        %v2929 = vsel %vm2049, %v2920, 0
        %v2932 = vsel %vm2049, %v2921, 0
        %2934 = vmatprep.subr.mxu0 0.0
        %2935 = vmatpush1.msra.mxu0 %v2439
        %2936 = vmatprep.subr.mxu0 0.0
        %2937 = vmatpush1.msra.mxu0 %v2440
        %2938 = vmatprep.subr.mxu0 0.0
        %2939 = vmatpush1.msra.mxu0 %v2441
        %2940 = vmatprep.subr.mxu0 0.0
        %2941 = vmatpush1.msra.mxu0 %v2442
        %2942 = vmatprep.subr.mxu0 0.0
        %2943 = vmatpush1.msra.mxu0 0.0
        %2944 = vmatprep.subr.mxu0 0.0
        %2945 = vmatpush1.msra.mxu0 0.0
        %2946 = vmatprep.subr.mxu0 0.0
        %2947 = vmatpush1.msra.mxu0 0.0
        %2948 = vmatprep.subr.mxu0 0.0
        %2949 = vmatpush1.msra.mxu0 0.0
        %2950 = vmatprep.subr.mxu0 0.0
        %2951 = vmatpush1.msra.mxu0 0.0
        %2952 = vmatprep.subr.mxu0 0.0
        %2953 = vmatpush1.msra.mxu0 0.0
        %2954 = vmatprep.subr.mxu0 0.0
        %2955 = vmatpush1.msra.mxu0 0.0
        %2956 = vmatprep.subr.mxu0 0.0
        %2957 = vmatpush1.msra.mxu0 0.0
        %2958 = vmatprep.subr.mxu0 0.0
        %2959 = vmatpush1.msra.mxu0 0.0
        %2960 = vmatprep.subr.mxu0 0.0
        %2961 = vmatpush1.msra.mxu0 0.0
        %2962 = vmatprep.subr.mxu0 0.0
        %2963 = vmatpush1.msra.mxu0 0.0
        %2964 = vmatprep.subr.mxu0 0.0
        %2965 = vmatpush1.msra.mxu0 0.0
        %2966 = vmatprep.subr.mxu0 0.0
        %2967 = vmatpush1.msra.mxu0 0.0
        %2968 = vmatprep.subr.mxu0 0.0
        %2969 = vmatpush1.msra.mxu0 0.0
        %2970 = vmatprep.subr.mxu0 0.0
        %2971 = vmatpush1.msra.mxu0 0.0
        %2972 = vmatprep.subr.mxu0 0.0
        %2973 = vmatpush1.msra.mxu0 0.0
        %2974 = vmatprep.subr.mxu0 0.0
        %2975 = vmatpush1.msra.mxu0 0.0
        %2976 = vmatprep.subr.mxu0 0.0
        %2977 = vmatpush1.msra.mxu0 0.0
        %2978 = vmatprep.subr.mxu0 0.0
        %2979 = vmatpush1.msra.mxu0 0.0
        %2980 = vmatprep.subr.mxu0 0.0
        %2981 = vmatpush1.msra.mxu0 0.0
        %2982 = vmatprep.subr.mxu0 0.0
        %2983 = vmatpush1.msra.mxu0 0.0
        %2984 = vmatprep.subr.mxu0 0.0
        %2985 = vmatpush1.msra.mxu0 0.0
        %2986 = vmatprep.subr.mxu0 0.0
        %2987 = vmatpush1.msra.mxu0 0.0
        %2988 = vmatprep.subr.mxu0 0.0
        %2989 = vmatpush1.msra.mxu0 0.0
        %2990 = vmatprep.subr.mxu0 0.0
        %2991 = vmatpush1.msra.mxu0 0.0
        %2992 = vmatprep.subr.mxu0 0.0
        %2993 = vmatpush1.msra.mxu0 0.0
        %2994 = vmatprep.subr.mxu0 0.0
        %2995 = vmatpush1.msra.mxu0 0.0
        %2996 = vmatprep.subr.mxu0 0.0
        %2997 = vmatpush1.msra.mxu0 0.0
        %2998 = vmatprep.mubr.f32.mxu0 0.0
        %2999 = vmatmul.mubr.f32.gmra.mrb[0].mxu0 %v2929
        %v3000 = vpop.f32.mrb[0].mxu0
        %v3001 = vadd.f32 0.0, %v3000
        %v3002 = vpop.f32.mrb[0].mxu0
        %3003 = vmatprep.mubr.f32.mxu0 0.0
        %3004 = vmatmul.mubr.f32.gmra.mrb[0].mxu0 %v2932
        %v3005 = vpop.f32.mrb[0].mxu0
        %v3006 = vadd.f32 0.0, %v3005
        %v3007 = vpop.f32.mrb[0].mxu0
        %3008 = vdwg.mxu0
        %v3010 = vsel %vm2049, %v2922, 0
        %v3013 = vsel %vm2049, %v2923, 0
        %3015 = vmatprep.subr.mxu0 0.0
        %3016 = vmatpush1.msra.mxu0 %v2443
        %3017 = vmatprep.subr.mxu0 0.0
        %3018 = vmatpush1.msra.mxu0 %v2444
        %3019 = vmatprep.subr.mxu0 0.0
        %3020 = vmatpush1.msra.mxu0 %v2445
        %3021 = vmatprep.subr.mxu0 0.0
        %3022 = vmatpush1.msra.mxu0 %v2446
        %3023 = vmatprep.subr.mxu0 0.0
        %3024 = vmatpush1.msra.mxu0 0.0
        %3025 = vmatprep.subr.mxu0 0.0
        %3026 = vmatpush1.msra.mxu0 0.0
        %3027 = vmatprep.subr.mxu0 0.0
        %3028 = vmatpush1.msra.mxu0 0.0
        %3029 = vmatprep.subr.mxu0 0.0
        %3030 = vmatpush1.msra.mxu0 0.0
        %3031 = vmatprep.subr.mxu0 0.0
        %3032 = vmatpush1.msra.mxu0 0.0
        %3033 = vmatprep.subr.mxu0 0.0
        %3034 = vmatpush1.msra.mxu0 0.0
        %3035 = vmatprep.subr.mxu0 0.0
        %3036 = vmatpush1.msra.mxu0 0.0
        %3037 = vmatprep.subr.mxu0 0.0
        %3038 = vmatpush1.msra.mxu0 0.0
        %3039 = vmatprep.subr.mxu0 0.0
        %3040 = vmatpush1.msra.mxu0 0.0
        %3041 = vmatprep.subr.mxu0 0.0
        %3042 = vmatpush1.msra.mxu0 0.0
        %3043 = vmatprep.subr.mxu0 0.0
        %3044 = vmatpush1.msra.mxu0 0.0
        %3045 = vmatprep.subr.mxu0 0.0
        %3046 = vmatpush1.msra.mxu0 0.0
        %3047 = vmatprep.subr.mxu0 0.0
        %3048 = vmatpush1.msra.mxu0 0.0
        %3049 = vmatprep.subr.mxu0 0.0
        %3050 = vmatpush1.msra.mxu0 0.0
        %3051 = vmatprep.subr.mxu0 0.0
        %3052 = vmatpush1.msra.mxu0 0.0
        %3053 = vmatprep.subr.mxu0 0.0
        %3054 = vmatpush1.msra.mxu0 0.0
        %3055 = vmatprep.subr.mxu0 0.0
        %3056 = vmatpush1.msra.mxu0 0.0
        %3057 = vmatprep.subr.mxu0 0.0
        %3058 = vmatpush1.msra.mxu0 0.0
        %3059 = vmatprep.subr.mxu0 0.0
        %3060 = vmatpush1.msra.mxu0 0.0
        %3061 = vmatprep.subr.mxu0 0.0
        %3062 = vmatpush1.msra.mxu0 0.0
        %3063 = vmatprep.subr.mxu0 0.0
        %3064 = vmatpush1.msra.mxu0 0.0
        %3065 = vmatprep.subr.mxu0 0.0
        %3066 = vmatpush1.msra.mxu0 0.0
        %3067 = vmatprep.subr.mxu0 0.0
        %3068 = vmatpush1.msra.mxu0 0.0
        %3069 = vmatprep.subr.mxu0 0.0
        %3070 = vmatpush1.msra.mxu0 0.0
        %3071 = vmatprep.subr.mxu0 0.0
        %3072 = vmatpush1.msra.mxu0 0.0
        %3073 = vmatprep.subr.mxu0 0.0
        %3074 = vmatpush1.msra.mxu0 0.0
        %3075 = vmatprep.subr.mxu0 0.0
        %3076 = vmatpush1.msra.mxu0 0.0
        %3077 = vmatprep.subr.mxu0 0.0
        %3078 = vmatpush1.msra.mxu0 0.0
        %3079 = vmatprep.mubr.f32.mxu0 0.0
        %3080 = vmatmul.mubr.f32.gmra.mrb[0].mxu0 %v3010
        %v3081 = vpop.f32.mrb[0].mxu0
        %v3082 = vadd.f32 0.0, %v3081
        %v3083 = vpop.f32.mrb[0].mxu0
        %3084 = vmatprep.mubr.f32.mxu0 0.0
        %3085 = vmatmul.mubr.f32.gmra.mrb[0].mxu0 %v3013
        %v3086 = vpop.f32.mrb[0].mxu0
        %v3087 = vadd.f32 0.0, %v3086
        %v3088 = vpop.f32.mrb[0].mxu0
        %3089 = vdwg.mxu0
        %v3091 = vsel %vm2049, %v2924, 0
        %v3094 = vsel %vm2049, %v2925, 0
        %3096 = vmatprep.subr.mxu0 0.0
        %3097 = vmatpush1.msra.mxu0 %v2447
        %3098 = vmatprep.subr.mxu0 0.0
        %3099 = vmatpush1.msra.mxu0 %v2448
        %3100 = vmatprep.subr.mxu0 0.0
        %3101 = vmatpush1.msra.mxu0 %v2449
        %3102 = vmatprep.subr.mxu0 0.0
        %3103 = vmatpush1.msra.mxu0 %v2450
        %3104 = vmatprep.subr.mxu0 0.0
        %3105 = vmatpush1.msra.mxu0 0.0
        %3106 = vmatprep.subr.mxu0 0.0
        %3107 = vmatpush1.msra.mxu0 0.0
        %3108 = vmatprep.subr.mxu0 0.0
        %3109 = vmatpush1.msra.mxu0 0.0
        %3110 = vmatprep.subr.mxu0 0.0
        %3111 = vmatpush1.msra.mxu0 0.0
        %3112 = vmatprep.subr.mxu0 0.0
        %3113 = vmatpush1.msra.mxu0 0.0
        %3114 = vmatprep.subr.mxu0 0.0
        %3115 = vmatpush1.msra.mxu0 0.0
        %3116 = vmatprep.subr.mxu0 0.0
        %3117 = vmatpush1.msra.mxu0 0.0
        %3118 = vmatprep.subr.mxu0 0.0
        %3119 = vmatpush1.msra.mxu0 0.0
        %3120 = vmatprep.subr.mxu0 0.0
        %3121 = vmatpush1.msra.mxu0 0.0
        %3122 = vmatprep.subr.mxu0 0.0
        %3123 = vmatpush1.msra.mxu0 0.0
        %3124 = vmatprep.subr.mxu0 0.0
        %3125 = vmatpush1.msra.mxu0 0.0
        %3126 = vmatprep.subr.mxu0 0.0
        %3127 = vmatpush1.msra.mxu0 0.0
        %3128 = vmatprep.subr.mxu0 0.0
        %3129 = vmatpush1.msra.mxu0 0.0
        %3130 = vmatprep.subr.mxu0 0.0
        %3131 = vmatpush1.msra.mxu0 0.0
        %3132 = vmatprep.subr.mxu0 0.0
        %3133 = vmatpush1.msra.mxu0 0.0
        %3134 = vmatprep.subr.mxu0 0.0
        %3135 = vmatpush1.msra.mxu0 0.0
        %3136 = vmatprep.subr.mxu0 0.0
        %3137 = vmatpush1.msra.mxu0 0.0
        %3138 = vmatprep.subr.mxu0 0.0
        %3139 = vmatpush1.msra.mxu0 0.0
        %3140 = vmatprep.subr.mxu0 0.0
        %3141 = vmatpush1.msra.mxu0 0.0
        %3142 = vmatprep.subr.mxu0 0.0
        %3143 = vmatpush1.msra.mxu0 0.0
        %3144 = vmatprep.subr.mxu0 0.0
        %3145 = vmatpush1.msra.mxu0 0.0
        %3146 = vmatprep.subr.mxu0 0.0
        %3147 = vmatpush1.msra.mxu0 0.0
        %3148 = vmatprep.subr.mxu0 0.0
        %3149 = vmatpush1.msra.mxu0 0.0
        %3150 = vmatprep.subr.mxu0 0.0
        %3151 = vmatpush1.msra.mxu0 0.0
        %3152 = vmatprep.subr.mxu0 0.0
        %3153 = vmatpush1.msra.mxu0 0.0
        %3154 = vmatprep.subr.mxu0 0.0
        %3155 = vmatpush1.msra.mxu0 0.0
        %3156 = vmatprep.subr.mxu0 0.0
        %3157 = vmatpush1.msra.mxu0 0.0
        %3158 = vmatprep.subr.mxu0 0.0
        %3159 = vmatpush1.msra.mxu0 0.0
        %3160 = vmatprep.mubr.f32.mxu0 0.0
        %3161 = vmatmul.mubr.f32.gmra.mrb[0].mxu0 %v3091
        %v3162 = vpop.f32.mrb[0].mxu0
        %v3163 = vadd.f32 0.0, %v3162
        %v3164 = vpop.f32.mrb[0].mxu0
        %3165 = vmatprep.mubr.f32.mxu0 0.0
        %3166 = vmatmul.mubr.f32.gmra.mrb[0].mxu0 %v3094
        %v3167 = vpop.f32.mrb[0].mxu0
        %v3168 = vadd.f32 0.0, %v3167
        %v3169 = vpop.f32.mrb[0].mxu0
        %3170 = vdwg.mxu0
        %v3172 = vsel %vm2049, %v2926, 0
        %v3175 = vsel %vm2049, %v2927, 0
        %3177 = vmatprep.subr.mxu0 0.0
        %3178 = vmatpush1.msra.mxu0 %v2451
        %3179 = vmatprep.subr.mxu0 0.0
        %3180 = vmatpush1.msra.mxu0 %v2452
        %3181 = vmatprep.subr.mxu0 0.0
        %3182 = vmatpush1.msra.mxu0 %v2453
        %3183 = vmatprep.subr.mxu0 0.0
        %3184 = vmatpush1.msra.mxu0 %v2454
        %3185 = vmatprep.subr.mxu0 0.0
        %3186 = vmatpush1.msra.mxu0 0.0
        %3187 = vmatprep.subr.mxu0 0.0
        %3188 = vmatpush1.msra.mxu0 0.0
        %3189 = vmatprep.subr.mxu0 0.0
        %3190 = vmatpush1.msra.mxu0 0.0
        %3191 = vmatprep.subr.mxu0 0.0
        %3192 = vmatpush1.msra.mxu0 0.0
        %3193 = vmatprep.subr.mxu0 0.0
        %3194 = vmatpush1.msra.mxu0 0.0
        %3195 = vmatprep.subr.mxu0 0.0
        %3196 = vmatpush1.msra.mxu0 0.0
        %3197 = vmatprep.subr.mxu0 0.0
        %3198 = vmatpush1.msra.mxu0 0.0
        %3199 = vmatprep.subr.mxu0 0.0
        %3200 = vmatpush1.msra.mxu0 0.0
        %3201 = vmatprep.subr.mxu0 0.0
        %3202 = vmatpush1.msra.mxu0 0.0
        %3203 = vmatprep.subr.mxu0 0.0
        %3204 = vmatpush1.msra.mxu0 0.0
        %3205 = vmatprep.subr.mxu0 0.0
        %3206 = vmatpush1.msra.mxu0 0.0
        %3207 = vmatprep.subr.mxu0 0.0
        %3208 = vmatpush1.msra.mxu0 0.0
        %3209 = vmatprep.subr.mxu0 0.0
        %3210 = vmatpush1.msra.mxu0 0.0
        %3211 = vmatprep.subr.mxu0 0.0
        %3212 = vmatpush1.msra.mxu0 0.0
        %3213 = vmatprep.subr.mxu0 0.0
        %3214 = vmatpush1.msra.mxu0 0.0
        %3215 = vmatprep.subr.mxu0 0.0
        %3216 = vmatpush1.msra.mxu0 0.0
        %3217 = vmatprep.subr.mxu0 0.0
        %3218 = vmatpush1.msra.mxu0 0.0
        %3219 = vmatprep.subr.mxu0 0.0
        %3220 = vmatpush1.msra.mxu0 0.0
        %3221 = vmatprep.subr.mxu0 0.0
        %3222 = vmatpush1.msra.mxu0 0.0
        %3223 = vmatprep.subr.mxu0 0.0
        %3224 = vmatpush1.msra.mxu0 0.0
        %3225 = vmatprep.subr.mxu0 0.0
        %3226 = vmatpush1.msra.mxu0 0.0
        %3227 = vmatprep.subr.mxu0 0.0
        %3228 = vmatpush1.msra.mxu0 0.0
        %3229 = vmatprep.subr.mxu0 0.0
        %3230 = vmatpush1.msra.mxu0 0.0
        %3231 = vmatprep.subr.mxu0 0.0
        %3232 = vmatpush1.msra.mxu0 0.0
        %3233 = vmatprep.subr.mxu0 0.0
        %3234 = vmatpush1.msra.mxu0 0.0
        %3235 = vmatprep.subr.mxu0 0.0
        %3236 = vmatpush1.msra.mxu0 0.0
        %3237 = vmatprep.subr.mxu0 0.0
        %3238 = vmatpush1.msra.mxu0 0.0
        %3239 = vmatprep.subr.mxu0 0.0
        %3240 = vmatpush1.msra.mxu0 0.0
        %3241 = vmatprep.mubr.f32.mxu0 0.0
        %3242 = vmatmul.mubr.f32.gmra.mrb[0].mxu0 %v3172
        %v3243 = vpop.f32.mrb[0].mxu0
        %v3244 = vadd.f32 0.0, %v3243
        %v3245 = vpop.f32.mrb[0].mxu0
        %3246 = vmatprep.mubr.f32.mxu0 0.0
        %3247 = vmatmul.mubr.f32.gmra.mrb[0].mxu0 %v3175
        %v3248 = vpop.f32.mrb[0].mxu0
        %v3249 = vadd.f32 0.0, %v3248
        %v3250 = vpop.f32.mrb[0].mxu0
        %3251 = vdwg.mxu0
        %v3252 = vcombine.low %v3001, %v3163
        %v3253 = vcombine.high %v3001, %v3163
        %v3255 = vunpack.c.l.s4 1983009808
        %v3256 = vunpack.c.0.s8 %v3255
        %v3257 = vlaneseq
        %v3258 = vshrl.u32 %v3257, 7
        %v3259 = vsub.s32 %v3256, %v3258
        %v3260 = vrot.slane %v3252, %v3259
        %v3262 = vunpack.c.l.s4 1983009808
        %v3263 = vunpack.c.0.s8 %v3262
        %v3264 = vlaneseq
        %v3265 = vshrl.u32 %v3264, 7
        %v3266 = vsub.s32 %v3263, %v3265
        %v3267 = vrot.slane %v3253, %v3266
        %v3268 = vcombine.low %v3082, %v3244
        %v3269 = vcombine.high %v3082, %v3244
        %v3271 = vunpack.c.l.s4 1983009808
        %v3272 = vunpack.c.0.s8 %v3271
        %v3273 = vlaneseq
        %v3274 = vshrl.u32 %v3273, 7
        %v3275 = vsub.s32 %v3272, %v3274
        %v3276 = vrot.slane %v3268, %v3275
        %v3278 = vunpack.c.l.s4 1983009808
        %v3279 = vunpack.c.0.s8 %v3278
        %v3280 = vlaneseq
        %v3281 = vshrl.u32 %v3280, 7
        %v3282 = vsub.s32 %v3279, %v3281
        %v3283 = vrot.slane %v3269, %v3282
        %v3284 = vcombine.low %v3260, %v3276
        %v3285 = vcombine.high %v3260, %v3276
        %v3287 = vunpack.c.l.s4 1934713408
        %v3288 = vunpack.c.0.s8 %v3287
        %v3289 = vlaneseq
        %v3290 = vshrl.u32 %v3289, 7
        %v3291 = vsub.s32 %v3288, %v3290
        %v3292 = vrot.slane %v3284, %v3291
        %v3294 = vunpack.c.l.s4 1934713408
        %v3295 = vunpack.c.0.s8 %v3294
        %v3296 = vlaneseq
        %v3297 = vshrl.u32 %v3296, 7
        %v3298 = vsub.s32 %v3295, %v3297
        %v3299 = vrot.slane %v3285, %v3298
        %v3300 = vcombine.low %v3267, %v3283
        %v3301 = vcombine.high %v3267, %v3283
        %v3303 = vunpack.c.l.s4 1934713408
        %v3304 = vunpack.c.0.s8 %v3303
        %v3305 = vlaneseq
        %v3306 = vshrl.u32 %v3305, 7
        %v3307 = vsub.s32 %v3304, %v3306
        %v3308 = vrot.slane %v3300, %v3307
        %v3310 = vunpack.c.l.s4 1934713408
        %v3311 = vunpack.c.0.s8 %v3310
        %v3312 = vlaneseq
        %v3313 = vshrl.u32 %v3312, 7
        %v3314 = vsub.s32 %v3311, %v3313
        %v3315 = vrot.slane %v3301, %v3314
        %v3316 = vcombine.high %v3292, 0.0
        %v3317 = vcombine.high %v3299, 0.0
        %v3318 = vcombine.high %v3308, 0.0
        %v3319 = vcombine.high %v3315, 0.0
        %v3320 = vcombine.low %v3006, %v3168
        %v3321 = vcombine.high %v3006, %v3168
        %v3323 = vunpack.c.l.s4 1983009808
        %v3324 = vunpack.c.0.s8 %v3323
        %v3325 = vlaneseq
        %v3326 = vshrl.u32 %v3325, 7
        %v3327 = vsub.s32 %v3324, %v3326
        %v3328 = vrot.slane %v3320, %v3327
        %v3330 = vunpack.c.l.s4 1983009808
        %v3331 = vunpack.c.0.s8 %v3330
        %v3332 = vlaneseq
        %v3333 = vshrl.u32 %v3332, 7
        %v3334 = vsub.s32 %v3331, %v3333
        %v3335 = vrot.slane %v3321, %v3334
        %v3336 = vcombine.low %v3087, %v3249
        %v3337 = vcombine.high %v3087, %v3249
        %v3339 = vunpack.c.l.s4 1983009808
        %v3340 = vunpack.c.0.s8 %v3339
        %v3341 = vlaneseq
        %v3342 = vshrl.u32 %v3341, 7
        %v3343 = vsub.s32 %v3340, %v3342
        %v3344 = vrot.slane %v3336, %v3343
        %v3346 = vunpack.c.l.s4 1983009808
        %v3347 = vunpack.c.0.s8 %v3346
        %v3348 = vlaneseq
        %v3349 = vshrl.u32 %v3348, 7
        %v3350 = vsub.s32 %v3347, %v3349
        %v3351 = vrot.slane %v3337, %v3350
        %v3352 = vcombine.low %v3328, %v3344
        %v3353 = vcombine.high %v3328, %v3344
        %v3355 = vunpack.c.l.s4 1934713408
        %v3356 = vunpack.c.0.s8 %v3355
        %v3357 = vlaneseq
        %v3358 = vshrl.u32 %v3357, 7
        %v3359 = vsub.s32 %v3356, %v3358
        %v3360 = vrot.slane %v3352, %v3359
        %v3362 = vunpack.c.l.s4 1934713408
        %v3363 = vunpack.c.0.s8 %v3362
        %v3364 = vlaneseq
        %v3365 = vshrl.u32 %v3364, 7
        %v3366 = vsub.s32 %v3363, %v3365
        %v3367 = vrot.slane %v3353, %v3366
        %v3368 = vcombine.low %v3335, %v3351
        %v3369 = vcombine.high %v3335, %v3351
        %v3371 = vunpack.c.l.s4 1934713408
        %v3372 = vunpack.c.0.s8 %v3371
        %v3373 = vlaneseq
        %v3374 = vshrl.u32 %v3373, 7
        %v3375 = vsub.s32 %v3372, %v3374
        %v3376 = vrot.slane %v3368, %v3375
        %v3378 = vunpack.c.l.s4 1934713408
        %v3379 = vunpack.c.0.s8 %v3378
        %v3380 = vlaneseq
        %v3381 = vshrl.u32 %v3380, 7
        %v3382 = vsub.s32 %v3379, %v3381
        %v3383 = vrot.slane %v3369, %v3382
        %v3384 = vcombine.high %v3360, 0.0
        %v3385 = vcombine.high %v3367, 0.0
        %v3386 = vcombine.high %v3376, 0.0
        %v3387 = vcombine.high %v3383, 0.0
        %v3388 = vcombine.low %v3292, %v3299
        %v3390 = vunpack.c.l.s4 1983009808
        %v3391 = vunpack.c.0.s8 %v3390
        %v3392 = vlaneseq
        %v3393 = vshrl.u32 %v3392, 7
        %v3394 = vsub.s32 %v3391, %v3393
        %v3395 = vrot.slane %v3388, %v3394
        %v3396 = vcombine.low %v3316, %v3317
        %v3398 = vunpack.c.l.s4 1983009808
        %v3399 = vunpack.c.0.s8 %v3398
        %v3400 = vlaneseq
        %v3401 = vshrl.u32 %v3400, 7
        %v3402 = vsub.s32 %v3399, %v3401
        %v3403 = vrot.slane %v3396, %v3402
        %v3404 = vcombine.low %v3308, %v3315
        %v3406 = vunpack.c.l.s4 1983009808
        %v3407 = vunpack.c.0.s8 %v3406
        %v3408 = vlaneseq
        %v3409 = vshrl.u32 %v3408, 7
        %v3410 = vsub.s32 %v3407, %v3409
        %v3411 = vrot.slane %v3404, %v3410
        %v3412 = vcombine.low %v3318, %v3319
        %v3414 = vunpack.c.l.s4 1983009808
        %v3415 = vunpack.c.0.s8 %v3414
        %v3416 = vlaneseq
        %v3417 = vshrl.u32 %v3416, 7
        %v3418 = vsub.s32 %v3415, %v3417
        %v3419 = vrot.slane %v3412, %v3418
        %v3420 = vcombine.low %v3395, %v3403
        %v3421 = vcombine.high %v3395, %v3403
        %v3423 = vunpack.c.l.s4 1934713408
        %v3424 = vunpack.c.0.s8 %v3423
        %v3425 = vlaneseq
        %v3426 = vshrl.u32 %v3425, 7
        %v3427 = vsub.s32 %v3424, %v3426
        %v3428 = vrot.slane %v3420, %v3427
        %v3430 = vunpack.c.l.s4 1934713408
        %v3431 = vunpack.c.0.s8 %v3430
        %v3432 = vlaneseq
        %v3433 = vshrl.u32 %v3432, 7
        %v3434 = vsub.s32 %v3431, %v3433
        %v3435 = vrot.slane %v3421, %v3434
        %v3436 = vcombine.low %v3411, %v3419
        %v3437 = vcombine.high %v3411, %v3419
        %v3439 = vunpack.c.l.s4 1934713408
        %v3440 = vunpack.c.0.s8 %v3439
        %v3441 = vlaneseq
        %v3442 = vshrl.u32 %v3441, 7
        %v3443 = vsub.s32 %v3440, %v3442
        %v3444 = vrot.slane %v3436, %v3443
        %v3446 = vunpack.c.l.s4 1934713408
        %v3447 = vunpack.c.0.s8 %v3446
        %v3448 = vlaneseq
        %v3449 = vshrl.u32 %v3448, 7
        %v3450 = vsub.s32 %v3447, %v3449
        %v3451 = vrot.slane %v3437, %v3450
        %v3452 = vcombine.low %v3428, %v3444
        %v3453 = vcombine.high %v3428, %v3444
        %v3454 = vcombine.low %v3435, %v3451
        %v3455 = vcombine.high %v3435, %v3451
        %v3456 = vcombine.low %v3360, %v3367
        %v3458 = vunpack.c.l.s4 1983009808
        %v3459 = vunpack.c.0.s8 %v3458
        %v3460 = vlaneseq
        %v3461 = vshrl.u32 %v3460, 7
        %v3462 = vsub.s32 %v3459, %v3461
        %v3463 = vrot.slane %v3456, %v3462
        %v3464 = vcombine.low %v3384, %v3385
        %v3466 = vunpack.c.l.s4 1983009808
        %v3467 = vunpack.c.0.s8 %v3466
        %v3468 = vlaneseq
        %v3469 = vshrl.u32 %v3468, 7
        %v3470 = vsub.s32 %v3467, %v3469
        %v3471 = vrot.slane %v3464, %v3470
        %v3472 = vcombine.low %v3376, %v3383
        %v3474 = vunpack.c.l.s4 1983009808
        %v3475 = vunpack.c.0.s8 %v3474
        %v3476 = vlaneseq
        %v3477 = vshrl.u32 %v3476, 7
        %v3478 = vsub.s32 %v3475, %v3477
        %v3479 = vrot.slane %v3472, %v3478
        %v3480 = vcombine.low %v3386, %v3387
        %v3482 = vunpack.c.l.s4 1983009808
        %v3483 = vunpack.c.0.s8 %v3482
        %v3484 = vlaneseq
        %v3485 = vshrl.u32 %v3484, 7
        %v3486 = vsub.s32 %v3483, %v3485
        %v3487 = vrot.slane %v3480, %v3486
        %v3488 = vcombine.low %v3463, %v3471
        %v3489 = vcombine.high %v3463, %v3471
        %v3491 = vunpack.c.l.s4 1934713408
        %v3492 = vunpack.c.0.s8 %v3491
        %v3493 = vlaneseq
        %v3494 = vshrl.u32 %v3493, 7
        %v3495 = vsub.s32 %v3492, %v3494
        %v3496 = vrot.slane %v3488, %v3495
        %v3498 = vunpack.c.l.s4 1934713408
        %v3499 = vunpack.c.0.s8 %v3498
        %v3500 = vlaneseq
        %v3501 = vshrl.u32 %v3500, 7
        %v3502 = vsub.s32 %v3499, %v3501
        %v3503 = vrot.slane %v3489, %v3502
        %v3504 = vcombine.low %v3479, %v3487
        %v3505 = vcombine.high %v3479, %v3487
        %v3507 = vunpack.c.l.s4 1934713408
        %v3508 = vunpack.c.0.s8 %v3507
        %v3509 = vlaneseq
        %v3510 = vshrl.u32 %v3509, 7
        %v3511 = vsub.s32 %v3508, %v3510
        %v3512 = vrot.slane %v3504, %v3511
        %v3514 = vunpack.c.l.s4 1934713408
        %v3515 = vunpack.c.0.s8 %v3514
        %v3516 = vlaneseq
        %v3517 = vshrl.u32 %v3516, 7
        %v3518 = vsub.s32 %v3515, %v3517
        %v3519 = vrot.slane %v3505, %v3518
        %v3520 = vcombine.low %v3496, %v3512
        %v3521 = vcombine.high %v3496, %v3512
        %v3522 = vcombine.low %v3503, %v3519
        %v3523 = vcombine.high %v3503, %v3519
        %3526 = vrot.lane.b32.xlu0 %v3453, 8
        %v3527 = vpop.permute.xlu0 %3526
        %3528 = vrot.lane.b32.xlu0 %v3521, 8
        %v3529 = vpop.permute.xlu0 %3528
        %3534 = vrot.lane.b32.xlu0 %v3454, 16
        %v3535 = vpop.permute.xlu0 %3534
        %3536 = vrot.lane.b32.xlu0 %v3522, 16
        %v3537 = vpop.permute.xlu0 %3536
        %3542 = vrot.lane.b32.xlu0 %v3455, 24
        %v3543 = vpop.permute.xlu0 %3542
        %3544 = vrot.lane.b32.xlu0 %v3523, 24
        %v3545 = vpop.permute.xlu0 %3544
        %v3548 = vsel %vm2455, %v3452, %v3527
        %v3549 = vsel %vm2455, %v3520, %v3529
        %vm3550 = vcmask 130048
        %v3551 = vsel %vm3550, %v3548, %v3535
        %v3552 = vsel %vm3550, %v3549, %v3537
        %vm3553 = vcmask 195584
        %v3554 = vsel %vm3553, %v3551, %v3543
        %v3555 = vsel %vm3553, %v3552, %v3545
        %v3556 = vld [vmem:[#allocation10] sm:$0xff]
        %v3557 = vld [vmem:[#allocation10 + $0x8] sm:$0xff]
        %v3558 = vld [vmem:[#allocation10 + $0x10] sm:$0xff]
        %v3559 = vld [vmem:[#allocation10 + $0x18] sm:$0xff]
        %v3560 = vld [vmem:[#allocation12] sm:$0x1]
        %v3562 = vlaneseq
        %v3563 = vshrl.u32 %v3562, 7
        %v3564 = vsub.s32 0, %v3563
        %v3565 = vrot.slane %v3560, %v3564
        %v3568 = vsel %vm2049, %v3554, 0
        %v3571 = vsel %vm2049, %v3555, 0
        %3573 = vmatprep.subr.mxu0 0.0
        %3574 = vmatpush1.msra.mxu0 %v3556
        %3575 = vmatprep.subr.mxu0 0.0
        %3576 = vmatpush1.msra.mxu0 %v3557
        %3577 = vmatprep.subr.mxu0 0.0
        %3578 = vmatpush1.msra.mxu0 %v3558
        %3579 = vmatprep.subr.mxu0 0.0
        %3580 = vmatpush1.msra.mxu0 %v3559
        %3581 = vmatprep.subr.mxu0 0.0
        %3582 = vmatpush1.msra.mxu0 0.0
        %3583 = vmatprep.subr.mxu0 0.0
        %3584 = vmatpush1.msra.mxu0 0.0
        %3585 = vmatprep.subr.mxu0 0.0
        %3586 = vmatpush1.msra.mxu0 0.0
        %3587 = vmatprep.subr.mxu0 0.0
        %3588 = vmatpush1.msra.mxu0 0.0
        %3589 = vmatprep.subr.mxu0 0.0
        %3590 = vmatpush1.msra.mxu0 0.0
        %3591 = vmatprep.subr.mxu0 0.0
        %3592 = vmatpush1.msra.mxu0 0.0
        %3593 = vmatprep.subr.mxu0 0.0
        %3594 = vmatpush1.msra.mxu0 0.0
        %3595 = vmatprep.subr.mxu0 0.0
        %3596 = vmatpush1.msra.mxu0 0.0
        %3597 = vmatprep.subr.mxu0 0.0
        %3598 = vmatpush1.msra.mxu0 0.0
        %3599 = vmatprep.subr.mxu0 0.0
        %3600 = vmatpush1.msra.mxu0 0.0
        %3601 = vmatprep.subr.mxu0 0.0
        %3602 = vmatpush1.msra.mxu0 0.0
        %3603 = vmatprep.subr.mxu0 0.0
        %3604 = vmatpush1.msra.mxu0 0.0
        %3605 = vmatprep.subr.mxu0 0.0
        %3606 = vmatpush1.msra.mxu0 0.0
        %3607 = vmatprep.subr.mxu0 0.0
        %3608 = vmatpush1.msra.mxu0 0.0
        %3609 = vmatprep.subr.mxu0 0.0
        %3610 = vmatpush1.msra.mxu0 0.0
        %3611 = vmatprep.subr.mxu0 0.0
        %3612 = vmatpush1.msra.mxu0 0.0
        %3613 = vmatprep.subr.mxu0 0.0
        %3614 = vmatpush1.msra.mxu0 0.0
        %3615 = vmatprep.subr.mxu0 0.0
        %3616 = vmatpush1.msra.mxu0 0.0
        %3617 = vmatprep.subr.mxu0 0.0
        %3618 = vmatpush1.msra.mxu0 0.0
        %3619 = vmatprep.subr.mxu0 0.0
        %3620 = vmatpush1.msra.mxu0 0.0
        %3621 = vmatprep.subr.mxu0 0.0
        %3622 = vmatpush1.msra.mxu0 0.0
        %3623 = vmatprep.subr.mxu0 0.0
        %3624 = vmatpush1.msra.mxu0 0.0
        %3625 = vmatprep.subr.mxu0 0.0
        %3626 = vmatpush1.msra.mxu0 0.0
        %3627 = vmatprep.subr.mxu0 0.0
        %3628 = vmatpush1.msra.mxu0 0.0
        %3629 = vmatprep.subr.mxu0 0.0
        %3630 = vmatpush1.msra.mxu0 0.0
        %3631 = vmatprep.subr.mxu0 0.0
        %3632 = vmatpush1.msra.mxu0 0.0
        %3633 = vmatprep.subr.mxu0 0.0
        %3634 = vmatpush1.msra.mxu0 0.0
        %3635 = vmatprep.subr.mxu0 0.0
        %3636 = vmatpush1.msra.mxu0 0.0
        %3637 = vmatprep.mubr.f32.mxu0 0.0
        %3638 = vmatmul.mubr.f32.gmra.mrb[0].mxu0 %v3568
        %v3639 = vpop.f32.mrb[0].mxu0
        %v3640 = vadd.f32 %v3565, %v3639
        %v3641 = vpop.f32.mrb[0].mxu0
        %3642 = vmatprep.mubr.f32.mxu0 0.0
        %3643 = vmatmul.mubr.f32.gmra.mrb[0].mxu0 %v3571
        %v3644 = vpop.f32.mrb[0].mxu0
        %v3645 = vadd.f32 %v3565, %v3644
        %v3646 = vpop.f32.mrb[0].mxu0
        %3647 = vdwg.mxu0
        %v3648 = vadd.f32 %v706, %v3640
        %v3649 = vadd.f32 %v707, %v3645
        %v3650 = vsel %vm2049, %v3648, 0.0
        %3651 = vadd.xlane.f32.xlu0 %v3650
        %v3652 = vpop.xlane.xlu0 %3651
        %v3653 = vsel %vm2049, %v3649, 0.0
        %3654 = vadd.xlane.f32.xlu0 %v3653
        %v3655 = vpop.xlane.xlu0 %3654
        %v3656 = vrcp.pop 32.0
        %v3657 = vmul.f32 %v3652, %v3656
        %v3658 = vmul.f32 %v3655, %v3656
        %v3659 = vmul.f32 %v3648, %v3648
        %v3660 = vmul.f32 %v3649, %v3649
        %v3661 = vsel %vm2049, %v3659, 0.0
        %3662 = vadd.xlane.f32.xlu0 %v3661
        %v3663 = vpop.xlane.xlu0 %3662
        %v3664 = vsel %vm2049, %v3660, 0.0
        %3665 = vadd.xlane.f32.xlu0 %v3664
        %v3666 = vpop.xlane.xlu0 %3665
        %v3667 = vmul.f32 %v3663, %v3656
        %v3668 = vmul.f32 %v3666, %v3656
        %v3669 = vmul.f32 %v3657, %v3657
        %v3670 = vmul.f32 %v3658, %v3658
        %v3671 = vsub.f32 %v3667, %v3669
        %v3672 = vsub.f32 %v3668, %v3670
        %v3673 = vsub.f32 %v3648, %v3657
        %v3674 = vsub.f32 %v3649, %v3658
        %v3675 = vadd.f32 %v3671, 1e-05
        %v3676 = vadd.f32 %v3672, 1e-05
        %v3677 = vrsqrt.pop %v3675
        %v3678 = vrsqrt.pop %v3676
        %v3679 = vmul.f32 %v3673, %v3677
        %v3680 = vmul.f32 %v3674, %v3678
        %v3681 = vld [vmem:[#allocation13] sm:$0x1]
        %v3683 = vlaneseq
        %v3684 = vshrl.u32 %v3683, 7
        %v3685 = vsub.s32 0, %v3684
        %v3686 = vrot.slane %v3681, %v3685
        %v3688 = vmul.f32 %v3679, %v3686
        %v3689 = vmul.f32 %v3680, %v3686
        %v3690 = vld [vmem:[%s10] sm:$0x1]
        %v3692 = vlaneseq
        %v3693 = vshrl.u32 %v3692, 7
        %v3694 = vsub.s32 0, %v3693
        %v3695 = vrot.slane %v3690, %v3694
        %v3697 = vadd.f32 %v3688, %v3695
        %v3698 = vadd.f32 %v3689, %v3695
        %v3699 = vld [vmem:[%s11] sm:$0xff]
        %v3700 = vld [vmem:[%s11 + $0x8] sm:$0xff]
        %v3701 = vld [vmem:[%s11 + $0x10] sm:$0xff]
        %v3702 = vld [vmem:[%s11 + $0x18] sm:$0xff]
        %v3703 = vld [vmem:[%s12] sm:$0x1]
        %v3705 = vlaneseq
        %v3706 = vshrl.u32 %v3705, 7
        %v3707 = vsub.s32 0, %v3706
        %v3708 = vrot.slane %v3703, %v3707
        %v3711 = vsel %vm2049, %v3697, 0
        %v3714 = vsel %vm2049, %v3698, 0
        %3716 = vmatprep.subr.mxu0 0.0
        %3717 = vmatpush1.msra.mxu0 %v3699
        %3718 = vmatprep.subr.mxu0 0.0
        %3719 = vmatpush1.msra.mxu0 %v3700
        %3720 = vmatprep.subr.mxu0 0.0
        %3721 = vmatpush1.msra.mxu0 %v3701
        %3722 = vmatprep.subr.mxu0 0.0
        %3723 = vmatpush1.msra.mxu0 %v3702
        %3724 = vmatprep.subr.mxu0 0.0
        %3725 = vmatpush1.msra.mxu0 0.0
        %3726 = vmatprep.subr.mxu0 0.0
        %3727 = vmatpush1.msra.mxu0 0.0
        %3728 = vmatprep.subr.mxu0 0.0
        %3729 = vmatpush1.msra.mxu0 0.0
        %3730 = vmatprep.subr.mxu0 0.0
        %3731 = vmatpush1.msra.mxu0 0.0
        %3732 = vmatprep.subr.mxu0 0.0
        %3733 = vmatpush1.msra.mxu0 0.0
        %3734 = vmatprep.subr.mxu0 0.0
        %3735 = vmatpush1.msra.mxu0 0.0
        %3736 = vmatprep.subr.mxu0 0.0
        %3737 = vmatpush1.msra.mxu0 0.0
        %3738 = vmatprep.subr.mxu0 0.0
        %3739 = vmatpush1.msra.mxu0 0.0
        %3740 = vmatprep.subr.mxu0 0.0
        %3741 = vmatpush1.msra.mxu0 0.0
        %3742 = vmatprep.subr.mxu0 0.0
        %3743 = vmatpush1.msra.mxu0 0.0
        %3744 = vmatprep.subr.mxu0 0.0
        %3745 = vmatpush1.msra.mxu0 0.0
        %3746 = vmatprep.subr.mxu0 0.0
        %3747 = vmatpush1.msra.mxu0 0.0
        %3748 = vmatprep.subr.mxu0 0.0
        %3749 = vmatpush1.msra.mxu0 0.0
        %3750 = vmatprep.subr.mxu0 0.0
        %3751 = vmatpush1.msra.mxu0 0.0
        %3752 = vmatprep.subr.mxu0 0.0
        %3753 = vmatpush1.msra.mxu0 0.0
        %3754 = vmatprep.subr.mxu0 0.0
        %3755 = vmatpush1.msra.mxu0 0.0
        %3756 = vmatprep.subr.mxu0 0.0
        %3757 = vmatpush1.msra.mxu0 0.0
        %3758 = vmatprep.subr.mxu0 0.0
        %3759 = vmatpush1.msra.mxu0 0.0
        %3760 = vmatprep.subr.mxu0 0.0
        %3761 = vmatpush1.msra.mxu0 0.0
        %3762 = vmatprep.subr.mxu0 0.0
        %3763 = vmatpush1.msra.mxu0 0.0
        %3764 = vmatprep.subr.mxu0 0.0
        %3765 = vmatpush1.msra.mxu0 0.0
        %3766 = vmatprep.subr.mxu0 0.0
        %3767 = vmatpush1.msra.mxu0 0.0
        %3768 = vmatprep.subr.mxu0 0.0
        %3769 = vmatpush1.msra.mxu0 0.0
        %3770 = vmatprep.subr.mxu0 0.0
        %3771 = vmatpush1.msra.mxu0 0.0
        %3772 = vmatprep.subr.mxu0 0.0
        %3773 = vmatpush1.msra.mxu0 0.0
        %3774 = vmatprep.subr.mxu0 0.0
        %3775 = vmatpush1.msra.mxu0 0.0
        %3776 = vmatprep.subr.mxu0 0.0
        %3777 = vmatpush1.msra.mxu0 0.0
        %3778 = vmatprep.subr.mxu0 0.0
        %3779 = vmatpush1.msra.mxu0 0.0
        %3780 = vmatprep.mubr.f32.mxu0 0.0
        %3781 = vmatmul.mubr.f32.gmra.mrb[0].mxu0 %v3711
        %v3782 = vpop.f32.mrb[0].mxu0
        %v3783 = vadd.f32 %v3708, %v3782
        %v3784 = vpop.f32.mrb[0].mxu0
        %3785 = vmatprep.mubr.f32.mxu0 0.0
        %3786 = vmatmul.mubr.f32.gmra.mrb[0].mxu0 %v3714
        %v3787 = vpop.f32.mrb[0].mxu0
        %v3788 = vadd.f32 %v3708, %v3787
        %v3789 = vpop.f32.mrb[0].mxu0
        %3790 = vdwg.mxu0
        %v3791 = vmax.f32 %v3783, 0.0
        %v3792 = vmax.f32 %v3788, 0.0
        %v3793 = vld [vmem:[%s13] sm:$0xff]
        %v3794 = vld [vmem:[%s13 + $0x8] sm:$0xff]
        %v3795 = vld [vmem:[%s13 + $0x10] sm:$0xff]
        %v3796 = vld [vmem:[%s13 + $0x18] sm:$0xff]
        %v3797 = vld [vmem:[%s13 + $0x20] sm:$0xff]
        %v3798 = vld [vmem:[%s13 + $0x28] sm:$0xff]
        %v3799 = vld [vmem:[%s13 + $0x30] sm:$0xff]
        %v3800 = vld [vmem:[%s13 + $0x38] sm:$0xff]
        %v3801 = vld [vmem:[%s14] sm:$0x1]
        %v3803 = vlaneseq
        %v3804 = vshrl.u32 %v3803, 7
        %v3805 = vsub.s32 0, %v3804
        %v3806 = vrot.slane %v3801, %v3805
        %vm3808 = vcmask 523264
        %v3810 = vsel %vm3808, %v3791, 0
        %v3813 = vsel %vm3808, %v3792, 0
        %3815 = vmatprep.subr.mxu0 0.0
        %3816 = vmatpush1.msra.mxu0 %v3793
        %3817 = vmatprep.subr.mxu0 0.0
        %3818 = vmatpush1.msra.mxu0 %v3794
        %3819 = vmatprep.subr.mxu0 0.0
        %3820 = vmatpush1.msra.mxu0 %v3795
        %3821 = vmatprep.subr.mxu0 0.0
        %3822 = vmatpush1.msra.mxu0 %v3796
        %3823 = vmatprep.subr.mxu0 0.0
        %3824 = vmatpush1.msra.mxu0 %v3797
        %3825 = vmatprep.subr.mxu0 0.0
        %3826 = vmatpush1.msra.mxu0 %v3798
        %3827 = vmatprep.subr.mxu0 0.0
        %3828 = vmatpush1.msra.mxu0 %v3799
        %3829 = vmatprep.subr.mxu0 0.0
        %3830 = vmatpush1.msra.mxu0 %v3800
        %3831 = vmatprep.subr.mxu0 0.0
        %3832 = vmatpush1.msra.mxu0 0.0
        %3833 = vmatprep.subr.mxu0 0.0
        %3834 = vmatpush1.msra.mxu0 0.0
        %3835 = vmatprep.subr.mxu0 0.0
        %3836 = vmatpush1.msra.mxu0 0.0
        %3837 = vmatprep.subr.mxu0 0.0
        %3838 = vmatpush1.msra.mxu0 0.0
        %3839 = vmatprep.subr.mxu0 0.0
        %3840 = vmatpush1.msra.mxu0 0.0
        %3841 = vmatprep.subr.mxu0 0.0
        %3842 = vmatpush1.msra.mxu0 0.0
        %3843 = vmatprep.subr.mxu0 0.0
        %3844 = vmatpush1.msra.mxu0 0.0
        %3845 = vmatprep.subr.mxu0 0.0
        %3846 = vmatpush1.msra.mxu0 0.0
        %3847 = vmatprep.subr.mxu0 0.0
        %3848 = vmatpush1.msra.mxu0 0.0
        %3849 = vmatprep.subr.mxu0 0.0
        %3850 = vmatpush1.msra.mxu0 0.0
        %3851 = vmatprep.subr.mxu0 0.0
        %3852 = vmatpush1.msra.mxu0 0.0
        %3853 = vmatprep.subr.mxu0 0.0
        %3854 = vmatpush1.msra.mxu0 0.0
        %3855 = vmatprep.subr.mxu0 0.0
        %3856 = vmatpush1.msra.mxu0 0.0
        %3857 = vmatprep.subr.mxu0 0.0
        %3858 = vmatpush1.msra.mxu0 0.0
        %3859 = vmatprep.subr.mxu0 0.0
        %3860 = vmatpush1.msra.mxu0 0.0
        %3861 = vmatprep.subr.mxu0 0.0
        %3862 = vmatpush1.msra.mxu0 0.0
        %3863 = vmatprep.subr.mxu0 0.0
        %3864 = vmatpush1.msra.mxu0 0.0
        %3865 = vmatprep.subr.mxu0 0.0
        %3866 = vmatpush1.msra.mxu0 0.0
        %3867 = vmatprep.subr.mxu0 0.0
        %3868 = vmatpush1.msra.mxu0 0.0
        %3869 = vmatprep.subr.mxu0 0.0
        %3870 = vmatpush1.msra.mxu0 0.0
        %3871 = vmatprep.subr.mxu0 0.0
        %3872 = vmatpush1.msra.mxu0 0.0
        %3873 = vmatprep.subr.mxu0 0.0
        %3874 = vmatpush1.msra.mxu0 0.0
        %3875 = vmatprep.subr.mxu0 0.0
        %3876 = vmatpush1.msra.mxu0 0.0
        %3877 = vmatprep.subr.mxu0 0.0
        %3878 = vmatpush1.msra.mxu0 0.0
        %3879 = vmatprep.mubr.f32.mxu0 0.0
        %3880 = vmatmul.mubr.f32.gmra.mrb[0].mxu0 %v3810
        %v3881 = vpop.f32.mrb[0].mxu0
        %v3882 = vadd.f32 %v3806, %v3881
        %v3883 = vpop.f32.mrb[0].mxu0
        %3884 = vmatprep.mubr.f32.mxu0 0.0
        %3885 = vmatmul.mubr.f32.gmra.mrb[0].mxu0 %v3813
        %v3886 = vpop.f32.mrb[0].mxu0
        %v3887 = vadd.f32 %v3806, %v3886
        %v3888 = vpop.f32.mrb[0].mxu0
        %3889 = vdwg.mxu0
        %v3890 = vadd.f32 %v3697, %v3882
        %v3891 = vadd.f32 %v3698, %v3887
        %v3892 = vsel %vm2049, %v3890, 0.0
        %3893 = vadd.xlane.f32.xlu0 %v3892
        %v3894 = vpop.xlane.xlu0 %3893
        %v3895 = vsel %vm2049, %v3891, 0.0
        %3896 = vadd.xlane.f32.xlu0 %v3895
        %v3897 = vpop.xlane.xlu0 %3896
        %v3898 = vmul.f32 %v3894, %v3656
        %v3899 = vmul.f32 %v3897, %v3656
        %v3900 = vmul.f32 %v3890, %v3890
        %v3901 = vmul.f32 %v3891, %v3891
        %v3902 = vsel %vm2049, %v3900, 0.0
        %3903 = vadd.xlane.f32.xlu0 %v3902
        %v3904 = vpop.xlane.xlu0 %3903
        %v3905 = vsel %vm2049, %v3901, 0.0
        %3906 = vadd.xlane.f32.xlu0 %v3905
        %v3907 = vpop.xlane.xlu0 %3906
        %v3908 = vmul.f32 %v3904, %v3656
        %v3909 = vmul.f32 %v3907, %v3656
        %v3910 = vmul.f32 %v3898, %v3898
        %v3911 = vmul.f32 %v3899, %v3899
        %v3912 = vsub.f32 %v3908, %v3910
        %v3913 = vsub.f32 %v3909, %v3911
        %v3914 = vsub.f32 %v3890, %v3898
        %v3915 = vsub.f32 %v3891, %v3899
        %v3916 = vadd.f32 %v3912, 1e-05
        %v3917 = vadd.f32 %v3913, 1e-05
        %v3918 = vrsqrt.pop %v3916
        %v3919 = vrsqrt.pop %v3917
        %v3920 = vmul.f32 %v3914, %v3918
        %v3921 = vmul.f32 %v3915, %v3919
        %v3922 = vld [vmem:[%s15] sm:$0x1]
        %v3924 = vlaneseq
        %v3925 = vshrl.u32 %v3924, 7
        %v3926 = vsub.s32 0, %v3925
        %v3927 = vrot.slane %v3922, %v3926
        %v3929 = vmul.f32 %v3920, %v3927
        %v3930 = vmul.f32 %v3921, %v3927
        %v3931 = vld [vmem:[%s16] sm:$0x1]
        %v3933 = vlaneseq
        %v3934 = vshrl.u32 %v3933, 7
        %v3935 = vsub.s32 0, %v3934
        %v3936 = vrot.slane %v3931, %v3935
        %v3938 = vadd.f32 %v3929, %v3936
        %v3939 = vadd.f32 %v3930, %v3936
        %3940 = vst.msk [vmem:[%s697] sm:$0xff] %vm2049, %v3938
        %3941 = vst.msk [vmem:[%s697 + $0x8] sm:$0xff] %vm2049, %v3939
        %s3942 = sand.u32 %s437, 1
        %s3943 = scalar_lea.sflag [#allocation6], %s3942
        %s3944 = sand.u32 %s437, 1
        %s3945 = smul.addr %s3944, 16
        %s3946 = scalar_lea.vmem [#allocation15], %s3945
        // Predicated region
        $region117: #{tpu_custom_call.1} parent=87 // pred_check
          %p3947 = pneg %p447
        $region118: #{tpu_custom_call.1} parent=87 // pred_check_branch
          %3949 = sbr.rel (%p3947) target = $region120
        $region119: #{tpu_custom_call.1} parent=87 // pred_region
          %s3950 = smul.u32 2, %s44
          %s3952 = ssub.s32 256, 256
          %3953 = vsyncadd %s3943, %s3952
          %s3954 = smul.addr %s43, 4
          %s3955 = sadd.s32 %s3950, %s3954
          %s3956 = smul.addr %s3955, 128
          %s3957 = scalar_lea.hbm %s17, %s3956
          %s3958 = sshll.u32 %s3946, 4
          %s3959 = int_to_ptr.vmem [resolvable:$true] %s3958
          %3964 = dma.vmem_to_hbm [thread:$0]  %s3959, 256, %s3957, %s3943, 128, 128, 8
        $region120: #{tpu_custom_call.1} parent=87 // pred_fallthru
          _
      $region88: #{tpu_custom_call.1} parent=5 // pred_fallthru
        _
      %p3965 = scmp.le.s32.totalorder 2, %s34
      // Predicated region
      $region121: #{tpu_custom_call.1} parent=5 // pred_check
        %p3966 = pneg %p3965
      $region122: #{tpu_custom_call.1} parent=5 // pred_check_branch
        %3968 = sbr.rel (%p3966) target = $region124
      $region123: #{tpu_custom_call.1} parent=5 // pred_region
        %s3969 = ssub.s32 %s34, 2
        // Predicated region
        $region125: #{tpu_custom_call.1} parent=123 // pred_check
          %p3970 = pneg %p453
        $region126: #{tpu_custom_call.1} parent=123 // pred_check_branch
          %3972 = sbr.rel (%p3970) target = $region128
        $region127: #{tpu_custom_call.1} parent=123 // pred_region
          %s3973 = sand.u32 %s438, 1
          %s3974 = scalar_lea.sflag [#allocation6], %s3973
          %s3975 = sand.u32 %s438, 1
          %s3976 = smul.addr %s3975, 16
          %s3977 = scalar_lea.vmem [#allocation15], %s3976
          %3978 = dma.done %s3974, 256
        $region128: #{tpu_custom_call.1} parent=123 // pred_fallthru
          _
      $region124: #{tpu_custom_call.1} parent=5 // pred_fallthru
        _
    $region6: #{tpu_custom_call.1} parent=1 // loop_footer
      %s38 = sadd.s32 1, %s34
    $region7: #{tpu_custom_call.1} parent=1 // loop_footer_branch
      %33 = sbr.rel target = $region3
    $region8: #{tpu_custom_call.1} parent=1 // loop_exit
      _
    %3979 = vsyncpa [#allocation5], 1
    %s3980 = scalar_lea.sflag [#allocation5], 1
    %3981 = vsyncpa %s3980, 1
    %3982 = vsyncpa [#allocation8], 1
    %s3983 = scalar_lea.sflag [#allocation8], 1
    %3984 = vsyncpa %s3983, 1
    %3985 = vsyncpa [#allocation11], 1
    %3986 = vsyncpa [#allocation14], 1
    %3987 = vsyncpa [#allocation6], 1
    %s3988 = scalar_lea.sflag [#allocation6], 1
    %3989 = vsyncpa %s3988, 1

</llo_original>
